<compile_context>
chip_gen: v5e
topology: v5e:2x2
jax: 0.10.0
libtpu: 0.0.40
codegen_flags: <defaults>
</compile_context>

<pallas_src>
import math

import jax
import jax.numpy as jnp
from jax.experimental import pallas as pl
from jax.experimental.pallas import tpu as pltpu

LANE = 128
BN_EPS = 1e-3
NUM_CLASSES = 10
LAST_CHANNEL = 64
VMEM_LIMIT = 32 * 1024 * 1024


# ----------------------------------------------------------------------------
# helpers from the reference implementation
# ----------------------------------------------------------------------------
def _make_divisible(ch, divisor=8, min_ch=None):
    if min_ch is None:
        min_ch = divisor
    new_ch = max(min_ch, int(ch + divisor / 2) // divisor * divisor)
    if new_ch < 0.9 * ch:
        new_ch += divisor
    return new_ch


def _cnf(input_c, kernel, expanded_c, out_c, use_se, activation, stride,
         width_multi=1.0):
    adj = lambda c: _make_divisible(c * width_multi, 8)
    return (adj(input_c), kernel, adj(expanded_c), adj(out_c),
            use_se, activation == "HS", stride)


# small MobileNetV3 configuration (subset of the "small" variant)
INVERTED_RESIDUAL_SETTING = [
    # input_c, kernel, expanded_c, out_c, use_se, use_hs, stride
    _cnf(16, 3, 16, 16, True, "RE", 2),
    _cnf(16, 3, 72, 24, False, "RE", 2),
    _cnf(24, 5, 96, 40, True, "HS", 1),
    _cnf(40, 3, 120, 40, True, "HS", 1),   # exercises the residual connection
]


def _rup(c, m=LANE):
    return ((c + m - 1) // m) * m


# ----------------------------------------------------------------------------
# activations (used inside Pallas kernels)
# ----------------------------------------------------------------------------
def _relu(x):
    return jnp.maximum(x, 0.0)


def _hardswish(x):
    return x * jnp.clip(x + 3.0, 0.0, 6.0) * (1.0 / 6.0)


def _hardsigmoid(x):
    return jnp.clip(x * (1.0 / 6.0) + 0.5, 0.0, 1.0)


def _cparams(sem=None):
    if sem is None:
        return pltpu.CompilerParams(vmem_limit_bytes=VMEM_LIMIT)
    return pltpu.CompilerParams(dimension_semantics=sem,
                                vmem_limit_bytes=VMEM_LIMIT)


# ----------------------------------------------------------------------------
# stem: 3x3 / stride-2 conv (3 -> 16) + folded BN + Hardswish as ONE matmul
# over the 27 real input taps (no 128-lane padding of the 3-channel image).
# ----------------------------------------------------------------------------
def stem_conv(x_nhwc, p):
    N, H, W, C = x_nhwc.shape
    K, stride, pad = 3, 2, 1
    Ho = (H + 2 * pad - K) // stride + 1
    Wo = (W + 2 * pad - K) // stride + 1
    xp = jnp.pad(x_nhwc, ((0, 0), (pad, pad), (pad, pad), (0, 0)))
    cols = []
    for kh in range(K):
        for kw in range(K):
            cols.append(jax.lax.slice(
                xp, (0, kh, kw, 0),
                (N, kh + stride * (Ho - 1) + 1, kw + stride * (Wo - 1) + 1, C),
                (1, stride, stride, 1)))
    patches = jnp.concatenate(cols, axis=-1).reshape(N, Ho * Wo, K * K * C)
    kdim = p["w"].shape[0]
    patches = jnp.pad(patches, ((0, 0), (0, 0), (0, kdim - K * K * C)))
    patches = patches.astype(jnp.bfloat16)
    Cout = p["w"].shape[-1]

    def kernel(x_ref, w_ref, shift_ref, o_ref):
        y = jnp.dot(x_ref[0], w_ref[...], preferred_element_type=jnp.float32)
        o_ref[0] = _hardswish(y + shift_ref[...]).astype(o_ref.dtype)

    out = pl.pallas_call(
        kernel,
        out_shape=jax.ShapeDtypeStruct((N, Ho * Wo, Cout), jnp.bfloat16),
        grid=(N,),
        in_specs=[pl.BlockSpec((1, Ho * Wo, kdim), lambda n: (n, 0, 0)),
                  pl.BlockSpec((kdim, Cout), lambda n: (0, 0)),
                  pl.BlockSpec((1, Cout), lambda n: (0, 0))],
        out_specs=pl.BlockSpec((1, Ho * Wo, Cout), lambda n: (n, 0, 0)),
        compiler_params=_cparams(("parallel",)),
    )(patches, p["w"], p["shift"])
    return out.reshape(N, Ho, Wo, Cout)


# ----------------------------------------------------------------------------
# fused inverted-residual block: expand -> depthwise -> SE -> project(+res)
# in a single pallas_call; the expanded activation stays in VMEM scratch.
# ----------------------------------------------------------------------------
def inverted_residual(x, p, cnf):
    in_c, K, exp_c, out_c, use_se, use_hs, stride = cnf
    act = _hardswish if use_hs else _relu
    N, H, W, Cin_p = x.shape
    Cexp_p = p["dw"]["w"].shape[-1]
    Cout_p = p["project"]["w"].shape[-1]
    has_expand = "expand" in p
    use_res = (stride == 1 and in_c == out_c)
    pad = (K - 1) // 2
    Hp, Wp = H + 2 * pad, W + 2 * pad
    Ho = (Hp - K) // stride + 1
    Wo = (Wp - K) // stride + 1

    # ---- wrapper-side input plumbing (bf16, small block inputs only) -------
    if stride == 1:
        x_parts = [x]
        part_shape = (1, H, W, Cin_p)
        scratch_shape = (Hp, Wp, Cexp_p)
    else:
        # 2x2 phase partition of the zero-padded input so every in-kernel tap
        # is a static slice (no strided VMEM access).
        xp = jnp.pad(x, ((0, 0), (pad, pad), (pad, pad), (0, 0)))
        xp = jnp.pad(xp, ((0, 0), (0, Hp % 2), (0, Wp % 2), (0, 0)))
        Hq, Wq = (Hp + 1) // 2, (Wp + 1) // 2
        x_parts = [xp[:, i::2, j::2, :] for i in range(2) for j in range(2)]
        part_shape = (1, Hq, Wq, Cin_p)
        scratch_shape = (4, Hq, Wq, Cexp_p)
    n_parts = len(x_parts)
    needs_scratch = has_expand or stride == 1

    def _interior(ph, size):
        # real (non-halo) index range of phase `ph` along an axis of length
        # `size` after padding by `pad`.
        lo = (pad - ph + 1) // 2
        hi = (pad + size - 1 - ph) // 2
        return lo, hi - lo + 1

    def kernel(*refs):
        pos = 0
        parts = refs[pos:pos + n_parts]; pos += n_parts
        if has_expand:
            we_ref, be_ref = refs[pos], refs[pos + 1]; pos += 2
        wd_ref, bd_ref = refs[pos], refs[pos + 1]; pos += 2
        if use_se:
            w1_ref, b1_ref, w2_ref, b2_ref = refs[pos:pos + 4]; pos += 4
        wp_ref, bp_ref = refs[pos], refs[pos + 1]; pos += 2
        o_ref = refs[pos]; pos += 1
        scr_ref = refs[pos] if needs_scratch else None

        # ---- expand 1x1 conv (or copy) into the zero-padded VMEM scratch ---
        if needs_scratch:
            scr_ref[...] = jnp.zeros(scratch_shape, jnp.float32)
            if has_expand:
                w_e = we_ref[...]
                b_e = be_ref[...]
            if stride == 1:
                for r in range(H):
                    xr = parts[0][0, r, :, :]                       # (W, Cin)
                    if has_expand:
                        hr = act(jnp.dot(xr, w_e,
                                         preferred_element_type=jnp.float32)
                                 + b_e)
                    else:
                        hr = xr.astype(jnp.float32)
                    scr_ref[pad + r, pad:pad + W, :] = hr
            else:
                # per-phase expand on the real (interior) values only; halo
                # stays zero from the scratch init.
                for ph in range(2):
                    lo_h, nh = _interior(ph, H)
                    for pw in range(2):
                        lo_w, nw = _interior(pw, W)
                        pidx = ph * 2 + pw
                        for r in range(nh):
                            xr = parts[pidx][0, lo_h + r, lo_w:lo_w + nw, :]
                            hr = act(jnp.dot(xr, w_e,
                                             preferred_element_type=jnp.float32)
                                     + b_e)
                            scr_ref[pidx, lo_h + r, lo_w:lo_w + nw, :] = hr

        # ---- depthwise KxK conv + folded BN + activation (VPU, f32) --------
        # TODO(synk): for large spatial extents tile this over row strips so
        # the f32 accumulator stays register-resident.
        w_d = wd_ref[...]                                           # (K*K, C)
        acc = jnp.zeros((Ho, Wo, Cexp_p), jnp.float32)
        for kh in range(K):
            for kw in range(K):
                if needs_scratch:
                    if stride == 1:
                        tap = scr_ref[kh:kh + Ho, kw:kw + Wo, :]
                    else:
                        tap = scr_ref[(kh % 2) * 2 + (kw % 2),
                                      kh // 2:kh // 2 + Ho,
                                      kw // 2:kw // 2 + Wo, :]
                else:
                    tap = parts[(kh % 2) * 2 + (kw % 2)][
                        0, kh // 2:kh // 2 + Ho,
                        kw // 2:kw // 2 + Wo, :].astype(jnp.float32)
                acc = acc + tap * w_d[kh * K + kw:kh * K + kw + 1, :]
        y = act(acc + bd_ref[...])                                  # (Ho,Wo,C)

        # ---- fused SqueezeExcitation (pool + fc1/ReLU + fc2/hardsigmoid) ---
        if use_se:
            m = jnp.mean(y, axis=(0, 1), keepdims=True)[0]          # (1, Cexp)
            h1 = _relu(jnp.dot(m.astype(jnp.bfloat16), w1_ref[...],
                               preferred_element_type=jnp.float32) + b1_ref[...])
            s = _hardsigmoid(jnp.dot(h1.astype(jnp.bfloat16), w2_ref[...],
                                     preferred_element_type=jnp.float32)
                             + b2_ref[...])
            y = y * s

        # ---- project 1x1 conv + folded BN (+ residual), bf16 store ---------
        w_p = wp_ref[...]
        b_p = bp_ref[...]
        if Wo % 8 == 0 and not use_res:
            flat = y.reshape(Ho * Wo, Cexp_p).astype(jnp.bfloat16)
            out = jnp.dot(flat, w_p, preferred_element_type=jnp.float32) + b_p
            o_ref[0] = out.reshape(Ho, Wo, Cout_p).astype(o_ref.dtype)
        else:
            for r in range(Ho):
                row = jnp.dot(y[r].astype(jnp.bfloat16), w_p,
                              preferred_element_type=jnp.float32) + b_p
                if use_res:
                    row = row + parts[0][0, r, :, :].astype(jnp.float32)
                o_ref[0, r, :, :] = row.astype(o_ref.dtype)

    weight_args = []
    if has_expand:
        weight_args += [p["expand"]["w"], p["expand"]["shift"]]
    weight_args += [p["dw"]["w"], p["dw"]["shift"]]
    if use_se:
        weight_args += [p["se"]["w1"], p["se"]["b1"], p["se"]["w2"], p["se"]["b2"]]
    weight_args += [p["project"]["w"], p["project"]["shift"]]

    in_specs = ([pl.BlockSpec(part_shape, lambda n: (n, 0, 0, 0))] * n_parts
                + [pl.BlockSpec(w.shape, lambda n: (0, 0)) for w in weight_args])
    scratch_shapes = ([pltpu.VMEM(scratch_shape, jnp.float32)]
                      if needs_scratch else [])

    return pl.pallas_call(
        kernel,
        out_shape=jax.ShapeDtypeStruct((N, Ho, Wo, Cout_p), jnp.bfloat16),
        grid=(N,),
        in_specs=in_specs,
        out_specs=pl.BlockSpec((1, Ho, Wo, Cout_p), lambda n: (n, 0, 0, 0)),
        scratch_shapes=scratch_shapes,
        compiler_params=_cparams(("parallel",)),
    )(*x_parts, *weight_args)


# ----------------------------------------------------------------------------
# head: last 1x1 conv (HS) + AdaptiveAvgPool(1) + Linear/HS + Dropout(eval)
# + Linear, fused into one kernel per batch element.
# ----------------------------------------------------------------------------
def head(x3, params):
    N, HW, C = x3.shape
    Cout = params["fc2_w"].shape[-1]
    w = params

    def kernel(x_ref, wl_ref, bl_ref, w1_ref, b1_ref, w2_ref, b2_ref, o_ref):
        y = _hardswish(jnp.dot(x_ref[0], wl_ref[...],
                               preferred_element_type=jnp.float32) + bl_ref[...])
        m = jnp.mean(y, axis=0, keepdims=True)                      # (1, Cmid)
        h = _hardswish(jnp.dot(m.astype(jnp.bfloat16), w1_ref[...],
                               preferred_element_type=jnp.float32) + b1_ref[...])
        # TODO(synk): Dropout(p=0.2) is the eval-mode identity here.
        o_ref[0] = jnp.dot(h.astype(jnp.bfloat16), w2_ref[...],
                           preferred_element_type=jnp.float32) + b2_ref[...]

    return pl.pallas_call(
        kernel,
        out_shape=jax.ShapeDtypeStruct((N, 1, Cout), jnp.float32),
        grid=(N,),
        in_specs=[pl.BlockSpec((1, HW, C), lambda n: (n, 0, 0)),
                  pl.BlockSpec(w["last_conv"]["w"].shape, lambda n: (0, 0)),
                  pl.BlockSpec(w["last_conv"]["shift"].shape, lambda n: (0, 0)),
                  pl.BlockSpec(w["fc1_w"].shape, lambda n: (0, 0)),
                  pl.BlockSpec(w["fc1_b"].shape, lambda n: (0, 0)),
                  pl.BlockSpec(w["fc2_w"].shape, lambda n: (0, 0)),
                  pl.BlockSpec(w["fc2_b"].shape, lambda n: (0, 0))],
        out_specs=pl.BlockSpec((1, 1, Cout), lambda n: (n, 0, 0)),
        compiler_params=_cparams(("parallel",)),
    )(x3, w["last_conv"]["w"], w["last_conv"]["shift"],
      w["fc1_w"], w["fc1_b"], w["fc2_w"], w["fc2_b"])


# ----------------------------------------------------------------------------
# model glue
# ----------------------------------------------------------------------------
def mobilenet_v3_forward(x_nchw, params):
    # PyTorch NCHW -> NHWC; inter-kernel activations are bf16, 128-lane padded.
    x = jnp.transpose(x_nchw, (0, 2, 3, 1)).astype(jnp.float32)
    x = stem_conv(x, params["stem"])
    for cnf, bp in zip(INVERTED_RESIDUAL_SETTING, params["blocks"]):
        x = inverted_residual(x, bp, cnf)
    N, H, W, C = x.shape
    logits = head(x.reshape(N, H * W, C), params)
    return logits[:, 0, :NUM_CLASSES]


# ----------------------------------------------------------------------------
# deterministic parameter initialization (matches module __init__ shapes/rules;
# BN scale folded into the conv weights, all tensors zero-padded to 128 lanes)
# ----------------------------------------------------------------------------
def _bn_fold(cout):
    # eval-mode BN (gamma=1, beta=0, running_mean=0, running_var=1)
    scale = jnp.full((cout,), 1.0 / math.sqrt(1.0 + BN_EPS), jnp.float32)
    shift = jnp.zeros((cout,), jnp.float32)
    return scale, shift


def _init_stem(key, K, cin, cout):
    cout_p = _rup(cout)
    kdim = K * K * cin
    kdim_p = ((kdim + 31) // 32) * 32          # tiny contraction padded to 32
    std = math.sqrt(2.0 / (cout * K * K))      # kaiming_normal fan_out
    w = jax.random.normal(key, (K, K, cin, cout), jnp.float32) * std
    scale, shift = _bn_fold(cout)
    w = (w * scale).reshape(kdim, cout)        # (kh, kw, ci) row order = im2col
    w = jnp.pad(w, ((0, kdim_p - kdim), (0, cout_p - cout)))
    return {"w": w.astype(jnp.bfloat16),
            "shift": jnp.pad(shift, (0, cout_p - cout)).reshape(1, cout_p)}


def _init_pw_conv_bn(key, cin, cout):
    cin_p, cout_p = _rup(cin), _rup(cout)
    std = math.sqrt(2.0 / cout)                # fan_out, K=1
    w = jax.random.normal(key, (cin, cout), jnp.float32) * std
    scale, shift = _bn_fold(cout)
    w = jnp.pad(w * scale, ((0, cin_p - cin), (0, cout_p - cout)))
    return {"w": w.astype(jnp.bfloat16),
            "shift": jnp.pad(shift, (0, cout_p - cout)).reshape(1, cout_p)}


def _init_dw_bn(key, K, c):
    c_p = _rup(c)
    std = math.sqrt(2.0 / (K * K))             # depthwise fan_out
    w = jax.random.normal(key, (K * K, c), jnp.float32) * std
    scale, shift = _bn_fold(c)
    w = jnp.pad(w * scale, ((0, 0), (0, c_p - c)))        # keep f32 (VPU MAC)
    return {"w": w, "shift": jnp.pad(shift, (0, c_p - c)).reshape(1, c_p)}


def _init_se(key, c):
    sq = _make_divisible(c // 4, 8)
    c_p, sq_p = _rup(c), _rup(sq)
    k1, k2 = jax.random.split(key)
    w1 = jax.random.normal(k1, (c, sq), jnp.float32) * math.sqrt(2.0 / sq)
    w2 = jax.random.normal(k2, (sq, c), jnp.float32) * math.sqrt(2.0 / c)
    return {"w1": jnp.pad(w1, ((0, c_p - c), (0, sq_p - sq))).astype(jnp.bfloat16),
            "b1": jnp.zeros((1, sq_p), jnp.float32),
            "w2": jnp.pad(w2, ((0, sq_p - sq), (0, c_p - c))).astype(jnp.bfloat16),
            "b2": jnp.zeros((1, c_p), jnp.float32)}


def init_params(key):
    keys = iter(jax.random.split(key, 64))
    params = {}
    first_c = INVERTED_RESIDUAL_SETTING[0][0]
    params["stem"] = _init_stem(next(keys), 3, 3, first_c)
    blocks = []
    for (in_c, k, exp_c, out_c, use_se, use_hs, stride) in INVERTED_RESIDUAL_SETTING:
        bp = {}
        if exp_c != in_c:
            bp["expand"] = _init_pw_conv_bn(next(keys), in_c, exp_c)
        bp["dw"] = _init_dw_bn(next(keys), k, exp_c)
        if use_se:
            bp["se"] = _init_se(next(keys), exp_c)
        bp["project"] = _init_pw_conv_bn(next(keys), exp_c, out_c)
        blocks.append(bp)
    params["blocks"] = blocks
    last_in = INVERTED_RESIDUAL_SETTING[-1][3]
    last_out = 6 * last_in
    params["last_conv"] = _init_pw_conv_bn(next(keys), last_in, last_out)
    lo_p, lc_p, nc_p = _rup(last_out), _rup(LAST_CHANNEL), _rup(NUM_CLASSES)
    fc1 = jax.random.normal(next(keys), (last_out, LAST_CHANNEL), jnp.float32) * 0.01
    fc2 = jax.random.normal(next(keys), (LAST_CHANNEL, NUM_CLASSES), jnp.float32) * 0.01
    params["fc1_w"] = jnp.pad(fc1, ((0, lo_p - last_out),
                                    (0, lc_p - LAST_CHANNEL))).astype(jnp.bfloat16)
    params["fc1_b"] = jnp.zeros((1, lc_p), jnp.float32)
    params["fc2_w"] = jnp.pad(fc2, ((0, lc_p - LAST_CHANNEL),
                                    (0, nc_p - NUM_CLASSES))).astype(jnp.bfloat16)
    params["fc2_b"] = jnp.zeros((1, nc_p), jnp.float32)
    return params


if __name__ == "__main__":
    key = jax.random.PRNGKey(0)
    pkey, xkey = jax.random.split(key)
    params = init_params(pkey)
    x = jax.random.normal(xkey, (2, 3, 32, 32), jnp.float32)   # NCHW, like PyTorch
    out = jax.jit(mobilenet_v3_forward)(x, params)
    out = jax.block_until_ready(out)
    assert out.shape == (2, NUM_CLASSES), out.shape
    print("KERNEL_OK")
</pallas_src>

<mosaic_0001>
module attributes {stable_mosaic.version = 11 : i64} {
  func.func @kernel(%arg0: i32, %arg1: memref<1x256x32xbf16, #tpu.memory_space<vmem>>, %arg2: memref<32x128xbf16, #tpu.memory_space<vmem>>, %arg3: memref<1x128xf32, #tpu.memory_space<vmem>>, %arg4: memref<1x256x128xbf16, #tpu.memory_space<vmem>>) attributes {dimension_semantics = [#tpu.dimension_semantics<parallel>], iteration_bounds = array<i64: 2>, scalar_prefetch = 0 : i64, scratch_operands = 0 : i64, tpu.core_type = #tpu.core_type<tc>, window_params = [{transform_indices = @transform_0, window_bounds = array<i64: 1, 256, 32>}, {pipeline_mode = #tpu.pipeline_mode<synchronous>, transform_indices = @transform_1, window_bounds = array<i64: 32, 128>}, {pipeline_mode = #tpu.pipeline_mode<synchronous>, transform_indices = @transform_2, window_bounds = array<i64: 1, 128>}, {transform_indices = @transform_3, window_bounds = array<i64: 1, 256, 128>}]} {
    %c0 = arith.constant 0 : index
    %c0_0 = arith.constant 0 : index
    %c0_1 = arith.constant 0 : index
    %0 = vector.load %arg1[%c0, %c0_0, %c0_1] : memref<1x256x32xbf16, #tpu.memory_space<vmem>>, vector<1x256x32xbf16>
    %1 = vector.shape_cast %0 : vector<1x256x32xbf16> to vector<256x32xbf16>
    %c0_2 = arith.constant 0 : index
    %c0_3 = arith.constant 0 : index
    %2 = vector.load %arg2[%c0_2, %c0_3] : memref<32x128xbf16, #tpu.memory_space<vmem>>, vector<32x128xbf16>
    %cst = arith.constant dense<0.000000e+00> : vector<256x128xf32>
    %3 = tpu.matmul %1, %2, %cst {dimension_numbers = #tpu.dot_dimension_numbers<[1], [0], [0], [1], [0, 0, 1, 1], [], []>} : vector<256x32xbf16>, vector<32x128xbf16>, vector<256x128xf32> -> vector<256x128xf32>
    %c0_4 = arith.constant 0 : index
    %c0_5 = arith.constant 0 : index
    %4 = vector.load %arg3[%c0_4, %c0_5] : memref<1x128xf32, #tpu.memory_space<vmem>>, vector<1x128xf32>
    %5 = vector.broadcast %4 : vector<1x128xf32> to vector<256x128xf32>
    %6 = arith.addf %3, %5 : vector<256x128xf32>
    %cst_6 = arith.constant 3.000000e+00 : f32
    %7 = vector.broadcast %cst_6 : f32 to vector<256x128xf32>
    %8 = arith.addf %6, %7 : vector<256x128xf32>
    %cst_7 = arith.constant 0.000000e+00 : f32
    %cst_8 = arith.constant 6.000000e+00 : f32
    %9 = vector.broadcast %cst_7 : f32 to vector<256x128xf32>
    %10 = arith.maximumf %9, %8 : vector<256x128xf32>
    %11 = vector.broadcast %cst_8 : f32 to vector<256x128xf32>
    %12 = arith.minimumf %11, %10 : vector<256x128xf32>
    %13 = arith.mulf %6, %12 : vector<256x128xf32>
    %cst_9 = arith.constant 0.166666672 : f32
    %14 = vector.broadcast %cst_9 : f32 to vector<256x128xf32>
    %15 = arith.mulf %13, %14 : vector<256x128xf32>
    %16 = arith.truncf %15 : vector<256x128xf32> to vector<256x128xbf16>
    %c0_10 = arith.constant 0 : index
    %c0_11 = arith.constant 0 : index
    %c0_12 = arith.constant 0 : index
    %17 = vector.load %arg4[%c0_10, %c0_11, %c0_12] : memref<1x256x128xbf16, #tpu.memory_space<vmem>>, vector<1x256x128xbf16>
    %18 = vector.shape_cast %17 : vector<1x256x128xbf16> to vector<256x128xbf16>
    %19 = vector.shape_cast %16 : vector<256x128xbf16> to vector<1x256x128xbf16>
    tpu.vector_store %arg4[%c0_10, %c0_11, %c0_12], %19 {strides = array<i32>} : memref<1x256x128xbf16, #tpu.memory_space<vmem>>, vector<1x256x128xbf16>,
    return
  }
  func.func @transform_0(%arg0: i32) -> (i32, i32, i32) {
    %c0_i32 = arith.constant 0 : i32
    %c0_i32_0 = arith.constant 0 : i32
    %c0_i32_1 = arith.constant 0 : i32
    return %arg0, %c0_i32, %c0_i32_0 : i32, i32, i32
  }
  func.func @transform_1(%arg0: i32) -> (i32, i32) {
    %c0_i32 = arith.constant 0 : i32
    %c0_i32_0 = arith.constant 0 : i32
    %c0_i32_1 = arith.constant 0 : i32
    return %c0_i32, %c0_i32_0 : i32, i32
  }
  func.func @transform_2(%arg0: i32) -> (i32, i32) {
    %c0_i32 = arith.constant 0 : i32
    %c0_i32_0 = arith.constant 0 : i32
    %c0_i32_1 = arith.constant 0 : i32
    return %c0_i32, %c0_i32_0 : i32, i32
  }
  func.func @transform_3(%arg0: i32) -> (i32, i32, i32) {
    %c0_i32 = arith.constant 0 : i32
    %c0_i32_0 = arith.constant 0 : i32
    %c0_i32_1 = arith.constant 0 : i32
    return %arg0, %c0_i32, %c0_i32_0 : i32, i32, i32
  }
}

module attributes {stable_mosaic.version = 11 : i64} {
  func.func @kernel(%arg0: i32, %arg1: memref<1x9x9x128xbf16, #tpu.memory_space<vmem>>, %arg2: memref<1x9x9x128xbf16, #tpu.memory_space<vmem>>, %arg3: memref<1x9x9x128xbf16, #tpu.memory_space<vmem>>, %arg4: memref<1x9x9x128xbf16, #tpu.memory_space<vmem>>, %arg5: memref<9x128xf32, #tpu.memory_space<vmem>>, %arg6: memref<1x128xf32, #tpu.memory_space<vmem>>, %arg7: memref<128x128xbf16, #tpu.memory_space<vmem>>, %arg8: memref<1x128xf32, #tpu.memory_space<vmem>>, %arg9: memref<128x128xbf16, #tpu.memory_space<vmem>>, %arg10: memref<1x128xf32, #tpu.memory_space<vmem>>, %arg11: memref<128x128xbf16, #tpu.memory_space<vmem>>, %arg12: memref<1x128xf32, #tpu.memory_space<vmem>>, %arg13: memref<1x8x8x128xbf16, #tpu.memory_space<vmem>>) attributes {dimension_semantics = [#tpu.dimension_semantics<parallel>], iteration_bounds = array<i64: 2>, scalar_prefetch = 0 : i64, scratch_operands = 0 : i64, tpu.core_type = #tpu.core_type<tc>, window_params = [{transform_indices = @transform_0, window_bounds = array<i64: 1, 9, 9, 128>}, {transform_indices = @transform_1, window_bounds = array<i64: 1, 9, 9, 128>}, {transform_indices = @transform_2, window_bounds = array<i64: 1, 9, 9, 128>}, {transform_indices = @transform_3, window_bounds = array<i64: 1, 9, 9, 128>}, {pipeline_mode = #tpu.pipeline_mode<synchronous>, transform_indices = @transform_4, window_bounds = array<i64: 9, 128>}, {pipeline_mode = #tpu.pipeline_mode<synchronous>, transform_indices = @transform_5, window_bounds = array<i64: 1, 128>}, {pipeline_mode = #tpu.pipeline_mode<synchronous>, transform_indices = @transform_6, window_bounds = array<i64: 128, 128>}, {pipeline_mode = #tpu.pipeline_mode<synchronous>, transform_indices = @transform_7, window_bounds = array<i64: 1, 128>}, {pipeline_mode = #tpu.pipeline_mode<synchronous>, transform_indices = @transform_8, window_bounds = array<i64: 128, 128>}, {pipeline_mode = #tpu.pipeline_mode<synchronous>, transform_indices = @transform_9, window_bounds = array<i64: 1, 128>}, {pipeline_mode = #tpu.pipeline_mode<synchronous>, transform_indices = @transform_10, window_bounds = array<i64: 128, 128>}, {pipeline_mode = #tpu.pipeline_mode<synchronous>, transform_indices = @transform_11, window_bounds = array<i64: 1, 128>}, {transform_indices = @transform_12, window_bounds = array<i64: 1, 8, 8, 128>}]} {
    %c0 = arith.constant 0 : index
    %c0_0 = arith.constant 0 : index
    %0 = vector.load %arg5[%c0, %c0_0] : memref<9x128xf32, #tpu.memory_space<vmem>>, vector<9x128xf32>
    %cst = arith.constant 0.000000e+00 : f32
    %1 = vector.broadcast %cst : f32 to vector<8x8x128xf32>
    %c0_1 = arith.constant 0 : index
    %c0_2 = arith.constant 0 : index
    %c0_3 = arith.constant 0 : index
    %c0_4 = arith.constant 0 : index
    %2 = vector.load %arg1[%c0_1, %c0_2, %c0_3, %c0_4] : memref<1x9x9x128xbf16, #tpu.memory_space<vmem>>, vector<1x8x8x128xbf16>
    %3 = vector.shape_cast %2 : vector<1x8x8x128xbf16> to vector<8x8x128xbf16>
    %4 = arith.extf %3 : vector<8x8x128xbf16> to vector<8x8x128xf32>
    %5 = vector.extract_strided_slice %0 {offsets = [0, 0], sizes = [1, 128], strides = [1, 1]} : vector<9x128xf32> to vector<1x128xf32>
    %6 = vector.shape_cast %5 : vector<1x128xf32> to vector<1x1x128xf32>
    %7 = vector.broadcast %6 : vector<1x1x128xf32> to vector<8x8x128xf32>
    %8 = arith.mulf %4, %7 : vector<8x8x128xf32>
    %9 = arith.addf %1, %8 : vector<8x8x128xf32>
    %c0_5 = arith.constant 0 : index
    %c0_6 = arith.constant 0 : index
    %c0_7 = arith.constant 0 : index
    %c0_8 = arith.constant 0 : index
    %10 = vector.load %arg2[%c0_5, %c0_6, %c0_7, %c0_8] : memref<1x9x9x128xbf16, #tpu.memory_space<vmem>>, vector<1x8x8x128xbf16>
    %11 = vector.shape_cast %10 : vector<1x8x8x128xbf16> to vector<8x8x128xbf16>
    %12 = arith.extf %11 : vector<8x8x128xbf16> to vector<8x8x128xf32>
    %13 = vector.extract_strided_slice %0 {offsets = [1, 0], sizes = [1, 128], strides = [1, 1]} : vector<9x128xf32> to vector<1x128xf32>
    %14 = vector.shape_cast %13 : vector<1x128xf32> to vector<1x1x128xf32>
    %15 = vector.broadcast %14 : vector<1x1x128xf32> to vector<8x8x128xf32>
    %16 = arith.mulf %12, %15 : vector<8x8x128xf32>
    %17 = arith.addf %9, %16 : vector<8x8x128xf32>
    %c0_9 = arith.constant 0 : index
    %c0_10 = arith.constant 0 : index
    %c1 = arith.constant 1 : index
    %c0_11 = arith.constant 0 : index
    %18 = vector.load %arg1[%c0_9, %c0_10, %c1, %c0_11] : memref<1x9x9x128xbf16, #tpu.memory_space<vmem>>, vector<1x8x8x128xbf16>
    %19 = vector.shape_cast %18 : vector<1x8x8x128xbf16> to vector<8x8x128xbf16>
    %20 = arith.extf %19 : vector<8x8x128xbf16> to vector<8x8x128xf32>
    %21 = vector.extract_strided_slice %0 {offsets = [2, 0], sizes = [1, 128], strides = [1, 1]} : vector<9x128xf32> to vector<1x128xf32>
    %22 = vector.shape_cast %21 : vector<1x128xf32> to vector<1x1x128xf32>
    %23 = vector.broadcast %22 : vector<1x1x128xf32> to vector<8x8x128xf32>
    %24 = arith.mulf %20, %23 : vector<8x8x128xf32>
    %25 = arith.addf %17, %24 : vector<8x8x128xf32>
    %c0_12 = arith.constant 0 : index
    %c0_13 = arith.constant 0 : index
    %c0_14 = arith.constant 0 : index
    %c0_15 = arith.constant 0 : index
    %26 = vector.load %arg3[%c0_12, %c0_13, %c0_14, %c0_15] : memref<1x9x9x128xbf16, #tpu.memory_space<vmem>>, vector<1x8x8x128xbf16>
    %27 = vector.shape_cast %26 : vector<1x8x8x128xbf16> to vector<8x8x128xbf16>
    %28 = arith.extf %27 : vector<8x8x128xbf16> to vector<8x8x128xf32>
    %29 = vector.extract_strided_slice %0 {offsets = [3, 0], sizes = [1, 128], strides = [1, 1]} : vector<9x128xf32> to vector<1x128xf32>
    %30 = vector.shape_cast %29 : vector<1x128xf32> to vector<1x1x128xf32>
    %31 = vector.broadcast %30 : vector<1x1x128xf32> to vector<8x8x128xf32>
    %32 = arith.mulf %28, %31 : vector<8x8x128xf32>
    %33 = arith.addf %25, %32 : vector<8x8x128xf32>
    %c0_16 = arith.constant 0 : index
    %c0_17 = arith.constant 0 : index
    %c0_18 = arith.constant 0 : index
    %c0_19 = arith.constant 0 : index
    %34 = vector.load %arg4[%c0_16, %c0_17, %c0_18, %c0_19] : memref<1x9x9x128xbf16, #tpu.memory_space<vmem>>, vector<1x8x8x128xbf16>
    %35 = vector.shape_cast %34 : vector<1x8x8x128xbf16> to vector<8x8x128xbf16>
    %36 = arith.extf %35 : vector<8x8x128xbf16> to vector<8x8x128xf32>
    %37 = vector.extract_strided_slice %0 {offsets = [4, 0], sizes = [1, 128], strides = [1, 1]} : vector<9x128xf32> to vector<1x128xf32>
    %38 = vector.shape_cast %37 : vector<1x128xf32> to vector<1x1x128xf32>
    %39 = vector.broadcast %38 : vector<1x1x128xf32> to vector<8x8x128xf32>
    %40 = arith.mulf %36, %39 : vector<8x8x128xf32>
    %41 = arith.addf %33, %40 : vector<8x8x128xf32>
    %c0_20 = arith.constant 0 : index
    %c0_21 = arith.constant 0 : index
    %c1_22 = arith.constant 1 : index
    %c0_23 = arith.constant 0 : index
    %42 = vector.load %arg3[%c0_20, %c0_21, %c1_22, %c0_23] : memref<1x9x9x128xbf16, #tpu.memory_space<vmem>>, vector<1x8x8x128xbf16>
    %43 = vector.shape_cast %42 : vector<1x8x8x128xbf16> to vector<8x8x128xbf16>
    %44 = arith.extf %43 : vector<8x8x128xbf16> to vector<8x8x128xf32>
    %45 = vector.extract_strided_slice %0 {offsets = [5, 0], sizes = [1, 128], strides = [1, 1]} : vector<9x128xf32> to vector<1x128xf32>
    %46 = vector.shape_cast %45 : vector<1x128xf32> to vector<1x1x128xf32>
    %47 = vector.broadcast %46 : vector<1x1x128xf32> to vector<8x8x128xf32>
    %48 = arith.mulf %44, %47 : vector<8x8x128xf32>
    %49 = arith.addf %41, %48 : vector<8x8x128xf32>
    %c0_24 = arith.constant 0 : index
    %c1_25 = arith.constant 1 : index
    %c0_26 = arith.constant 0 : index
    %c0_27 = arith.constant 0 : index
    %50 = vector.load %arg1[%c0_24, %c1_25, %c0_26, %c0_27] : memref<1x9x9x128xbf16, #tpu.memory_space<vmem>>, vector<1x8x8x128xbf16>
    %51 = vector.shape_cast %50 : vector<1x8x8x128xbf16> to vector<8x8x128xbf16>
    %52 = arith.extf %51 : vector<8x8x128xbf16> to vector<8x8x128xf32>
    %53 = vector.extract_strided_slice %0 {offsets = [6, 0], sizes = [1, 128], strides = [1, 1]} : vector<9x128xf32> to vector<1x128xf32>
    %54 = vector.shape_cast %53 : vector<1x128xf32> to vector<1x1x128xf32>
    %55 = vector.broadcast %54 : vector<1x1x128xf32> to vector<8x8x128xf32>
    %56 = arith.mulf %52, %55 : vector<8x8x128xf32>
    %57 = arith.addf %49, %56 : vector<8x8x128xf32>
    %c0_28 = arith.constant 0 : index
    %c1_29 = arith.constant 1 : index
    %c0_30 = arith.constant 0 : index
    %c0_31 = arith.constant 0 : index
    %58 = vector.load %arg2[%c0_28, %c1_29, %c0_30, %c0_31] : memref<1x9x9x128xbf16, #tpu.memory_space<vmem>>, vector<1x8x8x128xbf16>
    %59 = vector.shape_cast %58 : vector<1x8x8x128xbf16> to vector<8x8x128xbf16>
    %60 = arith.extf %59 : vector<8x8x128xbf16> to vector<8x8x128xf32>
    %61 = vector.extract_strided_slice %0 {offsets = [7, 0], sizes = [1, 128], strides = [1, 1]} : vector<9x128xf32> to vector<1x128xf32>
    %62 = vector.shape_cast %61 : vector<1x128xf32> to vector<1x1x128xf32>
    %63 = vector.broadcast %62 : vector<1x1x128xf32> to vector<8x8x128xf32>
    %64 = arith.mulf %60, %63 : vector<8x8x128xf32>
    %65 = arith.addf %57, %64 : vector<8x8x128xf32>
    %c0_32 = arith.constant 0 : index
    %c1_33 = arith.constant 1 : index
    %c1_34 = arith.constant 1 : index
    %c0_35 = arith.constant 0 : index
    %66 = vector.load %arg1[%c0_32, %c1_33, %c1_34, %c0_35] : memref<1x9x9x128xbf16, #tpu.memory_space<vmem>>, vector<1x8x8x128xbf16>
    %67 = vector.shape_cast %66 : vector<1x8x8x128xbf16> to vector<8x8x128xbf16>
    %68 = arith.extf %67 : vector<8x8x128xbf16> to vector<8x8x128xf32>
    %69 = vector.extract_strided_slice %0 {offsets = [8, 0], sizes = [1, 128], strides = [1, 1]} : vector<9x128xf32> to vector<1x128xf32>
    %70 = vector.shape_cast %69 : vector<1x128xf32> to vector<1x1x128xf32>
    %71 = vector.broadcast %70 : vector<1x1x128xf32> to vector<8x8x128xf32>
    %72 = arith.mulf %68, %71 : vector<8x8x128xf32>
    %73 = arith.addf %65, %72 : vector<8x8x128xf32>
    %c0_36 = arith.constant 0 : index
    %c0_37 = arith.constant 0 : index
    %74 = vector.load %arg6[%c0_36, %c0_37] : memref<1x128xf32, #tpu.memory_space<vmem>>, vector<1x128xf32>
    %75 = vector.shape_cast %74 : vector<1x128xf32> to vector<1x1x128xf32>
    %76 = vector.broadcast %75 : vector<1x1x128xf32> to vector<8x8x128xf32>
    %77 = arith.addf %73, %76 : vector<8x8x128xf32>
    %cst_38 = arith.constant 0.000000e+00 : f32
    %78 = vector.broadcast %cst_38 : f32 to vector<8x8x128xf32>
    %79 = arith.maximumf %77, %78 : vector<8x8x128xf32>
    %cst_39 = arith.constant dense<0.000000e+00> : vector<128xf32>
    %80 = vector.multi_reduction <add>, %79, %cst_39 [0, 1] : vector<8x8x128xf32> to vector<128xf32>
    %81 = vector.shape_cast %80 : vector<128xf32> to vector<1x1x128xf32>
    %cst_40 = arith.constant 6.400000e+01 : f32
    %82 = vector.broadcast %cst_40 : f32 to vector<1x1x128xf32>
    %83 = arith.divf %81, %82 : vector<1x1x128xf32>
    %84 = vector.shape_cast %83 : vector<1x1x128xf32> to vector<1x128xf32>
    %85 = arith.truncf %84 : vector<1x128xf32> to vector<1x128xbf16>
    %c0_41 = arith.constant 0 : index
    %c0_42 = arith.constant 0 : index
    %86 = vector.load %arg7[%c0_41, %c0_42] : memref<128x128xbf16, #tpu.memory_space<vmem>>, vector<128x128xbf16>
    %cst_43 = arith.constant dense<0.000000e+00> : vector<1x128xf32>
    %87 = tpu.matmul %85, %86, %cst_43 {dimension_numbers = #tpu.dot_dimension_numbers<[1], [0], [0], [1], [0, 0, 1, 1], [], []>} : vector<1x128xbf16>, vector<128x128xbf16>, vector<1x128xf32> -> vector<1x128xf32>
    %c0_44 = arith.constant 0 : index
    %c0_45 = arith.constant 0 : index
    %88 = vector.load %arg8[%c0_44, %c0_45] : memref<1x128xf32, #tpu.memory_space<vmem>>, vector<1x128xf32>
    %89 = arith.addf %87, %88 : vector<1x128xf32>
    %cst_46 = arith.constant 0.000000e+00 : f32
    %90 = vector.broadcast %cst_46 : f32 to vector<1x128xf32>
    %91 = arith.maximumf %89, %90 : vector<1x128xf32>
    %92 = arith.truncf %91 : vector<1x128xf32> to vector<1x128xbf16>
    %c0_47 = arith.constant 0 : index
    %c0_48 = arith.constant 0 : index
    %93 = vector.load %arg9[%c0_47, %c0_48] : memref<128x128xbf16, #tpu.memory_space<vmem>>, vector<128x128xbf16>
    %cst_49 = arith.constant dense<0.000000e+00> : vector<1x128xf32>
    %94 = tpu.matmul %92, %93, %cst_49 {dimension_numbers = #tpu.dot_dimension_numbers<[1], [0], [0], [1], [0, 0, 1, 1], [], []>} : vector<1x128xbf16>, vector<128x128xbf16>, vector<1x128xf32> -> vector<1x128xf32>
    %c0_50 = arith.constant 0 : index
    %c0_51 = arith.constant 0 : index
    %95 = vector.load %arg10[%c0_50, %c0_51] : memref<1x128xf32, #tpu.memory_space<vmem>>, vector<1x128xf32>
    %96 = arith.addf %94, %95 : vector<1x128xf32>
    %cst_52 = arith.constant 0.166666672 : f32
    %97 = vector.broadcast %cst_52 : f32 to vector<1x128xf32>
    %98 = arith.mulf %96, %97 : vector<1x128xf32>
    %cst_53 = arith.constant 5.000000e-01 : f32
    %99 = vector.broadcast %cst_53 : f32 to vector<1x128xf32>
    %100 = arith.addf %98, %99 : vector<1x128xf32>
    %cst_54 = arith.constant 0.000000e+00 : f32
    %cst_55 = arith.constant 1.000000e+00 : f32
    %101 = vector.broadcast %cst_54 : f32 to vector<1x128xf32>
    %102 = arith.maximumf %101, %100 : vector<1x128xf32>
    %103 = vector.broadcast %cst_55 : f32 to vector<1x128xf32>
    %104 = arith.minimumf %103, %102 : vector<1x128xf32>
    %105 = vector.shape_cast %104 : vector<1x128xf32> to vector<1x1x128xf32>
    %106 = vector.broadcast %105 : vector<1x1x128xf32> to vector<8x8x128xf32>
    %107 = arith.mulf %79, %106 : vector<8x8x128xf32>
    %c0_56 = arith.constant 0 : index
    %c0_57 = arith.constant 0 : index
    %108 = vector.load %arg11[%c0_56, %c0_57] : memref<128x128xbf16, #tpu.memory_space<vmem>>, vector<128x128xbf16>
    %c0_58 = arith.constant 0 : index
    %c0_59 = arith.constant 0 : index
    %109 = vector.load %arg12[%c0_58, %c0_59] : memref<1x128xf32, #tpu.memory_space<vmem>>, vector<1x128xf32>
    %110 = vector.shape_cast %107 : vector<8x8x128xf32> to vector<64x128xf32>
    %111 = arith.truncf %110 : vector<64x128xf32> to vector<64x128xbf16>
    %cst_60 = arith.constant dense<0.000000e+00> : vector<64x128xf32>
    %112 = tpu.matmul %111, %108, %cst_60 {dimension_numbers = #tpu.dot_dimension_numbers<[1], [0], [0], [1], [0, 0, 1, 1], [], []>} : vector<64x128xbf16>, vector<128x128xbf16>, vector<64x128xf32> -> vector<64x128xf32>
    %113 = vector.broadcast %109 : vector<1x128xf32> to vector<64x128xf32>
    %114 = arith.addf %112, %113 : vector<64x128xf32>
    %115 = vector.shape_cast %114 : vector<64x128xf32> to vector<8x8x128xf32>
    %116 = arith.truncf %115 : vector<8x8x128xf32> to vector<8x8x128xbf16>
    %c0_61 = arith.constant 0 : index
    %c0_62 = arith.constant 0 : index
    %c0_63 = arith.constant 0 : index
    %c0_64 = arith.constant 0 : index
    %117 = vector.load %arg13[%c0_61, %c0_62, %c0_63, %c0_64] : memref<1x8x8x128xbf16, #tpu.memory_space<vmem>>, vector<1x8x8x128xbf16>
    %118 = vector.shape_cast %117 : vector<1x8x8x128xbf16> to vector<8x8x128xbf16>
    %119 = vector.shape_cast %116 : vector<8x8x128xbf16> to vector<1x8x8x128xbf16>
    tpu.vector_store %arg13[%c0_61, %c0_62, %c0_63, %c0_64], %119 {strides = array<i32>} : memref<1x8x8x128xbf16, #tpu.memory_space<vmem>>, vector<1x8x8x128xbf16>,
    return
  }
  func.func @transform_0(%arg0: i32) -> (i32, i32, i32, i32) {
    %c0_i32 = arith.constant 0 : i32
    %c0_i32_0 = arith.constant 0 : i32
    %c0_i32_1 = arith.constant 0 : i32
    %c0_i32_2 = arith.constant 0 : i32
    return %arg0, %c0_i32, %c0_i32_0, %c0_i32_1 : i32, i32, i32, i32
  }
  func.func @transform_1(%arg0: i32) -> (i32, i32, i32, i32) {
    %c0_i32 = arith.constant 0 : i32
    %c0_i32_0 = arith.constant 0 : i32
    %c0_i32_1 = arith.constant 0 : i32
    %c0_i32_2 = arith.constant 0 : i32
    return %arg0, %c0_i32, %c0_i32_0, %c0_i32_1 : i32, i32, i32, i32
  }
  func.func @transform_2(%arg0: i32) -> (i32, i32, i32, i32) {
    %c0_i32 = arith.constant 0 : i32
    %c0_i32_0 = arith.constant 0 : i32
    %c0_i32_1 = arith.constant 0 : i32
    %c0_i32_2 = arith.constant 0 : i32
    return %arg0, %c0_i32, %c0_i32_0, %c0_i32_1 : i32, i32, i32, i32
  }
  func.func @transform_3(%arg0: i32) -> (i32, i32, i32, i32) {
    %c0_i32 = arith.constant 0 : i32
    %c0_i32_0 = arith.constant 0 : i32
    %c0_i32_1 = arith.constant 0 : i32
    %c0_i32_2 = arith.constant 0 : i32
    return %arg0, %c0_i32, %c0_i32_0, %c0_i32_1 : i32, i32, i32, i32
  }
  func.func @transform_4(%arg0: i32) -> (i32, i32) {
    %c0_i32 = arith.constant 0 : i32
    %c0_i32_0 = arith.constant 0 : i32
    %c0_i32_1 = arith.constant 0 : i32
    return %c0_i32, %c0_i32_0 : i32, i32
  }
  func.func @transform_5(%arg0: i32) -> (i32, i32) {
    %c0_i32 = arith.constant 0 : i32
    %c0_i32_0 = arith.constant 0 : i32
    %c0_i32_1 = arith.constant 0 : i32
    return %c0_i32, %c0_i32_0 : i32, i32
  }
  func.func @transform_6(%arg0: i32) -> (i32, i32) {
    %c0_i32 = arith.constant 0 : i32
    %c0_i32_0 = arith.constant 0 : i32
    %c0_i32_1 = arith.constant 0 : i32
    return %c0_i32, %c0_i32_0 : i32, i32
  }
  func.func @transform_7(%arg0: i32) -> (i32, i32) {
    %c0_i32 = arith.constant 0 : i32
    %c0_i32_0 = arith.constant 0 : i32
    %c0_i32_1 = arith.constant 0 : i32
    return %c0_i32, %c0_i32_0 : i32, i32
  }
  func.func @transform_8(%arg0: i32) -> (i32, i32) {
    %c0_i32 = arith.constant 0 : i32
    %c0_i32_0 = arith.constant 0 : i32
    %c0_i32_1 = arith.constant 0 : i32
    return %c0_i32, %c0_i32_0 : i32, i32
  }
  func.func @transform_9(%arg0: i32) -> (i32, i32) {
    %c0_i32 = arith.constant 0 : i32
    %c0_i32_0 = arith.constant 0 : i32
    %c0_i32_1 = arith.constant 0 : i32
    return %c0_i32, %c0_i32_0 : i32, i32
  }
  func.func @transform_10(%arg0: i32) -> (i32, i32) {
    %c0_i32 = arith.constant 0 : i32
    %c0_i32_0 = arith.constant 0 : i32
    %c0_i32_1 = arith.constant 0 : i32
    return %c0_i32, %c0_i32_0 : i32, i32
  }
  func.func @transform_11(%arg0: i32) -> (i32, i32) {
    %c0_i32 = arith.constant 0 : i32
    %c0_i32_0 = arith.constant 0 : i32
    %c0_i32_1 = arith.constant 0 : i32
    return %c0_i32, %c0_i32_0 : i32, i32
  }
  func.func @transform_12(%arg0: i32) -> (i32, i32, i32, i32) {
    %c0_i32 = arith.constant 0 : i32
    %c0_i32_0 = arith.constant 0 : i32
    %c0_i32_1 = arith.constant 0 : i32
    %c0_i32_2 = arith.constant 0 : i32
    return %arg0, %c0_i32, %c0_i32_0, %c0_i32_1 : i32, i32, i32, i32
  }
}

module attributes {stable_mosaic.version = 11 : i64} {
  func.func @kernel(%arg0: i32, %arg1: memref<1x5x5x128xbf16, #tpu.memory_space<vmem>>, %arg2: memref<1x5x5x128xbf16, #tpu.memory_space<vmem>>, %arg3: memref<1x5x5x128xbf16, #tpu.memory_space<vmem>>, %arg4: memref<1x5x5x128xbf16, #tpu.memory_space<vmem>>, %arg5: memref<128x128xbf16, #tpu.memory_space<vmem>>, %arg6: memref<1x128xf32, #tpu.memory_space<vmem>>, %arg7: memref<9x128xf32, #tpu.memory_space<vmem>>, %arg8: memref<1x128xf32, #tpu.memory_space<vmem>>, %arg9: memref<128x128xbf16, #tpu.memory_space<vmem>>, %arg10: memref<1x128xf32, #tpu.memory_space<vmem>>, %arg11: memref<1x4x4x128xbf16, #tpu.memory_space<vmem>>, %arg12: memref<4x5x5x128xf32, #tpu.memory_space<vmem>>) attributes {dimension_semantics = [#tpu.dimension_semantics<parallel>], iteration_bounds = array<i64: 2>, scalar_prefetch = 0 : i64, scratch_operands = 1 : i64, tpu.core_type = #tpu.core_type<tc>, window_params = [{transform_indices = @transform_0, window_bounds = array<i64: 1, 5, 5, 128>}, {transform_indices = @transform_1, window_bounds = array<i64: 1, 5, 5, 128>}, {transform_indices = @transform_2, window_bounds = array<i64: 1, 5, 5, 128>}, {transform_indices = @transform_3, window_bounds = array<i64: 1, 5, 5, 128>}, {pipeline_mode = #tpu.pipeline_mode<synchronous>, transform_indices = @transform_4, window_bounds = array<i64: 128, 128>}, {pipeline_mode = #tpu.pipeline_mode<synchronous>, transform_indices = @transform_5, window_bounds = array<i64: 1, 128>}, {pipeline_mode = #tpu.pipeline_mode<synchronous>, transform_indices = @transform_6, window_bounds = array<i64: 9, 128>}, {pipeline_mode = #tpu.pipeline_mode<synchronous>, transform_indices = @transform_7, window_bounds = array<i64: 1, 128>}, {pipeline_mode = #tpu.pipeline_mode<synchronous>, transform_indices = @transform_8, window_bounds = array<i64: 128, 128>}, {pipeline_mode = #tpu.pipeline_mode<synchronous>, transform_indices = @transform_9, window_bounds = array<i64: 1, 128>}, {transform_indices = @transform_10, window_bounds = array<i64: 1, 4, 4, 128>}]} {
    %cst = arith.constant 0.000000e+00 : f32
    %0 = vector.broadcast %cst : f32 to vector<4x5x5x128xf32>
    %c0 = arith.constant 0 : index
    %c0_0 = arith.constant 0 : index
    %c0_1 = arith.constant 0 : index
    %c0_2 = arith.constant 0 : index
    %1 = vector.load %arg12[%c0, %c0_0, %c0_1, %c0_2] : memref<4x5x5x128xf32, #tpu.memory_space<vmem>>, vector<4x5x5x128xf32>
    tpu.vector_store %arg12[%c0, %c0_0, %c0_1, %c0_2], %0 {strides = array<i32>} : memref<4x5x5x128xf32, #tpu.memory_space<vmem>>, vector<4x5x5x128xf32>,
    %c0_3 = arith.constant 0 : index
    %c0_4 = arith.constant 0 : index
    %2 = vector.load %arg5[%c0_3, %c0_4] : memref<128x128xbf16, #tpu.memory_space<vmem>>, vector<128x128xbf16>
    %c0_5 = arith.constant 0 : index
    %c0_6 = arith.constant 0 : index
    %3 = vector.load %arg6[%c0_5, %c0_6] : memref<1x128xf32, #tpu.memory_space<vmem>>, vector<1x128xf32>
    %c0_7 = arith.constant 0 : index
    %c1 = arith.constant 1 : index
    %c1_8 = arith.constant 1 : index
    %c0_9 = arith.constant 0 : index
    %4 = vector.load %arg1[%c0_7, %c1, %c1_8, %c0_9] : memref<1x5x5x128xbf16, #tpu.memory_space<vmem>>, vector<1x1x4x128xbf16>
    %5 = vector.shape_cast %4 : vector<1x1x4x128xbf16> to vector<4x128xbf16>
    %cst_10 = arith.constant dense<0.000000e+00> : vector<4x128xf32>
    %6 = tpu.matmul %5, %2, %cst_10 {dimension_numbers = #tpu.dot_dimension_numbers<[1], [0], [0], [1], [0, 0, 1, 1], [], []>} : vector<4x128xbf16>, vector<128x128xbf16>, vector<4x128xf32> -> vector<4x128xf32>
    %7 = vector.broadcast %3 : vector<1x128xf32> to vector<4x128xf32>
    %8 = arith.addf %6, %7 : vector<4x128xf32>
    %cst_11 = arith.constant 0.000000e+00 : f32
    %9 = vector.broadcast %cst_11 : f32 to vector<4x128xf32>
    %10 = arith.maximumf %8, %9 : vector<4x128xf32>
    %c0_12 = arith.constant 0 : index
    %c1_13 = arith.constant 1 : index
    %c1_14 = arith.constant 1 : index
    %c0_15 = arith.constant 0 : index
    %11 = vector.load %arg12[%c0_12, %c1_13, %c1_14, %c0_15] : memref<4x5x5x128xf32, #tpu.memory_space<vmem>>, vector<1x1x4x128xf32>
    %12 = vector.shape_cast %11 : vector<1x1x4x128xf32> to vector<4x128xf32>
    %13 = vector.shape_cast %10 : vector<4x128xf32> to vector<1x1x4x128xf32>
    tpu.vector_store %arg12[%c0_12, %c1_13, %c1_14, %c0_15], %13 {strides = array<i32>} : memref<4x5x5x128xf32, #tpu.memory_space<vmem>>, vector<1x1x4x128xf32>,
    %c0_16 = arith.constant 0 : index
    %c2 = arith.constant 2 : index
    %c1_17 = arith.constant 1 : index
    %c0_18 = arith.constant 0 : index
    %14 = vector.load %arg1[%c0_16, %c2, %c1_17, %c0_18] : memref<1x5x5x128xbf16, #tpu.memory_space<vmem>>, vector<1x1x4x128xbf16>
    %15 = vector.shape_cast %14 : vector<1x1x4x128xbf16> to vector<4x128xbf16>
    %cst_19 = arith.constant dense<0.000000e+00> : vector<4x128xf32>
    %16 = tpu.matmul %15, %2, %cst_19 {dimension_numbers = #tpu.dot_dimension_numbers<[1], [0], [0], [1], [0, 0, 1, 1], [], []>} : vector<4x128xbf16>, vector<128x128xbf16>, vector<4x128xf32> -> vector<4x128xf32>
    %17 = vector.broadcast %3 : vector<1x128xf32> to vector<4x128xf32>
    %18 = arith.addf %16, %17 : vector<4x128xf32>
    %cst_20 = arith.constant 0.000000e+00 : f32
    %19 = vector.broadcast %cst_20 : f32 to vector<4x128xf32>
    %20 = arith.maximumf %18, %19 : vector<4x128xf32>
    %c0_21 = arith.constant 0 : index
    %c2_22 = arith.constant 2 : index
    %c1_23 = arith.constant 1 : index
    %c0_24 = arith.constant 0 : index
    %21 = vector.load %arg12[%c0_21, %c2_22, %c1_23, %c0_24] : memref<4x5x5x128xf32, #tpu.memory_space<vmem>>, vector<1x1x4x128xf32>
    %22 = vector.shape_cast %21 : vector<1x1x4x128xf32> to vector<4x128xf32>
    %23 = vector.shape_cast %20 : vector<4x128xf32> to vector<1x1x4x128xf32>
    tpu.vector_store %arg12[%c0_21, %c2_22, %c1_23, %c0_24], %23 {strides = array<i32>} : memref<4x5x5x128xf32, #tpu.memory_space<vmem>>, vector<1x1x4x128xf32>,
    %c0_25 = arith.constant 0 : index
    %c3 = arith.constant 3 : index
    %c1_26 = arith.constant 1 : index
    %c0_27 = arith.constant 0 : index
    %24 = vector.load %arg1[%c0_25, %c3, %c1_26, %c0_27] : memref<1x5x5x128xbf16, #tpu.memory_space<vmem>>, vector<1x1x4x128xbf16>
    %25 = vector.shape_cast %24 : vector<1x1x4x128xbf16> to vector<4x128xbf16>
    %cst_28 = arith.constant dense<0.000000e+00> : vector<4x128xf32>
    %26 = tpu.matmul %25, %2, %cst_28 {dimension_numbers = #tpu.dot_dimension_numbers<[1], [0], [0], [1], [0, 0, 1, 1], [], []>} : vector<4x128xbf16>, vector<128x128xbf16>, vector<4x128xf32> -> vector<4x128xf32>
    %27 = vector.broadcast %3 : vector<1x128xf32> to vector<4x128xf32>
    %28 = arith.addf %26, %27 : vector<4x128xf32>
    %cst_29 = arith.constant 0.000000e+00 : f32
    %29 = vector.broadcast %cst_29 : f32 to vector<4x128xf32>
    %30 = arith.maximumf %28, %29 : vector<4x128xf32>
    %c0_30 = arith.constant 0 : index
    %c3_31 = arith.constant 3 : index
    %c1_32 = arith.constant 1 : index
    %c0_33 = arith.constant 0 : index
    %31 = vector.load %arg12[%c0_30, %c3_31, %c1_32, %c0_33] : memref<4x5x5x128xf32, #tpu.memory_space<vmem>>, vector<1x1x4x128xf32>
    %32 = vector.shape_cast %31 : vector<1x1x4x128xf32> to vector<4x128xf32>
    %33 = vector.shape_cast %30 : vector<4x128xf32> to vector<1x1x4x128xf32>
    tpu.vector_store %arg12[%c0_30, %c3_31, %c1_32, %c0_33], %33 {strides = array<i32>} : memref<4x5x5x128xf32, #tpu.memory_space<vmem>>, vector<1x1x4x128xf32>,
    %c0_34 = arith.constant 0 : index
    %c4 = arith.constant 4 : index
    %c1_35 = arith.constant 1 : index
    %c0_36 = arith.constant 0 : index
    %34 = vector.load %arg1[%c0_34, %c4, %c1_35, %c0_36] : memref<1x5x5x128xbf16, #tpu.memory_space<vmem>>, vector<1x1x4x128xbf16>
    %35 = vector.shape_cast %34 : vector<1x1x4x128xbf16> to vector<4x128xbf16>
    %cst_37 = arith.constant dense<0.000000e+00> : vector<4x128xf32>
    %36 = tpu.matmul %35, %2, %cst_37 {dimension_numbers = #tpu.dot_dimension_numbers<[1], [0], [0], [1], [0, 0, 1, 1], [], []>} : vector<4x128xbf16>, vector<128x128xbf16>, vector<4x128xf32> -> vector<4x128xf32>
    %37 = vector.broadcast %3 : vector<1x128xf32> to vector<4x128xf32>
    %38 = arith.addf %36, %37 : vector<4x128xf32>
    %cst_38 = arith.constant 0.000000e+00 : f32
    %39 = vector.broadcast %cst_38 : f32 to vector<4x128xf32>
    %40 = arith.maximumf %38, %39 : vector<4x128xf32>
    %c0_39 = arith.constant 0 : index
    %c4_40 = arith.constant 4 : index
    %c1_41 = arith.constant 1 : index
    %c0_42 = arith.constant 0 : index
    %41 = vector.load %arg12[%c0_39, %c4_40, %c1_41, %c0_42] : memref<4x5x5x128xf32, #tpu.memory_space<vmem>>, vector<1x1x4x128xf32>
    %42 = vector.shape_cast %41 : vector<1x1x4x128xf32> to vector<4x128xf32>
    %43 = vector.shape_cast %40 : vector<4x128xf32> to vector<1x1x4x128xf32>
    tpu.vector_store %arg12[%c0_39, %c4_40, %c1_41, %c0_42], %43 {strides = array<i32>} : memref<4x5x5x128xf32, #tpu.memory_space<vmem>>, vector<1x1x4x128xf32>,
    %c0_43 = arith.constant 0 : index
    %c1_44 = arith.constant 1 : index
    %c0_45 = arith.constant 0 : index
    %c0_46 = arith.constant 0 : index
    %44 = vector.load %arg2[%c0_43, %c1_44, %c0_45, %c0_46] : memref<1x5x5x128xbf16, #tpu.memory_space<vmem>>, vector<1x1x4x128xbf16>
    %45 = vector.shape_cast %44 : vector<1x1x4x128xbf16> to vector<4x128xbf16>
    %cst_47 = arith.constant dense<0.000000e+00> : vector<4x128xf32>
    %46 = tpu.matmul %45, %2, %cst_47 {dimension_numbers = #tpu.dot_dimension_numbers<[1], [0], [0], [1], [0, 0, 1, 1], [], []>} : vector<4x128xbf16>, vector<128x128xbf16>, vector<4x128xf32> -> vector<4x128xf32>
    %47 = vector.broadcast %3 : vector<1x128xf32> to vector<4x128xf32>
    %48 = arith.addf %46, %47 : vector<4x128xf32>
    %cst_48 = arith.constant 0.000000e+00 : f32
    %49 = vector.broadcast %cst_48 : f32 to vector<4x128xf32>
    %50 = arith.maximumf %48, %49 : vector<4x128xf32>
    %c1_49 = arith.constant 1 : index
    %c1_50 = arith.constant 1 : index
    %c0_51 = arith.constant 0 : index
    %c0_52 = arith.constant 0 : index
    %51 = vector.load %arg12[%c1_49, %c1_50, %c0_51, %c0_52] : memref<4x5x5x128xf32, #tpu.memory_space<vmem>>, vector<1x1x4x128xf32>
    %52 = vector.shape_cast %51 : vector<1x1x4x128xf32> to vector<4x128xf32>
    %53 = vector.shape_cast %50 : vector<4x128xf32> to vector<1x1x4x128xf32>
    tpu.vector_store %arg12[%c1_49, %c1_50, %c0_51, %c0_52], %53 {strides = array<i32>} : memref<4x5x5x128xf32, #tpu.memory_space<vmem>>, vector<1x1x4x128xf32>,
    %c0_53 = arith.constant 0 : index
    %c2_54 = arith.constant 2 : index
    %c0_55 = arith.constant 0 : index
    %c0_56 = arith.constant 0 : index
    %54 = vector.load %arg2[%c0_53, %c2_54, %c0_55, %c0_56] : memref<1x5x5x128xbf16, #tpu.memory_space<vmem>>, vector<1x1x4x128xbf16>
    %55 = vector.shape_cast %54 : vector<1x1x4x128xbf16> to vector<4x128xbf16>
    %cst_57 = arith.constant dense<0.000000e+00> : vector<4x128xf32>
    %56 = tpu.matmul %55, %2, %cst_57 {dimension_numbers = #tpu.dot_dimension_numbers<[1], [0], [0], [1], [0, 0, 1, 1], [], []>} : vector<4x128xbf16>, vector<128x128xbf16>, vector<4x128xf32> -> vector<4x128xf32>
    %57 = vector.broadcast %3 : vector<1x128xf32> to vector<4x128xf32>
    %58 = arith.addf %56, %57 : vector<4x128xf32>
    %cst_58 = arith.constant 0.000000e+00 : f32
    %59 = vector.broadcast %cst_58 : f32 to vector<4x128xf32>
    %60 = arith.maximumf %58, %59 : vector<4x128xf32>
    %c1_59 = arith.constant 1 : index
    %c2_60 = arith.constant 2 : index
    %c0_61 = arith.constant 0 : index
    %c0_62 = arith.constant 0 : index
    %61 = vector.load %arg12[%c1_59, %c2_60, %c0_61, %c0_62] : memref<4x5x5x128xf32, #tpu.memory_space<vmem>>, vector<1x1x4x128xf32>
    %62 = vector.shape_cast %61 : vector<1x1x4x128xf32> to vector<4x128xf32>
    %63 = vector.shape_cast %60 : vector<4x128xf32> to vector<1x1x4x128xf32>
    tpu.vector_store %arg12[%c1_59, %c2_60, %c0_61, %c0_62], %63 {strides = array<i32>} : memref<4x5x5x128xf32, #tpu.memory_space<vmem>>, vector<1x1x4x128xf32>,
    %c0_63 = arith.constant 0 : index
    %c3_64 = arith.constant 3 : index
    %c0_65 = arith.constant 0 : index
    %c0_66 = arith.constant 0 : index
    %64 = vector.load %arg2[%c0_63, %c3_64, %c0_65, %c0_66] : memref<1x5x5x128xbf16, #tpu.memory_space<vmem>>, vector<1x1x4x128xbf16>
    %65 = vector.shape_cast %64 : vector<1x1x4x128xbf16> to vector<4x128xbf16>
    %cst_67 = arith.constant dense<0.000000e+00> : vector<4x128xf32>
    %66 = tpu.matmul %65, %2, %cst_67 {dimension_numbers = #tpu.dot_dimension_numbers<[1], [0], [0], [1], [0, 0, 1, 1], [], []>} : vector<4x128xbf16>, vector<128x128xbf16>, vector<4x128xf32> -> vector<4x128xf32>
    %67 = vector.broadcast %3 : vector<1x128xf32> to vector<4x128xf32>
    %68 = arith.addf %66, %67 : vector<4x128xf32>
    %cst_68 = arith.constant 0.000000e+00 : f32
    %69 = vector.broadcast %cst_68 : f32 to vector<4x128xf32>
    %70 = arith.maximumf %68, %69 : vector<4x128xf32>
    %c1_69 = arith.constant 1 : index
    %c3_70 = arith.constant 3 : index
    %c0_71 = arith.constant 0 : index
    %c0_72 = arith.constant 0 : index
    %71 = vector.load %arg12[%c1_69, %c3_70, %c0_71, %c0_72] : memref<4x5x5x128xf32, #tpu.memory_space<vmem>>, vector<1x1x4x128xf32>
    %72 = vector.shape_cast %71 : vector<1x1x4x128xf32> to vector<4x128xf32>
    %73 = vector.shape_cast %70 : vector<4x128xf32> to vector<1x1x4x128xf32>
    tpu.vector_store %arg12[%c1_69, %c3_70, %c0_71, %c0_72], %73 {strides = array<i32>} : memref<4x5x5x128xf32, #tpu.memory_space<vmem>>, vector<1x1x4x128xf32>,
    %c0_73 = arith.constant 0 : index
    %c4_74 = arith.constant 4 : index
    %c0_75 = arith.constant 0 : index
    %c0_76 = arith.constant 0 : index
    %74 = vector.load %arg2[%c0_73, %c4_74, %c0_75, %c0_76] : memref<1x5x5x128xbf16, #tpu.memory_space<vmem>>, vector<1x1x4x128xbf16>
    %75 = vector.shape_cast %74 : vector<1x1x4x128xbf16> to vector<4x128xbf16>
    %cst_77 = arith.constant dense<0.000000e+00> : vector<4x128xf32>
    %76 = tpu.matmul %75, %2, %cst_77 {dimension_numbers = #tpu.dot_dimension_numbers<[1], [0], [0], [1], [0, 0, 1, 1], [], []>} : vector<4x128xbf16>, vector<128x128xbf16>, vector<4x128xf32> -> vector<4x128xf32>
    %77 = vector.broadcast %3 : vector<1x128xf32> to vector<4x128xf32>
    %78 = arith.addf %76, %77 : vector<4x128xf32>
    %cst_78 = arith.constant 0.000000e+00 : f32
    %79 = vector.broadcast %cst_78 : f32 to vector<4x128xf32>
    %80 = arith.maximumf %78, %79 : vector<4x128xf32>
    %c1_79 = arith.constant 1 : index
    %c4_80 = arith.constant 4 : index
    %c0_81 = arith.constant 0 : index
    %c0_82 = arith.constant 0 : index
    %81 = vector.load %arg12[%c1_79, %c4_80, %c0_81, %c0_82] : memref<4x5x5x128xf32, #tpu.memory_space<vmem>>, vector<1x1x4x128xf32>
    %82 = vector.shape_cast %81 : vector<1x1x4x128xf32> to vector<4x128xf32>
    %83 = vector.shape_cast %80 : vector<4x128xf32> to vector<1x1x4x128xf32>
    tpu.vector_store %arg12[%c1_79, %c4_80, %c0_81, %c0_82], %83 {strides = array<i32>} : memref<4x5x5x128xf32, #tpu.memory_space<vmem>>, vector<1x1x4x128xf32>,
    %c0_83 = arith.constant 0 : index
    %c0_84 = arith.constant 0 : index
    %c1_85 = arith.constant 1 : index
    %c0_86 = arith.constant 0 : index
    %84 = vector.load %arg3[%c0_83, %c0_84, %c1_85, %c0_86] : memref<1x5x5x128xbf16, #tpu.memory_space<vmem>>, vector<1x1x4x128xbf16>
    %85 = vector.shape_cast %84 : vector<1x1x4x128xbf16> to vector<4x128xbf16>
    %cst_87 = arith.constant dense<0.000000e+00> : vector<4x128xf32>
    %86 = tpu.matmul %85, %2, %cst_87 {dimension_numbers = #tpu.dot_dimension_numbers<[1], [0], [0], [1], [0, 0, 1, 1], [], []>} : vector<4x128xbf16>, vector<128x128xbf16>, vector<4x128xf32> -> vector<4x128xf32>
    %87 = vector.broadcast %3 : vector<1x128xf32> to vector<4x128xf32>
    %88 = arith.addf %86, %87 : vector<4x128xf32>
    %cst_88 = arith.constant 0.000000e+00 : f32
    %89 = vector.broadcast %cst_88 : f32 to vector<4x128xf32>
    %90 = arith.maximumf %88, %89 : vector<4x128xf32>
    %c2_89 = arith.constant 2 : index
    %c0_90 = arith.constant 0 : index
    %c1_91 = arith.constant 1 : index
    %c0_92 = arith.constant 0 : index
    %91 = vector.load %arg12[%c2_89, %c0_90, %c1_91, %c0_92] : memref<4x5x5x128xf32, #tpu.memory_space<vmem>>, vector<1x1x4x128xf32>
    %92 = vector.shape_cast %91 : vector<1x1x4x128xf32> to vector<4x128xf32>
    %93 = vector.shape_cast %90 : vector<4x128xf32> to vector<1x1x4x128xf32>
    tpu.vector_store %arg12[%c2_89, %c0_90, %c1_91, %c0_92], %93 {strides = array<i32>} : memref<4x5x5x128xf32, #tpu.memory_space<vmem>>, vector<1x1x4x128xf32>,
    %c0_93 = arith.constant 0 : index
    %c1_94 = arith.constant 1 : index
    %c1_95 = arith.constant 1 : index
    %c0_96 = arith.constant 0 : index
    %94 = vector.load %arg3[%c0_93, %c1_94, %c1_95, %c0_96] : memref<1x5x5x128xbf16, #tpu.memory_space<vmem>>, vector<1x1x4x128xbf16>
    %95 = vector.shape_cast %94 : vector<1x1x4x128xbf16> to vector<4x128xbf16>
    %cst_97 = arith.constant dense<0.000000e+00> : vector<4x128xf32>
    %96 = tpu.matmul %95, %2, %cst_97 {dimension_numbers = #tpu.dot_dimension_numbers<[1], [0], [0], [1], [0, 0, 1, 1], [], []>} : vector<4x128xbf16>, vector<128x128xbf16>, vector<4x128xf32> -> vector<4x128xf32>
    %97 = vector.broadcast %3 : vector<1x128xf32> to vector<4x128xf32>
    %98 = arith.addf %96, %97 : vector<4x128xf32>
    %cst_98 = arith.constant 0.000000e+00 : f32
    %99 = vector.broadcast %cst_98 : f32 to vector<4x128xf32>
    %100 = arith.maximumf %98, %99 : vector<4x128xf32>
    %c2_99 = arith.constant 2 : index
    %c1_100 = arith.constant 1 : index
    %c1_101 = arith.constant 1 : index
    %c0_102 = arith.constant 0 : index
    %101 = vector.load %arg12[%c2_99, %c1_100, %c1_101, %c0_102] : memref<4x5x5x128xf32, #tpu.memory_space<vmem>>, vector<1x1x4x128xf32>
    %102 = vector.shape_cast %101 : vector<1x1x4x128xf32> to vector<4x128xf32>
    %103 = vector.shape_cast %100 : vector<4x128xf32> to vector<1x1x4x128xf32>
    tpu.vector_store %arg12[%c2_99, %c1_100, %c1_101, %c0_102], %103 {strides = array<i32>} : memref<4x5x5x128xf32, #tpu.memory_space<vmem>>, vector<1x1x4x128xf32>,
    %c0_103 = arith.constant 0 : index
    %c2_104 = arith.constant 2 : index
    %c1_105 = arith.constant 1 : index
    %c0_106 = arith.constant 0 : index
    %104 = vector.load %arg3[%c0_103, %c2_104, %c1_105, %c0_106] : memref<1x5x5x128xbf16, #tpu.memory_space<vmem>>, vector<1x1x4x128xbf16>
    %105 = vector.shape_cast %104 : vector<1x1x4x128xbf16> to vector<4x128xbf16>
    %cst_107 = arith.constant dense<0.000000e+00> : vector<4x128xf32>
    %106 = tpu.matmul %105, %2, %cst_107 {dimension_numbers = #tpu.dot_dimension_numbers<[1], [0], [0], [1], [0, 0, 1, 1], [], []>} : vector<4x128xbf16>, vector<128x128xbf16>, vector<4x128xf32> -> vector<4x128xf32>
    %107 = vector.broadcast %3 : vector<1x128xf32> to vector<4x128xf32>
    %108 = arith.addf %106, %107 : vector<4x128xf32>
    %cst_108 = arith.constant 0.000000e+00 : f32
    %109 = vector.broadcast %cst_108 : f32 to vector<4x128xf32>
    %110 = arith.maximumf %108, %109 : vector<4x128xf32>
    %c2_109 = arith.constant 2 : index
    %c2_110 = arith.constant 2 : index
    %c1_111 = arith.constant 1 : index
    %c0_112 = arith.constant 0 : index
    %111 = vector.load %arg12[%c2_109, %c2_110, %c1_111, %c0_112] : memref<4x5x5x128xf32, #tpu.memory_space<vmem>>, vector<1x1x4x128xf32>
    %112 = vector.shape_cast %111 : vector<1x1x4x128xf32> to vector<4x128xf32>
    %113 = vector.shape_cast %110 : vector<4x128xf32> to vector<1x1x4x128xf32>
    tpu.vector_store %arg12[%c2_109, %c2_110, %c1_111, %c0_112], %113 {strides = array<i32>} : memref<4x5x5x128xf32, #tpu.memory_space<vmem>>, vector<1x1x4x128xf32>,
    %c0_113 = arith.constant 0 : index
    %c3_114 = arith.constant 3 : index
    %c1_115 = arith.constant 1 : index
    %c0_116 = arith.constant 0 : index
    %114 = vector.load %arg3[%c0_113, %c3_114, %c1_115, %c0_116] : memref<1x5x5x128xbf16, #tpu.memory_space<vmem>>, vector<1x1x4x128xbf16>
    %115 = vector.shape_cast %114 : vector<1x1x4x128xbf16> to vector<4x128xbf16>
    %cst_117 = arith.constant dense<0.000000e+00> : vector<4x128xf32>
    %116 = tpu.matmul %115, %2, %cst_117 {dimension_numbers = #tpu.dot_dimension_numbers<[1], [0], [0], [1], [0, 0, 1, 1], [], []>} : vector<4x128xbf16>, vector<128x128xbf16>, vector<4x128xf32> -> vector<4x128xf32>
    %117 = vector.broadcast %3 : vector<1x128xf32> to vector<4x128xf32>
    %118 = arith.addf %116, %117 : vector<4x128xf32>
    %cst_118 = arith.constant 0.000000e+00 : f32
    %119 = vector.broadcast %cst_118 : f32 to vector<4x128xf32>
    %120 = arith.maximumf %118, %119 : vector<4x128xf32>
    %c2_119 = arith.constant 2 : index
    %c3_120 = arith.constant 3 : index
    %c1_121 = arith.constant 1 : index
    %c0_122 = arith.constant 0 : index
    %121 = vector.load %arg12[%c2_119, %c3_120, %c1_121, %c0_122] : memref<4x5x5x128xf32, #tpu.memory_space<vmem>>, vector<1x1x4x128xf32>
    %122 = vector.shape_cast %121 : vector<1x1x4x128xf32> to vector<4x128xf32>
    %123 = vector.shape_cast %120 : vector<4x128xf32> to vector<1x1x4x128xf32>
    tpu.vector_store %arg12[%c2_119, %c3_120, %c1_121, %c0_122], %123 {strides = array<i32>} : memref<4x5x5x128xf32, #tpu.memory_space<vmem>>, vector<1x1x4x128xf32>,
    %c0_123 = arith.constant 0 : index
    %c0_124 = arith.constant 0 : index
    %c0_125 = arith.constant 0 : index
    %c0_126 = arith.constant 0 : index
    %124 = vector.load %arg4[%c0_123, %c0_124, %c0_125, %c0_126] : memref<1x5x5x128xbf16, #tpu.memory_space<vmem>>, vector<1x1x4x128xbf16>
    %125 = vector.shape_cast %124 : vector<1x1x4x128xbf16> to vector<4x128xbf16>
    %cst_127 = arith.constant dense<0.000000e+00> : vector<4x128xf32>
    %126 = tpu.matmul %125, %2, %cst_127 {dimension_numbers = #tpu.dot_dimension_numbers<[1], [0], [0], [1], [0, 0, 1, 1], [], []>} : vector<4x128xbf16>, vector<128x128xbf16>, vector<4x128xf32> -> vector<4x128xf32>
    %127 = vector.broadcast %3 : vector<1x128xf32> to vector<4x128xf32>
    %128 = arith.addf %126, %127 : vector<4x128xf32>
    %cst_128 = arith.constant 0.000000e+00 : f32
    %129 = vector.broadcast %cst_128 : f32 to vector<4x128xf32>
    %130 = arith.maximumf %128, %129 : vector<4x128xf32>
    %c3_129 = arith.constant 3 : index
    %c0_130 = arith.constant 0 : index
    %c0_131 = arith.constant 0 : index
    %c0_132 = arith.constant 0 : index
    %131 = vector.load %arg12[%c3_129, %c0_130, %c0_131, %c0_132] : memref<4x5x5x128xf32, #tpu.memory_space<vmem>>, vector<1x1x4x128xf32>
    %132 = vector.shape_cast %131 : vector<1x1x4x128xf32> to vector<4x128xf32>
    %133 = vector.shape_cast %130 : vector<4x128xf32> to vector<1x1x4x128xf32>
    tpu.vector_store %arg12[%c3_129, %c0_130, %c0_131, %c0_132], %133 {strides = array<i32>} : memref<4x5x5x128xf32, #tpu.memory_space<vmem>>, vector<1x1x4x128xf32>,
    %c0_133 = arith.constant 0 : index
    %c1_134 = arith.constant 1 : index
    %c0_135 = arith.constant 0 : index
    %c0_136 = arith.constant 0 : index
    %134 = vector.load %arg4[%c0_133, %c1_134, %c0_135, %c0_136] : memref<1x5x5x128xbf16, #tpu.memory_space<vmem>>, vector<1x1x4x128xbf16>
    %135 = vector.shape_cast %134 : vector<1x1x4x128xbf16> to vector<4x128xbf16>
    %cst_137 = arith.constant dense<0.000000e+00> : vector<4x128xf32>
    %136 = tpu.matmul %135, %2, %cst_137 {dimension_numbers = #tpu.dot_dimension_numbers<[1], [0], [0], [1], [0, 0, 1, 1], [], []>} : vector<4x128xbf16>, vector<128x128xbf16>, vector<4x128xf32> -> vector<4x128xf32>
    %137 = vector.broadcast %3 : vector<1x128xf32> to vector<4x128xf32>
    %138 = arith.addf %136, %137 : vector<4x128xf32>
    %cst_138 = arith.constant 0.000000e+00 : f32
    %139 = vector.broadcast %cst_138 : f32 to vector<4x128xf32>
    %140 = arith.maximumf %138, %139 : vector<4x128xf32>
    %c3_139 = arith.constant 3 : index
    %c1_140 = arith.constant 1 : index
    %c0_141 = arith.constant 0 : index
    %c0_142 = arith.constant 0 : index
    %141 = vector.load %arg12[%c3_139, %c1_140, %c0_141, %c0_142] : memref<4x5x5x128xf32, #tpu.memory_space<vmem>>, vector<1x1x4x128xf32>
    %142 = vector.shape_cast %141 : vector<1x1x4x128xf32> to vector<4x128xf32>
    %143 = vector.shape_cast %140 : vector<4x128xf32> to vector<1x1x4x128xf32>
    tpu.vector_store %arg12[%c3_139, %c1_140, %c0_141, %c0_142], %143 {strides = array<i32>} : memref<4x5x5x128xf32, #tpu.memory_space<vmem>>, vector<1x1x4x128xf32>,
    %c0_143 = arith.constant 0 : index
    %c2_144 = arith.constant 2 : index
    %c0_145 = arith.constant 0 : index
    %c0_146 = arith.constant 0 : index
    %144 = vector.load %arg4[%c0_143, %c2_144, %c0_145, %c0_146] : memref<1x5x5x128xbf16, #tpu.memory_space<vmem>>, vector<1x1x4x128xbf16>
    %145 = vector.shape_cast %144 : vector<1x1x4x128xbf16> to vector<4x128xbf16>
    %cst_147 = arith.constant dense<0.000000e+00> : vector<4x128xf32>
    %146 = tpu.matmul %145, %2, %cst_147 {dimension_numbers = #tpu.dot_dimension_numbers<[1], [0], [0], [1], [0, 0, 1, 1], [], []>} : vector<4x128xbf16>, vector<128x128xbf16>, vector<4x128xf32> -> vector<4x128xf32>
    %147 = vector.broadcast %3 : vector<1x128xf32> to vector<4x128xf32>
    %148 = arith.addf %146, %147 : vector<4x128xf32>
    %cst_148 = arith.constant 0.000000e+00 : f32
    %149 = vector.broadcast %cst_148 : f32 to vector<4x128xf32>
    %150 = arith.maximumf %148, %149 : vector<4x128xf32>
    %c3_149 = arith.constant 3 : index
    %c2_150 = arith.constant 2 : index
    %c0_151 = arith.constant 0 : index
    %c0_152 = arith.constant 0 : index
    %151 = vector.load %arg12[%c3_149, %c2_150, %c0_151, %c0_152] : memref<4x5x5x128xf32, #tpu.memory_space<vmem>>, vector<1x1x4x128xf32>
    %152 = vector.shape_cast %151 : vector<1x1x4x128xf32> to vector<4x128xf32>
    %153 = vector.shape_cast %150 : vector<4x128xf32> to vector<1x1x4x128xf32>
    tpu.vector_store %arg12[%c3_149, %c2_150, %c0_151, %c0_152], %153 {strides = array<i32>} : memref<4x5x5x128xf32, #tpu.memory_space<vmem>>, vector<1x1x4x128xf32>,
    %c0_153 = arith.constant 0 : index
    %c3_154 = arith.constant 3 : index
    %c0_155 = arith.constant 0 : index
    %c0_156 = arith.constant 0 : index
    %154 = vector.load %arg4[%c0_153, %c3_154, %c0_155, %c0_156] : memref<1x5x5x128xbf16, #tpu.memory_space<vmem>>, vector<1x1x4x128xbf16>
    %155 = vector.shape_cast %154 : vector<1x1x4x128xbf16> to vector<4x128xbf16>
    %cst_157 = arith.constant dense<0.000000e+00> : vector<4x128xf32>
    %156 = tpu.matmul %155, %2, %cst_157 {dimension_numbers = #tpu.dot_dimension_numbers<[1], [0], [0], [1], [0, 0, 1, 1], [], []>} : vector<4x128xbf16>, vector<128x128xbf16>, vector<4x128xf32> -> vector<4x128xf32>
    %157 = vector.broadcast %3 : vector<1x128xf32> to vector<4x128xf32>
    %158 = arith.addf %156, %157 : vector<4x128xf32>
    %cst_158 = arith.constant 0.000000e+00 : f32
    %159 = vector.broadcast %cst_158 : f32 to vector<4x128xf32>
    %160 = arith.maximumf %158, %159 : vector<4x128xf32>
    %c3_159 = arith.constant 3 : index
    %c3_160 = arith.constant 3 : index
    %c0_161 = arith.constant 0 : index
    %c0_162 = arith.constant 0 : index
    %161 = vector.load %arg12[%c3_159, %c3_160, %c0_161, %c0_162] : memref<4x5x5x128xf32, #tpu.memory_space<vmem>>, vector<1x1x4x128xf32>
    %162 = vector.shape_cast %161 : vector<1x1x4x128xf32> to vector<4x128xf32>
    %163 = vector.shape_cast %160 : vector<4x128xf32> to vector<1x1x4x128xf32>
    tpu.vector_store %arg12[%c3_159, %c3_160, %c0_161, %c0_162], %163 {strides = array<i32>} : memref<4x5x5x128xf32, #tpu.memory_space<vmem>>, vector<1x1x4x128xf32>,
    %c0_163 = arith.constant 0 : index
    %c0_164 = arith.constant 0 : index
    %164 = vector.load %arg7[%c0_163, %c0_164] : memref<9x128xf32, #tpu.memory_space<vmem>>, vector<9x128xf32>
    %cst_165 = arith.constant 0.000000e+00 : f32
    %165 = vector.broadcast %cst_165 : f32 to vector<4x4x128xf32>
    %c0_166 = arith.constant 0 : index
    %c0_167 = arith.constant 0 : index
    %c0_168 = arith.constant 0 : index
    %c0_169 = arith.constant 0 : index
    %166 = vector.load %arg12[%c0_166, %c0_167, %c0_168, %c0_169] : memref<4x5x5x128xf32, #tpu.memory_space<vmem>>, vector<1x4x4x128xf32>
    %167 = vector.shape_cast %166 : vector<1x4x4x128xf32> to vector<4x4x128xf32>
    %168 = vector.extract_strided_slice %164 {offsets = [0, 0], sizes = [1, 128], strides = [1, 1]} : vector<9x128xf32> to vector<1x128xf32>
    %169 = vector.shape_cast %168 : vector<1x128xf32> to vector<1x1x128xf32>
    %170 = vector.broadcast %169 : vector<1x1x128xf32> to vector<4x4x128xf32>
    %171 = arith.mulf %167, %170 : vector<4x4x128xf32>
    %172 = arith.addf %165, %171 : vector<4x4x128xf32>
    %c1_170 = arith.constant 1 : index
    %c0_171 = arith.constant 0 : index
    %c0_172 = arith.constant 0 : index
    %c0_173 = arith.constant 0 : index
    %173 = vector.load %arg12[%c1_170, %c0_171, %c0_172, %c0_173] : memref<4x5x5x128xf32, #tpu.memory_space<vmem>>, vector<1x4x4x128xf32>
    %174 = vector.shape_cast %173 : vector<1x4x4x128xf32> to vector<4x4x128xf32>
    %175 = vector.extract_strided_slice %164 {offsets = [1, 0], sizes = [1, 128], strides = [1, 1]} : vector<9x128xf32> to vector<1x128xf32>
    %176 = vector.shape_cast %175 : vector<1x128xf32> to vector<1x1x128xf32>
    %177 = vector.broadcast %176 : vector<1x1x128xf32> to vector<4x4x128xf32>
    %178 = arith.mulf %174, %177 : vector<4x4x128xf32>
    %179 = arith.addf %172, %178 : vector<4x4x128xf32>
    %c0_174 = arith.constant 0 : index
    %c0_175 = arith.constant 0 : index
    %c1_176 = arith.constant 1 : index
    %c0_177 = arith.constant 0 : index
    %180 = vector.load %arg12[%c0_174, %c0_175, %c1_176, %c0_177] : memref<4x5x5x128xf32, #tpu.memory_space<vmem>>, vector<1x4x4x128xf32>
    %181 = vector.shape_cast %180 : vector<1x4x4x128xf32> to vector<4x4x128xf32>
    %182 = vector.extract_strided_slice %164 {offsets = [2, 0], sizes = [1, 128], strides = [1, 1]} : vector<9x128xf32> to vector<1x128xf32>
    %183 = vector.shape_cast %182 : vector<1x128xf32> to vector<1x1x128xf32>
    %184 = vector.broadcast %183 : vector<1x1x128xf32> to vector<4x4x128xf32>
    %185 = arith.mulf %181, %184 : vector<4x4x128xf32>
    %186 = arith.addf %179, %185 : vector<4x4x128xf32>
    %c2_178 = arith.constant 2 : index
    %c0_179 = arith.constant 0 : index
    %c0_180 = arith.constant 0 : index
    %c0_181 = arith.constant 0 : index
    %187 = vector.load %arg12[%c2_178, %c0_179, %c0_180, %c0_181] : memref<4x5x5x128xf32, #tpu.memory_space<vmem>>, vector<1x4x4x128xf32>
    %188 = vector.shape_cast %187 : vector<1x4x4x128xf32> to vector<4x4x128xf32>
    %189 = vector.extract_strided_slice %164 {offsets = [3, 0], sizes = [1, 128], strides = [1, 1]} : vector<9x128xf32> to vector<1x128xf32>
    %190 = vector.shape_cast %189 : vector<1x128xf32> to vector<1x1x128xf32>
    %191 = vector.broadcast %190 : vector<1x1x128xf32> to vector<4x4x128xf32>
    %192 = arith.mulf %188, %191 : vector<4x4x128xf32>
    %193 = arith.addf %186, %192 : vector<4x4x128xf32>
    %c3_182 = arith.constant 3 : index
    %c0_183 = arith.constant 0 : index
    %c0_184 = arith.constant 0 : index
    %c0_185 = arith.constant 0 : index
    %194 = vector.load %arg12[%c3_182, %c0_183, %c0_184, %c0_185] : memref<4x5x5x128xf32, #tpu.memory_space<vmem>>, vector<1x4x4x128xf32>
    %195 = vector.shape_cast %194 : vector<1x4x4x128xf32> to vector<4x4x128xf32>
    %196 = vector.extract_strided_slice %164 {offsets = [4, 0], sizes = [1, 128], strides = [1, 1]} : vector<9x128xf32> to vector<1x128xf32>
    %197 = vector.shape_cast %196 : vector<1x128xf32> to vector<1x1x128xf32>
    %198 = vector.broadcast %197 : vector<1x1x128xf32> to vector<4x4x128xf32>
    %199 = arith.mulf %195, %198 : vector<4x4x128xf32>
    %200 = arith.addf %193, %199 : vector<4x4x128xf32>
    %c2_186 = arith.constant 2 : index
    %c0_187 = arith.constant 0 : index
    %c1_188 = arith.constant 1 : index
    %c0_189 = arith.constant 0 : index
    %201 = vector.load %arg12[%c2_186, %c0_187, %c1_188, %c0_189] : memref<4x5x5x128xf32, #tpu.memory_space<vmem>>, vector<1x4x4x128xf32>
    %202 = vector.shape_cast %201 : vector<1x4x4x128xf32> to vector<4x4x128xf32>
    %203 = vector.extract_strided_slice %164 {offsets = [5, 0], sizes = [1, 128], strides = [1, 1]} : vector<9x128xf32> to vector<1x128xf32>
    %204 = vector.shape_cast %203 : vector<1x128xf32> to vector<1x1x128xf32>
    %205 = vector.broadcast %204 : vector<1x1x128xf32> to vector<4x4x128xf32>
    %206 = arith.mulf %202, %205 : vector<4x4x128xf32>
    %207 = arith.addf %200, %206 : vector<4x4x128xf32>
    %c0_190 = arith.constant 0 : index
    %c1_191 = arith.constant 1 : index
    %c0_192 = arith.constant 0 : index
    %c0_193 = arith.constant 0 : index
    %208 = vector.load %arg12[%c0_190, %c1_191, %c0_192, %c0_193] : memref<4x5x5x128xf32, #tpu.memory_space<vmem>>, vector<1x4x4x128xf32>
    %209 = vector.shape_cast %208 : vector<1x4x4x128xf32> to vector<4x4x128xf32>
    %210 = vector.extract_strided_slice %164 {offsets = [6, 0], sizes = [1, 128], strides = [1, 1]} : vector<9x128xf32> to vector<1x128xf32>
    %211 = vector.shape_cast %210 : vector<1x128xf32> to vector<1x1x128xf32>
    %212 = vector.broadcast %211 : vector<1x1x128xf32> to vector<4x4x128xf32>
    %213 = arith.mulf %209, %212 : vector<4x4x128xf32>
    %214 = arith.addf %207, %213 : vector<4x4x128xf32>
    %c1_194 = arith.constant 1 : index
    %c1_195 = arith.constant 1 : index
    %c0_196 = arith.constant 0 : index
    %c0_197 = arith.constant 0 : index
    %215 = vector.load %arg12[%c1_194, %c1_195, %c0_196, %c0_197] : memref<4x5x5x128xf32, #tpu.memory_space<vmem>>, vector<1x4x4x128xf32>
    %216 = vector.shape_cast %215 : vector<1x4x4x128xf32> to vector<4x4x128xf32>
    %217 = vector.extract_strided_slice %164 {offsets = [7, 0], sizes = [1, 128], strides = [1, 1]} : vector<9x128xf32> to vector<1x128xf32>
    %218 = vector.shape_cast %217 : vector<1x128xf32> to vector<1x1x128xf32>
    %219 = vector.broadcast %218 : vector<1x1x128xf32> to vector<4x4x128xf32>
    %220 = arith.mulf %216, %219 : vector<4x4x128xf32>
    %221 = arith.addf %214, %220 : vector<4x4x128xf32>
    %c0_198 = arith.constant 0 : index
    %c1_199 = arith.constant 1 : index
    %c1_200 = arith.constant 1 : index
    %c0_201 = arith.constant 0 : index
    %222 = vector.load %arg12[%c0_198, %c1_199, %c1_200, %c0_201] : memref<4x5x5x128xf32, #tpu.memory_space<vmem>>, vector<1x4x4x128xf32>
    %223 = vector.shape_cast %222 : vector<1x4x4x128xf32> to vector<4x4x128xf32>
    %224 = vector.extract_strided_slice %164 {offsets = [8, 0], sizes = [1, 128], strides = [1, 1]} : vector<9x128xf32> to vector<1x128xf32>
    %225 = vector.shape_cast %224 : vector<1x128xf32> to vector<1x1x128xf32>
    %226 = vector.broadcast %225 : vector<1x1x128xf32> to vector<4x4x128xf32>
    %227 = arith.mulf %223, %226 : vector<4x4x128xf32>
    %228 = arith.addf %221, %227 : vector<4x4x128xf32>
    %c0_202 = arith.constant 0 : index
    %c0_203 = arith.constant 0 : index
    %229 = vector.load %arg8[%c0_202, %c0_203] : memref<1x128xf32, #tpu.memory_space<vmem>>, vector<1x128xf32>
    %230 = vector.shape_cast %229 : vector<1x128xf32> to vector<1x1x128xf32>
    %231 = vector.broadcast %230 : vector<1x1x128xf32> to vector<4x4x128xf32>
    %232 = arith.addf %228, %231 : vector<4x4x128xf32>
    %cst_204 = arith.constant 0.000000e+00 : f32
    %233 = vector.broadcast %cst_204 : f32 to vector<4x4x128xf32>
    %234 = arith.maximumf %232, %233 : vector<4x4x128xf32>
    %c0_205 = arith.constant 0 : index
    %c0_206 = arith.constant 0 : index
    %235 = vector.load %arg9[%c0_205, %c0_206] : memref<128x128xbf16, #tpu.memory_space<vmem>>, vector<128x128xbf16>
    %c0_207 = arith.constant 0 : index
    %c0_208 = arith.constant 0 : index
    %236 = vector.load %arg10[%c0_207, %c0_208] : memref<1x128xf32, #tpu.memory_space<vmem>>, vector<1x128xf32>
    %237 = vector.extract_strided_slice %234 {offsets = [0, 0, 0], sizes = [1, 4, 128], strides = [1, 1, 1]} : vector<4x4x128xf32> to vector<1x4x128xf32>
    %238 = vector.shape_cast %237 : vector<1x4x128xf32> to vector<4x128xf32>
    %239 = arith.truncf %238 : vector<4x128xf32> to vector<4x128xbf16>
    %cst_209 = arith.constant dense<0.000000e+00> : vector<4x128xf32>
    %240 = tpu.matmul %239, %235, %cst_209 {dimension_numbers = #tpu.dot_dimension_numbers<[1], [0], [0], [1], [0, 0, 1, 1], [], []>} : vector<4x128xbf16>, vector<128x128xbf16>, vector<4x128xf32> -> vector<4x128xf32>
    %241 = vector.broadcast %236 : vector<1x128xf32> to vector<4x128xf32>
    %242 = arith.addf %240, %241 : vector<4x128xf32>
    %243 = arith.truncf %242 : vector<4x128xf32> to vector<4x128xbf16>
    %c0_210 = arith.constant 0 : index
    %c0_211 = arith.constant 0 : index
    %c0_212 = arith.constant 0 : index
    %c0_213 = arith.constant 0 : index
    %244 = vector.load %arg11[%c0_210, %c0_211, %c0_212, %c0_213] : memref<1x4x4x128xbf16, #tpu.memory_space<vmem>>, vector<1x1x4x128xbf16>
    %245 = vector.shape_cast %244 : vector<1x1x4x128xbf16> to vector<4x128xbf16>
    %246 = vector.shape_cast %243 : vector<4x128xbf16> to vector<1x1x4x128xbf16>
    tpu.vector_store %arg11[%c0_210, %c0_211, %c0_212, %c0_213], %246 {strides = array<i32>} : memref<1x4x4x128xbf16, #tpu.memory_space<vmem>>, vector<1x1x4x128xbf16>,
    %247 = vector.extract_strided_slice %234 {offsets = [1, 0, 0], sizes = [1, 4, 128], strides = [1, 1, 1]} : vector<4x4x128xf32> to vector<1x4x128xf32>
    %248 = vector.shape_cast %247 : vector<1x4x128xf32> to vector<4x128xf32>
    %249 = arith.truncf %248 : vector<4x128xf32> to vector<4x128xbf16>
    %cst_214 = arith.constant dense<0.000000e+00> : vector<4x128xf32>
    %250 = tpu.matmul %249, %235, %cst_214 {dimension_numbers = #tpu.dot_dimension_numbers<[1], [0], [0], [1], [0, 0, 1, 1], [], []>} : vector<4x128xbf16>, vector<128x128xbf16>, vector<4x128xf32> -> vector<4x128xf32>
    %251 = vector.broadcast %236 : vector<1x128xf32> to vector<4x128xf32>
    %252 = arith.addf %250, %251 : vector<4x128xf32>
    %253 = arith.truncf %252 : vector<4x128xf32> to vector<4x128xbf16>
    %c0_215 = arith.constant 0 : index
    %c1_216 = arith.constant 1 : index
    %c0_217 = arith.constant 0 : index
    %c0_218 = arith.constant 0 : index
    %254 = vector.load %arg11[%c0_215, %c1_216, %c0_217, %c0_218] : memref<1x4x4x128xbf16, #tpu.memory_space<vmem>>, vector<1x1x4x128xbf16>
    %255 = vector.shape_cast %254 : vector<1x1x4x128xbf16> to vector<4x128xbf16>
    %256 = vector.shape_cast %253 : vector<4x128xbf16> to vector<1x1x4x128xbf16>
    tpu.vector_store %arg11[%c0_215, %c1_216, %c0_217, %c0_218], %256 {strides = array<i32>} : memref<1x4x4x128xbf16, #tpu.memory_space<vmem>>, vector<1x1x4x128xbf16>,
    %257 = vector.extract_strided_slice %234 {offsets = [2, 0, 0], sizes = [1, 4, 128], strides = [1, 1, 1]} : vector<4x4x128xf32> to vector<1x4x128xf32>
    %258 = vector.shape_cast %257 : vector<1x4x128xf32> to vector<4x128xf32>
    %259 = arith.truncf %258 : vector<4x128xf32> to vector<4x128xbf16>
    %cst_219 = arith.constant dense<0.000000e+00> : vector<4x128xf32>
    %260 = tpu.matmul %259, %235, %cst_219 {dimension_numbers = #tpu.dot_dimension_numbers<[1], [0], [0], [1], [0, 0, 1, 1], [], []>} : vector<4x128xbf16>, vector<128x128xbf16>, vector<4x128xf32> -> vector<4x128xf32>
    %261 = vector.broadcast %236 : vector<1x128xf32> to vector<4x128xf32>
    %262 = arith.addf %260, %261 : vector<4x128xf32>
    %263 = arith.truncf %262 : vector<4x128xf32> to vector<4x128xbf16>
    %c0_220 = arith.constant 0 : index
    %c2_221 = arith.constant 2 : index
    %c0_222 = arith.constant 0 : index
    %c0_223 = arith.constant 0 : index
    %264 = vector.load %arg11[%c0_220, %c2_221, %c0_222, %c0_223] : memref<1x4x4x128xbf16, #tpu.memory_space<vmem>>, vector<1x1x4x128xbf16>
    %265 = vector.shape_cast %264 : vector<1x1x4x128xbf16> to vector<4x128xbf16>
    %266 = vector.shape_cast %263 : vector<4x128xbf16> to vector<1x1x4x128xbf16>
    tpu.vector_store %arg11[%c0_220, %c2_221, %c0_222, %c0_223], %266 {strides = array<i32>} : memref<1x4x4x128xbf16, #tpu.memory_space<vmem>>, vector<1x1x4x128xbf16>,
    %267 = vector.extract_strided_slice %234 {offsets = [3, 0, 0], sizes = [1, 4, 128], strides = [1, 1, 1]} : vector<4x4x128xf32> to vector<1x4x128xf32>
    %268 = vector.shape_cast %267 : vector<1x4x128xf32> to vector<4x128xf32>
    %269 = arith.truncf %268 : vector<4x128xf32> to vector<4x128xbf16>
    %cst_224 = arith.constant dense<0.000000e+00> : vector<4x128xf32>
    %270 = tpu.matmul %269, %235, %cst_224 {dimension_numbers = #tpu.dot_dimension_numbers<[1], [0], [0], [1], [0, 0, 1, 1], [], []>} : vector<4x128xbf16>, vector<128x128xbf16>, vector<4x128xf32> -> vector<4x128xf32>
    %271 = vector.broadcast %236 : vector<1x128xf32> to vector<4x128xf32>
    %272 = arith.addf %270, %271 : vector<4x128xf32>
    %273 = arith.truncf %272 : vector<4x128xf32> to vector<4x128xbf16>
    %c0_225 = arith.constant 0 : index
    %c3_226 = arith.constant 3 : index
    %c0_227 = arith.constant 0 : index
    %c0_228 = arith.constant 0 : index
    %274 = vector.load %arg11[%c0_225, %c3_226, %c0_227, %c0_228] : memref<1x4x4x128xbf16, #tpu.memory_space<vmem>>, vector<1x1x4x128xbf16>
    %275 = vector.shape_cast %274 : vector<1x1x4x128xbf16> to vector<4x128xbf16>
    %276 = vector.shape_cast %273 : vector<4x128xbf16> to vector<1x1x4x128xbf16>
    tpu.vector_store %arg11[%c0_225, %c3_226, %c0_227, %c0_228], %276 {strides = array<i32>} : memref<1x4x4x128xbf16, #tpu.memory_space<vmem>>, vector<1x1x4x128xbf16>,
    return
  }
  func.func @transform_0(%arg0: i32) -> (i32, i32, i32, i32) {
    %c0_i32 = arith.constant 0 : i32
    %c0_i32_0 = arith.constant 0 : i32
    %c0_i32_1 = arith.constant 0 : i32
    %c0_i32_2 = arith.constant 0 : i32
    return %arg0, %c0_i32, %c0_i32_0, %c0_i32_1 : i32, i32, i32, i32
  }
  func.func @transform_1(%arg0: i32) -> (i32, i32, i32, i32) {
    %c0_i32 = arith.constant 0 : i32
    %c0_i32_0 = arith.constant 0 : i32
    %c0_i32_1 = arith.constant 0 : i32
    %c0_i32_2 = arith.constant 0 : i32
    return %arg0, %c0_i32, %c0_i32_0, %c0_i32_1 : i32, i32, i32, i32
  }
  func.func @transform_2(%arg0: i32) -> (i32, i32, i32, i32) {
    %c0_i32 = arith.constant 0 : i32
    %c0_i32_0 = arith.constant 0 : i32
    %c0_i32_1 = arith.constant 0 : i32
    %c0_i32_2 = arith.constant 0 : i32
    return %arg0, %c0_i32, %c0_i32_0, %c0_i32_1 : i32, i32, i32, i32
  }
  func.func @transform_3(%arg0: i32) -> (i32, i32, i32, i32) {
    %c0_i32 = arith.constant 0 : i32
    %c0_i32_0 = arith.constant 0 : i32
    %c0_i32_1 = arith.constant 0 : i32
    %c0_i32_2 = arith.constant 0 : i32
    return %arg0, %c0_i32, %c0_i32_0, %c0_i32_1 : i32, i32, i32, i32
  }
  func.func @transform_4(%arg0: i32) -> (i32, i32) {
    %c0_i32 = arith.constant 0 : i32
    %c0_i32_0 = arith.constant 0 : i32
    %c0_i32_1 = arith.constant 0 : i32
    return %c0_i32, %c0_i32_0 : i32, i32
  }
  func.func @transform_5(%arg0: i32) -> (i32, i32) {
    %c0_i32 = arith.constant 0 : i32
    %c0_i32_0 = arith.constant 0 : i32
    %c0_i32_1 = arith.constant 0 : i32
    return %c0_i32, %c0_i32_0 : i32, i32
  }
  func.func @transform_6(%arg0: i32) -> (i32, i32) {
    %c0_i32 = arith.constant 0 : i32
    %c0_i32_0 = arith.constant 0 : i32
    %c0_i32_1 = arith.constant 0 : i32
    return %c0_i32, %c0_i32_0 : i32, i32
  }
  func.func @transform_7(%arg0: i32) -> (i32, i32) {
    %c0_i32 = arith.constant 0 : i32
    %c0_i32_0 = arith.constant 0 : i32
    %c0_i32_1 = arith.constant 0 : i32
    return %c0_i32, %c0_i32_0 : i32, i32
  }
  func.func @transform_8(%arg0: i32) -> (i32, i32) {
    %c0_i32 = arith.constant 0 : i32
    %c0_i32_0 = arith.constant 0 : i32
    %c0_i32_1 = arith.constant 0 : i32
    return %c0_i32, %c0_i32_0 : i32, i32
  }
  func.func @transform_9(%arg0: i32) -> (i32, i32) {
    %c0_i32 = arith.constant 0 : i32
    %c0_i32_0 = arith.constant 0 : i32
    %c0_i32_1 = arith.constant 0 : i32
    return %c0_i32, %c0_i32_0 : i32, i32
  }
  func.func @transform_10(%arg0: i32) -> (i32, i32, i32, i32) {
    %c0_i32 = arith.constant 0 : i32
    %c0_i32_0 = arith.constant 0 : i32
    %c0_i32_1 = arith.constant 0 : i32
    %c0_i32_2 = arith.constant 0 : i32
    return %arg0, %c0_i32, %c0_i32_0, %c0_i32_1 : i32, i32, i32, i32
  }
}

module attributes {stable_mosaic.version = 11 : i64} {
  func.func @kernel(%arg0: i32, %arg1: memref<1x4x4x128xbf16, #tpu.memory_space<vmem>>, %arg2: memref<128x128xbf16, #tpu.memory_space<vmem>>, %arg3: memref<1x128xf32, #tpu.memory_space<vmem>>, %arg4: memref<25x128xf32, #tpu.memory_space<vmem>>, %arg5: memref<1x128xf32, #tpu.memory_space<vmem>>, %arg6: memref<128x128xbf16, #tpu.memory_space<vmem>>, %arg7: memref<1x128xf32, #tpu.memory_space<vmem>>, %arg8: memref<128x128xbf16, #tpu.memory_space<vmem>>, %arg9: memref<1x128xf32, #tpu.memory_space<vmem>>, %arg10: memref<128x128xbf16, #tpu.memory_space<vmem>>, %arg11: memref<1x128xf32, #tpu.memory_space<vmem>>, %arg12: memref<1x4x4x128xbf16, #tpu.memory_space<vmem>>, %arg13: memref<8x8x128xf32, #tpu.memory_space<vmem>>) attributes {dimension_semantics = [#tpu.dimension_semantics<parallel>], iteration_bounds = array<i64: 2>, scalar_prefetch = 0 : i64, scratch_operands = 1 : i64, tpu.core_type = #tpu.core_type<tc>, window_params = [{transform_indices = @transform_0, window_bounds = array<i64: 1, 4, 4, 128>}, {pipeline_mode = #tpu.pipeline_mode<synchronous>, transform_indices = @transform_1, window_bounds = array<i64: 128, 128>}, {pipeline_mode = #tpu.pipeline_mode<synchronous>, transform_indices = @transform_2, window_bounds = array<i64: 1, 128>}, {pipeline_mode = #tpu.pipeline_mode<synchronous>, transform_indices = @transform_3, window_bounds = array<i64: 25, 128>}, {pipeline_mode = #tpu.pipeline_mode<synchronous>, transform_indices = @transform_4, window_bounds = array<i64: 1, 128>}, {pipeline_mode = #tpu.pipeline_mode<synchronous>, transform_indices = @transform_5, window_bounds = array<i64: 128, 128>}, {pipeline_mode = #tpu.pipeline_mode<synchronous>, transform_indices = @transform_6, window_bounds = array<i64: 1, 128>}, {pipeline_mode = #tpu.pipeline_mode<synchronous>, transform_indices = @transform_7, window_bounds = array<i64: 128, 128>}, {pipeline_mode = #tpu.pipeline_mode<synchronous>, transform_indices = @transform_8, window_bounds = array<i64: 1, 128>}, {pipeline_mode = #tpu.pipeline_mode<synchronous>, transform_indices = @transform_9, window_bounds = array<i64: 128, 128>}, {pipeline_mode = #tpu.pipeline_mode<synchronous>, transform_indices = @transform_10, window_bounds = array<i64: 1, 128>}, {transform_indices = @transform_11, window_bounds = array<i64: 1, 4, 4, 128>}]} {
    %cst = arith.constant 0.000000e+00 : f32
    %0 = vector.broadcast %cst : f32 to vector<8x8x128xf32>
    %c0 = arith.constant 0 : index
    %c0_0 = arith.constant 0 : index
    %c0_1 = arith.constant 0 : index
    %1 = vector.load %arg13[%c0, %c0_0, %c0_1] : memref<8x8x128xf32, #tpu.memory_space<vmem>>, vector<8x8x128xf32>
    tpu.vector_store %arg13[%c0, %c0_0, %c0_1], %0 {strides = array<i32>} : memref<8x8x128xf32, #tpu.memory_space<vmem>>, vector<8x8x128xf32>,
    %c0_2 = arith.constant 0 : index
    %c0_3 = arith.constant 0 : index
    %2 = vector.load %arg2[%c0_2, %c0_3] : memref<128x128xbf16, #tpu.memory_space<vmem>>, vector<128x128xbf16>
    %c0_4 = arith.constant 0 : index
    %c0_5 = arith.constant 0 : index
    %3 = vector.load %arg3[%c0_4, %c0_5] : memref<1x128xf32, #tpu.memory_space<vmem>>, vector<1x128xf32>
    %c0_6 = arith.constant 0 : index
    %c0_7 = arith.constant 0 : index
    %c0_8 = arith.constant 0 : index
    %c0_9 = arith.constant 0 : index
    %4 = vector.load %arg1[%c0_6, %c0_7, %c0_8, %c0_9] : memref<1x4x4x128xbf16, #tpu.memory_space<vmem>>, vector<1x1x4x128xbf16>
    %5 = vector.shape_cast %4 : vector<1x1x4x128xbf16> to vector<4x128xbf16>
    %cst_10 = arith.constant dense<0.000000e+00> : vector<4x128xf32>
    %6 = tpu.matmul %5, %2, %cst_10 {dimension_numbers = #tpu.dot_dimension_numbers<[1], [0], [0], [1], [0, 0, 1, 1], [], []>} : vector<4x128xbf16>, vector<128x128xbf16>, vector<4x128xf32> -> vector<4x128xf32>
    %7 = vector.broadcast %3 : vector<1x128xf32> to vector<4x128xf32>
    %8 = arith.addf %6, %7 : vector<4x128xf32>
    %cst_11 = arith.constant 3.000000e+00 : f32
    %9 = vector.broadcast %cst_11 : f32 to vector<4x128xf32>
    %10 = arith.addf %8, %9 : vector<4x128xf32>
    %cst_12 = arith.constant 0.000000e+00 : f32
    %cst_13 = arith.constant 6.000000e+00 : f32
    %11 = vector.broadcast %cst_12 : f32 to vector<4x128xf32>
    %12 = arith.maximumf %11, %10 : vector<4x128xf32>
    %13 = vector.broadcast %cst_13 : f32 to vector<4x128xf32>
    %14 = arith.minimumf %13, %12 : vector<4x128xf32>
    %15 = arith.mulf %8, %14 : vector<4x128xf32>
    %cst_14 = arith.constant 0.166666672 : f32
    %16 = vector.broadcast %cst_14 : f32 to vector<4x128xf32>
    %17 = arith.mulf %15, %16 : vector<4x128xf32>
    %c2 = arith.constant 2 : index
    %c2_15 = arith.constant 2 : index
    %c0_16 = arith.constant 0 : index
    %18 = vector.load %arg13[%c2, %c2_15, %c0_16] : memref<8x8x128xf32, #tpu.memory_space<vmem>>, vector<1x4x128xf32>
    %19 = vector.shape_cast %18 : vector<1x4x128xf32> to vector<4x128xf32>
    %20 = vector.shape_cast %17 : vector<4x128xf32> to vector<1x4x128xf32>
    tpu.vector_store %arg13[%c2, %c2_15, %c0_16], %20 {strides = array<i32>} : memref<8x8x128xf32, #tpu.memory_space<vmem>>, vector<1x4x128xf32>,
    %c0_17 = arith.constant 0 : index
    %c1 = arith.constant 1 : index
    %c0_18 = arith.constant 0 : index
    %c0_19 = arith.constant 0 : index
    %21 = vector.load %arg1[%c0_17, %c1, %c0_18, %c0_19] : memref<1x4x4x128xbf16, #tpu.memory_space<vmem>>, vector<1x1x4x128xbf16>
    %22 = vector.shape_cast %21 : vector<1x1x4x128xbf16> to vector<4x128xbf16>
    %cst_20 = arith.constant dense<0.000000e+00> : vector<4x128xf32>
    %23 = tpu.matmul %22, %2, %cst_20 {dimension_numbers = #tpu.dot_dimension_numbers<[1], [0], [0], [1], [0, 0, 1, 1], [], []>} : vector<4x128xbf16>, vector<128x128xbf16>, vector<4x128xf32> -> vector<4x128xf32>
    %24 = vector.broadcast %3 : vector<1x128xf32> to vector<4x128xf32>
    %25 = arith.addf %23, %24 : vector<4x128xf32>
    %cst_21 = arith.constant 3.000000e+00 : f32
    %26 = vector.broadcast %cst_21 : f32 to vector<4x128xf32>
    %27 = arith.addf %25, %26 : vector<4x128xf32>
    %cst_22 = arith.constant 0.000000e+00 : f32
    %cst_23 = arith.constant 6.000000e+00 : f32
    %28 = vector.broadcast %cst_22 : f32 to vector<4x128xf32>
    %29 = arith.maximumf %28, %27 : vector<4x128xf32>
    %30 = vector.broadcast %cst_23 : f32 to vector<4x128xf32>
    %31 = arith.minimumf %30, %29 : vector<4x128xf32>
    %32 = arith.mulf %25, %31 : vector<4x128xf32>
    %cst_24 = arith.constant 0.166666672 : f32
    %33 = vector.broadcast %cst_24 : f32 to vector<4x128xf32>
    %34 = arith.mulf %32, %33 : vector<4x128xf32>
    %c3 = arith.constant 3 : index
    %c2_25 = arith.constant 2 : index
    %c0_26 = arith.constant 0 : index
    %35 = vector.load %arg13[%c3, %c2_25, %c0_26] : memref<8x8x128xf32, #tpu.memory_space<vmem>>, vector<1x4x128xf32>
    %36 = vector.shape_cast %35 : vector<1x4x128xf32> to vector<4x128xf32>
    %37 = vector.shape_cast %34 : vector<4x128xf32> to vector<1x4x128xf32>
    tpu.vector_store %arg13[%c3, %c2_25, %c0_26], %37 {strides = array<i32>} : memref<8x8x128xf32, #tpu.memory_space<vmem>>, vector<1x4x128xf32>,
    %c0_27 = arith.constant 0 : index
    %c2_28 = arith.constant 2 : index
    %c0_29 = arith.constant 0 : index
    %c0_30 = arith.constant 0 : index
    %38 = vector.load %arg1[%c0_27, %c2_28, %c0_29, %c0_30] : memref<1x4x4x128xbf16, #tpu.memory_space<vmem>>, vector<1x1x4x128xbf16>
    %39 = vector.shape_cast %38 : vector<1x1x4x128xbf16> to vector<4x128xbf16>
    %cst_31 = arith.constant dense<0.000000e+00> : vector<4x128xf32>
    %40 = tpu.matmul %39, %2, %cst_31 {dimension_numbers = #tpu.dot_dimension_numbers<[1], [0], [0], [1], [0, 0, 1, 1], [], []>} : vector<4x128xbf16>, vector<128x128xbf16>, vector<4x128xf32> -> vector<4x128xf32>
    %41 = vector.broadcast %3 : vector<1x128xf32> to vector<4x128xf32>
    %42 = arith.addf %40, %41 : vector<4x128xf32>
    %cst_32 = arith.constant 3.000000e+00 : f32
    %43 = vector.broadcast %cst_32 : f32 to vector<4x128xf32>
    %44 = arith.addf %42, %43 : vector<4x128xf32>
    %cst_33 = arith.constant 0.000000e+00 : f32
    %cst_34 = arith.constant 6.000000e+00 : f32
    %45 = vector.broadcast %cst_33 : f32 to vector<4x128xf32>
    %46 = arith.maximumf %45, %44 : vector<4x128xf32>
    %47 = vector.broadcast %cst_34 : f32 to vector<4x128xf32>
    %48 = arith.minimumf %47, %46 : vector<4x128xf32>
    %49 = arith.mulf %42, %48 : vector<4x128xf32>
    %cst_35 = arith.constant 0.166666672 : f32
    %50 = vector.broadcast %cst_35 : f32 to vector<4x128xf32>
    %51 = arith.mulf %49, %50 : vector<4x128xf32>
    %c4 = arith.constant 4 : index
    %c2_36 = arith.constant 2 : index
    %c0_37 = arith.constant 0 : index
    %52 = vector.load %arg13[%c4, %c2_36, %c0_37] : memref<8x8x128xf32, #tpu.memory_space<vmem>>, vector<1x4x128xf32>
    %53 = vector.shape_cast %52 : vector<1x4x128xf32> to vector<4x128xf32>
    %54 = vector.shape_cast %51 : vector<4x128xf32> to vector<1x4x128xf32>
    tpu.vector_store %arg13[%c4, %c2_36, %c0_37], %54 {strides = array<i32>} : memref<8x8x128xf32, #tpu.memory_space<vmem>>, vector<1x4x128xf32>,
    %c0_38 = arith.constant 0 : index
    %c3_39 = arith.constant 3 : index
    %c0_40 = arith.constant 0 : index
    %c0_41 = arith.constant 0 : index
    %55 = vector.load %arg1[%c0_38, %c3_39, %c0_40, %c0_41] : memref<1x4x4x128xbf16, #tpu.memory_space<vmem>>, vector<1x1x4x128xbf16>
    %56 = vector.shape_cast %55 : vector<1x1x4x128xbf16> to vector<4x128xbf16>
    %cst_42 = arith.constant dense<0.000000e+00> : vector<4x128xf32>
    %57 = tpu.matmul %56, %2, %cst_42 {dimension_numbers = #tpu.dot_dimension_numbers<[1], [0], [0], [1], [0, 0, 1, 1], [], []>} : vector<4x128xbf16>, vector<128x128xbf16>, vector<4x128xf32> -> vector<4x128xf32>
    %58 = vector.broadcast %3 : vector<1x128xf32> to vector<4x128xf32>
    %59 = arith.addf %57, %58 : vector<4x128xf32>
    %cst_43 = arith.constant 3.000000e+00 : f32
    %60 = vector.broadcast %cst_43 : f32 to vector<4x128xf32>
    %61 = arith.addf %59, %60 : vector<4x128xf32>
    %cst_44 = arith.constant 0.000000e+00 : f32
    %cst_45 = arith.constant 6.000000e+00 : f32
    %62 = vector.broadcast %cst_44 : f32 to vector<4x128xf32>
    %63 = arith.maximumf %62, %61 : vector<4x128xf32>
    %64 = vector.broadcast %cst_45 : f32 to vector<4x128xf32>
    %65 = arith.minimumf %64, %63 : vector<4x128xf32>
    %66 = arith.mulf %59, %65 : vector<4x128xf32>
    %cst_46 = arith.constant 0.166666672 : f32
    %67 = vector.broadcast %cst_46 : f32 to vector<4x128xf32>
    %68 = arith.mulf %66, %67 : vector<4x128xf32>
    %c5 = arith.constant 5 : index
    %c2_47 = arith.constant 2 : index
    %c0_48 = arith.constant 0 : index
    %69 = vector.load %arg13[%c5, %c2_47, %c0_48] : memref<8x8x128xf32, #tpu.memory_space<vmem>>, vector<1x4x128xf32>
    %70 = vector.shape_cast %69 : vector<1x4x128xf32> to vector<4x128xf32>
    %71 = vector.shape_cast %68 : vector<4x128xf32> to vector<1x4x128xf32>
    tpu.vector_store %arg13[%c5, %c2_47, %c0_48], %71 {strides = array<i32>} : memref<8x8x128xf32, #tpu.memory_space<vmem>>, vector<1x4x128xf32>,
    %c0_49 = arith.constant 0 : index
    %c0_50 = arith.constant 0 : index
    %72 = vector.load %arg4[%c0_49, %c0_50] : memref<25x128xf32, #tpu.memory_space<vmem>>, vector<25x128xf32>
    %cst_51 = arith.constant 0.000000e+00 : f32
    %73 = vector.broadcast %cst_51 : f32 to vector<4x4x128xf32>
    %c0_52 = arith.constant 0 : index
    %c0_53 = arith.constant 0 : index
    %c0_54 = arith.constant 0 : index
    %74 = vector.load %arg13[%c0_52, %c0_53, %c0_54] : memref<8x8x128xf32, #tpu.memory_space<vmem>>, vector<4x4x128xf32>
    %75 = vector.extract_strided_slice %72 {offsets = [0, 0], sizes = [1, 128], strides = [1, 1]} : vector<25x128xf32> to vector<1x128xf32>
    %76 = vector.shape_cast %75 : vector<1x128xf32> to vector<1x1x128xf32>
    %77 = vector.broadcast %76 : vector<1x1x128xf32> to vector<4x4x128xf32>
    %78 = arith.mulf %74, %77 : vector<4x4x128xf32>
    %79 = arith.addf %73, %78 : vector<4x4x128xf32>
    %c0_55 = arith.constant 0 : index
    %c1_56 = arith.constant 1 : index
    %c0_57 = arith.constant 0 : index
    %80 = vector.load %arg13[%c0_55, %c1_56, %c0_57] : memref<8x8x128xf32, #tpu.memory_space<vmem>>, vector<4x4x128xf32>
    %81 = vector.extract_strided_slice %72 {offsets = [1, 0], sizes = [1, 128], strides = [1, 1]} : vector<25x128xf32> to vector<1x128xf32>
    %82 = vector.shape_cast %81 : vector<1x128xf32> to vector<1x1x128xf32>
    %83 = vector.broadcast %82 : vector<1x1x128xf32> to vector<4x4x128xf32>
    %84 = arith.mulf %80, %83 : vector<4x4x128xf32>
    %85 = arith.addf %79, %84 : vector<4x4x128xf32>
    %c0_58 = arith.constant 0 : index
    %c2_59 = arith.constant 2 : index
    %c0_60 = arith.constant 0 : index
    %86 = vector.load %arg13[%c0_58, %c2_59, %c0_60] : memref<8x8x128xf32, #tpu.memory_space<vmem>>, vector<4x4x128xf32>
    %87 = vector.extract_strided_slice %72 {offsets = [2, 0], sizes = [1, 128], strides = [1, 1]} : vector<25x128xf32> to vector<1x128xf32>
    %88 = vector.shape_cast %87 : vector<1x128xf32> to vector<1x1x128xf32>
    %89 = vector.broadcast %88 : vector<1x1x128xf32> to vector<4x4x128xf32>
    %90 = arith.mulf %86, %89 : vector<4x4x128xf32>
    %91 = arith.addf %85, %90 : vector<4x4x128xf32>
    %c0_61 = arith.constant 0 : index
    %c3_62 = arith.constant 3 : index
    %c0_63 = arith.constant 0 : index
    %92 = vector.load %arg13[%c0_61, %c3_62, %c0_63] : memref<8x8x128xf32, #tpu.memory_space<vmem>>, vector<4x4x128xf32>
    %93 = vector.extract_strided_slice %72 {offsets = [3, 0], sizes = [1, 128], strides = [1, 1]} : vector<25x128xf32> to vector<1x128xf32>
    %94 = vector.shape_cast %93 : vector<1x128xf32> to vector<1x1x128xf32>
    %95 = vector.broadcast %94 : vector<1x1x128xf32> to vector<4x4x128xf32>
    %96 = arith.mulf %92, %95 : vector<4x4x128xf32>
    %97 = arith.addf %91, %96 : vector<4x4x128xf32>
    %c0_64 = arith.constant 0 : index
    %c4_65 = arith.constant 4 : index
    %c0_66 = arith.constant 0 : index
    %98 = vector.load %arg13[%c0_64, %c4_65, %c0_66] : memref<8x8x128xf32, #tpu.memory_space<vmem>>, vector<4x4x128xf32>
    %99 = vector.extract_strided_slice %72 {offsets = [4, 0], sizes = [1, 128], strides = [1, 1]} : vector<25x128xf32> to vector<1x128xf32>
    %100 = vector.shape_cast %99 : vector<1x128xf32> to vector<1x1x128xf32>
    %101 = vector.broadcast %100 : vector<1x1x128xf32> to vector<4x4x128xf32>
    %102 = arith.mulf %98, %101 : vector<4x4x128xf32>
    %103 = arith.addf %97, %102 : vector<4x4x128xf32>
    %c1_67 = arith.constant 1 : index
    %c0_68 = arith.constant 0 : index
    %c0_69 = arith.constant 0 : index
    %104 = vector.load %arg13[%c1_67, %c0_68, %c0_69] : memref<8x8x128xf32, #tpu.memory_space<vmem>>, vector<4x4x128xf32>
    %105 = vector.extract_strided_slice %72 {offsets = [5, 0], sizes = [1, 128], strides = [1, 1]} : vector<25x128xf32> to vector<1x128xf32>
    %106 = vector.shape_cast %105 : vector<1x128xf32> to vector<1x1x128xf32>
    %107 = vector.broadcast %106 : vector<1x1x128xf32> to vector<4x4x128xf32>
    %108 = arith.mulf %104, %107 : vector<4x4x128xf32>
    %109 = arith.addf %103, %108 : vector<4x4x128xf32>
    %c1_70 = arith.constant 1 : index
    %c1_71 = arith.constant 1 : index
    %c0_72 = arith.constant 0 : index
    %110 = vector.load %arg13[%c1_70, %c1_71, %c0_72] : memref<8x8x128xf32, #tpu.memory_space<vmem>>, vector<4x4x128xf32>
    %111 = vector.extract_strided_slice %72 {offsets = [6, 0], sizes = [1, 128], strides = [1, 1]} : vector<25x128xf32> to vector<1x128xf32>
    %112 = vector.shape_cast %111 : vector<1x128xf32> to vector<1x1x128xf32>
    %113 = vector.broadcast %112 : vector<1x1x128xf32> to vector<4x4x128xf32>
    %114 = arith.mulf %110, %113 : vector<4x4x128xf32>
    %115 = arith.addf %109, %114 : vector<4x4x128xf32>
    %c1_73 = arith.constant 1 : index
    %c2_74 = arith.constant 2 : index
    %c0_75 = arith.constant 0 : index
    %116 = vector.load %arg13[%c1_73, %c2_74, %c0_75] : memref<8x8x128xf32, #tpu.memory_space<vmem>>, vector<4x4x128xf32>
    %117 = vector.extract_strided_slice %72 {offsets = [7, 0], sizes = [1, 128], strides = [1, 1]} : vector<25x128xf32> to vector<1x128xf32>
    %118 = vector.shape_cast %117 : vector<1x128xf32> to vector<1x1x128xf32>
    %119 = vector.broadcast %118 : vector<1x1x128xf32> to vector<4x4x128xf32>
    %120 = arith.mulf %116, %119 : vector<4x4x128xf32>
    %121 = arith.addf %115, %120 : vector<4x4x128xf32>
    %c1_76 = arith.constant 1 : index
    %c3_77 = arith.constant 3 : index
    %c0_78 = arith.constant 0 : index
    %122 = vector.load %arg13[%c1_76, %c3_77, %c0_78] : memref<8x8x128xf32, #tpu.memory_space<vmem>>, vector<4x4x128xf32>
    %123 = vector.extract_strided_slice %72 {offsets = [8, 0], sizes = [1, 128], strides = [1, 1]} : vector<25x128xf32> to vector<1x128xf32>
    %124 = vector.shape_cast %123 : vector<1x128xf32> to vector<1x1x128xf32>
    %125 = vector.broadcast %124 : vector<1x1x128xf32> to vector<4x4x128xf32>
    %126 = arith.mulf %122, %125 : vector<4x4x128xf32>
    %127 = arith.addf %121, %126 : vector<4x4x128xf32>
    %c1_79 = arith.constant 1 : index
    %c4_80 = arith.constant 4 : index
    %c0_81 = arith.constant 0 : index
    %128 = vector.load %arg13[%c1_79, %c4_80, %c0_81] : memref<8x8x128xf32, #tpu.memory_space<vmem>>, vector<4x4x128xf32>
    %129 = vector.extract_strided_slice %72 {offsets = [9, 0], sizes = [1, 128], strides = [1, 1]} : vector<25x128xf32> to vector<1x128xf32>
    %130 = vector.shape_cast %129 : vector<1x128xf32> to vector<1x1x128xf32>
    %131 = vector.broadcast %130 : vector<1x1x128xf32> to vector<4x4x128xf32>
    %132 = arith.mulf %128, %131 : vector<4x4x128xf32>
    %133 = arith.addf %127, %132 : vector<4x4x128xf32>
    %c2_82 = arith.constant 2 : index
    %c0_83 = arith.constant 0 : index
    %c0_84 = arith.constant 0 : index
    %134 = vector.load %arg13[%c2_82, %c0_83, %c0_84] : memref<8x8x128xf32, #tpu.memory_space<vmem>>, vector<4x4x128xf32>
    %135 = vector.extract_strided_slice %72 {offsets = [10, 0], sizes = [1, 128], strides = [1, 1]} : vector<25x128xf32> to vector<1x128xf32>
    %136 = vector.shape_cast %135 : vector<1x128xf32> to vector<1x1x128xf32>
    %137 = vector.broadcast %136 : vector<1x1x128xf32> to vector<4x4x128xf32>
    %138 = arith.mulf %134, %137 : vector<4x4x128xf32>
    %139 = arith.addf %133, %138 : vector<4x4x128xf32>
    %c2_85 = arith.constant 2 : index
    %c1_86 = arith.constant 1 : index
    %c0_87 = arith.constant 0 : index
    %140 = vector.load %arg13[%c2_85, %c1_86, %c0_87] : memref<8x8x128xf32, #tpu.memory_space<vmem>>, vector<4x4x128xf32>
    %141 = vector.extract_strided_slice %72 {offsets = [11, 0], sizes = [1, 128], strides = [1, 1]} : vector<25x128xf32> to vector<1x128xf32>
    %142 = vector.shape_cast %141 : vector<1x128xf32> to vector<1x1x128xf32>
    %143 = vector.broadcast %142 : vector<1x1x128xf32> to vector<4x4x128xf32>
    %144 = arith.mulf %140, %143 : vector<4x4x128xf32>
    %145 = arith.addf %139, %144 : vector<4x4x128xf32>
    %c2_88 = arith.constant 2 : index
    %c2_89 = arith.constant 2 : index
    %c0_90 = arith.constant 0 : index
    %146 = vector.load %arg13[%c2_88, %c2_89, %c0_90] : memref<8x8x128xf32, #tpu.memory_space<vmem>>, vector<4x4x128xf32>
    %147 = vector.extract_strided_slice %72 {offsets = [12, 0], sizes = [1, 128], strides = [1, 1]} : vector<25x128xf32> to vector<1x128xf32>
    %148 = vector.shape_cast %147 : vector<1x128xf32> to vector<1x1x128xf32>
    %149 = vector.broadcast %148 : vector<1x1x128xf32> to vector<4x4x128xf32>
    %150 = arith.mulf %146, %149 : vector<4x4x128xf32>
    %151 = arith.addf %145, %150 : vector<4x4x128xf32>
    %c2_91 = arith.constant 2 : index
    %c3_92 = arith.constant 3 : index
    %c0_93 = arith.constant 0 : index
    %152 = vector.load %arg13[%c2_91, %c3_92, %c0_93] : memref<8x8x128xf32, #tpu.memory_space<vmem>>, vector<4x4x128xf32>
    %153 = vector.extract_strided_slice %72 {offsets = [13, 0], sizes = [1, 128], strides = [1, 1]} : vector<25x128xf32> to vector<1x128xf32>
    %154 = vector.shape_cast %153 : vector<1x128xf32> to vector<1x1x128xf32>
    %155 = vector.broadcast %154 : vector<1x1x128xf32> to vector<4x4x128xf32>
    %156 = arith.mulf %152, %155 : vector<4x4x128xf32>
    %157 = arith.addf %151, %156 : vector<4x4x128xf32>
    %c2_94 = arith.constant 2 : index
    %c4_95 = arith.constant 4 : index
    %c0_96 = arith.constant 0 : index
    %158 = vector.load %arg13[%c2_94, %c4_95, %c0_96] : memref<8x8x128xf32, #tpu.memory_space<vmem>>, vector<4x4x128xf32>
    %159 = vector.extract_strided_slice %72 {offsets = [14, 0], sizes = [1, 128], strides = [1, 1]} : vector<25x128xf32> to vector<1x128xf32>
    %160 = vector.shape_cast %159 : vector<1x128xf32> to vector<1x1x128xf32>
    %161 = vector.broadcast %160 : vector<1x1x128xf32> to vector<4x4x128xf32>
    %162 = arith.mulf %158, %161 : vector<4x4x128xf32>
    %163 = arith.addf %157, %162 : vector<4x4x128xf32>
    %c3_97 = arith.constant 3 : index
    %c0_98 = arith.constant 0 : index
    %c0_99 = arith.constant 0 : index
    %164 = vector.load %arg13[%c3_97, %c0_98, %c0_99] : memref<8x8x128xf32, #tpu.memory_space<vmem>>, vector<4x4x128xf32>
    %165 = vector.extract_strided_slice %72 {offsets = [15, 0], sizes = [1, 128], strides = [1, 1]} : vector<25x128xf32> to vector<1x128xf32>
    %166 = vector.shape_cast %165 : vector<1x128xf32> to vector<1x1x128xf32>
    %167 = vector.broadcast %166 : vector<1x1x128xf32> to vector<4x4x128xf32>
    %168 = arith.mulf %164, %167 : vector<4x4x128xf32>
    %169 = arith.addf %163, %168 : vector<4x4x128xf32>
    %c3_100 = arith.constant 3 : index
    %c1_101 = arith.constant 1 : index
    %c0_102 = arith.constant 0 : index
    %170 = vector.load %arg13[%c3_100, %c1_101, %c0_102] : memref<8x8x128xf32, #tpu.memory_space<vmem>>, vector<4x4x128xf32>
    %171 = vector.extract_strided_slice %72 {offsets = [16, 0], sizes = [1, 128], strides = [1, 1]} : vector<25x128xf32> to vector<1x128xf32>
    %172 = vector.shape_cast %171 : vector<1x128xf32> to vector<1x1x128xf32>
    %173 = vector.broadcast %172 : vector<1x1x128xf32> to vector<4x4x128xf32>
    %174 = arith.mulf %170, %173 : vector<4x4x128xf32>
    %175 = arith.addf %169, %174 : vector<4x4x128xf32>
    %c3_103 = arith.constant 3 : index
    %c2_104 = arith.constant 2 : index
    %c0_105 = arith.constant 0 : index
    %176 = vector.load %arg13[%c3_103, %c2_104, %c0_105] : memref<8x8x128xf32, #tpu.memory_space<vmem>>, vector<4x4x128xf32>
    %177 = vector.extract_strided_slice %72 {offsets = [17, 0], sizes = [1, 128], strides = [1, 1]} : vector<25x128xf32> to vector<1x128xf32>
    %178 = vector.shape_cast %177 : vector<1x128xf32> to vector<1x1x128xf32>
    %179 = vector.broadcast %178 : vector<1x1x128xf32> to vector<4x4x128xf32>
    %180 = arith.mulf %176, %179 : vector<4x4x128xf32>
    %181 = arith.addf %175, %180 : vector<4x4x128xf32>
    %c3_106 = arith.constant 3 : index
    %c3_107 = arith.constant 3 : index
    %c0_108 = arith.constant 0 : index
    %182 = vector.load %arg13[%c3_106, %c3_107, %c0_108] : memref<8x8x128xf32, #tpu.memory_space<vmem>>, vector<4x4x128xf32>
    %183 = vector.extract_strided_slice %72 {offsets = [18, 0], sizes = [1, 128], strides = [1, 1]} : vector<25x128xf32> to vector<1x128xf32>
    %184 = vector.shape_cast %183 : vector<1x128xf32> to vector<1x1x128xf32>
    %185 = vector.broadcast %184 : vector<1x1x128xf32> to vector<4x4x128xf32>
    %186 = arith.mulf %182, %185 : vector<4x4x128xf32>
    %187 = arith.addf %181, %186 : vector<4x4x128xf32>
    %c3_109 = arith.constant 3 : index
    %c4_110 = arith.constant 4 : index
    %c0_111 = arith.constant 0 : index
    %188 = vector.load %arg13[%c3_109, %c4_110, %c0_111] : memref<8x8x128xf32, #tpu.memory_space<vmem>>, vector<4x4x128xf32>
    %189 = vector.extract_strided_slice %72 {offsets = [19, 0], sizes = [1, 128], strides = [1, 1]} : vector<25x128xf32> to vector<1x128xf32>
    %190 = vector.shape_cast %189 : vector<1x128xf32> to vector<1x1x128xf32>
    %191 = vector.broadcast %190 : vector<1x1x128xf32> to vector<4x4x128xf32>
    %192 = arith.mulf %188, %191 : vector<4x4x128xf32>
    %193 = arith.addf %187, %192 : vector<4x4x128xf32>
    %c4_112 = arith.constant 4 : index
    %c0_113 = arith.constant 0 : index
    %c0_114 = arith.constant 0 : index
    %194 = vector.load %arg13[%c4_112, %c0_113, %c0_114] : memref<8x8x128xf32, #tpu.memory_space<vmem>>, vector<4x4x128xf32>
    %195 = vector.extract_strided_slice %72 {offsets = [20, 0], sizes = [1, 128], strides = [1, 1]} : vector<25x128xf32> to vector<1x128xf32>
    %196 = vector.shape_cast %195 : vector<1x128xf32> to vector<1x1x128xf32>
    %197 = vector.broadcast %196 : vector<1x1x128xf32> to vector<4x4x128xf32>
    %198 = arith.mulf %194, %197 : vector<4x4x128xf32>
    %199 = arith.addf %193, %198 : vector<4x4x128xf32>
    %c4_115 = arith.constant 4 : index
    %c1_116 = arith.constant 1 : index
    %c0_117 = arith.constant 0 : index
    %200 = vector.load %arg13[%c4_115, %c1_116, %c0_117] : memref<8x8x128xf32, #tpu.memory_space<vmem>>, vector<4x4x128xf32>
    %201 = vector.extract_strided_slice %72 {offsets = [21, 0], sizes = [1, 128], strides = [1, 1]} : vector<25x128xf32> to vector<1x128xf32>
    %202 = vector.shape_cast %201 : vector<1x128xf32> to vector<1x1x128xf32>
    %203 = vector.broadcast %202 : vector<1x1x128xf32> to vector<4x4x128xf32>
    %204 = arith.mulf %200, %203 : vector<4x4x128xf32>
    %205 = arith.addf %199, %204 : vector<4x4x128xf32>
    %c4_118 = arith.constant 4 : index
    %c2_119 = arith.constant 2 : index
    %c0_120 = arith.constant 0 : index
    %206 = vector.load %arg13[%c4_118, %c2_119, %c0_120] : memref<8x8x128xf32, #tpu.memory_space<vmem>>, vector<4x4x128xf32>
    %207 = vector.extract_strided_slice %72 {offsets = [22, 0], sizes = [1, 128], strides = [1, 1]} : vector<25x128xf32> to vector<1x128xf32>
    %208 = vector.shape_cast %207 : vector<1x128xf32> to vector<1x1x128xf32>
    %209 = vector.broadcast %208 : vector<1x1x128xf32> to vector<4x4x128xf32>
    %210 = arith.mulf %206, %209 : vector<4x4x128xf32>
    %211 = arith.addf %205, %210 : vector<4x4x128xf32>
    %c4_121 = arith.constant 4 : index
    %c3_122 = arith.constant 3 : index
    %c0_123 = arith.constant 0 : index
    %212 = vector.load %arg13[%c4_121, %c3_122, %c0_123] : memref<8x8x128xf32, #tpu.memory_space<vmem>>, vector<4x4x128xf32>
    %213 = vector.extract_strided_slice %72 {offsets = [23, 0], sizes = [1, 128], strides = [1, 1]} : vector<25x128xf32> to vector<1x128xf32>
    %214 = vector.shape_cast %213 : vector<1x128xf32> to vector<1x1x128xf32>
    %215 = vector.broadcast %214 : vector<1x1x128xf32> to vector<4x4x128xf32>
    %216 = arith.mulf %212, %215 : vector<4x4x128xf32>
    %217 = arith.addf %211, %216 : vector<4x4x128xf32>
    %c4_124 = arith.constant 4 : index
    %c4_125 = arith.constant 4 : index
    %c0_126 = arith.constant 0 : index
    %218 = vector.load %arg13[%c4_124, %c4_125, %c0_126] : memref<8x8x128xf32, #tpu.memory_space<vmem>>, vector<4x4x128xf32>
    %219 = vector.extract_strided_slice %72 {offsets = [24, 0], sizes = [1, 128], strides = [1, 1]} : vector<25x128xf32> to vector<1x128xf32>
    %220 = vector.shape_cast %219 : vector<1x128xf32> to vector<1x1x128xf32>
    %221 = vector.broadcast %220 : vector<1x1x128xf32> to vector<4x4x128xf32>
    %222 = arith.mulf %218, %221 : vector<4x4x128xf32>
    %223 = arith.addf %217, %222 : vector<4x4x128xf32>
    %c0_127 = arith.constant 0 : index
    %c0_128 = arith.constant 0 : index
    %224 = vector.load %arg5[%c0_127, %c0_128] : memref<1x128xf32, #tpu.memory_space<vmem>>, vector<1x128xf32>
    %225 = vector.shape_cast %224 : vector<1x128xf32> to vector<1x1x128xf32>
    %226 = vector.broadcast %225 : vector<1x1x128xf32> to vector<4x4x128xf32>
    %227 = arith.addf %223, %226 : vector<4x4x128xf32>
    %cst_129 = arith.constant 3.000000e+00 : f32
    %228 = vector.broadcast %cst_129 : f32 to vector<4x4x128xf32>
    %229 = arith.addf %227, %228 : vector<4x4x128xf32>
    %cst_130 = arith.constant 0.000000e+00 : f32
    %cst_131 = arith.constant 6.000000e+00 : f32
    %230 = vector.broadcast %cst_130 : f32 to vector<4x4x128xf32>
    %231 = arith.maximumf %230, %229 : vector<4x4x128xf32>
    %232 = vector.broadcast %cst_131 : f32 to vector<4x4x128xf32>
    %233 = arith.minimumf %232, %231 : vector<4x4x128xf32>
    %234 = arith.mulf %227, %233 : vector<4x4x128xf32>
    %cst_132 = arith.constant 0.166666672 : f32
    %235 = vector.broadcast %cst_132 : f32 to vector<4x4x128xf32>
    %236 = arith.mulf %234, %235 : vector<4x4x128xf32>
    %cst_133 = arith.constant dense<0.000000e+00> : vector<128xf32>
    %237 = vector.multi_reduction <add>, %236, %cst_133 [0, 1] : vector<4x4x128xf32> to vector<128xf32>
    %238 = vector.shape_cast %237 : vector<128xf32> to vector<1x1x128xf32>
    %cst_134 = arith.constant 1.600000e+01 : f32
    %239 = vector.broadcast %cst_134 : f32 to vector<1x1x128xf32>
    %240 = arith.divf %238, %239 : vector<1x1x128xf32>
    %241 = vector.shape_cast %240 : vector<1x1x128xf32> to vector<1x128xf32>
    %242 = arith.truncf %241 : vector<1x128xf32> to vector<1x128xbf16>
    %c0_135 = arith.constant 0 : index
    %c0_136 = arith.constant 0 : index
    %243 = vector.load %arg6[%c0_135, %c0_136] : memref<128x128xbf16, #tpu.memory_space<vmem>>, vector<128x128xbf16>
    %cst_137 = arith.constant dense<0.000000e+00> : vector<1x128xf32>
    %244 = tpu.matmul %242, %243, %cst_137 {dimension_numbers = #tpu.dot_dimension_numbers<[1], [0], [0], [1], [0, 0, 1, 1], [], []>} : vector<1x128xbf16>, vector<128x128xbf16>, vector<1x128xf32> -> vector<1x128xf32>
    %c0_138 = arith.constant 0 : index
    %c0_139 = arith.constant 0 : index
    %245 = vector.load %arg7[%c0_138, %c0_139] : memref<1x128xf32, #tpu.memory_space<vmem>>, vector<1x128xf32>
    %246 = arith.addf %244, %245 : vector<1x128xf32>
    %cst_140 = arith.constant 0.000000e+00 : f32
    %247 = vector.broadcast %cst_140 : f32 to vector<1x128xf32>
    %248 = arith.maximumf %246, %247 : vector<1x128xf32>
    %249 = arith.truncf %248 : vector<1x128xf32> to vector<1x128xbf16>
    %c0_141 = arith.constant 0 : index
    %c0_142 = arith.constant 0 : index
    %250 = vector.load %arg8[%c0_141, %c0_142] : memref<128x128xbf16, #tpu.memory_space<vmem>>, vector<128x128xbf16>
    %cst_143 = arith.constant dense<0.000000e+00> : vector<1x128xf32>
    %251 = tpu.matmul %249, %250, %cst_143 {dimension_numbers = #tpu.dot_dimension_numbers<[1], [0], [0], [1], [0, 0, 1, 1], [], []>} : vector<1x128xbf16>, vector<128x128xbf16>, vector<1x128xf32> -> vector<1x128xf32>
    %c0_144 = arith.constant 0 : index
    %c0_145 = arith.constant 0 : index
    %252 = vector.load %arg9[%c0_144, %c0_145] : memref<1x128xf32, #tpu.memory_space<vmem>>, vector<1x128xf32>
    %253 = arith.addf %251, %252 : vector<1x128xf32>
    %cst_146 = arith.constant 0.166666672 : f32
    %254 = vector.broadcast %cst_146 : f32 to vector<1x128xf32>
    %255 = arith.mulf %253, %254 : vector<1x128xf32>
    %cst_147 = arith.constant 5.000000e-01 : f32
    %256 = vector.broadcast %cst_147 : f32 to vector<1x128xf32>
    %257 = arith.addf %255, %256 : vector<1x128xf32>
    %cst_148 = arith.constant 0.000000e+00 : f32
    %cst_149 = arith.constant 1.000000e+00 : f32
    %258 = vector.broadcast %cst_148 : f32 to vector<1x128xf32>
    %259 = arith.maximumf %258, %257 : vector<1x128xf32>
    %260 = vector.broadcast %cst_149 : f32 to vector<1x128xf32>
    %261 = arith.minimumf %260, %259 : vector<1x128xf32>
    %262 = vector.shape_cast %261 : vector<1x128xf32> to vector<1x1x128xf32>
    %263 = vector.broadcast %262 : vector<1x1x128xf32> to vector<4x4x128xf32>
    %264 = arith.mulf %236, %263 : vector<4x4x128xf32>
    %c0_150 = arith.constant 0 : index
    %c0_151 = arith.constant 0 : index
    %265 = vector.load %arg10[%c0_150, %c0_151] : memref<128x128xbf16, #tpu.memory_space<vmem>>, vector<128x128xbf16>
    %c0_152 = arith.constant 0 : index
    %c0_153 = arith.constant 0 : index
    %266 = vector.load %arg11[%c0_152, %c0_153] : memref<1x128xf32, #tpu.memory_space<vmem>>, vector<1x128xf32>
    %267 = vector.extract_strided_slice %264 {offsets = [0, 0, 0], sizes = [1, 4, 128], strides = [1, 1, 1]} : vector<4x4x128xf32> to vector<1x4x128xf32>
    %268 = vector.shape_cast %267 : vector<1x4x128xf32> to vector<4x128xf32>
    %269 = arith.truncf %268 : vector<4x128xf32> to vector<4x128xbf16>
    %cst_154 = arith.constant dense<0.000000e+00> : vector<4x128xf32>
    %270 = tpu.matmul %269, %265, %cst_154 {dimension_numbers = #tpu.dot_dimension_numbers<[1], [0], [0], [1], [0, 0, 1, 1], [], []>} : vector<4x128xbf16>, vector<128x128xbf16>, vector<4x128xf32> -> vector<4x128xf32>
    %271 = vector.broadcast %266 : vector<1x128xf32> to vector<4x128xf32>
    %272 = arith.addf %270, %271 : vector<4x128xf32>
    %273 = arith.truncf %272 : vector<4x128xf32> to vector<4x128xbf16>
    %c0_155 = arith.constant 0 : index
    %c0_156 = arith.constant 0 : index
    %c0_157 = arith.constant 0 : index
    %c0_158 = arith.constant 0 : index
    %274 = vector.load %arg12[%c0_155, %c0_156, %c0_157, %c0_158] : memref<1x4x4x128xbf16, #tpu.memory_space<vmem>>, vector<1x1x4x128xbf16>
    %275 = vector.shape_cast %274 : vector<1x1x4x128xbf16> to vector<4x128xbf16>
    %276 = vector.shape_cast %273 : vector<4x128xbf16> to vector<1x1x4x128xbf16>
    tpu.vector_store %arg12[%c0_155, %c0_156, %c0_157, %c0_158], %276 {strides = array<i32>} : memref<1x4x4x128xbf16, #tpu.memory_space<vmem>>, vector<1x1x4x128xbf16>,
    %277 = vector.extract_strided_slice %264 {offsets = [1, 0, 0], sizes = [1, 4, 128], strides = [1, 1, 1]} : vector<4x4x128xf32> to vector<1x4x128xf32>
    %278 = vector.shape_cast %277 : vector<1x4x128xf32> to vector<4x128xf32>
    %279 = arith.truncf %278 : vector<4x128xf32> to vector<4x128xbf16>
    %cst_159 = arith.constant dense<0.000000e+00> : vector<4x128xf32>
    %280 = tpu.matmul %279, %265, %cst_159 {dimension_numbers = #tpu.dot_dimension_numbers<[1], [0], [0], [1], [0, 0, 1, 1], [], []>} : vector<4x128xbf16>, vector<128x128xbf16>, vector<4x128xf32> -> vector<4x128xf32>
    %281 = vector.broadcast %266 : vector<1x128xf32> to vector<4x128xf32>
    %282 = arith.addf %280, %281 : vector<4x128xf32>
    %283 = arith.truncf %282 : vector<4x128xf32> to vector<4x128xbf16>
    %c0_160 = arith.constant 0 : index
    %c1_161 = arith.constant 1 : index
    %c0_162 = arith.constant 0 : index
    %c0_163 = arith.constant 0 : index
    %284 = vector.load %arg12[%c0_160, %c1_161, %c0_162, %c0_163] : memref<1x4x4x128xbf16, #tpu.memory_space<vmem>>, vector<1x1x4x128xbf16>
    %285 = vector.shape_cast %284 : vector<1x1x4x128xbf16> to vector<4x128xbf16>
    %286 = vector.shape_cast %283 : vector<4x128xbf16> to vector<1x1x4x128xbf16>
    tpu.vector_store %arg12[%c0_160, %c1_161, %c0_162, %c0_163], %286 {strides = array<i32>} : memref<1x4x4x128xbf16, #tpu.memory_space<vmem>>, vector<1x1x4x128xbf16>,
    %287 = vector.extract_strided_slice %264 {offsets = [2, 0, 0], sizes = [1, 4, 128], strides = [1, 1, 1]} : vector<4x4x128xf32> to vector<1x4x128xf32>
    %288 = vector.shape_cast %287 : vector<1x4x128xf32> to vector<4x128xf32>
    %289 = arith.truncf %288 : vector<4x128xf32> to vector<4x128xbf16>
    %cst_164 = arith.constant dense<0.000000e+00> : vector<4x128xf32>
    %290 = tpu.matmul %289, %265, %cst_164 {dimension_numbers = #tpu.dot_dimension_numbers<[1], [0], [0], [1], [0, 0, 1, 1], [], []>} : vector<4x128xbf16>, vector<128x128xbf16>, vector<4x128xf32> -> vector<4x128xf32>
    %291 = vector.broadcast %266 : vector<1x128xf32> to vector<4x128xf32>
    %292 = arith.addf %290, %291 : vector<4x128xf32>
    %293 = arith.truncf %292 : vector<4x128xf32> to vector<4x128xbf16>
    %c0_165 = arith.constant 0 : index
    %c2_166 = arith.constant 2 : index
    %c0_167 = arith.constant 0 : index
    %c0_168 = arith.constant 0 : index
    %294 = vector.load %arg12[%c0_165, %c2_166, %c0_167, %c0_168] : memref<1x4x4x128xbf16, #tpu.memory_space<vmem>>, vector<1x1x4x128xbf16>
    %295 = vector.shape_cast %294 : vector<1x1x4x128xbf16> to vector<4x128xbf16>
    %296 = vector.shape_cast %293 : vector<4x128xbf16> to vector<1x1x4x128xbf16>
    tpu.vector_store %arg12[%c0_165, %c2_166, %c0_167, %c0_168], %296 {strides = array<i32>} : memref<1x4x4x128xbf16, #tpu.memory_space<vmem>>, vector<1x1x4x128xbf16>,
    %297 = vector.extract_strided_slice %264 {offsets = [3, 0, 0], sizes = [1, 4, 128], strides = [1, 1, 1]} : vector<4x4x128xf32> to vector<1x4x128xf32>
    %298 = vector.shape_cast %297 : vector<1x4x128xf32> to vector<4x128xf32>
    %299 = arith.truncf %298 : vector<4x128xf32> to vector<4x128xbf16>
    %cst_169 = arith.constant dense<0.000000e+00> : vector<4x128xf32>
    %300 = tpu.matmul %299, %265, %cst_169 {dimension_numbers = #tpu.dot_dimension_numbers<[1], [0], [0], [1], [0, 0, 1, 1], [], []>} : vector<4x128xbf16>, vector<128x128xbf16>, vector<4x128xf32> -> vector<4x128xf32>
    %301 = vector.broadcast %266 : vector<1x128xf32> to vector<4x128xf32>
    %302 = arith.addf %300, %301 : vector<4x128xf32>
    %303 = arith.truncf %302 : vector<4x128xf32> to vector<4x128xbf16>
    %c0_170 = arith.constant 0 : index
    %c3_171 = arith.constant 3 : index
    %c0_172 = arith.constant 0 : index
    %c0_173 = arith.constant 0 : index
    %304 = vector.load %arg12[%c0_170, %c3_171, %c0_172, %c0_173] : memref<1x4x4x128xbf16, #tpu.memory_space<vmem>>, vector<1x1x4x128xbf16>
    %305 = vector.shape_cast %304 : vector<1x1x4x128xbf16> to vector<4x128xbf16>
    %306 = vector.shape_cast %303 : vector<4x128xbf16> to vector<1x1x4x128xbf16>
    tpu.vector_store %arg12[%c0_170, %c3_171, %c0_172, %c0_173], %306 {strides = array<i32>} : memref<1x4x4x128xbf16, #tpu.memory_space<vmem>>, vector<1x1x4x128xbf16>,
    return
  }
  func.func @transform_0(%arg0: i32) -> (i32, i32, i32, i32) {
    %c0_i32 = arith.constant 0 : i32
    %c0_i32_0 = arith.constant 0 : i32
    %c0_i32_1 = arith.constant 0 : i32
    %c0_i32_2 = arith.constant 0 : i32
    return %arg0, %c0_i32, %c0_i32_0, %c0_i32_1 : i32, i32, i32, i32
  }
  func.func @transform_1(%arg0: i32) -> (i32, i32) {
    %c0_i32 = arith.constant 0 : i32
    %c0_i32_0 = arith.constant 0 : i32
    %c0_i32_1 = arith.constant 0 : i32
    return %c0_i32, %c0_i32_0 : i32, i32
  }
  func.func @transform_2(%arg0: i32) -> (i32, i32) {
    %c0_i32 = arith.constant 0 : i32
    %c0_i32_0 = arith.constant 0 : i32
    %c0_i32_1 = arith.constant 0 : i32
    return %c0_i32, %c0_i32_0 : i32, i32
  }
  func.func @transform_3(%arg0: i32) -> (i32, i32) {
    %c0_i32 = arith.constant 0 : i32
    %c0_i32_0 = arith.constant 0 : i32
    %c0_i32_1 = arith.constant 0 : i32
    return %c0_i32, %c0_i32_0 : i32, i32
  }
  func.func @transform_4(%arg0: i32) -> (i32, i32) {
    %c0_i32 = arith.constant 0 : i32
    %c0_i32_0 = arith.constant 0 : i32
    %c0_i32_1 = arith.constant 0 : i32
    return %c0_i32, %c0_i32_0 : i32, i32
  }
  func.func @transform_5(%arg0: i32) -> (i32, i32) {
    %c0_i32 = arith.constant 0 : i32
    %c0_i32_0 = arith.constant 0 : i32
    %c0_i32_1 = arith.constant 0 : i32
    return %c0_i32, %c0_i32_0 : i32, i32
  }
  func.func @transform_6(%arg0: i32) -> (i32, i32) {
    %c0_i32 = arith.constant 0 : i32
    %c0_i32_0 = arith.constant 0 : i32
    %c0_i32_1 = arith.constant 0 : i32
    return %c0_i32, %c0_i32_0 : i32, i32
  }
  func.func @transform_7(%arg0: i32) -> (i32, i32) {
    %c0_i32 = arith.constant 0 : i32
    %c0_i32_0 = arith.constant 0 : i32
    %c0_i32_1 = arith.constant 0 : i32
    return %c0_i32, %c0_i32_0 : i32, i32
  }
  func.func @transform_8(%arg0: i32) -> (i32, i32) {
    %c0_i32 = arith.constant 0 : i32
    %c0_i32_0 = arith.constant 0 : i32
    %c0_i32_1 = arith.constant 0 : i32
    return %c0_i32, %c0_i32_0 : i32, i32
  }
  func.func @transform_9(%arg0: i32) -> (i32, i32) {
    %c0_i32 = arith.constant 0 : i32
    %c0_i32_0 = arith.constant 0 : i32
    %c0_i32_1 = arith.constant 0 : i32
    return %c0_i32, %c0_i32_0 : i32, i32
  }
  func.func @transform_10(%arg0: i32) -> (i32, i32) {
    %c0_i32 = arith.constant 0 : i32
    %c0_i32_0 = arith.constant 0 : i32
    %c0_i32_1 = arith.constant 0 : i32
    return %c0_i32, %c0_i32_0 : i32, i32
  }
  func.func @transform_11(%arg0: i32) -> (i32, i32, i32, i32) {
    %c0_i32 = arith.constant 0 : i32
    %c0_i32_0 = arith.constant 0 : i32
    %c0_i32_1 = arith.constant 0 : i32
    %c0_i32_2 = arith.constant 0 : i32
    return %arg0, %c0_i32, %c0_i32_0, %c0_i32_1 : i32, i32, i32, i32
  }
}

module attributes {stable_mosaic.version = 11 : i64} {
  func.func @kernel(%arg0: i32, %arg1: memref<1x4x4x128xbf16, #tpu.memory_space<vmem>>, %arg2: memref<128x128xbf16, #tpu.memory_space<vmem>>, %arg3: memref<1x128xf32, #tpu.memory_space<vmem>>, %arg4: memref<9x128xf32, #tpu.memory_space<vmem>>, %arg5: memref<1x128xf32, #tpu.memory_space<vmem>>, %arg6: memref<128x128xbf16, #tpu.memory_space<vmem>>, %arg7: memref<1x128xf32, #tpu.memory_space<vmem>>, %arg8: memref<128x128xbf16, #tpu.memory_space<vmem>>, %arg9: memref<1x128xf32, #tpu.memory_space<vmem>>, %arg10: memref<128x128xbf16, #tpu.memory_space<vmem>>, %arg11: memref<1x128xf32, #tpu.memory_space<vmem>>, %arg12: memref<1x4x4x128xbf16, #tpu.memory_space<vmem>>, %arg13: memref<6x6x128xf32, #tpu.memory_space<vmem>>) attributes {dimension_semantics = [#tpu.dimension_semantics<parallel>], iteration_bounds = array<i64: 2>, scalar_prefetch = 0 : i64, scratch_operands = 1 : i64, tpu.core_type = #tpu.core_type<tc>, window_params = [{transform_indices = @transform_0, window_bounds = array<i64: 1, 4, 4, 128>}, {pipeline_mode = #tpu.pipeline_mode<synchronous>, transform_indices = @transform_1, window_bounds = array<i64: 128, 128>}, {pipeline_mode = #tpu.pipeline_mode<synchronous>, transform_indices = @transform_2, window_bounds = array<i64: 1, 128>}, {pipeline_mode = #tpu.pipeline_mode<synchronous>, transform_indices = @transform_3, window_bounds = array<i64: 9, 128>}, {pipeline_mode = #tpu.pipeline_mode<synchronous>, transform_indices = @transform_4, window_bounds = array<i64: 1, 128>}, {pipeline_mode = #tpu.pipeline_mode<synchronous>, transform_indices = @transform_5, window_bounds = array<i64: 128, 128>}, {pipeline_mode = #tpu.pipeline_mode<synchronous>, transform_indices = @transform_6, window_bounds = array<i64: 1, 128>}, {pipeline_mode = #tpu.pipeline_mode<synchronous>, transform_indices = @transform_7, window_bounds = array<i64: 128, 128>}, {pipeline_mode = #tpu.pipeline_mode<synchronous>, transform_indices = @transform_8, window_bounds = array<i64: 1, 128>}, {pipeline_mode = #tpu.pipeline_mode<synchronous>, transform_indices = @transform_9, window_bounds = array<i64: 128, 128>}, {pipeline_mode = #tpu.pipeline_mode<synchronous>, transform_indices = @transform_10, window_bounds = array<i64: 1, 128>}, {transform_indices = @transform_11, window_bounds = array<i64: 1, 4, 4, 128>}]} {
    %cst = arith.constant 0.000000e+00 : f32
    %0 = vector.broadcast %cst : f32 to vector<6x6x128xf32>
    %c0 = arith.constant 0 : index
    %c0_0 = arith.constant 0 : index
    %c0_1 = arith.constant 0 : index
    %1 = vector.load %arg13[%c0, %c0_0, %c0_1] : memref<6x6x128xf32, #tpu.memory_space<vmem>>, vector<6x6x128xf32>
    tpu.vector_store %arg13[%c0, %c0_0, %c0_1], %0 {strides = array<i32>} : memref<6x6x128xf32, #tpu.memory_space<vmem>>, vector<6x6x128xf32>,
    %c0_2 = arith.constant 0 : index
    %c0_3 = arith.constant 0 : index
    %2 = vector.load %arg2[%c0_2, %c0_3] : memref<128x128xbf16, #tpu.memory_space<vmem>>, vector<128x128xbf16>
    %c0_4 = arith.constant 0 : index
    %c0_5 = arith.constant 0 : index
    %3 = vector.load %arg3[%c0_4, %c0_5] : memref<1x128xf32, #tpu.memory_space<vmem>>, vector<1x128xf32>
    %c0_6 = arith.constant 0 : index
    %c0_7 = arith.constant 0 : index
    %c0_8 = arith.constant 0 : index
    %c0_9 = arith.constant 0 : index
    %4 = vector.load %arg1[%c0_6, %c0_7, %c0_8, %c0_9] : memref<1x4x4x128xbf16, #tpu.memory_space<vmem>>, vector<1x1x4x128xbf16>
    %5 = vector.shape_cast %4 : vector<1x1x4x128xbf16> to vector<4x128xbf16>
    %cst_10 = arith.constant dense<0.000000e+00> : vector<4x128xf32>
    %6 = tpu.matmul %5, %2, %cst_10 {dimension_numbers = #tpu.dot_dimension_numbers<[1], [0], [0], [1], [0, 0, 1, 1], [], []>} : vector<4x128xbf16>, vector<128x128xbf16>, vector<4x128xf32> -> vector<4x128xf32>
    %7 = vector.broadcast %3 : vector<1x128xf32> to vector<4x128xf32>
    %8 = arith.addf %6, %7 : vector<4x128xf32>
    %cst_11 = arith.constant 3.000000e+00 : f32
    %9 = vector.broadcast %cst_11 : f32 to vector<4x128xf32>
    %10 = arith.addf %8, %9 : vector<4x128xf32>
    %cst_12 = arith.constant 0.000000e+00 : f32
    %cst_13 = arith.constant 6.000000e+00 : f32
    %11 = vector.broadcast %cst_12 : f32 to vector<4x128xf32>
    %12 = arith.maximumf %11, %10 : vector<4x128xf32>
    %13 = vector.broadcast %cst_13 : f32 to vector<4x128xf32>
    %14 = arith.minimumf %13, %12 : vector<4x128xf32>
    %15 = arith.mulf %8, %14 : vector<4x128xf32>
    %cst_14 = arith.constant 0.166666672 : f32
    %16 = vector.broadcast %cst_14 : f32 to vector<4x128xf32>
    %17 = arith.mulf %15, %16 : vector<4x128xf32>
    %c1 = arith.constant 1 : index
    %c1_15 = arith.constant 1 : index
    %c0_16 = arith.constant 0 : index
    %18 = vector.load %arg13[%c1, %c1_15, %c0_16] : memref<6x6x128xf32, #tpu.memory_space<vmem>>, vector<1x4x128xf32>
    %19 = vector.shape_cast %18 : vector<1x4x128xf32> to vector<4x128xf32>
    %20 = vector.shape_cast %17 : vector<4x128xf32> to vector<1x4x128xf32>
    tpu.vector_store %arg13[%c1, %c1_15, %c0_16], %20 {strides = array<i32>} : memref<6x6x128xf32, #tpu.memory_space<vmem>>, vector<1x4x128xf32>,
    %c0_17 = arith.constant 0 : index
    %c1_18 = arith.constant 1 : index
    %c0_19 = arith.constant 0 : index
    %c0_20 = arith.constant 0 : index
    %21 = vector.load %arg1[%c0_17, %c1_18, %c0_19, %c0_20] : memref<1x4x4x128xbf16, #tpu.memory_space<vmem>>, vector<1x1x4x128xbf16>
    %22 = vector.shape_cast %21 : vector<1x1x4x128xbf16> to vector<4x128xbf16>
    %cst_21 = arith.constant dense<0.000000e+00> : vector<4x128xf32>
    %23 = tpu.matmul %22, %2, %cst_21 {dimension_numbers = #tpu.dot_dimension_numbers<[1], [0], [0], [1], [0, 0, 1, 1], [], []>} : vector<4x128xbf16>, vector<128x128xbf16>, vector<4x128xf32> -> vector<4x128xf32>
    %24 = vector.broadcast %3 : vector<1x128xf32> to vector<4x128xf32>
    %25 = arith.addf %23, %24 : vector<4x128xf32>
    %cst_22 = arith.constant 3.000000e+00 : f32
    %26 = vector.broadcast %cst_22 : f32 to vector<4x128xf32>
    %27 = arith.addf %25, %26 : vector<4x128xf32>
    %cst_23 = arith.constant 0.000000e+00 : f32
    %cst_24 = arith.constant 6.000000e+00 : f32
    %28 = vector.broadcast %cst_23 : f32 to vector<4x128xf32>
    %29 = arith.maximumf %28, %27 : vector<4x128xf32>
    %30 = vector.broadcast %cst_24 : f32 to vector<4x128xf32>
    %31 = arith.minimumf %30, %29 : vector<4x128xf32>
    %32 = arith.mulf %25, %31 : vector<4x128xf32>
    %cst_25 = arith.constant 0.166666672 : f32
    %33 = vector.broadcast %cst_25 : f32 to vector<4x128xf32>
    %34 = arith.mulf %32, %33 : vector<4x128xf32>
    %c2 = arith.constant 2 : index
    %c1_26 = arith.constant 1 : index
    %c0_27 = arith.constant 0 : index
    %35 = vector.load %arg13[%c2, %c1_26, %c0_27] : memref<6x6x128xf32, #tpu.memory_space<vmem>>, vector<1x4x128xf32>
    %36 = vector.shape_cast %35 : vector<1x4x128xf32> to vector<4x128xf32>
    %37 = vector.shape_cast %34 : vector<4x128xf32> to vector<1x4x128xf32>
    tpu.vector_store %arg13[%c2, %c1_26, %c0_27], %37 {strides = array<i32>} : memref<6x6x128xf32, #tpu.memory_space<vmem>>, vector<1x4x128xf32>,
    %c0_28 = arith.constant 0 : index
    %c2_29 = arith.constant 2 : index
    %c0_30 = arith.constant 0 : index
    %c0_31 = arith.constant 0 : index
    %38 = vector.load %arg1[%c0_28, %c2_29, %c0_30, %c0_31] : memref<1x4x4x128xbf16, #tpu.memory_space<vmem>>, vector<1x1x4x128xbf16>
    %39 = vector.shape_cast %38 : vector<1x1x4x128xbf16> to vector<4x128xbf16>
    %cst_32 = arith.constant dense<0.000000e+00> : vector<4x128xf32>
    %40 = tpu.matmul %39, %2, %cst_32 {dimension_numbers = #tpu.dot_dimension_numbers<[1], [0], [0], [1], [0, 0, 1, 1], [], []>} : vector<4x128xbf16>, vector<128x128xbf16>, vector<4x128xf32> -> vector<4x128xf32>
    %41 = vector.broadcast %3 : vector<1x128xf32> to vector<4x128xf32>
    %42 = arith.addf %40, %41 : vector<4x128xf32>
    %cst_33 = arith.constant 3.000000e+00 : f32
    %43 = vector.broadcast %cst_33 : f32 to vector<4x128xf32>
    %44 = arith.addf %42, %43 : vector<4x128xf32>
    %cst_34 = arith.constant 0.000000e+00 : f32
    %cst_35 = arith.constant 6.000000e+00 : f32
    %45 = vector.broadcast %cst_34 : f32 to vector<4x128xf32>
    %46 = arith.maximumf %45, %44 : vector<4x128xf32>
    %47 = vector.broadcast %cst_35 : f32 to vector<4x128xf32>
    %48 = arith.minimumf %47, %46 : vector<4x128xf32>
    %49 = arith.mulf %42, %48 : vector<4x128xf32>
    %cst_36 = arith.constant 0.166666672 : f32
    %50 = vector.broadcast %cst_36 : f32 to vector<4x128xf32>
    %51 = arith.mulf %49, %50 : vector<4x128xf32>
    %c3 = arith.constant 3 : index
    %c1_37 = arith.constant 1 : index
    %c0_38 = arith.constant 0 : index
    %52 = vector.load %arg13[%c3, %c1_37, %c0_38] : memref<6x6x128xf32, #tpu.memory_space<vmem>>, vector<1x4x128xf32>
    %53 = vector.shape_cast %52 : vector<1x4x128xf32> to vector<4x128xf32>
    %54 = vector.shape_cast %51 : vector<4x128xf32> to vector<1x4x128xf32>
    tpu.vector_store %arg13[%c3, %c1_37, %c0_38], %54 {strides = array<i32>} : memref<6x6x128xf32, #tpu.memory_space<vmem>>, vector<1x4x128xf32>,
    %c0_39 = arith.constant 0 : index
    %c3_40 = arith.constant 3 : index
    %c0_41 = arith.constant 0 : index
    %c0_42 = arith.constant 0 : index
    %55 = vector.load %arg1[%c0_39, %c3_40, %c0_41, %c0_42] : memref<1x4x4x128xbf16, #tpu.memory_space<vmem>>, vector<1x1x4x128xbf16>
    %56 = vector.shape_cast %55 : vector<1x1x4x128xbf16> to vector<4x128xbf16>
    %cst_43 = arith.constant dense<0.000000e+00> : vector<4x128xf32>
    %57 = tpu.matmul %56, %2, %cst_43 {dimension_numbers = #tpu.dot_dimension_numbers<[1], [0], [0], [1], [0, 0, 1, 1], [], []>} : vector<4x128xbf16>, vector<128x128xbf16>, vector<4x128xf32> -> vector<4x128xf32>
    %58 = vector.broadcast %3 : vector<1x128xf32> to vector<4x128xf32>
    %59 = arith.addf %57, %58 : vector<4x128xf32>
    %cst_44 = arith.constant 3.000000e+00 : f32
    %60 = vector.broadcast %cst_44 : f32 to vector<4x128xf32>
    %61 = arith.addf %59, %60 : vector<4x128xf32>
    %cst_45 = arith.constant 0.000000e+00 : f32
    %cst_46 = arith.constant 6.000000e+00 : f32
    %62 = vector.broadcast %cst_45 : f32 to vector<4x128xf32>
    %63 = arith.maximumf %62, %61 : vector<4x128xf32>
    %64 = vector.broadcast %cst_46 : f32 to vector<4x128xf32>
    %65 = arith.minimumf %64, %63 : vector<4x128xf32>
    %66 = arith.mulf %59, %65 : vector<4x128xf32>
    %cst_47 = arith.constant 0.166666672 : f32
    %67 = vector.broadcast %cst_47 : f32 to vector<4x128xf32>
    %68 = arith.mulf %66, %67 : vector<4x128xf32>
    %c4 = arith.constant 4 : index
    %c1_48 = arith.constant 1 : index
    %c0_49 = arith.constant 0 : index
    %69 = vector.load %arg13[%c4, %c1_48, %c0_49] : memref<6x6x128xf32, #tpu.memory_space<vmem>>, vector<1x4x128xf32>
    %70 = vector.shape_cast %69 : vector<1x4x128xf32> to vector<4x128xf32>
    %71 = vector.shape_cast %68 : vector<4x128xf32> to vector<1x4x128xf32>
    tpu.vector_store %arg13[%c4, %c1_48, %c0_49], %71 {strides = array<i32>} : memref<6x6x128xf32, #tpu.memory_space<vmem>>, vector<1x4x128xf32>,
    %c0_50 = arith.constant 0 : index
    %c0_51 = arith.constant 0 : index
    %72 = vector.load %arg4[%c0_50, %c0_51] : memref<9x128xf32, #tpu.memory_space<vmem>>, vector<9x128xf32>
    %cst_52 = arith.constant 0.000000e+00 : f32
    %73 = vector.broadcast %cst_52 : f32 to vector<4x4x128xf32>
    %c0_53 = arith.constant 0 : index
    %c0_54 = arith.constant 0 : index
    %c0_55 = arith.constant 0 : index
    %74 = vector.load %arg13[%c0_53, %c0_54, %c0_55] : memref<6x6x128xf32, #tpu.memory_space<vmem>>, vector<4x4x128xf32>
    %75 = vector.extract_strided_slice %72 {offsets = [0, 0], sizes = [1, 128], strides = [1, 1]} : vector<9x128xf32> to vector<1x128xf32>
    %76 = vector.shape_cast %75 : vector<1x128xf32> to vector<1x1x128xf32>
    %77 = vector.broadcast %76 : vector<1x1x128xf32> to vector<4x4x128xf32>
    %78 = arith.mulf %74, %77 : vector<4x4x128xf32>
    %79 = arith.addf %73, %78 : vector<4x4x128xf32>
    %c0_56 = arith.constant 0 : index
    %c1_57 = arith.constant 1 : index
    %c0_58 = arith.constant 0 : index
    %80 = vector.load %arg13[%c0_56, %c1_57, %c0_58] : memref<6x6x128xf32, #tpu.memory_space<vmem>>, vector<4x4x128xf32>
    %81 = vector.extract_strided_slice %72 {offsets = [1, 0], sizes = [1, 128], strides = [1, 1]} : vector<9x128xf32> to vector<1x128xf32>
    %82 = vector.shape_cast %81 : vector<1x128xf32> to vector<1x1x128xf32>
    %83 = vector.broadcast %82 : vector<1x1x128xf32> to vector<4x4x128xf32>
    %84 = arith.mulf %80, %83 : vector<4x4x128xf32>
    %85 = arith.addf %79, %84 : vector<4x4x128xf32>
    %c0_59 = arith.constant 0 : index
    %c2_60 = arith.constant 2 : index
    %c0_61 = arith.constant 0 : index
    %86 = vector.load %arg13[%c0_59, %c2_60, %c0_61] : memref<6x6x128xf32, #tpu.memory_space<vmem>>, vector<4x4x128xf32>
    %87 = vector.extract_strided_slice %72 {offsets = [2, 0], sizes = [1, 128], strides = [1, 1]} : vector<9x128xf32> to vector<1x128xf32>
    %88 = vector.shape_cast %87 : vector<1x128xf32> to vector<1x1x128xf32>
    %89 = vector.broadcast %88 : vector<1x1x128xf32> to vector<4x4x128xf32>
    %90 = arith.mulf %86, %89 : vector<4x4x128xf32>
    %91 = arith.addf %85, %90 : vector<4x4x128xf32>
    %c1_62 = arith.constant 1 : index
    %c0_63 = arith.constant 0 : index
    %c0_64 = arith.constant 0 : index
    %92 = vector.load %arg13[%c1_62, %c0_63, %c0_64] : memref<6x6x128xf32, #tpu.memory_space<vmem>>, vector<4x4x128xf32>
    %93 = vector.extract_strided_slice %72 {offsets = [3, 0], sizes = [1, 128], strides = [1, 1]} : vector<9x128xf32> to vector<1x128xf32>
    %94 = vector.shape_cast %93 : vector<1x128xf32> to vector<1x1x128xf32>
    %95 = vector.broadcast %94 : vector<1x1x128xf32> to vector<4x4x128xf32>
    %96 = arith.mulf %92, %95 : vector<4x4x128xf32>
    %97 = arith.addf %91, %96 : vector<4x4x128xf32>
    %c1_65 = arith.constant 1 : index
    %c1_66 = arith.constant 1 : index
    %c0_67 = arith.constant 0 : index
    %98 = vector.load %arg13[%c1_65, %c1_66, %c0_67] : memref<6x6x128xf32, #tpu.memory_space<vmem>>, vector<4x4x128xf32>
    %99 = vector.extract_strided_slice %72 {offsets = [4, 0], sizes = [1, 128], strides = [1, 1]} : vector<9x128xf32> to vector<1x128xf32>
    %100 = vector.shape_cast %99 : vector<1x128xf32> to vector<1x1x128xf32>
    %101 = vector.broadcast %100 : vector<1x1x128xf32> to vector<4x4x128xf32>
    %102 = arith.mulf %98, %101 : vector<4x4x128xf32>
    %103 = arith.addf %97, %102 : vector<4x4x128xf32>
    %c1_68 = arith.constant 1 : index
    %c2_69 = arith.constant 2 : index
    %c0_70 = arith.constant 0 : index
    %104 = vector.load %arg13[%c1_68, %c2_69, %c0_70] : memref<6x6x128xf32, #tpu.memory_space<vmem>>, vector<4x4x128xf32>
    %105 = vector.extract_strided_slice %72 {offsets = [5, 0], sizes = [1, 128], strides = [1, 1]} : vector<9x128xf32> to vector<1x128xf32>
    %106 = vector.shape_cast %105 : vector<1x128xf32> to vector<1x1x128xf32>
    %107 = vector.broadcast %106 : vector<1x1x128xf32> to vector<4x4x128xf32>
    %108 = arith.mulf %104, %107 : vector<4x4x128xf32>
    %109 = arith.addf %103, %108 : vector<4x4x128xf32>
    %c2_71 = arith.constant 2 : index
    %c0_72 = arith.constant 0 : index
    %c0_73 = arith.constant 0 : index
    %110 = vector.load %arg13[%c2_71, %c0_72, %c0_73] : memref<6x6x128xf32, #tpu.memory_space<vmem>>, vector<4x4x128xf32>
    %111 = vector.extract_strided_slice %72 {offsets = [6, 0], sizes = [1, 128], strides = [1, 1]} : vector<9x128xf32> to vector<1x128xf32>
    %112 = vector.shape_cast %111 : vector<1x128xf32> to vector<1x1x128xf32>
    %113 = vector.broadcast %112 : vector<1x1x128xf32> to vector<4x4x128xf32>
    %114 = arith.mulf %110, %113 : vector<4x4x128xf32>
    %115 = arith.addf %109, %114 : vector<4x4x128xf32>
    %c2_74 = arith.constant 2 : index
    %c1_75 = arith.constant 1 : index
    %c0_76 = arith.constant 0 : index
    %116 = vector.load %arg13[%c2_74, %c1_75, %c0_76] : memref<6x6x128xf32, #tpu.memory_space<vmem>>, vector<4x4x128xf32>
    %117 = vector.extract_strided_slice %72 {offsets = [7, 0], sizes = [1, 128], strides = [1, 1]} : vector<9x128xf32> to vector<1x128xf32>
    %118 = vector.shape_cast %117 : vector<1x128xf32> to vector<1x1x128xf32>
    %119 = vector.broadcast %118 : vector<1x1x128xf32> to vector<4x4x128xf32>
    %120 = arith.mulf %116, %119 : vector<4x4x128xf32>
    %121 = arith.addf %115, %120 : vector<4x4x128xf32>
    %c2_77 = arith.constant 2 : index
    %c2_78 = arith.constant 2 : index
    %c0_79 = arith.constant 0 : index
    %122 = vector.load %arg13[%c2_77, %c2_78, %c0_79] : memref<6x6x128xf32, #tpu.memory_space<vmem>>, vector<4x4x128xf32>
    %123 = vector.extract_strided_slice %72 {offsets = [8, 0], sizes = [1, 128], strides = [1, 1]} : vector<9x128xf32> to vector<1x128xf32>
    %124 = vector.shape_cast %123 : vector<1x128xf32> to vector<1x1x128xf32>
    %125 = vector.broadcast %124 : vector<1x1x128xf32> to vector<4x4x128xf32>
    %126 = arith.mulf %122, %125 : vector<4x4x128xf32>
    %127 = arith.addf %121, %126 : vector<4x4x128xf32>
    %c0_80 = arith.constant 0 : index
    %c0_81 = arith.constant 0 : index
    %128 = vector.load %arg5[%c0_80, %c0_81] : memref<1x128xf32, #tpu.memory_space<vmem>>, vector<1x128xf32>
    %129 = vector.shape_cast %128 : vector<1x128xf32> to vector<1x1x128xf32>
    %130 = vector.broadcast %129 : vector<1x1x128xf32> to vector<4x4x128xf32>
    %131 = arith.addf %127, %130 : vector<4x4x128xf32>
    %cst_82 = arith.constant 3.000000e+00 : f32
    %132 = vector.broadcast %cst_82 : f32 to vector<4x4x128xf32>
    %133 = arith.addf %131, %132 : vector<4x4x128xf32>
    %cst_83 = arith.constant 0.000000e+00 : f32
    %cst_84 = arith.constant 6.000000e+00 : f32
    %134 = vector.broadcast %cst_83 : f32 to vector<4x4x128xf32>
    %135 = arith.maximumf %134, %133 : vector<4x4x128xf32>
    %136 = vector.broadcast %cst_84 : f32 to vector<4x4x128xf32>
    %137 = arith.minimumf %136, %135 : vector<4x4x128xf32>
    %138 = arith.mulf %131, %137 : vector<4x4x128xf32>
    %cst_85 = arith.constant 0.166666672 : f32
    %139 = vector.broadcast %cst_85 : f32 to vector<4x4x128xf32>
    %140 = arith.mulf %138, %139 : vector<4x4x128xf32>
    %cst_86 = arith.constant dense<0.000000e+00> : vector<128xf32>
    %141 = vector.multi_reduction <add>, %140, %cst_86 [0, 1] : vector<4x4x128xf32> to vector<128xf32>
    %142 = vector.shape_cast %141 : vector<128xf32> to vector<1x1x128xf32>
    %cst_87 = arith.constant 1.600000e+01 : f32
    %143 = vector.broadcast %cst_87 : f32 to vector<1x1x128xf32>
    %144 = arith.divf %142, %143 : vector<1x1x128xf32>
    %145 = vector.shape_cast %144 : vector<1x1x128xf32> to vector<1x128xf32>
    %146 = arith.truncf %145 : vector<1x128xf32> to vector<1x128xbf16>
    %c0_88 = arith.constant 0 : index
    %c0_89 = arith.constant 0 : index
    %147 = vector.load %arg6[%c0_88, %c0_89] : memref<128x128xbf16, #tpu.memory_space<vmem>>, vector<128x128xbf16>
    %cst_90 = arith.constant dense<0.000000e+00> : vector<1x128xf32>
    %148 = tpu.matmul %146, %147, %cst_90 {dimension_numbers = #tpu.dot_dimension_numbers<[1], [0], [0], [1], [0, 0, 1, 1], [], []>} : vector<1x128xbf16>, vector<128x128xbf16>, vector<1x128xf32> -> vector<1x128xf32>
    %c0_91 = arith.constant 0 : index
    %c0_92 = arith.constant 0 : index
    %149 = vector.load %arg7[%c0_91, %c0_92] : memref<1x128xf32, #tpu.memory_space<vmem>>, vector<1x128xf32>
    %150 = arith.addf %148, %149 : vector<1x128xf32>
    %cst_93 = arith.constant 0.000000e+00 : f32
    %151 = vector.broadcast %cst_93 : f32 to vector<1x128xf32>
    %152 = arith.maximumf %150, %151 : vector<1x128xf32>
    %153 = arith.truncf %152 : vector<1x128xf32> to vector<1x128xbf16>
    %c0_94 = arith.constant 0 : index
    %c0_95 = arith.constant 0 : index
    %154 = vector.load %arg8[%c0_94, %c0_95] : memref<128x128xbf16, #tpu.memory_space<vmem>>, vector<128x128xbf16>
    %cst_96 = arith.constant dense<0.000000e+00> : vector<1x128xf32>
    %155 = tpu.matmul %153, %154, %cst_96 {dimension_numbers = #tpu.dot_dimension_numbers<[1], [0], [0], [1], [0, 0, 1, 1], [], []>} : vector<1x128xbf16>, vector<128x128xbf16>, vector<1x128xf32> -> vector<1x128xf32>
    %c0_97 = arith.constant 0 : index
    %c0_98 = arith.constant 0 : index
    %156 = vector.load %arg9[%c0_97, %c0_98] : memref<1x128xf32, #tpu.memory_space<vmem>>, vector<1x128xf32>
    %157 = arith.addf %155, %156 : vector<1x128xf32>
    %cst_99 = arith.constant 0.166666672 : f32
    %158 = vector.broadcast %cst_99 : f32 to vector<1x128xf32>
    %159 = arith.mulf %157, %158 : vector<1x128xf32>
    %cst_100 = arith.constant 5.000000e-01 : f32
    %160 = vector.broadcast %cst_100 : f32 to vector<1x128xf32>
    %161 = arith.addf %159, %160 : vector<1x128xf32>
    %cst_101 = arith.constant 0.000000e+00 : f32
    %cst_102 = arith.constant 1.000000e+00 : f32
    %162 = vector.broadcast %cst_101 : f32 to vector<1x128xf32>
    %163 = arith.maximumf %162, %161 : vector<1x128xf32>
    %164 = vector.broadcast %cst_102 : f32 to vector<1x128xf32>
    %165 = arith.minimumf %164, %163 : vector<1x128xf32>
    %166 = vector.shape_cast %165 : vector<1x128xf32> to vector<1x1x128xf32>
    %167 = vector.broadcast %166 : vector<1x1x128xf32> to vector<4x4x128xf32>
    %168 = arith.mulf %140, %167 : vector<4x4x128xf32>
    %c0_103 = arith.constant 0 : index
    %c0_104 = arith.constant 0 : index
    %169 = vector.load %arg10[%c0_103, %c0_104] : memref<128x128xbf16, #tpu.memory_space<vmem>>, vector<128x128xbf16>
    %c0_105 = arith.constant 0 : index
    %c0_106 = arith.constant 0 : index
    %170 = vector.load %arg11[%c0_105, %c0_106] : memref<1x128xf32, #tpu.memory_space<vmem>>, vector<1x128xf32>
    %171 = vector.extract_strided_slice %168 {offsets = [0, 0, 0], sizes = [1, 4, 128], strides = [1, 1, 1]} : vector<4x4x128xf32> to vector<1x4x128xf32>
    %172 = vector.shape_cast %171 : vector<1x4x128xf32> to vector<4x128xf32>
    %173 = arith.truncf %172 : vector<4x128xf32> to vector<4x128xbf16>
    %cst_107 = arith.constant dense<0.000000e+00> : vector<4x128xf32>
    %174 = tpu.matmul %173, %169, %cst_107 {dimension_numbers = #tpu.dot_dimension_numbers<[1], [0], [0], [1], [0, 0, 1, 1], [], []>} : vector<4x128xbf16>, vector<128x128xbf16>, vector<4x128xf32> -> vector<4x128xf32>
    %175 = vector.broadcast %170 : vector<1x128xf32> to vector<4x128xf32>
    %176 = arith.addf %174, %175 : vector<4x128xf32>
    %c0_108 = arith.constant 0 : index
    %c0_109 = arith.constant 0 : index
    %c0_110 = arith.constant 0 : index
    %c0_111 = arith.constant 0 : index
    %177 = vector.load %arg1[%c0_108, %c0_109, %c0_110, %c0_111] : memref<1x4x4x128xbf16, #tpu.memory_space<vmem>>, vector<1x1x4x128xbf16>
    %178 = vector.shape_cast %177 : vector<1x1x4x128xbf16> to vector<4x128xbf16>
    %179 = arith.extf %178 : vector<4x128xbf16> to vector<4x128xf32>
    %180 = arith.addf %176, %179 : vector<4x128xf32>
    %181 = arith.truncf %180 : vector<4x128xf32> to vector<4x128xbf16>
    %c0_112 = arith.constant 0 : index
    %c0_113 = arith.constant 0 : index
    %c0_114 = arith.constant 0 : index
    %c0_115 = arith.constant 0 : index
    %182 = vector.load %arg12[%c0_112, %c0_113, %c0_114, %c0_115] : memref<1x4x4x128xbf16, #tpu.memory_space<vmem>>, vector<1x1x4x128xbf16>
    %183 = vector.shape_cast %182 : vector<1x1x4x128xbf16> to vector<4x128xbf16>
    %184 = vector.shape_cast %181 : vector<4x128xbf16> to vector<1x1x4x128xbf16>
    tpu.vector_store %arg12[%c0_112, %c0_113, %c0_114, %c0_115], %184 {strides = array<i32>} : memref<1x4x4x128xbf16, #tpu.memory_space<vmem>>, vector<1x1x4x128xbf16>,
    %185 = vector.extract_strided_slice %168 {offsets = [1, 0, 0], sizes = [1, 4, 128], strides = [1, 1, 1]} : vector<4x4x128xf32> to vector<1x4x128xf32>
    %186 = vector.shape_cast %185 : vector<1x4x128xf32> to vector<4x128xf32>
    %187 = arith.truncf %186 : vector<4x128xf32> to vector<4x128xbf16>
    %cst_116 = arith.constant dense<0.000000e+00> : vector<4x128xf32>
    %188 = tpu.matmul %187, %169, %cst_116 {dimension_numbers = #tpu.dot_dimension_numbers<[1], [0], [0], [1], [0, 0, 1, 1], [], []>} : vector<4x128xbf16>, vector<128x128xbf16>, vector<4x128xf32> -> vector<4x128xf32>
    %189 = vector.broadcast %170 : vector<1x128xf32> to vector<4x128xf32>
    %190 = arith.addf %188, %189 : vector<4x128xf32>
    %c0_117 = arith.constant 0 : index
    %c1_118 = arith.constant 1 : index
    %c0_119 = arith.constant 0 : index
    %c0_120 = arith.constant 0 : index
    %191 = vector.load %arg1[%c0_117, %c1_118, %c0_119, %c0_120] : memref<1x4x4x128xbf16, #tpu.memory_space<vmem>>, vector<1x1x4x128xbf16>
    %192 = vector.shape_cast %191 : vector<1x1x4x128xbf16> to vector<4x128xbf16>
    %193 = arith.extf %192 : vector<4x128xbf16> to vector<4x128xf32>
    %194 = arith.addf %190, %193 : vector<4x128xf32>
    %195 = arith.truncf %194 : vector<4x128xf32> to vector<4x128xbf16>
    %c0_121 = arith.constant 0 : index
    %c1_122 = arith.constant 1 : index
    %c0_123 = arith.constant 0 : index
    %c0_124 = arith.constant 0 : index
    %196 = vector.load %arg12[%c0_121, %c1_122, %c0_123, %c0_124] : memref<1x4x4x128xbf16, #tpu.memory_space<vmem>>, vector<1x1x4x128xbf16>
    %197 = vector.shape_cast %196 : vector<1x1x4x128xbf16> to vector<4x128xbf16>
    %198 = vector.shape_cast %195 : vector<4x128xbf16> to vector<1x1x4x128xbf16>
    tpu.vector_store %arg12[%c0_121, %c1_122, %c0_123, %c0_124], %198 {strides = array<i32>} : memref<1x4x4x128xbf16, #tpu.memory_space<vmem>>, vector<1x1x4x128xbf16>,
    %199 = vector.extract_strided_slice %168 {offsets = [2, 0, 0], sizes = [1, 4, 128], strides = [1, 1, 1]} : vector<4x4x128xf32> to vector<1x4x128xf32>
    %200 = vector.shape_cast %199 : vector<1x4x128xf32> to vector<4x128xf32>
    %201 = arith.truncf %200 : vector<4x128xf32> to vector<4x128xbf16>
    %cst_125 = arith.constant dense<0.000000e+00> : vector<4x128xf32>
    %202 = tpu.matmul %201, %169, %cst_125 {dimension_numbers = #tpu.dot_dimension_numbers<[1], [0], [0], [1], [0, 0, 1, 1], [], []>} : vector<4x128xbf16>, vector<128x128xbf16>, vector<4x128xf32> -> vector<4x128xf32>
    %203 = vector.broadcast %170 : vector<1x128xf32> to vector<4x128xf32>
    %204 = arith.addf %202, %203 : vector<4x128xf32>
    %c0_126 = arith.constant 0 : index
    %c2_127 = arith.constant 2 : index
    %c0_128 = arith.constant 0 : index
    %c0_129 = arith.constant 0 : index
    %205 = vector.load %arg1[%c0_126, %c2_127, %c0_128, %c0_129] : memref<1x4x4x128xbf16, #tpu.memory_space<vmem>>, vector<1x1x4x128xbf16>
    %206 = vector.shape_cast %205 : vector<1x1x4x128xbf16> to vector<4x128xbf16>
    %207 = arith.extf %206 : vector<4x128xbf16> to vector<4x128xf32>
    %208 = arith.addf %204, %207 : vector<4x128xf32>
    %209 = arith.truncf %208 : vector<4x128xf32> to vector<4x128xbf16>
    %c0_130 = arith.constant 0 : index
    %c2_131 = arith.constant 2 : index
    %c0_132 = arith.constant 0 : index
    %c0_133 = arith.constant 0 : index
    %210 = vector.load %arg12[%c0_130, %c2_131, %c0_132, %c0_133] : memref<1x4x4x128xbf16, #tpu.memory_space<vmem>>, vector<1x1x4x128xbf16>
    %211 = vector.shape_cast %210 : vector<1x1x4x128xbf16> to vector<4x128xbf16>
    %212 = vector.shape_cast %209 : vector<4x128xbf16> to vector<1x1x4x128xbf16>
    tpu.vector_store %arg12[%c0_130, %c2_131, %c0_132, %c0_133], %212 {strides = array<i32>} : memref<1x4x4x128xbf16, #tpu.memory_space<vmem>>, vector<1x1x4x128xbf16>,
    %213 = vector.extract_strided_slice %168 {offsets = [3, 0, 0], sizes = [1, 4, 128], strides = [1, 1, 1]} : vector<4x4x128xf32> to vector<1x4x128xf32>
    %214 = vector.shape_cast %213 : vector<1x4x128xf32> to vector<4x128xf32>
    %215 = arith.truncf %214 : vector<4x128xf32> to vector<4x128xbf16>
    %cst_134 = arith.constant dense<0.000000e+00> : vector<4x128xf32>
    %216 = tpu.matmul %215, %169, %cst_134 {dimension_numbers = #tpu.dot_dimension_numbers<[1], [0], [0], [1], [0, 0, 1, 1], [], []>} : vector<4x128xbf16>, vector<128x128xbf16>, vector<4x128xf32> -> vector<4x128xf32>
    %217 = vector.broadcast %170 : vector<1x128xf32> to vector<4x128xf32>
    %218 = arith.addf %216, %217 : vector<4x128xf32>
    %c0_135 = arith.constant 0 : index
    %c3_136 = arith.constant 3 : index
    %c0_137 = arith.constant 0 : index
    %c0_138 = arith.constant 0 : index
    %219 = vector.load %arg1[%c0_135, %c3_136, %c0_137, %c0_138] : memref<1x4x4x128xbf16, #tpu.memory_space<vmem>>, vector<1x1x4x128xbf16>
    %220 = vector.shape_cast %219 : vector<1x1x4x128xbf16> to vector<4x128xbf16>
    %221 = arith.extf %220 : vector<4x128xbf16> to vector<4x128xf32>
    %222 = arith.addf %218, %221 : vector<4x128xf32>
    %223 = arith.truncf %222 : vector<4x128xf32> to vector<4x128xbf16>
    %c0_139 = arith.constant 0 : index
    %c3_140 = arith.constant 3 : index
    %c0_141 = arith.constant 0 : index
    %c0_142 = arith.constant 0 : index
    %224 = vector.load %arg12[%c0_139, %c3_140, %c0_141, %c0_142] : memref<1x4x4x128xbf16, #tpu.memory_space<vmem>>, vector<1x1x4x128xbf16>
    %225 = vector.shape_cast %224 : vector<1x1x4x128xbf16> to vector<4x128xbf16>
    %226 = vector.shape_cast %223 : vector<4x128xbf16> to vector<1x1x4x128xbf16>
    tpu.vector_store %arg12[%c0_139, %c3_140, %c0_141, %c0_142], %226 {strides = array<i32>} : memref<1x4x4x128xbf16, #tpu.memory_space<vmem>>, vector<1x1x4x128xbf16>,
    return
  }
  func.func @transform_0(%arg0: i32) -> (i32, i32, i32, i32) {
    %c0_i32 = arith.constant 0 : i32
    %c0_i32_0 = arith.constant 0 : i32
    %c0_i32_1 = arith.constant 0 : i32
    %c0_i32_2 = arith.constant 0 : i32
    return %arg0, %c0_i32, %c0_i32_0, %c0_i32_1 : i32, i32, i32, i32
  }
  func.func @transform_1(%arg0: i32) -> (i32, i32) {
    %c0_i32 = arith.constant 0 : i32
    %c0_i32_0 = arith.constant 0 : i32
    %c0_i32_1 = arith.constant 0 : i32
    return %c0_i32, %c0_i32_0 : i32, i32
  }
  func.func @transform_2(%arg0: i32) -> (i32, i32) {
    %c0_i32 = arith.constant 0 : i32
    %c0_i32_0 = arith.constant 0 : i32
    %c0_i32_1 = arith.constant 0 : i32
    return %c0_i32, %c0_i32_0 : i32, i32
  }
  func.func @transform_3(%arg0: i32) -> (i32, i32) {
    %c0_i32 = arith.constant 0 : i32
    %c0_i32_0 = arith.constant 0 : i32
    %c0_i32_1 = arith.constant 0 : i32
    return %c0_i32, %c0_i32_0 : i32, i32
  }
  func.func @transform_4(%arg0: i32) -> (i32, i32) {
    %c0_i32 = arith.constant 0 : i32
    %c0_i32_0 = arith.constant 0 : i32
    %c0_i32_1 = arith.constant 0 : i32
    return %c0_i32, %c0_i32_0 : i32, i32
  }
  func.func @transform_5(%arg0: i32) -> (i32, i32) {
    %c0_i32 = arith.constant 0 : i32
    %c0_i32_0 = arith.constant 0 : i32
    %c0_i32_1 = arith.constant 0 : i32
    return %c0_i32, %c0_i32_0 : i32, i32
  }
  func.func @transform_6(%arg0: i32) -> (i32, i32) {
    %c0_i32 = arith.constant 0 : i32
    %c0_i32_0 = arith.constant 0 : i32
    %c0_i32_1 = arith.constant 0 : i32
    return %c0_i32, %c0_i32_0 : i32, i32
  }
  func.func @transform_7(%arg0: i32) -> (i32, i32) {
    %c0_i32 = arith.constant 0 : i32
    %c0_i32_0 = arith.constant 0 : i32
    %c0_i32_1 = arith.constant 0 : i32
    return %c0_i32, %c0_i32_0 : i32, i32
  }
  func.func @transform_8(%arg0: i32) -> (i32, i32) {
    %c0_i32 = arith.constant 0 : i32
    %c0_i32_0 = arith.constant 0 : i32
    %c0_i32_1 = arith.constant 0 : i32
    return %c0_i32, %c0_i32_0 : i32, i32
  }
  func.func @transform_9(%arg0: i32) -> (i32, i32) {
    %c0_i32 = arith.constant 0 : i32
    %c0_i32_0 = arith.constant 0 : i32
    %c0_i32_1 = arith.constant 0 : i32
    return %c0_i32, %c0_i32_0 : i32, i32
  }
  func.func @transform_10(%arg0: i32) -> (i32, i32) {
    %c0_i32 = arith.constant 0 : i32
    %c0_i32_0 = arith.constant 0 : i32
    %c0_i32_1 = arith.constant 0 : i32
    return %c0_i32, %c0_i32_0 : i32, i32
  }
  func.func @transform_11(%arg0: i32) -> (i32, i32, i32, i32) {
    %c0_i32 = arith.constant 0 : i32
    %c0_i32_0 = arith.constant 0 : i32
    %c0_i32_1 = arith.constant 0 : i32
    %c0_i32_2 = arith.constant 0 : i32
    return %arg0, %c0_i32, %c0_i32_0, %c0_i32_1 : i32, i32, i32, i32
  }
}

module attributes {stable_mosaic.version = 11 : i64} {
  func.func @kernel(%arg0: i32, %arg1: memref<1x16x128xbf16, #tpu.memory_space<vmem>>, %arg2: memref<128x256xbf16, #tpu.memory_space<vmem>>, %arg3: memref<1x256xf32, #tpu.memory_space<vmem>>, %arg4: memref<256x128xbf16, #tpu.memory_space<vmem>>, %arg5: memref<1x128xf32, #tpu.memory_space<vmem>>, %arg6: memref<128x128xbf16, #tpu.memory_space<vmem>>, %arg7: memref<1x128xf32, #tpu.memory_space<vmem>>, %arg8: memref<1x1x128xf32, #tpu.memory_space<vmem>>) attributes {dimension_semantics = [#tpu.dimension_semantics<parallel>], iteration_bounds = array<i64: 2>, scalar_prefetch = 0 : i64, scratch_operands = 0 : i64, tpu.core_type = #tpu.core_type<tc>, window_params = [{transform_indices = @transform_0, window_bounds = array<i64: 1, 16, 128>}, {pipeline_mode = #tpu.pipeline_mode<synchronous>, transform_indices = @transform_1, window_bounds = array<i64: 128, 256>}, {pipeline_mode = #tpu.pipeline_mode<synchronous>, transform_indices = @transform_2, window_bounds = array<i64: 1, 256>}, {pipeline_mode = #tpu.pipeline_mode<synchronous>, transform_indices = @transform_3, window_bounds = array<i64: 256, 128>}, {pipeline_mode = #tpu.pipeline_mode<synchronous>, transform_indices = @transform_4, window_bounds = array<i64: 1, 128>}, {pipeline_mode = #tpu.pipeline_mode<synchronous>, transform_indices = @transform_5, window_bounds = array<i64: 128, 128>}, {pipeline_mode = #tpu.pipeline_mode<synchronous>, transform_indices = @transform_6, window_bounds = array<i64: 1, 128>}, {transform_indices = @transform_7, window_bounds = array<i64: 1, 1, 128>}]} {
    %c0 = arith.constant 0 : index
    %c0_0 = arith.constant 0 : index
    %c0_1 = arith.constant 0 : index
    %0 = vector.load %arg1[%c0, %c0_0, %c0_1] : memref<1x16x128xbf16, #tpu.memory_space<vmem>>, vector<1x16x128xbf16>
    %1 = vector.shape_cast %0 : vector<1x16x128xbf16> to vector<16x128xbf16>
    %c0_2 = arith.constant 0 : index
    %c0_3 = arith.constant 0 : index
    %2 = vector.load %arg2[%c0_2, %c0_3] : memref<128x256xbf16, #tpu.memory_space<vmem>>, vector<128x256xbf16>
    %cst = arith.constant dense<0.000000e+00> : vector<16x256xf32>
    %3 = tpu.matmul %1, %2, %cst {dimension_numbers = #tpu.dot_dimension_numbers<[1], [0], [0], [1], [0, 0, 1, 1], [], []>} : vector<16x128xbf16>, vector<128x256xbf16>, vector<16x256xf32> -> vector<16x256xf32>
    %c0_4 = arith.constant 0 : index
    %c0_5 = arith.constant 0 : index
    %4 = vector.load %arg3[%c0_4, %c0_5] : memref<1x256xf32, #tpu.memory_space<vmem>>, vector<1x256xf32>
    %5 = vector.broadcast %4 : vector<1x256xf32> to vector<16x256xf32>
    %6 = arith.addf %3, %5 : vector<16x256xf32>
    %cst_6 = arith.constant 3.000000e+00 : f32
    %7 = vector.broadcast %cst_6 : f32 to vector<16x256xf32>
    %8 = arith.addf %6, %7 : vector<16x256xf32>
    %cst_7 = arith.constant 0.000000e+00 : f32
    %cst_8 = arith.constant 6.000000e+00 : f32
    %9 = vector.broadcast %cst_7 : f32 to vector<16x256xf32>
    %10 = arith.maximumf %9, %8 : vector<16x256xf32>
    %11 = vector.broadcast %cst_8 : f32 to vector<16x256xf32>
    %12 = arith.minimumf %11, %10 : vector<16x256xf32>
    %13 = arith.mulf %6, %12 : vector<16x256xf32>
    %cst_9 = arith.constant 0.166666672 : f32
    %14 = vector.broadcast %cst_9 : f32 to vector<16x256xf32>
    %15 = arith.mulf %13, %14 : vector<16x256xf32>
    %cst_10 = arith.constant dense<0.000000e+00> : vector<256xf32>
    %16 = vector.multi_reduction <add>, %15, %cst_10 [0] : vector<16x256xf32> to vector<256xf32>
    %17 = vector.shape_cast %16 : vector<256xf32> to vector<1x256xf32>
    %cst_11 = arith.constant 1.600000e+01 : f32
    %18 = vector.broadcast %cst_11 : f32 to vector<1x256xf32>
    %19 = arith.divf %17, %18 : vector<1x256xf32>
    %20 = arith.truncf %19 : vector<1x256xf32> to vector<1x256xbf16>
    %c0_12 = arith.constant 0 : index
    %c0_13 = arith.constant 0 : index
    %21 = vector.load %arg4[%c0_12, %c0_13] : memref<256x128xbf16, #tpu.memory_space<vmem>>, vector<256x128xbf16>
    %cst_14 = arith.constant dense<0.000000e+00> : vector<1x128xf32>
    %22 = tpu.matmul %20, %21, %cst_14 {dimension_numbers = #tpu.dot_dimension_numbers<[1], [0], [0], [1], [0, 0, 1, 1], [], []>} : vector<1x256xbf16>, vector<256x128xbf16>, vector<1x128xf32> -> vector<1x128xf32>
    %c0_15 = arith.constant 0 : index
    %c0_16 = arith.constant 0 : index
    %23 = vector.load %arg5[%c0_15, %c0_16] : memref<1x128xf32, #tpu.memory_space<vmem>>, vector<1x128xf32>
    %24 = arith.addf %22, %23 : vector<1x128xf32>
    %cst_17 = arith.constant 3.000000e+00 : f32
    %25 = vector.broadcast %cst_17 : f32 to vector<1x128xf32>
    %26 = arith.addf %24, %25 : vector<1x128xf32>
    %cst_18 = arith.constant 0.000000e+00 : f32
    %cst_19 = arith.constant 6.000000e+00 : f32
    %27 = vector.broadcast %cst_18 : f32 to vector<1x128xf32>
    %28 = arith.maximumf %27, %26 : vector<1x128xf32>
    %29 = vector.broadcast %cst_19 : f32 to vector<1x128xf32>
    %30 = arith.minimumf %29, %28 : vector<1x128xf32>
    %31 = arith.mulf %24, %30 : vector<1x128xf32>
    %cst_20 = arith.constant 0.166666672 : f32
    %32 = vector.broadcast %cst_20 : f32 to vector<1x128xf32>
    %33 = arith.mulf %31, %32 : vector<1x128xf32>
    %34 = arith.truncf %33 : vector<1x128xf32> to vector<1x128xbf16>
    %c0_21 = arith.constant 0 : index
    %c0_22 = arith.constant 0 : index
    %35 = vector.load %arg6[%c0_21, %c0_22] : memref<128x128xbf16, #tpu.memory_space<vmem>>, vector<128x128xbf16>
    %cst_23 = arith.constant dense<0.000000e+00> : vector<1x128xf32>
    %36 = tpu.matmul %34, %35, %cst_23 {dimension_numbers = #tpu.dot_dimension_numbers<[1], [0], [0], [1], [0, 0, 1, 1], [], []>} : vector<1x128xbf16>, vector<128x128xbf16>, vector<1x128xf32> -> vector<1x128xf32>
    %c0_24 = arith.constant 0 : index
    %c0_25 = arith.constant 0 : index
    %37 = vector.load %arg7[%c0_24, %c0_25] : memref<1x128xf32, #tpu.memory_space<vmem>>, vector<1x128xf32>
    %38 = arith.addf %36, %37 : vector<1x128xf32>
    %c0_26 = arith.constant 0 : index
    %c0_27 = arith.constant 0 : index
    %c0_28 = arith.constant 0 : index
    %39 = vector.load %arg8[%c0_26, %c0_27, %c0_28] : memref<1x1x128xf32, #tpu.memory_space<vmem>>, vector<1x1x128xf32>
    %40 = vector.shape_cast %39 : vector<1x1x128xf32> to vector<1x128xf32>
    %41 = vector.shape_cast %38 : vector<1x128xf32> to vector<1x1x128xf32>
    tpu.vector_store %arg8[%c0_26, %c0_27, %c0_28], %41 {strides = array<i32>} : memref<1x1x128xf32, #tpu.memory_space<vmem>>, vector<1x1x128xf32>,
    return
  }
  func.func @transform_0(%arg0: i32) -> (i32, i32, i32) {
    %c0_i32 = arith.constant 0 : i32
    %c0_i32_0 = arith.constant 0 : i32
    %c0_i32_1 = arith.constant 0 : i32
    return %arg0, %c0_i32, %c0_i32_0 : i32, i32, i32
  }
  func.func @transform_1(%arg0: i32) -> (i32, i32) {
    %c0_i32 = arith.constant 0 : i32
    %c0_i32_0 = arith.constant 0 : i32
    %c0_i32_1 = arith.constant 0 : i32
    return %c0_i32, %c0_i32_0 : i32, i32
  }
  func.func @transform_2(%arg0: i32) -> (i32, i32) {
    %c0_i32 = arith.constant 0 : i32
    %c0_i32_0 = arith.constant 0 : i32
    %c0_i32_1 = arith.constant 0 : i32
    return %c0_i32, %c0_i32_0 : i32, i32
  }
  func.func @transform_3(%arg0: i32) -> (i32, i32) {
    %c0_i32 = arith.constant 0 : i32
    %c0_i32_0 = arith.constant 0 : i32
    %c0_i32_1 = arith.constant 0 : i32
    return %c0_i32, %c0_i32_0 : i32, i32
  }
  func.func @transform_4(%arg0: i32) -> (i32, i32) {
    %c0_i32 = arith.constant 0 : i32
    %c0_i32_0 = arith.constant 0 : i32
    %c0_i32_1 = arith.constant 0 : i32
    return %c0_i32, %c0_i32_0 : i32, i32
  }
  func.func @transform_5(%arg0: i32) -> (i32, i32) {
    %c0_i32 = arith.constant 0 : i32
    %c0_i32_0 = arith.constant 0 : i32
    %c0_i32_1 = arith.constant 0 : i32
    return %c0_i32, %c0_i32_0 : i32, i32
  }
  func.func @transform_6(%arg0: i32) -> (i32, i32) {
    %c0_i32 = arith.constant 0 : i32
    %c0_i32_0 = arith.constant 0 : i32
    %c0_i32_1 = arith.constant 0 : i32
    return %c0_i32, %c0_i32_0 : i32, i32
  }
  func.func @transform_7(%arg0: i32) -> (i32, i32, i32) {
    %c0_i32 = arith.constant 0 : i32
    %c0_i32_0 = arith.constant 0 : i32
    %c0_i32_1 = arith.constant 0 : i32
    return %arg0, %c0_i32, %c0_i32_0 : i32, i32, i32
  }
}

</mosaic_0001>

<llo_original>
// kernel: mobilenet_v3_forward.6
$region0: #{mobilenet_v3_forward.6}
  #allocation0 [shape = 'u32[]', space=smem, size = 0x4, offset = 0x4, fixed_abs, tag = 'smem constant byte address 0x4 - core index']
  #allocation1 [shape = 'u32[72,128]{1,0:T(1,128)}', space=vmem, size = 0x9000, scoped, tag = 'internal scratch']
  %s0 = inlined_call_operand.vmem [shape: bf16[2,256,32], index: 0, kind: input, shape index: {}]
  %s1 = inlined_call_operand.vmem [shape: bf16[32,128], index: 1, kind: input, shape index: {}]
  %s2 = inlined_call_operand.vmem [shape: f32[1,128], index: 2, kind: input, shape index: {}]
  %s3 = inlined_call_operand.vmem [shape: bf16[2,256,128], index: 3, kind: output, shape index: {}]
  %s4 = sld [smem:[#allocation0]]
  $region45: #{mobilenet_v3_forward.6} parent=0
    _
  %s6 = ssub.s32 1, %s4
  %s7 = scalar_select 0, %s6, %s4
  loop: start=0, step=1, limit=4
  $region2: #{mobilenet_v3_forward.6} parent=0 // loop_pre_header
    _
  $region3: #{mobilenet_v3_forward.6} parent=0 // loop_header
    %s9 = sphi 0, %s13
    %p10 = scmp.ge.s32.totalorder %s9, 4
    %s19 = sphi 0, %s21
    %s22 = sphi 0, %s19
    %s23 = sphi 0, %s22
    %s39 = sphi 0, %s23
    %s43 = sphi 0, %s43
    %s45 = sphi 0, %s43
    %s46 = sphi 0, %s45
    %s60 = sphi 0, %s46
    %s64 = sphi 0, %s64
    %s66 = sphi 0, %s64
    %s67 = sphi 0, %s66
    %s81 = sphi 0, %s67
    %s87 = sphi 0, %s89
    %s90 = sphi 0, %s87
    %s91 = sphi 0, %s90
    %s107 = sphi 0, %s91
  $region4: #{mobilenet_v3_forward.6} parent=0 // loop_header_branch
    %12 = sbr.rel (%p10) target = $region8
  $region5: #{mobilenet_v3_forward.6} parent=0 // loop_body
    %s14 = ssub.s32 %s9, 1
    %s15 = ssub.s32 %s9, 2
    %s16 = sadd.s32 %s9, 1
    %s17 = ssub.s32 %s9, %s16
    %p18 = scmp.eq.s32.totalorder %s17, 0
    %s20 = sadd.s32 %s19, 1
    %s21 = scalar_select %p18, %s19, %s20
    %p24 = pneg %p18
    %p25 = scmp.eq.s32.totalorder %s9, 1
    %p26 = por %p24, %p25
    %p27 = scmp.ne.s32.totalorder %s19, %s22
    %p28 = scmp.eq.s32.totalorder %s9, 0
    %p29 = por %p27, %p28
    %p30 = scmp.ne.s32.totalorder %s19, %s22
    %p31 = scmp.eq.s32.totalorder %s14, 1
    %p32 = por %p30, %p31
    %p33 = scmp.ne.s32.totalorder %s22, %s23
    %p34 = scmp.eq.s32.totalorder %s14, 0
    %p35 = por %p33, %p34
    %p36 = scmp.ne.s32.totalorder %s22, %s23
    %p37 = scmp.eq.s32.totalorder %s15, 1
    %p38 = por %p36, %p37
    %p40 = scmp.ne.s32.totalorder %s23, %s39
    %p41 = scmp.eq.s32.totalorder %s15, 0
    %p42 = por %p40, %p41
    %s44 = sadd.s32 %s43, 1
    %p47 = scmp.eq.s32.totalorder %s9, 1
    %p48 = scmp.ne.s32.totalorder %s43, %s45
    %p49 = scmp.eq.s32.totalorder %s9, 0
    %p50 = por %p48, %p49
    %p51 = scmp.ne.s32.totalorder %s43, %s45
    %p52 = scmp.eq.s32.totalorder %s14, 1
    %p53 = por %p51, %p52
    %p54 = scmp.ne.s32.totalorder %s45, %s46
    %p55 = scmp.eq.s32.totalorder %s14, 0
    %p56 = por %p54, %p55
    %p57 = scmp.ne.s32.totalorder %s45, %s46
    %p58 = scmp.eq.s32.totalorder %s15, 1
    %p59 = por %p57, %p58
    %p61 = scmp.ne.s32.totalorder %s46, %s60
    %p62 = scmp.eq.s32.totalorder %s15, 0
    %p63 = por %p61, %p62
    %s65 = sadd.s32 %s64, 1
    %p68 = scmp.eq.s32.totalorder %s9, 1
    %p69 = scmp.ne.s32.totalorder %s64, %s66
    %p70 = scmp.eq.s32.totalorder %s9, 0
    %p71 = por %p69, %p70
    %p72 = scmp.ne.s32.totalorder %s64, %s66
    %p73 = scmp.eq.s32.totalorder %s14, 1
    %p74 = por %p72, %p73
    %p75 = scmp.ne.s32.totalorder %s66, %s67
    %p76 = scmp.eq.s32.totalorder %s14, 0
    %p77 = por %p75, %p76
    %p78 = scmp.ne.s32.totalorder %s66, %s67
    %p79 = scmp.eq.s32.totalorder %s15, 1
    %p80 = por %p78, %p79
    %p82 = scmp.ne.s32.totalorder %s67, %s81
    %p83 = scmp.eq.s32.totalorder %s15, 0
    %p84 = por %p82, %p83
    %s85 = ssub.s32 %s9, %s16
    %p86 = scmp.eq.s32.totalorder %s85, 0
    %s88 = sadd.s32 %s87, 1
    %s89 = scalar_select %p86, %s87, %s88
    %p92 = pneg %p86
    %p93 = scmp.eq.s32.totalorder %s9, 1
    %p94 = por %p92, %p93
    %p95 = scmp.ne.s32.totalorder %s87, %s90
    %p96 = scmp.eq.s32.totalorder %s9, 0
    %p97 = por %p95, %p96
    %p98 = scmp.ne.s32.totalorder %s87, %s90
    %p99 = scmp.eq.s32.totalorder %s14, 1
    %p100 = por %p98, %p99
    %p101 = scmp.ne.s32.totalorder %s90, %s91
    %p102 = scmp.eq.s32.totalorder %s14, 0
    %p103 = por %p101, %p102
    %p104 = scmp.ne.s32.totalorder %s90, %s91
    %p105 = scmp.eq.s32.totalorder %s15, 1
    %p106 = por %p104, %p105
    %p108 = scmp.ne.s32.totalorder %s91, %s107
    %p109 = scmp.eq.s32.totalorder %s15, 0
    %p110 = por %p108, %p109
    %p111 = scmp.le.s32.totalorder 1, %s9
    %p112 = scmp.lt.s32.totalorder %s9, 3
    %p113 = pnand %p111, %p112
    %p114 = pneg %p113
    // Predicated region
    $region9: #{mobilenet_v3_forward.6} parent=5 // pred_check
      _
    $region10: #{mobilenet_v3_forward.6} parent=5 // pred_check_branch
      %116 = sbr.rel (%p113) target = $region12
    $region11: #{mobilenet_v3_forward.6} parent=5 // pred_region
      %s117 = ssub.s32 %s9, 1
      // Predicated region
      $region13: #{mobilenet_v3_forward.6} parent=11 // pred_check
        %p118 = pneg %p56
      $region14: #{mobilenet_v3_forward.6} parent=11 // pred_check_branch
        %120 = sbr.rel (%p118) target = $region16
      $region15: #{mobilenet_v3_forward.6} parent=11 // pred_region
        _
      $region16: #{mobilenet_v3_forward.6} parent=11 // pred_fallthru
        _
      // Predicated region
      $region17: #{mobilenet_v3_forward.6} parent=11 // pred_check
        %p121 = pneg %p77
      $region18: #{mobilenet_v3_forward.6} parent=11 // pred_check_branch
        %123 = sbr.rel (%p121) target = $region20
      $region19: #{mobilenet_v3_forward.6} parent=11 // pred_region
        _
      $region20: #{mobilenet_v3_forward.6} parent=11 // pred_fallthru
        _
    $region12: #{mobilenet_v3_forward.6} parent=5 // pred_fallthru
      _
    %p124 = scmp.lt.s32.totalorder %s9, 2
    // Predicated region
    $region21: #{mobilenet_v3_forward.6} parent=5 // pred_check
      %p125 = pneg %p124
    $region22: #{mobilenet_v3_forward.6} parent=5 // pred_check_branch
      %127 = sbr.rel (%p125) target = $region24
    $region23: #{mobilenet_v3_forward.6} parent=5 // pred_region
      // Predicated region
      $region25: #{mobilenet_v3_forward.6} parent=23 // pred_check
        %p128 = pneg %p29
      $region26: #{mobilenet_v3_forward.6} parent=23 // pred_check_branch
        %130 = sbr.rel (%p128) target = $region28
      $region27: #{mobilenet_v3_forward.6} parent=23 // pred_region
        %p131 = scmp.lt.s32.totalorder %s9, 1
        %s132 = scalar_select %p131, %s9, 1
        %s133 = smul.addr %s132, 32
        %s134 = smul.addr %s133, 4
        %s135 = scalar_lea.vmem %s0, %s134
      $region28: #{mobilenet_v3_forward.6} parent=23 // pred_fallthru
        _
    $region24: #{mobilenet_v3_forward.6} parent=5 // pred_fallthru
      _
    %p136 = scmp.le.s32.totalorder 1, %s9
    %p137 = scmp.lt.s32.totalorder %s9, 3
    %p138 = pnand %p136, %p137
    %p139 = pneg %p138
    // Predicated region
    $region29: #{mobilenet_v3_forward.6} parent=5 // pred_check
      _
    $region30: #{mobilenet_v3_forward.6} parent=5 // pred_check_branch
      %141 = sbr.rel (%p138) target = $region32
    $region31: #{mobilenet_v3_forward.6} parent=5 // pred_region
      %s142 = ssub.s32 %s9, 1
      %p143 = scmp.lt.s32.totalorder %s14, 1
      %s144 = scalar_select %p143, %s14, 1
      %s145 = smul.addr %s144, 32
      %s146 = smul.addr %s145, 4
      %s147 = scalar_lea.vmem %s0, %s146
      %p148 = pneg %p35
      %p149 = pneg %p32
      %p150 = pneg %p56
      %p151 = pneg %p53
      %p152 = pneg %p77
      %p153 = pneg %p74
      %p154 = pneg %p103
      %p155 = pneg %p100
      %p156 = scmp.lt.s32.totalorder %s14, 1
      %s157 = scalar_select %p156, %s14, 1
      %s158 = smul.addr %s157, 32
      %s159 = smul.addr %s158, 4
      %s160 = scalar_lea.vmem %s3, %s159
      %p161 = scmp.lt.s32.totalorder %s14, 1
      %s162 = scalar_select %p161, %s14, 1
      %s163 = smul.addr %s162, 32
      %s164 = smul.addr %s163, 4
      %s165 = scalar_lea.vmem %s0, %s164
      %p166 = scmp.lt.s32.totalorder %s14, 1
      %s167 = scalar_select %p166, %s14, 1
      %s168 = smul.addr %s167, 32
      %s169 = smul.addr %s168, 4
      %s170 = scalar_lea.vmem %s3, %s169
      %v172 = vld [vmem:[%s165] sm:$0xf]
      %v173 = vld [vmem:[%s165 + $0x4] sm:$0xf]
      %v174 = vld [vmem:[%s165 + $0x8] sm:$0xf]
      %v175 = vld [vmem:[%s165 + $0xc] sm:$0xf]
      %v176 = vld [vmem:[%s165 + $0x10] sm:$0xf]
      %v177 = vld [vmem:[%s165 + $0x14] sm:$0xf]
      %v178 = vld [vmem:[%s165 + $0x18] sm:$0xf]
      %v179 = vld [vmem:[%s165 + $0x1c] sm:$0xf]
      %v180 = vld [vmem:[%s165 + $0x20] sm:$0xf]
      %v181 = vld [vmem:[%s165 + $0x24] sm:$0xf]
      %v182 = vld [vmem:[%s165 + $0x28] sm:$0xf]
      %v183 = vld [vmem:[%s165 + $0x2c] sm:$0xf]
      %v184 = vld [vmem:[%s165 + $0x30] sm:$0xf]
      %v185 = vld [vmem:[%s165 + $0x34] sm:$0xf]
      %v186 = vld [vmem:[%s165 + $0x38] sm:$0xf]
      %v187 = vld [vmem:[%s165 + $0x3c] sm:$0xf]
      %v188 = vld [vmem:[%s165 + $0x40] sm:$0xf]
      %v189 = vld [vmem:[%s165 + $0x44] sm:$0xf]
      %v190 = vld [vmem:[%s165 + $0x48] sm:$0xf]
      %v191 = vld [vmem:[%s165 + $0x4c] sm:$0xf]
      %v192 = vld [vmem:[%s165 + $0x50] sm:$0xf]
      %v193 = vld [vmem:[%s165 + $0x54] sm:$0xf]
      %v194 = vld [vmem:[%s165 + $0x58] sm:$0xf]
      %v195 = vld [vmem:[%s165 + $0x5c] sm:$0xf]
      %v196 = vld [vmem:[%s165 + $0x60] sm:$0xf]
      %v197 = vld [vmem:[%s165 + $0x64] sm:$0xf]
      %v198 = vld [vmem:[%s165 + $0x68] sm:$0xf]
      %v199 = vld [vmem:[%s165 + $0x6c] sm:$0xf]
      %v200 = vld [vmem:[%s165 + $0x70] sm:$0xf]
      %v201 = vld [vmem:[%s165 + $0x74] sm:$0xf]
      %v202 = vld [vmem:[%s165 + $0x78] sm:$0xf]
      %v203 = vld [vmem:[%s165 + $0x7c] sm:$0xf]
      %v204 = vld [vmem:[%s1] sm:$0xf]
      %v205 = vld [vmem:[%s1 + $0x4] sm:$0xf]
      %v206 = vld [vmem:[%s1 + $0x8] sm:$0xf]
      %v207 = vld [vmem:[%s1 + $0xc] sm:$0xf]
      %v208 = vld [vmem:[%s2] sm:$0x1]
      %v210 = vperm.slane %v208, 0
      %v244 = vunpack.c.l.b16 %v172
      %v245 = vunpack.c.l.b16 %v173
      %v246 = vunpack.c.l.b16 %v174
      %v247 = vunpack.c.l.b16 %v175
      %v248 = vunpack.c.l.b16 %v176
      %v249 = vunpack.c.l.b16 %v177
      %v250 = vunpack.c.l.b16 %v178
      %v251 = vunpack.c.l.b16 %v179
      %v252 = vunpack.c.l.b16 %v180
      %v253 = vunpack.c.l.b16 %v181
      %v254 = vunpack.c.l.b16 %v182
      %v255 = vunpack.c.l.b16 %v183
      %v256 = vunpack.c.l.b16 %v184
      %v257 = vunpack.c.l.b16 %v185
      %v258 = vunpack.c.l.b16 %v186
      %v259 = vunpack.c.l.b16 %v187
      %v260 = vunpack.c.l.b16 %v188
      %v261 = vunpack.c.l.b16 %v189
      %v262 = vunpack.c.l.b16 %v190
      %v263 = vunpack.c.l.b16 %v191
      %v264 = vunpack.c.l.b16 %v192
      %v265 = vunpack.c.l.b16 %v193
      %v266 = vunpack.c.l.b16 %v194
      %v267 = vunpack.c.l.b16 %v195
      %v268 = vunpack.c.l.b16 %v196
      %v269 = vunpack.c.l.b16 %v197
      %v270 = vunpack.c.l.b16 %v198
      %v271 = vunpack.c.l.b16 %v199
      %v272 = vunpack.c.l.b16 %v200
      %v273 = vunpack.c.l.b16 %v201
      %v274 = vunpack.c.l.b16 %v202
      %v275 = vunpack.c.l.b16 %v203
      %v276 = vpack.c.b16 %v245, %v244
      %v277 = vpack.c.b16 %v247, %v246
      %v278 = vpack.c.b16 %v249, %v248
      %v279 = vpack.c.b16 %v251, %v250
      %v280 = vpack.c.b16 %v253, %v252
      %v281 = vpack.c.b16 %v255, %v254
      %v282 = vpack.c.b16 %v257, %v256
      %v283 = vpack.c.b16 %v259, %v258
      %v284 = vpack.c.b16 %v261, %v260
      %v285 = vpack.c.b16 %v263, %v262
      %v286 = vpack.c.b16 %v265, %v264
      %v287 = vpack.c.b16 %v267, %v266
      %v288 = vpack.c.b16 %v269, %v268
      %v289 = vpack.c.b16 %v271, %v270
      %v290 = vpack.c.b16 %v273, %v272
      %v291 = vpack.c.b16 %v275, %v274
      %v296 = vunpack.c.l.b16 %v204
      %v297 = vunpack.c.l.b16 %v205
      %v298 = vunpack.c.l.b16 %v206
      %v299 = vunpack.c.l.b16 %v207
      %v300 = vpack.c.b16 %v297, %v296
      %v301 = vpack.c.b16 %v299, %v298
      %vm304 = vcmask 261120
      %v306 = vsel %vm304, %v276, 0
      %v309 = vsel %vm304, %v277, 0
      %v312 = vsel %vm304, %v278, 0
      %v315 = vsel %vm304, %v279, 0
      %v318 = vsel %vm304, %v280, 0
      %v321 = vsel %vm304, %v281, 0
      %v324 = vsel %vm304, %v282, 0
      %v327 = vsel %vm304, %v283, 0
      %v330 = vsel %vm304, %v284, 0
      %v333 = vsel %vm304, %v285, 0
      %v336 = vsel %vm304, %v286, 0
      %v339 = vsel %vm304, %v287, 0
      %v342 = vsel %vm304, %v288, 0
      %v345 = vsel %vm304, %v289, 0
      %v348 = vsel %vm304, %v290, 0
      %v351 = vsel %vm304, %v291, 0
      %353 = vmatpush.bf16.msra.mxu0 0
      %354 = vmatpush.bf16.msra.mxu0 0
      %355 = vmatpush.bf16.msra.mxu0 0
      %356 = vmatpush.bf16.msra.mxu0 0
      %357 = vmatpush.bf16.msra.mxu0 0
      %358 = vmatpush.bf16.msra.mxu0 0
      %359 = vmatpush.bf16.msra.mxu0 %v301
      %360 = vmatpush.bf16.msra.mxu0 %v300
      %361 = vmatmul.bf16.gmra.mxu0 %v306
      %v362 = vpop.f32.mrf.mxu0
      %v363 = vadd.f32 %v210, %v362
      %v364 = vpop.f32.mrf.mxu0
      %v365 = vadd.f32 %v210, %v364
      %366 = vmatmul.bf16.gmra.mxu0 %v309
      %v367 = vpop.f32.mrf.mxu0
      %v368 = vadd.f32 %v210, %v367
      %v369 = vpop.f32.mrf.mxu0
      %v370 = vadd.f32 %v210, %v369
      %371 = vmatmul.bf16.gmra.mxu0 %v312
      %v372 = vpop.f32.mrf.mxu0
      %v373 = vadd.f32 %v210, %v372
      %v374 = vpop.f32.mrf.mxu0
      %v375 = vadd.f32 %v210, %v374
      %376 = vmatmul.bf16.gmra.mxu0 %v315
      %v377 = vpop.f32.mrf.mxu0
      %v378 = vadd.f32 %v210, %v377
      %v379 = vpop.f32.mrf.mxu0
      %v380 = vadd.f32 %v210, %v379
      %381 = vmatmul.bf16.gmra.mxu0 %v318
      %v382 = vpop.f32.mrf.mxu0
      %v383 = vadd.f32 %v210, %v382
      %v384 = vpop.f32.mrf.mxu0
      %v385 = vadd.f32 %v210, %v384
      %386 = vmatmul.bf16.gmra.mxu0 %v321
      %v387 = vpop.f32.mrf.mxu0
      %v388 = vadd.f32 %v210, %v387
      %v389 = vpop.f32.mrf.mxu0
      %v390 = vadd.f32 %v210, %v389
      %391 = vmatmul.bf16.gmra.mxu0 %v324
      %v392 = vpop.f32.mrf.mxu0
      %v393 = vadd.f32 %v210, %v392
      %v394 = vpop.f32.mrf.mxu0
      %v395 = vadd.f32 %v210, %v394
      %396 = vmatmul.bf16.gmra.mxu0 %v327
      %v397 = vpop.f32.mrf.mxu0
      %v398 = vadd.f32 %v210, %v397
      %v399 = vpop.f32.mrf.mxu0
      %v400 = vadd.f32 %v210, %v399
      %401 = vmatmul.bf16.gmra.mxu0 %v330
      %v402 = vpop.f32.mrf.mxu0
      %v403 = vadd.f32 %v210, %v402
      %v404 = vpop.f32.mrf.mxu0
      %v405 = vadd.f32 %v210, %v404
      %406 = vmatmul.bf16.gmra.mxu0 %v333
      %v407 = vpop.f32.mrf.mxu0
      %v408 = vadd.f32 %v210, %v407
      %v409 = vpop.f32.mrf.mxu0
      %v410 = vadd.f32 %v210, %v409
      %411 = vmatmul.bf16.gmra.mxu0 %v336
      %v412 = vpop.f32.mrf.mxu0
      %v413 = vadd.f32 %v210, %v412
      %v414 = vpop.f32.mrf.mxu0
      %v415 = vadd.f32 %v210, %v414
      %416 = vmatmul.bf16.gmra.mxu0 %v339
      %v417 = vpop.f32.mrf.mxu0
      %v418 = vadd.f32 %v210, %v417
      %v419 = vpop.f32.mrf.mxu0
      %v420 = vadd.f32 %v210, %v419
      %421 = vmatmul.bf16.gmra.mxu0 %v342
      %v422 = vpop.f32.mrf.mxu0
      %v423 = vadd.f32 %v210, %v422
      %v424 = vpop.f32.mrf.mxu0
      %v425 = vadd.f32 %v210, %v424
      %426 = vmatmul.bf16.gmra.mxu0 %v345
      %v427 = vpop.f32.mrf.mxu0
      %v428 = vadd.f32 %v210, %v427
      %v429 = vpop.f32.mrf.mxu0
      %v430 = vadd.f32 %v210, %v429
      %431 = vmatmul.bf16.gmra.mxu0 %v348
      %v432 = vpop.f32.mrf.mxu0
      %v433 = vadd.f32 %v210, %v432
      %v434 = vpop.f32.mrf.mxu0
      %v435 = vadd.f32 %v210, %v434
      %436 = vmatmul.bf16.gmra.mxu0 %v351
      %v437 = vpop.f32.mrf.mxu0
      %v438 = vadd.f32 %v210, %v437
      %v439 = vpop.f32.mrf.mxu0
      %v440 = vadd.f32 %v210, %v439
      %441 = vdwg.mxu0
      %v442 = vadd.f32 %v363, 3.0
      %v443 = vadd.f32 %v365, 3.0
      %v444 = vadd.f32 %v368, 3.0
      %v445 = vadd.f32 %v370, 3.0
      %v446 = vadd.f32 %v373, 3.0
      %v447 = vadd.f32 %v375, 3.0
      %v448 = vadd.f32 %v378, 3.0
      %v449 = vadd.f32 %v380, 3.0
      %v450 = vadd.f32 %v383, 3.0
      %v451 = vadd.f32 %v385, 3.0
      %v452 = vadd.f32 %v388, 3.0
      %v453 = vadd.f32 %v390, 3.0
      %v454 = vadd.f32 %v393, 3.0
      %v455 = vadd.f32 %v395, 3.0
      %v456 = vadd.f32 %v398, 3.0
      %v457 = vadd.f32 %v400, 3.0
      %v458 = vadd.f32 %v403, 3.0
      %v459 = vadd.f32 %v405, 3.0
      %v460 = vadd.f32 %v408, 3.0
      %v461 = vadd.f32 %v410, 3.0
      %v462 = vadd.f32 %v413, 3.0
      %v463 = vadd.f32 %v415, 3.0
      %v464 = vadd.f32 %v418, 3.0
      %v465 = vadd.f32 %v420, 3.0
      %v466 = vadd.f32 %v423, 3.0
      %v467 = vadd.f32 %v425, 3.0
      %v468 = vadd.f32 %v428, 3.0
      %v469 = vadd.f32 %v430, 3.0
      %v470 = vadd.f32 %v433, 3.0
      %v471 = vadd.f32 %v435, 3.0
      %v472 = vadd.f32 %v438, 3.0
      %v473 = vadd.f32 %v440, 3.0
      %v474 = vmax.f32 %v442, 0.0
      %v475 = vmax.f32 %v443, 0.0
      %v476 = vmax.f32 %v444, 0.0
      %v477 = vmax.f32 %v445, 0.0
      %v478 = vmax.f32 %v446, 0.0
      %v479 = vmax.f32 %v447, 0.0
      %v480 = vmax.f32 %v448, 0.0
      %v481 = vmax.f32 %v449, 0.0
      %v482 = vmax.f32 %v450, 0.0
      %v483 = vmax.f32 %v451, 0.0
      %v484 = vmax.f32 %v452, 0.0
      %v485 = vmax.f32 %v453, 0.0
      %v486 = vmax.f32 %v454, 0.0
      %v487 = vmax.f32 %v455, 0.0
      %v488 = vmax.f32 %v456, 0.0
      %v489 = vmax.f32 %v457, 0.0
      %v490 = vmax.f32 %v458, 0.0
      %v491 = vmax.f32 %v459, 0.0
      %v492 = vmax.f32 %v460, 0.0
      %v493 = vmax.f32 %v461, 0.0
      %v494 = vmax.f32 %v462, 0.0
      %v495 = vmax.f32 %v463, 0.0
      %v496 = vmax.f32 %v464, 0.0
      %v497 = vmax.f32 %v465, 0.0
      %v498 = vmax.f32 %v466, 0.0
      %v499 = vmax.f32 %v467, 0.0
      %v500 = vmax.f32 %v468, 0.0
      %v501 = vmax.f32 %v469, 0.0
      %v502 = vmax.f32 %v470, 0.0
      %v503 = vmax.f32 %v471, 0.0
      %v504 = vmax.f32 %v472, 0.0
      %v505 = vmax.f32 %v473, 0.0
      %v506 = vmin.f32 %v474, 6.0
      %v507 = vmin.f32 %v475, 6.0
      %v508 = vmin.f32 %v476, 6.0
      %v509 = vmin.f32 %v477, 6.0
      %v510 = vmin.f32 %v478, 6.0
      %v511 = vmin.f32 %v479, 6.0
      %v512 = vmin.f32 %v480, 6.0
      %v513 = vmin.f32 %v481, 6.0
      %v514 = vmin.f32 %v482, 6.0
      %v515 = vmin.f32 %v483, 6.0
      %v516 = vmin.f32 %v484, 6.0
      %v517 = vmin.f32 %v485, 6.0
      %v518 = vmin.f32 %v486, 6.0
      %v519 = vmin.f32 %v487, 6.0
      %v520 = vmin.f32 %v488, 6.0
      %v521 = vmin.f32 %v489, 6.0
      %v522 = vmin.f32 %v490, 6.0
      %v523 = vmin.f32 %v491, 6.0
      %v524 = vmin.f32 %v492, 6.0
      %v525 = vmin.f32 %v493, 6.0
      %v526 = vmin.f32 %v494, 6.0
      %v527 = vmin.f32 %v495, 6.0
      %v528 = vmin.f32 %v496, 6.0
      %v529 = vmin.f32 %v497, 6.0
      %v530 = vmin.f32 %v498, 6.0
      %v531 = vmin.f32 %v499, 6.0
      %v532 = vmin.f32 %v500, 6.0
      %v533 = vmin.f32 %v501, 6.0
      %v534 = vmin.f32 %v502, 6.0
      %v535 = vmin.f32 %v503, 6.0
      %v536 = vmin.f32 %v504, 6.0
      %v537 = vmin.f32 %v505, 6.0
      %v538 = vmul.f32 %v363, %v506
      %v539 = vmul.f32 %v365, %v507
      %v540 = vmul.f32 %v368, %v508
      %v541 = vmul.f32 %v370, %v509
      %v542 = vmul.f32 %v373, %v510
      %v543 = vmul.f32 %v375, %v511
      %v544 = vmul.f32 %v378, %v512
      %v545 = vmul.f32 %v380, %v513
      %v546 = vmul.f32 %v383, %v514
      %v547 = vmul.f32 %v385, %v515
      %v548 = vmul.f32 %v388, %v516
      %v549 = vmul.f32 %v390, %v517
      %v550 = vmul.f32 %v393, %v518
      %v551 = vmul.f32 %v395, %v519
      %v552 = vmul.f32 %v398, %v520
      %v553 = vmul.f32 %v400, %v521
      %v554 = vmul.f32 %v403, %v522
      %v555 = vmul.f32 %v405, %v523
      %v556 = vmul.f32 %v408, %v524
      %v557 = vmul.f32 %v410, %v525
      %v558 = vmul.f32 %v413, %v526
      %v559 = vmul.f32 %v415, %v527
      %v560 = vmul.f32 %v418, %v528
      %v561 = vmul.f32 %v420, %v529
      %v562 = vmul.f32 %v423, %v530
      %v563 = vmul.f32 %v425, %v531
      %v564 = vmul.f32 %v428, %v532
      %v565 = vmul.f32 %v430, %v533
      %v566 = vmul.f32 %v433, %v534
      %v567 = vmul.f32 %v435, %v535
      %v568 = vmul.f32 %v438, %v536
      %v569 = vmul.f32 %v440, %v537
      %v570 = vmul.f32 %v538, 0.16666667
      %v571 = vmul.f32 %v539, 0.16666667
      %v572 = vmul.f32 %v540, 0.16666667
      %v573 = vmul.f32 %v541, 0.16666667
      %v574 = vmul.f32 %v542, 0.16666667
      %v575 = vmul.f32 %v543, 0.16666667
      %v576 = vmul.f32 %v544, 0.16666667
      %v577 = vmul.f32 %v545, 0.16666667
      %v578 = vmul.f32 %v546, 0.16666667
      %v579 = vmul.f32 %v547, 0.16666667
      %v580 = vmul.f32 %v548, 0.16666667
      %v581 = vmul.f32 %v549, 0.16666667
      %v582 = vmul.f32 %v550, 0.16666667
      %v583 = vmul.f32 %v551, 0.16666667
      %v584 = vmul.f32 %v552, 0.16666667
      %v585 = vmul.f32 %v553, 0.16666667
      %v586 = vmul.f32 %v554, 0.16666667
      %v587 = vmul.f32 %v555, 0.16666667
      %v588 = vmul.f32 %v556, 0.16666667
      %v589 = vmul.f32 %v557, 0.16666667
      %v590 = vmul.f32 %v558, 0.16666667
      %v591 = vmul.f32 %v559, 0.16666667
      %v592 = vmul.f32 %v560, 0.16666667
      %v593 = vmul.f32 %v561, 0.16666667
      %v594 = vmul.f32 %v562, 0.16666667
      %v595 = vmul.f32 %v563, 0.16666667
      %v596 = vmul.f32 %v564, 0.16666667
      %v597 = vmul.f32 %v565, 0.16666667
      %v598 = vmul.f32 %v566, 0.16666667
      %v599 = vmul.f32 %v567, 0.16666667
      %v600 = vmul.f32 %v568, 0.16666667
      %v601 = vmul.f32 %v569, 0.16666667
      %v602 = vpack.c.bf16 %v570, %v570
      %v603 = vpack.c.bf16 %v571, %v571
      %v604 = vpack.c.bf16 %v572, %v572
      %v605 = vpack.c.bf16 %v573, %v573
      %v606 = vpack.c.bf16 %v574, %v574
      %v607 = vpack.c.bf16 %v575, %v575
      %v608 = vpack.c.bf16 %v576, %v576
      %v609 = vpack.c.bf16 %v577, %v577
      %v610 = vpack.c.bf16 %v578, %v578
      %v611 = vpack.c.bf16 %v579, %v579
      %v612 = vpack.c.bf16 %v580, %v580
      %v613 = vpack.c.bf16 %v581, %v581
      %v614 = vpack.c.bf16 %v582, %v582
      %v615 = vpack.c.bf16 %v583, %v583
      %v616 = vpack.c.bf16 %v584, %v584
      %v617 = vpack.c.bf16 %v585, %v585
      %v618 = vpack.c.bf16 %v586, %v586
      %v619 = vpack.c.bf16 %v587, %v587
      %v620 = vpack.c.bf16 %v588, %v588
      %v621 = vpack.c.bf16 %v589, %v589
      %v622 = vpack.c.bf16 %v590, %v590
      %v623 = vpack.c.bf16 %v591, %v591
      %v624 = vpack.c.bf16 %v592, %v592
      %v625 = vpack.c.bf16 %v593, %v593
      %v626 = vpack.c.bf16 %v594, %v594
      %v627 = vpack.c.bf16 %v595, %v595
      %v628 = vpack.c.bf16 %v596, %v596
      %v629 = vpack.c.bf16 %v597, %v597
      %v630 = vpack.c.bf16 %v598, %v598
      %v631 = vpack.c.bf16 %v599, %v599
      %v632 = vpack.c.bf16 %v600, %v600
      %v633 = vpack.c.bf16 %v601, %v601
      %634 = vst [vmem:[%s170] sm:$0xf] %v602
      %635 = vst [vmem:[%s170 + $0x4] sm:$0xf] %v603
      %636 = vst [vmem:[%s170 + $0x8] sm:$0xf] %v604
      %637 = vst [vmem:[%s170 + $0xc] sm:$0xf] %v605
      %638 = vst [vmem:[%s170 + $0x10] sm:$0xf] %v606
      %639 = vst [vmem:[%s170 + $0x14] sm:$0xf] %v607
      %640 = vst [vmem:[%s170 + $0x18] sm:$0xf] %v608
      %641 = vst [vmem:[%s170 + $0x1c] sm:$0xf] %v609
      %642 = vst [vmem:[%s170 + $0x20] sm:$0xf] %v610
      %643 = vst [vmem:[%s170 + $0x24] sm:$0xf] %v611
      %644 = vst [vmem:[%s170 + $0x28] sm:$0xf] %v612
      %645 = vst [vmem:[%s170 + $0x2c] sm:$0xf] %v613
      %646 = vst [vmem:[%s170 + $0x30] sm:$0xf] %v614
      %647 = vst [vmem:[%s170 + $0x34] sm:$0xf] %v615
      %648 = vst [vmem:[%s170 + $0x38] sm:$0xf] %v616
      %649 = vst [vmem:[%s170 + $0x3c] sm:$0xf] %v617
      %650 = vst [vmem:[%s170 + $0x40] sm:$0xf] %v618
      %651 = vst [vmem:[%s170 + $0x44] sm:$0xf] %v619
      %652 = vst [vmem:[%s170 + $0x48] sm:$0xf] %v620
      %653 = vst [vmem:[%s170 + $0x4c] sm:$0xf] %v621
      %654 = vst [vmem:[%s170 + $0x50] sm:$0xf] %v622
      %655 = vst [vmem:[%s170 + $0x54] sm:$0xf] %v623
      %656 = vst [vmem:[%s170 + $0x58] sm:$0xf] %v624
      %657 = vst [vmem:[%s170 + $0x5c] sm:$0xf] %v625
      %658 = vst [vmem:[%s170 + $0x60] sm:$0xf] %v626
      %659 = vst [vmem:[%s170 + $0x64] sm:$0xf] %v627
      %660 = vst [vmem:[%s170 + $0x68] sm:$0xf] %v628
      %661 = vst [vmem:[%s170 + $0x6c] sm:$0xf] %v629
      %662 = vst [vmem:[%s170 + $0x70] sm:$0xf] %v630
      %663 = vst [vmem:[%s170 + $0x74] sm:$0xf] %v631
      %664 = vst [vmem:[%s170 + $0x78] sm:$0xf] %v632
      %665 = vst [vmem:[%s170 + $0x7c] sm:$0xf] %v633
      %p666 = scmp.lt.s32.totalorder %s14, 1
      %s667 = scalar_select %p666, %s14, 1
      %s668 = smul.addr %s667, 32
      %s669 = smul.addr %s668, 4
      %s670 = scalar_lea.vmem %s3, %s669
      // Predicated region
      $region33: #{mobilenet_v3_forward.6} parent=31 // pred_check
        %p671 = pneg %p100
      $region34: #{mobilenet_v3_forward.6} parent=31 // pred_check_branch
        %673 = sbr.rel (%p671) target = $region36
      $region35: #{mobilenet_v3_forward.6} parent=31 // pred_region
        _
      $region36: #{mobilenet_v3_forward.6} parent=31 // pred_fallthru
        _
    $region32: #{mobilenet_v3_forward.6} parent=5 // pred_fallthru
      _
    %p674 = scmp.le.s32.totalorder 2, %s9
    // Predicated region
    $region37: #{mobilenet_v3_forward.6} parent=5 // pred_check
      %p675 = pneg %p674
    $region38: #{mobilenet_v3_forward.6} parent=5 // pred_check_branch
      %677 = sbr.rel (%p675) target = $region40
    $region39: #{mobilenet_v3_forward.6} parent=5 // pred_region
      %s678 = ssub.s32 %s9, 2
      // Predicated region
      $region41: #{mobilenet_v3_forward.6} parent=39 // pred_check
        %p679 = pneg %p106
      $region42: #{mobilenet_v3_forward.6} parent=39 // pred_check_branch
        %681 = sbr.rel (%p679) target = $region44
      $region43: #{mobilenet_v3_forward.6} parent=39 // pred_region
        %p682 = scmp.lt.s32.totalorder %s15, 1
        %s683 = scalar_select %p682, %s15, 1
        %s684 = smul.addr %s683, 32
        %s685 = smul.addr %s684, 4
        %s686 = scalar_lea.vmem %s3, %s685
      $region44: #{mobilenet_v3_forward.6} parent=39 // pred_fallthru
        _
    $region40: #{mobilenet_v3_forward.6} parent=5 // pred_fallthru
      _
  $region6: #{mobilenet_v3_forward.6} parent=0 // loop_footer
    %s13 = sadd.s32 1, %s9
  $region7: #{mobilenet_v3_forward.6} parent=0 // loop_footer_branch
    %8 = sbr.rel target = $region3
  $region8: #{mobilenet_v3_forward.6} parent=0 // loop_exit
    _

// kernel: mobilenet_v3_forward.7
$region0: #{mobilenet_v3_forward.7}
  #allocation0 [shape = 'u32[]', space=smem, size = 0x4, offset = 0x4, fixed_abs, tag = 'smem constant byte address 0x4 - core index']
  #allocation1 [shape = 'u32[72,128]{1,0:T(1,128)}', space=vmem, size = 0x9000, scoped, tag = 'internal scratch']
  %s0 = inlined_call_operand.vmem [shape: bf16[2,9,9,128], index: 0, kind: input, shape index: {}]
  %s1 = inlined_call_operand.vmem [shape: bf16[2,9,9,128], index: 1, kind: input, shape index: {}]
  %s2 = inlined_call_operand.vmem [shape: bf16[2,9,9,128], index: 2, kind: input, shape index: {}]
  %s3 = inlined_call_operand.vmem [shape: bf16[2,9,9,128], index: 3, kind: input, shape index: {}]
  %s4 = inlined_call_operand.vmem [shape: f32[9,128], index: 4, kind: input, shape index: {}]
  %s5 = inlined_call_operand.vmem [shape: f32[1,128], index: 5, kind: input, shape index: {}]
  %s6 = inlined_call_operand.vmem [shape: bf16[128,128], index: 6, kind: input, shape index: {}]
  %s7 = inlined_call_operand.vmem [shape: f32[1,128], index: 7, kind: input, shape index: {}]
  %s8 = inlined_call_operand.vmem [shape: bf16[128,128], index: 8, kind: input, shape index: {}]
  %s9 = inlined_call_operand.vmem [shape: f32[1,128], index: 9, kind: input, shape index: {}]
  %s10 = inlined_call_operand.vmem [shape: bf16[128,128], index: 10, kind: input, shape index: {}]
  %s11 = inlined_call_operand.vmem [shape: f32[1,128], index: 11, kind: input, shape index: {}]
  %s12 = inlined_call_operand.vmem [shape: bf16[2,8,8,128], index: 12, kind: output, shape index: {}]
  %s13 = sld [smem:[#allocation0]]
  $region81: #{mobilenet_v3_forward.7} parent=0
    _
  %s15 = ssub.s32 1, %s13
  %s16 = scalar_select 0, %s15, %s13
  loop: start=0, step=1, limit=4
  $region2: #{mobilenet_v3_forward.7} parent=0 // loop_pre_header
    _
  $region3: #{mobilenet_v3_forward.7} parent=0 // loop_header
    %s18 = sphi 0, %s22
    %p19 = scmp.ge.s32.totalorder %s18, 4
    %s28 = sphi 0, %s30
    %s31 = sphi 0, %s28
    %s32 = sphi 0, %s31
    %s48 = sphi 0, %s32
    %s54 = sphi 0, %s56
    %s57 = sphi 0, %s54
    %s58 = sphi 0, %s57
    %s74 = sphi 0, %s58
    %s80 = sphi 0, %s82
    %s83 = sphi 0, %s80
    %s84 = sphi 0, %s83
    %s100 = sphi 0, %s84
    %s106 = sphi 0, %s108
    %s109 = sphi 0, %s106
    %s110 = sphi 0, %s109
    %s126 = sphi 0, %s110
    %s130 = sphi 0, %s130
    %s132 = sphi 0, %s130
    %s133 = sphi 0, %s132
    %s147 = sphi 0, %s133
    %s151 = sphi 0, %s151
    %s153 = sphi 0, %s151
    %s154 = sphi 0, %s153
    %s168 = sphi 0, %s154
    %s172 = sphi 0, %s172
    %s174 = sphi 0, %s172
    %s175 = sphi 0, %s174
    %s189 = sphi 0, %s175
    %s193 = sphi 0, %s193
    %s195 = sphi 0, %s193
    %s196 = sphi 0, %s195
    %s210 = sphi 0, %s196
    %s214 = sphi 0, %s214
    %s216 = sphi 0, %s214
    %s217 = sphi 0, %s216
    %s231 = sphi 0, %s217
    %s235 = sphi 0, %s235
    %s237 = sphi 0, %s235
    %s238 = sphi 0, %s237
    %s252 = sphi 0, %s238
    %s256 = sphi 0, %s256
    %s258 = sphi 0, %s256
    %s259 = sphi 0, %s258
    %s273 = sphi 0, %s259
    %s277 = sphi 0, %s277
    %s279 = sphi 0, %s277
    %s280 = sphi 0, %s279
    %s294 = sphi 0, %s280
    %s300 = sphi 0, %s302
    %s303 = sphi 0, %s300
    %s304 = sphi 0, %s303
    %s320 = sphi 0, %s304
  $region4: #{mobilenet_v3_forward.7} parent=0 // loop_header_branch
    %21 = sbr.rel (%p19) target = $region8
  $region5: #{mobilenet_v3_forward.7} parent=0 // loop_body
    %s23 = ssub.s32 %s18, 1
    %s24 = ssub.s32 %s18, 2
    %s25 = sadd.s32 %s18, 1
    %s26 = ssub.s32 %s18, %s25
    %p27 = scmp.eq.s32.totalorder %s26, 0
    %s29 = sadd.s32 %s28, 1
    %s30 = scalar_select %p27, %s28, %s29
    %p33 = pneg %p27
    %p34 = scmp.eq.s32.totalorder %s18, 1
    %p35 = por %p33, %p34
    %p36 = scmp.ne.s32.totalorder %s28, %s31
    %p37 = scmp.eq.s32.totalorder %s18, 0
    %p38 = por %p36, %p37
    %p39 = scmp.ne.s32.totalorder %s28, %s31
    %p40 = scmp.eq.s32.totalorder %s23, 1
    %p41 = por %p39, %p40
    %p42 = scmp.ne.s32.totalorder %s31, %s32
    %p43 = scmp.eq.s32.totalorder %s23, 0
    %p44 = por %p42, %p43
    %p45 = scmp.ne.s32.totalorder %s31, %s32
    %p46 = scmp.eq.s32.totalorder %s24, 1
    %p47 = por %p45, %p46
    %p49 = scmp.ne.s32.totalorder %s32, %s48
    %p50 = scmp.eq.s32.totalorder %s24, 0
    %p51 = por %p49, %p50
    %s52 = ssub.s32 %s18, %s25
    %p53 = scmp.eq.s32.totalorder %s52, 0
    %s55 = sadd.s32 %s54, 1
    %s56 = scalar_select %p53, %s54, %s55
    %p59 = pneg %p53
    %p60 = scmp.eq.s32.totalorder %s18, 1
    %p61 = por %p59, %p60
    %p62 = scmp.ne.s32.totalorder %s54, %s57
    %p63 = scmp.eq.s32.totalorder %s18, 0
    %p64 = por %p62, %p63
    %p65 = scmp.ne.s32.totalorder %s54, %s57
    %p66 = scmp.eq.s32.totalorder %s23, 1
    %p67 = por %p65, %p66
    %p68 = scmp.ne.s32.totalorder %s57, %s58
    %p69 = scmp.eq.s32.totalorder %s23, 0
    %p70 = por %p68, %p69
    %p71 = scmp.ne.s32.totalorder %s57, %s58
    %p72 = scmp.eq.s32.totalorder %s24, 1
    %p73 = por %p71, %p72
    %p75 = scmp.ne.s32.totalorder %s58, %s74
    %p76 = scmp.eq.s32.totalorder %s24, 0
    %p77 = por %p75, %p76
    %s78 = ssub.s32 %s18, %s25
    %p79 = scmp.eq.s32.totalorder %s78, 0
    %s81 = sadd.s32 %s80, 1
    %s82 = scalar_select %p79, %s80, %s81
    %p85 = pneg %p79
    %p86 = scmp.eq.s32.totalorder %s18, 1
    %p87 = por %p85, %p86
    %p88 = scmp.ne.s32.totalorder %s80, %s83
    %p89 = scmp.eq.s32.totalorder %s18, 0
    %p90 = por %p88, %p89
    %p91 = scmp.ne.s32.totalorder %s80, %s83
    %p92 = scmp.eq.s32.totalorder %s23, 1
    %p93 = por %p91, %p92
    %p94 = scmp.ne.s32.totalorder %s83, %s84
    %p95 = scmp.eq.s32.totalorder %s23, 0
    %p96 = por %p94, %p95
    %p97 = scmp.ne.s32.totalorder %s83, %s84
    %p98 = scmp.eq.s32.totalorder %s24, 1
    %p99 = por %p97, %p98
    %p101 = scmp.ne.s32.totalorder %s84, %s100
    %p102 = scmp.eq.s32.totalorder %s24, 0
    %p103 = por %p101, %p102
    %s104 = ssub.s32 %s18, %s25
    %p105 = scmp.eq.s32.totalorder %s104, 0
    %s107 = sadd.s32 %s106, 1
    %s108 = scalar_select %p105, %s106, %s107
    %p111 = pneg %p105
    %p112 = scmp.eq.s32.totalorder %s18, 1
    %p113 = por %p111, %p112
    %p114 = scmp.ne.s32.totalorder %s106, %s109
    %p115 = scmp.eq.s32.totalorder %s18, 0
    %p116 = por %p114, %p115
    %p117 = scmp.ne.s32.totalorder %s106, %s109
    %p118 = scmp.eq.s32.totalorder %s23, 1
    %p119 = por %p117, %p118
    %p120 = scmp.ne.s32.totalorder %s109, %s110
    %p121 = scmp.eq.s32.totalorder %s23, 0
    %p122 = por %p120, %p121
    %p123 = scmp.ne.s32.totalorder %s109, %s110
    %p124 = scmp.eq.s32.totalorder %s24, 1
    %p125 = por %p123, %p124
    %p127 = scmp.ne.s32.totalorder %s110, %s126
    %p128 = scmp.eq.s32.totalorder %s24, 0
    %p129 = por %p127, %p128
    %s131 = sadd.s32 %s130, 1
    %p134 = scmp.eq.s32.totalorder %s18, 1
    %p135 = scmp.ne.s32.totalorder %s130, %s132
    %p136 = scmp.eq.s32.totalorder %s18, 0
    %p137 = por %p135, %p136
    %p138 = scmp.ne.s32.totalorder %s130, %s132
    %p139 = scmp.eq.s32.totalorder %s23, 1
    %p140 = por %p138, %p139
    %p141 = scmp.ne.s32.totalorder %s132, %s133
    %p142 = scmp.eq.s32.totalorder %s23, 0
    %p143 = por %p141, %p142
    %p144 = scmp.ne.s32.totalorder %s132, %s133
    %p145 = scmp.eq.s32.totalorder %s24, 1
    %p146 = por %p144, %p145
    %p148 = scmp.ne.s32.totalorder %s133, %s147
    %p149 = scmp.eq.s32.totalorder %s24, 0
    %p150 = por %p148, %p149
    %s152 = sadd.s32 %s151, 1
    %p155 = scmp.eq.s32.totalorder %s18, 1
    %p156 = scmp.ne.s32.totalorder %s151, %s153
    %p157 = scmp.eq.s32.totalorder %s18, 0
    %p158 = por %p156, %p157
    %p159 = scmp.ne.s32.totalorder %s151, %s153
    %p160 = scmp.eq.s32.totalorder %s23, 1
    %p161 = por %p159, %p160
    %p162 = scmp.ne.s32.totalorder %s153, %s154
    %p163 = scmp.eq.s32.totalorder %s23, 0
    %p164 = por %p162, %p163
    %p165 = scmp.ne.s32.totalorder %s153, %s154
    %p166 = scmp.eq.s32.totalorder %s24, 1
    %p167 = por %p165, %p166
    %p169 = scmp.ne.s32.totalorder %s154, %s168
    %p170 = scmp.eq.s32.totalorder %s24, 0
    %p171 = por %p169, %p170
    %s173 = sadd.s32 %s172, 1
    %p176 = scmp.eq.s32.totalorder %s18, 1
    %p177 = scmp.ne.s32.totalorder %s172, %s174
    %p178 = scmp.eq.s32.totalorder %s18, 0
    %p179 = por %p177, %p178
    %p180 = scmp.ne.s32.totalorder %s172, %s174
    %p181 = scmp.eq.s32.totalorder %s23, 1
    %p182 = por %p180, %p181
    %p183 = scmp.ne.s32.totalorder %s174, %s175
    %p184 = scmp.eq.s32.totalorder %s23, 0
    %p185 = por %p183, %p184
    %p186 = scmp.ne.s32.totalorder %s174, %s175
    %p187 = scmp.eq.s32.totalorder %s24, 1
    %p188 = por %p186, %p187
    %p190 = scmp.ne.s32.totalorder %s175, %s189
    %p191 = scmp.eq.s32.totalorder %s24, 0
    %p192 = por %p190, %p191
    %s194 = sadd.s32 %s193, 1
    %p197 = scmp.eq.s32.totalorder %s18, 1
    %p198 = scmp.ne.s32.totalorder %s193, %s195
    %p199 = scmp.eq.s32.totalorder %s18, 0
    %p200 = por %p198, %p199
    %p201 = scmp.ne.s32.totalorder %s193, %s195
    %p202 = scmp.eq.s32.totalorder %s23, 1
    %p203 = por %p201, %p202
    %p204 = scmp.ne.s32.totalorder %s195, %s196
    %p205 = scmp.eq.s32.totalorder %s23, 0
    %p206 = por %p204, %p205
    %p207 = scmp.ne.s32.totalorder %s195, %s196
    %p208 = scmp.eq.s32.totalorder %s24, 1
    %p209 = por %p207, %p208
    %p211 = scmp.ne.s32.totalorder %s196, %s210
    %p212 = scmp.eq.s32.totalorder %s24, 0
    %p213 = por %p211, %p212
    %s215 = sadd.s32 %s214, 1
    %p218 = scmp.eq.s32.totalorder %s18, 1
    %p219 = scmp.ne.s32.totalorder %s214, %s216
    %p220 = scmp.eq.s32.totalorder %s18, 0
    %p221 = por %p219, %p220
    %p222 = scmp.ne.s32.totalorder %s214, %s216
    %p223 = scmp.eq.s32.totalorder %s23, 1
    %p224 = por %p222, %p223
    %p225 = scmp.ne.s32.totalorder %s216, %s217
    %p226 = scmp.eq.s32.totalorder %s23, 0
    %p227 = por %p225, %p226
    %p228 = scmp.ne.s32.totalorder %s216, %s217
    %p229 = scmp.eq.s32.totalorder %s24, 1
    %p230 = por %p228, %p229
    %p232 = scmp.ne.s32.totalorder %s217, %s231
    %p233 = scmp.eq.s32.totalorder %s24, 0
    %p234 = por %p232, %p233
    %s236 = sadd.s32 %s235, 1
    %p239 = scmp.eq.s32.totalorder %s18, 1
    %p240 = scmp.ne.s32.totalorder %s235, %s237
    %p241 = scmp.eq.s32.totalorder %s18, 0
    %p242 = por %p240, %p241
    %p243 = scmp.ne.s32.totalorder %s235, %s237
    %p244 = scmp.eq.s32.totalorder %s23, 1
    %p245 = por %p243, %p244
    %p246 = scmp.ne.s32.totalorder %s237, %s238
    %p247 = scmp.eq.s32.totalorder %s23, 0
    %p248 = por %p246, %p247
    %p249 = scmp.ne.s32.totalorder %s237, %s238
    %p250 = scmp.eq.s32.totalorder %s24, 1
    %p251 = por %p249, %p250
    %p253 = scmp.ne.s32.totalorder %s238, %s252
    %p254 = scmp.eq.s32.totalorder %s24, 0
    %p255 = por %p253, %p254
    %s257 = sadd.s32 %s256, 1
    %p260 = scmp.eq.s32.totalorder %s18, 1
    %p261 = scmp.ne.s32.totalorder %s256, %s258
    %p262 = scmp.eq.s32.totalorder %s18, 0
    %p263 = por %p261, %p262
    %p264 = scmp.ne.s32.totalorder %s256, %s258
    %p265 = scmp.eq.s32.totalorder %s23, 1
    %p266 = por %p264, %p265
    %p267 = scmp.ne.s32.totalorder %s258, %s259
    %p268 = scmp.eq.s32.totalorder %s23, 0
    %p269 = por %p267, %p268
    %p270 = scmp.ne.s32.totalorder %s258, %s259
    %p271 = scmp.eq.s32.totalorder %s24, 1
    %p272 = por %p270, %p271
    %p274 = scmp.ne.s32.totalorder %s259, %s273
    %p275 = scmp.eq.s32.totalorder %s24, 0
    %p276 = por %p274, %p275
    %s278 = sadd.s32 %s277, 1
    %p281 = scmp.eq.s32.totalorder %s18, 1
    %p282 = scmp.ne.s32.totalorder %s277, %s279
    %p283 = scmp.eq.s32.totalorder %s18, 0
    %p284 = por %p282, %p283
    %p285 = scmp.ne.s32.totalorder %s277, %s279
    %p286 = scmp.eq.s32.totalorder %s23, 1
    %p287 = por %p285, %p286
    %p288 = scmp.ne.s32.totalorder %s279, %s280
    %p289 = scmp.eq.s32.totalorder %s23, 0
    %p290 = por %p288, %p289
    %p291 = scmp.ne.s32.totalorder %s279, %s280
    %p292 = scmp.eq.s32.totalorder %s24, 1
    %p293 = por %p291, %p292
    %p295 = scmp.ne.s32.totalorder %s280, %s294
    %p296 = scmp.eq.s32.totalorder %s24, 0
    %p297 = por %p295, %p296
    %s298 = ssub.s32 %s18, %s25
    %p299 = scmp.eq.s32.totalorder %s298, 0
    %s301 = sadd.s32 %s300, 1
    %s302 = scalar_select %p299, %s300, %s301
    %p305 = pneg %p299
    %p306 = scmp.eq.s32.totalorder %s18, 1
    %p307 = por %p305, %p306
    %p308 = scmp.ne.s32.totalorder %s300, %s303
    %p309 = scmp.eq.s32.totalorder %s18, 0
    %p310 = por %p308, %p309
    %p311 = scmp.ne.s32.totalorder %s300, %s303
    %p312 = scmp.eq.s32.totalorder %s23, 1
    %p313 = por %p311, %p312
    %p314 = scmp.ne.s32.totalorder %s303, %s304
    %p315 = scmp.eq.s32.totalorder %s23, 0
    %p316 = por %p314, %p315
    %p317 = scmp.ne.s32.totalorder %s303, %s304
    %p318 = scmp.eq.s32.totalorder %s24, 1
    %p319 = por %p317, %p318
    %p321 = scmp.ne.s32.totalorder %s304, %s320
    %p322 = scmp.eq.s32.totalorder %s24, 0
    %p323 = por %p321, %p322
    %p324 = scmp.le.s32.totalorder 1, %s18
    %p325 = scmp.lt.s32.totalorder %s18, 3
    %p326 = pnand %p324, %p325
    %p327 = pneg %p326
    // Predicated region
    $region9: #{mobilenet_v3_forward.7} parent=5 // pred_check
      _
    $region10: #{mobilenet_v3_forward.7} parent=5 // pred_check_branch
      %329 = sbr.rel (%p326) target = $region12
    $region11: #{mobilenet_v3_forward.7} parent=5 // pred_region
      %s330 = ssub.s32 %s18, 1
      // Predicated region
      $region13: #{mobilenet_v3_forward.7} parent=11 // pred_check
        %p331 = pneg %p143
      $region14: #{mobilenet_v3_forward.7} parent=11 // pred_check_branch
        %333 = sbr.rel (%p331) target = $region16
      $region15: #{mobilenet_v3_forward.7} parent=11 // pred_region
        _
      $region16: #{mobilenet_v3_forward.7} parent=11 // pred_fallthru
        _
      // Predicated region
      $region17: #{mobilenet_v3_forward.7} parent=11 // pred_check
        %p334 = pneg %p164
      $region18: #{mobilenet_v3_forward.7} parent=11 // pred_check_branch
        %336 = sbr.rel (%p334) target = $region20
      $region19: #{mobilenet_v3_forward.7} parent=11 // pred_region
        _
      $region20: #{mobilenet_v3_forward.7} parent=11 // pred_fallthru
        _
      // Predicated region
      $region21: #{mobilenet_v3_forward.7} parent=11 // pred_check
        %p337 = pneg %p185
      $region22: #{mobilenet_v3_forward.7} parent=11 // pred_check_branch
        %339 = sbr.rel (%p337) target = $region24
      $region23: #{mobilenet_v3_forward.7} parent=11 // pred_region
        _
      $region24: #{mobilenet_v3_forward.7} parent=11 // pred_fallthru
        _
      // Predicated region
      $region25: #{mobilenet_v3_forward.7} parent=11 // pred_check
        %p340 = pneg %p206
      $region26: #{mobilenet_v3_forward.7} parent=11 // pred_check_branch
        %342 = sbr.rel (%p340) target = $region28
      $region27: #{mobilenet_v3_forward.7} parent=11 // pred_region
        _
      $region28: #{mobilenet_v3_forward.7} parent=11 // pred_fallthru
        _
      // Predicated region
      $region29: #{mobilenet_v3_forward.7} parent=11 // pred_check
        %p343 = pneg %p227
      $region30: #{mobilenet_v3_forward.7} parent=11 // pred_check_branch
        %345 = sbr.rel (%p343) target = $region32
      $region31: #{mobilenet_v3_forward.7} parent=11 // pred_region
        _
      $region32: #{mobilenet_v3_forward.7} parent=11 // pred_fallthru
        _
      // Predicated region
      $region33: #{mobilenet_v3_forward.7} parent=11 // pred_check
        %p346 = pneg %p248
      $region34: #{mobilenet_v3_forward.7} parent=11 // pred_check_branch
        %348 = sbr.rel (%p346) target = $region36
      $region35: #{mobilenet_v3_forward.7} parent=11 // pred_region
        _
      $region36: #{mobilenet_v3_forward.7} parent=11 // pred_fallthru
        _
      // Predicated region
      $region37: #{mobilenet_v3_forward.7} parent=11 // pred_check
        %p349 = pneg %p269
      $region38: #{mobilenet_v3_forward.7} parent=11 // pred_check_branch
        %351 = sbr.rel (%p349) target = $region40
      $region39: #{mobilenet_v3_forward.7} parent=11 // pred_region
        _
      $region40: #{mobilenet_v3_forward.7} parent=11 // pred_fallthru
        _
      // Predicated region
      $region41: #{mobilenet_v3_forward.7} parent=11 // pred_check
        %p352 = pneg %p290
      $region42: #{mobilenet_v3_forward.7} parent=11 // pred_check_branch
        %354 = sbr.rel (%p352) target = $region44
      $region43: #{mobilenet_v3_forward.7} parent=11 // pred_region
        _
      $region44: #{mobilenet_v3_forward.7} parent=11 // pred_fallthru
        _
    $region12: #{mobilenet_v3_forward.7} parent=5 // pred_fallthru
      _
    %p355 = scmp.lt.s32.totalorder %s18, 2
    // Predicated region
    $region45: #{mobilenet_v3_forward.7} parent=5 // pred_check
      %p356 = pneg %p355
    $region46: #{mobilenet_v3_forward.7} parent=5 // pred_check_branch
      %358 = sbr.rel (%p356) target = $region48
    $region47: #{mobilenet_v3_forward.7} parent=5 // pred_region
      // Predicated region
      $region49: #{mobilenet_v3_forward.7} parent=47 // pred_check
        %p359 = pneg %p38
      $region50: #{mobilenet_v3_forward.7} parent=47 // pred_check_branch
        %361 = sbr.rel (%p359) target = $region52
      $region51: #{mobilenet_v3_forward.7} parent=47 // pred_region
        %p362 = scmp.lt.s32.totalorder %s18, 1
        %s363 = scalar_select %p362, %s18, 1
        %s364 = smul.addr %s363, 18
        %s365 = smul.addr %s364, 4
        %s366 = scalar_lea.vmem %s0, %s365
      $region52: #{mobilenet_v3_forward.7} parent=47 // pred_fallthru
        _
      // Predicated region
      $region53: #{mobilenet_v3_forward.7} parent=47 // pred_check
        %p367 = pneg %p64
      $region54: #{mobilenet_v3_forward.7} parent=47 // pred_check_branch
        %369 = sbr.rel (%p367) target = $region56
      $region55: #{mobilenet_v3_forward.7} parent=47 // pred_region
        %p370 = scmp.lt.s32.totalorder %s18, 1
        %s371 = scalar_select %p370, %s18, 1
        %s372 = smul.addr %s371, 18
        %s373 = smul.addr %s372, 4
        %s374 = scalar_lea.vmem %s1, %s373
      $region56: #{mobilenet_v3_forward.7} parent=47 // pred_fallthru
        _
      // Predicated region
      $region57: #{mobilenet_v3_forward.7} parent=47 // pred_check
        %p375 = pneg %p90
      $region58: #{mobilenet_v3_forward.7} parent=47 // pred_check_branch
        %377 = sbr.rel (%p375) target = $region60
      $region59: #{mobilenet_v3_forward.7} parent=47 // pred_region
        %p378 = scmp.lt.s32.totalorder %s18, 1
        %s379 = scalar_select %p378, %s18, 1
        %s380 = smul.addr %s379, 18
        %s381 = smul.addr %s380, 4
        %s382 = scalar_lea.vmem %s2, %s381
      $region60: #{mobilenet_v3_forward.7} parent=47 // pred_fallthru
        _
      // Predicated region
      $region61: #{mobilenet_v3_forward.7} parent=47 // pred_check
        %p383 = pneg %p116
      $region62: #{mobilenet_v3_forward.7} parent=47 // pred_check_branch
        %385 = sbr.rel (%p383) target = $region64
      $region63: #{mobilenet_v3_forward.7} parent=47 // pred_region
        %p386 = scmp.lt.s32.totalorder %s18, 1
        %s387 = scalar_select %p386, %s18, 1
        %s388 = smul.addr %s387, 18
        %s389 = smul.addr %s388, 4
        %s390 = scalar_lea.vmem %s3, %s389
      $region64: #{mobilenet_v3_forward.7} parent=47 // pred_fallthru
        _
    $region48: #{mobilenet_v3_forward.7} parent=5 // pred_fallthru
      _
    %p391 = scmp.le.s32.totalorder 1, %s18
    %p392 = scmp.lt.s32.totalorder %s18, 3
    %p393 = pnand %p391, %p392
    %p394 = pneg %p393
    // Predicated region
    $region65: #{mobilenet_v3_forward.7} parent=5 // pred_check
      _
    $region66: #{mobilenet_v3_forward.7} parent=5 // pred_check_branch
      %396 = sbr.rel (%p393) target = $region68
    $region67: #{mobilenet_v3_forward.7} parent=5 // pred_region
      %s397 = ssub.s32 %s18, 1
      %p398 = scmp.lt.s32.totalorder %s23, 1
      %s399 = scalar_select %p398, %s23, 1
      %s400 = smul.addr %s399, 18
      %s401 = smul.addr %s400, 4
      %s402 = scalar_lea.vmem %s0, %s401
      %p403 = pneg %p44
      %p404 = pneg %p41
      %p405 = scmp.lt.s32.totalorder %s23, 1
      %s406 = scalar_select %p405, %s23, 1
      %s407 = smul.addr %s406, 18
      %s408 = smul.addr %s407, 4
      %s409 = scalar_lea.vmem %s1, %s408
      %p410 = pneg %p70
      %p411 = pneg %p67
      %p412 = scmp.lt.s32.totalorder %s23, 1
      %s413 = scalar_select %p412, %s23, 1
      %s414 = smul.addr %s413, 18
      %s415 = smul.addr %s414, 4
      %s416 = scalar_lea.vmem %s2, %s415
      %p417 = pneg %p96
      %p418 = pneg %p93
      %p419 = scmp.lt.s32.totalorder %s23, 1
      %s420 = scalar_select %p419, %s23, 1
      %s421 = smul.addr %s420, 18
      %s422 = smul.addr %s421, 4
      %s423 = scalar_lea.vmem %s3, %s422
      %p424 = pneg %p122
      %p425 = pneg %p119
      %p426 = pneg %p143
      %p427 = pneg %p140
      %p428 = pneg %p164
      %p429 = pneg %p161
      %p430 = pneg %p185
      %p431 = pneg %p182
      %p432 = pneg %p206
      %p433 = pneg %p203
      %p434 = pneg %p227
      %p435 = pneg %p224
      %p436 = pneg %p248
      %p437 = pneg %p245
      %p438 = pneg %p269
      %p439 = pneg %p266
      %p440 = pneg %p290
      %p441 = pneg %p287
      %p442 = pneg %p316
      %p443 = pneg %p313
      %p444 = scmp.lt.s32.totalorder %s23, 1
      %s445 = scalar_select %p444, %s23, 1
      %s446 = smul.addr %s445, 8
      %s447 = smul.addr %s446, 4
      %s448 = scalar_lea.vmem %s12, %s447
      %p449 = scmp.lt.s32.totalorder %s23, 1
      %s450 = scalar_select %p449, %s23, 1
      %s451 = smul.addr %s450, 18
      %s452 = smul.addr %s451, 4
      %s453 = scalar_lea.vmem %s0, %s452
      %p454 = scmp.lt.s32.totalorder %s23, 1
      %s455 = scalar_select %p454, %s23, 1
      %s456 = smul.addr %s455, 18
      %s457 = smul.addr %s456, 4
      %s458 = scalar_lea.vmem %s1, %s457
      %p459 = scmp.lt.s32.totalorder %s23, 1
      %s460 = scalar_select %p459, %s23, 1
      %s461 = smul.addr %s460, 18
      %s462 = smul.addr %s461, 4
      %s463 = scalar_lea.vmem %s2, %s462
      %p464 = scmp.lt.s32.totalorder %s23, 1
      %s465 = scalar_select %p464, %s23, 1
      %s466 = smul.addr %s465, 18
      %s467 = smul.addr %s466, 4
      %s468 = scalar_lea.vmem %s3, %s467
      %p469 = scmp.lt.s32.totalorder %s23, 1
      %s470 = scalar_select %p469, %s23, 1
      %s471 = smul.addr %s470, 8
      %s472 = smul.addr %s471, 4
      %s473 = scalar_lea.vmem %s12, %s472
      %v474 = vld [vmem:[%s4] sm:$0xff]
      %v475 = vld [vmem:[%s4 + $0x8] sm:$0x1]
      %v476 = vld [vmem:[%s453] sm:$0xf]
      %v477 = vld [vmem:[%s453 + $0x8] sm:$0xf]
      %v478 = vld [vmem:[%s453 + $0x10] sm:$0xf]
      %v479 = vld [vmem:[%s453 + $0x18] sm:$0xf]
      %v480 = vld [vmem:[%s453 + $0x20] sm:$0xf]
      %v481 = vld [vmem:[%s453 + $0x28] sm:$0xf]
      %v482 = vld [vmem:[%s453 + $0x30] sm:$0xf]
      %v483 = vld [vmem:[%s453 + $0x38] sm:$0xf]
      %v484 = vunpack.c.l.bf16 %v476
      %v485 = vunpack.c.l.bf16 %v477
      %v486 = vunpack.c.l.bf16 %v478
      %v487 = vunpack.c.l.bf16 %v479
      %v488 = vunpack.c.l.bf16 %v480
      %v489 = vunpack.c.l.bf16 %v481
      %v490 = vunpack.c.l.bf16 %v482
      %v491 = vunpack.c.l.bf16 %v483
      %v492 = vperm.slane %v474, 0
      %v493 = vmul.f32 %v484, %v492
      %v494 = vmul.f32 %v485, %v492
      %v495 = vmul.f32 %v486, %v492
      %v496 = vmul.f32 %v487, %v492
      %v497 = vmul.f32 %v488, %v492
      %v498 = vmul.f32 %v489, %v492
      %v499 = vmul.f32 %v490, %v492
      %v500 = vmul.f32 %v491, %v492
      %v501 = vadd.f32 %v493, 0.0
      %v502 = vadd.f32 %v494, 0.0
      %v503 = vadd.f32 %v495, 0.0
      %v504 = vadd.f32 %v496, 0.0
      %v505 = vadd.f32 %v497, 0.0
      %v506 = vadd.f32 %v498, 0.0
      %v507 = vadd.f32 %v499, 0.0
      %v508 = vadd.f32 %v500, 0.0
      %v509 = vld [vmem:[%s458] sm:$0xf]
      %v510 = vld [vmem:[%s458 + $0x8] sm:$0xf]
      %v511 = vld [vmem:[%s458 + $0x10] sm:$0xf]
      %v512 = vld [vmem:[%s458 + $0x18] sm:$0xf]
      %v513 = vld [vmem:[%s458 + $0x20] sm:$0xf]
      %v514 = vld [vmem:[%s458 + $0x28] sm:$0xf]
      %v515 = vld [vmem:[%s458 + $0x30] sm:$0xf]
      %v516 = vld [vmem:[%s458 + $0x38] sm:$0xf]
      %v517 = vunpack.c.l.bf16 %v509
      %v518 = vunpack.c.l.bf16 %v510
      %v519 = vunpack.c.l.bf16 %v511
      %v520 = vunpack.c.l.bf16 %v512
      %v521 = vunpack.c.l.bf16 %v513
      %v522 = vunpack.c.l.bf16 %v514
      %v523 = vunpack.c.l.bf16 %v515
      %v524 = vunpack.c.l.bf16 %v516
      %v525 = vperm.slane %v474, 1
      %v526 = vmul.f32 %v517, %v525
      %v527 = vmul.f32 %v518, %v525
      %v528 = vmul.f32 %v519, %v525
      %v529 = vmul.f32 %v520, %v525
      %v530 = vmul.f32 %v521, %v525
      %v531 = vmul.f32 %v522, %v525
      %v532 = vmul.f32 %v523, %v525
      %v533 = vmul.f32 %v524, %v525
      %v534 = vadd.f32 %v501, %v526
      %v535 = vadd.f32 %v502, %v527
      %v536 = vadd.f32 %v503, %v528
      %v537 = vadd.f32 %v504, %v529
      %v538 = vadd.f32 %v505, %v530
      %v539 = vadd.f32 %v506, %v531
      %v540 = vadd.f32 %v507, %v532
      %v541 = vadd.f32 %v508, %v533
      %v542 = vld [vmem:[%s453 + $0x4] sm:$0x1]
      %v543 = vld [vmem:[%s453 + $0xc] sm:$0x1]
      %v544 = vld [vmem:[%s453 + $0x14] sm:$0x1]
      %v545 = vld [vmem:[%s453 + $0x1c] sm:$0x1]
      %v546 = vld [vmem:[%s453 + $0x24] sm:$0x1]
      %v547 = vld [vmem:[%s453 + $0x2c] sm:$0x1]
      %v548 = vld [vmem:[%s453 + $0x34] sm:$0x1]
      %v549 = vld [vmem:[%s453 + $0x3c] sm:$0x1]
      %v550 = vunpack.c.l.bf16 %v542
      %v551 = vunpack.c.l.bf16 %v543
      %v552 = vunpack.c.l.bf16 %v544
      %v553 = vunpack.c.l.bf16 %v545
      %v554 = vunpack.c.l.bf16 %v546
      %v555 = vunpack.c.l.bf16 %v547
      %v556 = vunpack.c.l.bf16 %v548
      %v557 = vunpack.c.l.bf16 %v549
      %v558 = vperm.slane %v474, 2
      %v559 = vmul.f32 %v484, %v558
      %v560 = vmul.f32 %v550, %v558
      %v561 = vmul.f32 %v485, %v558
      %v562 = vmul.f32 %v551, %v558
      %v563 = vmul.f32 %v486, %v558
      %v564 = vmul.f32 %v552, %v558
      %v565 = vmul.f32 %v487, %v558
      %v566 = vmul.f32 %v553, %v558
      %v567 = vmul.f32 %v488, %v558
      %v568 = vmul.f32 %v554, %v558
      %v569 = vmul.f32 %v489, %v558
      %v570 = vmul.f32 %v555, %v558
      %v571 = vmul.f32 %v490, %v558
      %v572 = vmul.f32 %v556, %v558
      %v573 = vmul.f32 %v491, %v558
      %v574 = vmul.f32 %v557, %v558
      %vm591 = vcmask 1046528
      %v592 = vrot.slane %v559, 1
      %v593 = vrot.slane %v560, 1
      %v594 = vsel %vm591, %v592, %v593
      %v595 = vrot.slane %v561, 1
      %v596 = vrot.slane %v562, 1
      %v597 = vsel %vm591, %v595, %v596
      %v598 = vrot.slane %v563, 1
      %v599 = vrot.slane %v564, 1
      %v600 = vsel %vm591, %v598, %v599
      %v601 = vrot.slane %v565, 1
      %v602 = vrot.slane %v566, 1
      %v603 = vsel %vm591, %v601, %v602
      %v604 = vrot.slane %v567, 1
      %v605 = vrot.slane %v568, 1
      %v606 = vsel %vm591, %v604, %v605
      %v607 = vrot.slane %v569, 1
      %v608 = vrot.slane %v570, 1
      %v609 = vsel %vm591, %v607, %v608
      %v610 = vrot.slane %v571, 1
      %v611 = vrot.slane %v572, 1
      %v612 = vsel %vm591, %v610, %v611
      %v613 = vrot.slane %v573, 1
      %v614 = vrot.slane %v574, 1
      %v615 = vsel %vm591, %v613, %v614
      %v624 = vadd.f32 %v534, %v594
      %v625 = vadd.f32 %v535, %v597
      %v626 = vadd.f32 %v536, %v600
      %v627 = vadd.f32 %v537, %v603
      %v628 = vadd.f32 %v538, %v606
      %v629 = vadd.f32 %v539, %v609
      %v630 = vadd.f32 %v540, %v612
      %v631 = vadd.f32 %v541, %v615
      %v632 = vld [vmem:[%s463] sm:$0xf]
      %v633 = vld [vmem:[%s463 + $0x8] sm:$0xf]
      %v634 = vld [vmem:[%s463 + $0x10] sm:$0xf]
      %v635 = vld [vmem:[%s463 + $0x18] sm:$0xf]
      %v636 = vld [vmem:[%s463 + $0x20] sm:$0xf]
      %v637 = vld [vmem:[%s463 + $0x28] sm:$0xf]
      %v638 = vld [vmem:[%s463 + $0x30] sm:$0xf]
      %v639 = vld [vmem:[%s463 + $0x38] sm:$0xf]
      %v640 = vunpack.c.l.bf16 %v632
      %v641 = vunpack.c.l.bf16 %v633
      %v642 = vunpack.c.l.bf16 %v634
      %v643 = vunpack.c.l.bf16 %v635
      %v644 = vunpack.c.l.bf16 %v636
      %v645 = vunpack.c.l.bf16 %v637
      %v646 = vunpack.c.l.bf16 %v638
      %v647 = vunpack.c.l.bf16 %v639
      %v648 = vperm.slane %v474, 3
      %v649 = vmul.f32 %v640, %v648
      %v650 = vmul.f32 %v641, %v648
      %v651 = vmul.f32 %v642, %v648
      %v652 = vmul.f32 %v643, %v648
      %v653 = vmul.f32 %v644, %v648
      %v654 = vmul.f32 %v645, %v648
      %v655 = vmul.f32 %v646, %v648
      %v656 = vmul.f32 %v647, %v648
      %v657 = vadd.f32 %v624, %v649
      %v658 = vadd.f32 %v625, %v650
      %v659 = vadd.f32 %v626, %v651
      %v660 = vadd.f32 %v627, %v652
      %v661 = vadd.f32 %v628, %v653
      %v662 = vadd.f32 %v629, %v654
      %v663 = vadd.f32 %v630, %v655
      %v664 = vadd.f32 %v631, %v656
      %v665 = vld [vmem:[%s468] sm:$0xf]
      %v666 = vld [vmem:[%s468 + $0x8] sm:$0xf]
      %v667 = vld [vmem:[%s468 + $0x10] sm:$0xf]
      %v668 = vld [vmem:[%s468 + $0x18] sm:$0xf]
      %v669 = vld [vmem:[%s468 + $0x20] sm:$0xf]
      %v670 = vld [vmem:[%s468 + $0x28] sm:$0xf]
      %v671 = vld [vmem:[%s468 + $0x30] sm:$0xf]
      %v672 = vld [vmem:[%s468 + $0x38] sm:$0xf]
      %v673 = vunpack.c.l.bf16 %v665
      %v674 = vunpack.c.l.bf16 %v666
      %v675 = vunpack.c.l.bf16 %v667
      %v676 = vunpack.c.l.bf16 %v668
      %v677 = vunpack.c.l.bf16 %v669
      %v678 = vunpack.c.l.bf16 %v670
      %v679 = vunpack.c.l.bf16 %v671
      %v680 = vunpack.c.l.bf16 %v672
      %v681 = vperm.slane %v474, 4
      %v682 = vmul.f32 %v673, %v681
      %v683 = vmul.f32 %v674, %v681
      %v684 = vmul.f32 %v675, %v681
      %v685 = vmul.f32 %v676, %v681
      %v686 = vmul.f32 %v677, %v681
      %v687 = vmul.f32 %v678, %v681
      %v688 = vmul.f32 %v679, %v681
      %v689 = vmul.f32 %v680, %v681
      %v690 = vadd.f32 %v657, %v682
      %v691 = vadd.f32 %v658, %v683
      %v692 = vadd.f32 %v659, %v684
      %v693 = vadd.f32 %v660, %v685
      %v694 = vadd.f32 %v661, %v686
      %v695 = vadd.f32 %v662, %v687
      %v696 = vadd.f32 %v663, %v688
      %v697 = vadd.f32 %v664, %v689
      %v698 = vld [vmem:[%s463 + $0x4] sm:$0x1]
      %v699 = vld [vmem:[%s463 + $0xc] sm:$0x1]
      %v700 = vld [vmem:[%s463 + $0x14] sm:$0x1]
      %v701 = vld [vmem:[%s463 + $0x1c] sm:$0x1]
      %v702 = vld [vmem:[%s463 + $0x24] sm:$0x1]
      %v703 = vld [vmem:[%s463 + $0x2c] sm:$0x1]
      %v704 = vld [vmem:[%s463 + $0x34] sm:$0x1]
      %v705 = vld [vmem:[%s463 + $0x3c] sm:$0x1]
      %v706 = vunpack.c.l.bf16 %v698
      %v707 = vunpack.c.l.bf16 %v699
      %v708 = vunpack.c.l.bf16 %v700
      %v709 = vunpack.c.l.bf16 %v701
      %v710 = vunpack.c.l.bf16 %v702
      %v711 = vunpack.c.l.bf16 %v703
      %v712 = vunpack.c.l.bf16 %v704
      %v713 = vunpack.c.l.bf16 %v705
      %v714 = vperm.slane %v474, 5
      %v715 = vmul.f32 %v640, %v714
      %v716 = vmul.f32 %v706, %v714
      %v717 = vmul.f32 %v641, %v714
      %v718 = vmul.f32 %v707, %v714
      %v719 = vmul.f32 %v642, %v714
      %v720 = vmul.f32 %v708, %v714
      %v721 = vmul.f32 %v643, %v714
      %v722 = vmul.f32 %v709, %v714
      %v723 = vmul.f32 %v644, %v714
      %v724 = vmul.f32 %v710, %v714
      %v725 = vmul.f32 %v645, %v714
      %v726 = vmul.f32 %v711, %v714
      %v727 = vmul.f32 %v646, %v714
      %v728 = vmul.f32 %v712, %v714
      %v729 = vmul.f32 %v647, %v714
      %v730 = vmul.f32 %v713, %v714
      %v747 = vrot.slane %v715, 1
      %v748 = vrot.slane %v716, 1
      %v749 = vsel %vm591, %v747, %v748
      %v750 = vrot.slane %v717, 1
      %v751 = vrot.slane %v718, 1
      %v752 = vsel %vm591, %v750, %v751
      %v753 = vrot.slane %v719, 1
      %v754 = vrot.slane %v720, 1
      %v755 = vsel %vm591, %v753, %v754
      %v756 = vrot.slane %v721, 1
      %v757 = vrot.slane %v722, 1
      %v758 = vsel %vm591, %v756, %v757
      %v759 = vrot.slane %v723, 1
      %v760 = vrot.slane %v724, 1
      %v761 = vsel %vm591, %v759, %v760
      %v762 = vrot.slane %v725, 1
      %v763 = vrot.slane %v726, 1
      %v764 = vsel %vm591, %v762, %v763
      %v765 = vrot.slane %v727, 1
      %v766 = vrot.slane %v728, 1
      %v767 = vsel %vm591, %v765, %v766
      %v768 = vrot.slane %v729, 1
      %v769 = vrot.slane %v730, 1
      %v770 = vsel %vm591, %v768, %v769
      %v779 = vadd.f32 %v690, %v749
      %v780 = vadd.f32 %v691, %v752
      %v781 = vadd.f32 %v692, %v755
      %v782 = vadd.f32 %v693, %v758
      %v783 = vadd.f32 %v694, %v761
      %v784 = vadd.f32 %v695, %v764
      %v785 = vadd.f32 %v696, %v767
      %v786 = vadd.f32 %v697, %v770
      %s787 = scalar_lea.vmem %s453, 8
      %v788 = vld [vmem:[%s787] sm:$0xf]
      %v789 = vld [vmem:[%s787 + $0x8] sm:$0xf]
      %v790 = vld [vmem:[%s787 + $0x10] sm:$0xf]
      %v791 = vld [vmem:[%s787 + $0x18] sm:$0xf]
      %v792 = vld [vmem:[%s787 + $0x20] sm:$0xf]
      %v793 = vld [vmem:[%s787 + $0x28] sm:$0xf]
      %v794 = vld [vmem:[%s787 + $0x30] sm:$0xf]
      %v795 = vld [vmem:[%s787 + $0x38] sm:$0xf]
      %v796 = vunpack.c.l.bf16 %v788
      %v797 = vunpack.c.l.bf16 %v789
      %v798 = vunpack.c.l.bf16 %v790
      %v799 = vunpack.c.l.bf16 %v791
      %v800 = vunpack.c.l.bf16 %v792
      %v801 = vunpack.c.l.bf16 %v793
      %v802 = vunpack.c.l.bf16 %v794
      %v803 = vunpack.c.l.bf16 %v795
      %v804 = vperm.slane %v474, 6
      %v805 = vmul.f32 %v796, %v804
      %v806 = vmul.f32 %v797, %v804
      %v807 = vmul.f32 %v798, %v804
      %v808 = vmul.f32 %v799, %v804
      %v809 = vmul.f32 %v800, %v804
      %v810 = vmul.f32 %v801, %v804
      %v811 = vmul.f32 %v802, %v804
      %v812 = vmul.f32 %v803, %v804
      %v813 = vadd.f32 %v779, %v805
      %v814 = vadd.f32 %v780, %v806
      %v815 = vadd.f32 %v781, %v807
      %v816 = vadd.f32 %v782, %v808
      %v817 = vadd.f32 %v783, %v809
      %v818 = vadd.f32 %v784, %v810
      %v819 = vadd.f32 %v785, %v811
      %v820 = vadd.f32 %v786, %v812
      %s821 = scalar_lea.vmem %s458, 8
      %v822 = vld [vmem:[%s821] sm:$0xf]
      %v823 = vld [vmem:[%s821 + $0x8] sm:$0xf]
      %v824 = vld [vmem:[%s821 + $0x10] sm:$0xf]
      %v825 = vld [vmem:[%s821 + $0x18] sm:$0xf]
      %v826 = vld [vmem:[%s821 + $0x20] sm:$0xf]
      %v827 = vld [vmem:[%s821 + $0x28] sm:$0xf]
      %v828 = vld [vmem:[%s821 + $0x30] sm:$0xf]
      %v829 = vld [vmem:[%s821 + $0x38] sm:$0xf]
      %v830 = vunpack.c.l.bf16 %v822
      %v831 = vunpack.c.l.bf16 %v823
      %v832 = vunpack.c.l.bf16 %v824
      %v833 = vunpack.c.l.bf16 %v825
      %v834 = vunpack.c.l.bf16 %v826
      %v835 = vunpack.c.l.bf16 %v827
      %v836 = vunpack.c.l.bf16 %v828
      %v837 = vunpack.c.l.bf16 %v829
      %v838 = vperm.slane %v474, 7
      %v839 = vmul.f32 %v830, %v838
      %v840 = vmul.f32 %v831, %v838
      %v841 = vmul.f32 %v832, %v838
      %v842 = vmul.f32 %v833, %v838
      %v843 = vmul.f32 %v834, %v838
      %v844 = vmul.f32 %v835, %v838
      %v845 = vmul.f32 %v836, %v838
      %v846 = vmul.f32 %v837, %v838
      %v847 = vadd.f32 %v813, %v839
      %v848 = vadd.f32 %v814, %v840
      %v849 = vadd.f32 %v815, %v841
      %v850 = vadd.f32 %v816, %v842
      %v851 = vadd.f32 %v817, %v843
      %v852 = vadd.f32 %v818, %v844
      %v853 = vadd.f32 %v819, %v845
      %v854 = vadd.f32 %v820, %v846
      %v855 = vld [vmem:[%s787 + $0x4] sm:$0x1]
      %v856 = vld [vmem:[%s787 + $0xc] sm:$0x1]
      %v857 = vld [vmem:[%s787 + $0x14] sm:$0x1]
      %v858 = vld [vmem:[%s787 + $0x1c] sm:$0x1]
      %v859 = vld [vmem:[%s787 + $0x24] sm:$0x1]
      %v860 = vld [vmem:[%s787 + $0x2c] sm:$0x1]
      %v861 = vld [vmem:[%s787 + $0x34] sm:$0x1]
      %v862 = vld [vmem:[%s787 + $0x3c] sm:$0x1]
      %v863 = vunpack.c.l.bf16 %v855
      %v864 = vunpack.c.l.bf16 %v856
      %v865 = vunpack.c.l.bf16 %v857
      %v866 = vunpack.c.l.bf16 %v858
      %v867 = vunpack.c.l.bf16 %v859
      %v868 = vunpack.c.l.bf16 %v860
      %v869 = vunpack.c.l.bf16 %v861
      %v870 = vunpack.c.l.bf16 %v862
      %v871 = vperm.slane %v475, 0
      %v872 = vmul.f32 %v796, %v871
      %v873 = vmul.f32 %v863, %v871
      %v874 = vmul.f32 %v797, %v871
      %v875 = vmul.f32 %v864, %v871
      %v876 = vmul.f32 %v798, %v871
      %v877 = vmul.f32 %v865, %v871
      %v878 = vmul.f32 %v799, %v871
      %v879 = vmul.f32 %v866, %v871
      %v880 = vmul.f32 %v800, %v871
      %v881 = vmul.f32 %v867, %v871
      %v882 = vmul.f32 %v801, %v871
      %v883 = vmul.f32 %v868, %v871
      %v884 = vmul.f32 %v802, %v871
      %v885 = vmul.f32 %v869, %v871
      %v886 = vmul.f32 %v803, %v871
      %v887 = vmul.f32 %v870, %v871
      %v904 = vrot.slane %v872, 1
      %v905 = vrot.slane %v873, 1
      %v906 = vsel %vm591, %v904, %v905
      %v907 = vrot.slane %v874, 1
      %v908 = vrot.slane %v875, 1
      %v909 = vsel %vm591, %v907, %v908
      %v910 = vrot.slane %v876, 1
      %v911 = vrot.slane %v877, 1
      %v912 = vsel %vm591, %v910, %v911
      %v913 = vrot.slane %v878, 1
      %v914 = vrot.slane %v879, 1
      %v915 = vsel %vm591, %v913, %v914
      %v916 = vrot.slane %v880, 1
      %v917 = vrot.slane %v881, 1
      %v918 = vsel %vm591, %v916, %v917
      %v919 = vrot.slane %v882, 1
      %v920 = vrot.slane %v883, 1
      %v921 = vsel %vm591, %v919, %v920
      %v922 = vrot.slane %v884, 1
      %v923 = vrot.slane %v885, 1
      %v924 = vsel %vm591, %v922, %v923
      %v925 = vrot.slane %v886, 1
      %v926 = vrot.slane %v887, 1
      %v927 = vsel %vm591, %v925, %v926
      %v936 = vadd.f32 %v847, %v906
      %v937 = vadd.f32 %v848, %v909
      %v938 = vadd.f32 %v849, %v912
      %v939 = vadd.f32 %v850, %v915
      %v940 = vadd.f32 %v851, %v918
      %v941 = vadd.f32 %v852, %v921
      %v942 = vadd.f32 %v853, %v924
      %v943 = vadd.f32 %v854, %v927
      %v944 = vld [vmem:[%s5] sm:$0x1]
      %v946 = vperm.slane %v944, 0
      %v948 = vadd.f32 %v936, %v946
      %v949 = vadd.f32 %v937, %v946
      %v950 = vadd.f32 %v938, %v946
      %v951 = vadd.f32 %v939, %v946
      %v952 = vadd.f32 %v940, %v946
      %v953 = vadd.f32 %v941, %v946
      %v954 = vadd.f32 %v942, %v946
      %v955 = vadd.f32 %v943, %v946
      %v956 = vmax.f32 %v948, 0.0
      %v957 = vmax.f32 %v949, 0.0
      %v958 = vmax.f32 %v950, 0.0
      %v959 = vmax.f32 %v951, 0.0
      %v960 = vmax.f32 %v952, 0.0
      %v961 = vmax.f32 %v953, 0.0
      %v962 = vmax.f32 %v954, 0.0
      %v963 = vmax.f32 %v955, 0.0
      %v964 = vadd.f32 %v956, %v957
      %v965 = vadd.f32 %v964, %v958
      %v966 = vadd.f32 %v965, %v959
      %v967 = vadd.f32 %v966, %v960
      %v968 = vadd.f32 %v967, %v961
      %v969 = vadd.f32 %v968, %v962
      %v970 = vadd.f32 %v969, %v963
      %v971 = vrot.slane %v970, 4
      %v972 = vadd.f32 %v970, %v971
      %v973 = vrot.slane %v972, 2
      %v974 = vadd.f32 %v972, %v973
      %v975 = vrot.slane %v974, 1
      %v976 = vadd.f32 %v974, %v975
      %v977 = vrcp.pop 64.0
      %v978 = vmul.f32 64.0, %v977
      %v979 = vsub.f32 1.0, %v978
      %v980 = vmul.f32 %v977, %v979
      %v981 = vadd.f32 %v977, %v980
      %vm982 = vweird.f32 %v977
      %v983 = vsel %vm982, %v977, %v981
      %v984 = vmul.f32 %v976, %v983
      %v985 = vpack.c.bf16 %v984, %v984
      %v986 = vld [vmem:[%s6] sm:$0xf]
      %v987 = vld [vmem:[%s6 + $0x4] sm:$0xf]
      %v988 = vld [vmem:[%s6 + $0x8] sm:$0xf]
      %v989 = vld [vmem:[%s6 + $0xc] sm:$0xf]
      %v990 = vld [vmem:[%s6 + $0x10] sm:$0xf]
      %v991 = vld [vmem:[%s6 + $0x14] sm:$0xf]
      %v992 = vld [vmem:[%s6 + $0x18] sm:$0xf]
      %v993 = vld [vmem:[%s6 + $0x1c] sm:$0xf]
      %v994 = vld [vmem:[%s6 + $0x20] sm:$0xf]
      %v995 = vld [vmem:[%s6 + $0x24] sm:$0xf]
      %v996 = vld [vmem:[%s6 + $0x28] sm:$0xf]
      %v997 = vld [vmem:[%s6 + $0x2c] sm:$0xf]
      %v998 = vld [vmem:[%s6 + $0x30] sm:$0xf]
      %v999 = vld [vmem:[%s6 + $0x34] sm:$0xf]
      %v1000 = vld [vmem:[%s6 + $0x38] sm:$0xf]
      %v1001 = vld [vmem:[%s6 + $0x3c] sm:$0xf]
      %v1002 = vld [vmem:[%s7] sm:$0x1]
      %v1019 = vunpack.c.l.b16 %v986
      %v1020 = vunpack.c.l.b16 %v987
      %v1021 = vunpack.c.l.b16 %v988
      %v1022 = vunpack.c.l.b16 %v989
      %v1023 = vunpack.c.l.b16 %v990
      %v1024 = vunpack.c.l.b16 %v991
      %v1025 = vunpack.c.l.b16 %v992
      %v1026 = vunpack.c.l.b16 %v993
      %v1027 = vunpack.c.l.b16 %v994
      %v1028 = vunpack.c.l.b16 %v995
      %v1029 = vunpack.c.l.b16 %v996
      %v1030 = vunpack.c.l.b16 %v997
      %v1031 = vunpack.c.l.b16 %v998
      %v1032 = vunpack.c.l.b16 %v999
      %v1033 = vunpack.c.l.b16 %v1000
      %v1034 = vunpack.c.l.b16 %v1001
      %v1035 = vpack.c.b16 %v1020, %v1019
      %v1036 = vpack.c.b16 %v1022, %v1021
      %v1037 = vpack.c.b16 %v1024, %v1023
      %v1038 = vpack.c.b16 %v1026, %v1025
      %v1039 = vpack.c.b16 %v1028, %v1027
      %v1040 = vpack.c.b16 %v1030, %v1029
      %v1041 = vpack.c.b16 %v1032, %v1031
      %v1042 = vpack.c.b16 %v1034, %v1033
      %1051 = vmatpush.bf16.msra.mxu0 %v1042
      %1052 = vmatpush.bf16.msra.mxu0 %v1041
      %1053 = vmatpush.bf16.msra.mxu0 %v1040
      %1054 = vmatpush.bf16.msra.mxu0 %v1039
      %1055 = vmatpush.bf16.msra.mxu0 %v1038
      %1056 = vmatpush.bf16.msra.mxu0 %v1037
      %1057 = vmatpush.bf16.msra.mxu0 %v1036
      %1058 = vmatpush.bf16.msra.mxu0 %v1035
      %1059 = vmatmul.bf16.gmra.mxu0 %v985
      %v1060 = vpop.f32.mrf.mxu0
      %v1061 = vadd.f32 %v1002, %v1060
      %v1062 = vpop.f32.mrf.mxu0
      %1063 = vdwg.mxu0
      %v1064 = vmax.f32 %v1061, 0.0
      %v1065 = vpack.c.bf16 %v1064, %v1064
      %v1066 = vld [vmem:[%s8] sm:$0xf]
      %v1067 = vld [vmem:[%s8 + $0x4] sm:$0xf]
      %v1068 = vld [vmem:[%s8 + $0x8] sm:$0xf]
      %v1069 = vld [vmem:[%s8 + $0xc] sm:$0xf]
      %v1070 = vld [vmem:[%s8 + $0x10] sm:$0xf]
      %v1071 = vld [vmem:[%s8 + $0x14] sm:$0xf]
      %v1072 = vld [vmem:[%s8 + $0x18] sm:$0xf]
      %v1073 = vld [vmem:[%s8 + $0x1c] sm:$0xf]
      %v1074 = vld [vmem:[%s8 + $0x20] sm:$0xf]
      %v1075 = vld [vmem:[%s8 + $0x24] sm:$0xf]
      %v1076 = vld [vmem:[%s8 + $0x28] sm:$0xf]
      %v1077 = vld [vmem:[%s8 + $0x2c] sm:$0xf]
      %v1078 = vld [vmem:[%s8 + $0x30] sm:$0xf]
      %v1079 = vld [vmem:[%s8 + $0x34] sm:$0xf]
      %v1080 = vld [vmem:[%s8 + $0x38] sm:$0xf]
      %v1081 = vld [vmem:[%s8 + $0x3c] sm:$0xf]
      %v1082 = vld [vmem:[%s9] sm:$0x1]
      %v1099 = vunpack.c.l.b16 %v1066
      %v1100 = vunpack.c.l.b16 %v1067
      %v1101 = vunpack.c.l.b16 %v1068
      %v1102 = vunpack.c.l.b16 %v1069
      %v1103 = vunpack.c.l.b16 %v1070
      %v1104 = vunpack.c.l.b16 %v1071
      %v1105 = vunpack.c.l.b16 %v1072
      %v1106 = vunpack.c.l.b16 %v1073
      %v1107 = vunpack.c.l.b16 %v1074
      %v1108 = vunpack.c.l.b16 %v1075
      %v1109 = vunpack.c.l.b16 %v1076
      %v1110 = vunpack.c.l.b16 %v1077
      %v1111 = vunpack.c.l.b16 %v1078
      %v1112 = vunpack.c.l.b16 %v1079
      %v1113 = vunpack.c.l.b16 %v1080
      %v1114 = vunpack.c.l.b16 %v1081
      %v1115 = vpack.c.b16 %v1100, %v1099
      %v1116 = vpack.c.b16 %v1102, %v1101
      %v1117 = vpack.c.b16 %v1104, %v1103
      %v1118 = vpack.c.b16 %v1106, %v1105
      %v1119 = vpack.c.b16 %v1108, %v1107
      %v1120 = vpack.c.b16 %v1110, %v1109
      %v1121 = vpack.c.b16 %v1112, %v1111
      %v1122 = vpack.c.b16 %v1114, %v1113
      %1131 = vmatpush.bf16.msra.mxu0 %v1122
      %1132 = vmatpush.bf16.msra.mxu0 %v1121
      %1133 = vmatpush.bf16.msra.mxu0 %v1120
      %1134 = vmatpush.bf16.msra.mxu0 %v1119
      %1135 = vmatpush.bf16.msra.mxu0 %v1118
      %1136 = vmatpush.bf16.msra.mxu0 %v1117
      %1137 = vmatpush.bf16.msra.mxu0 %v1116
      %1138 = vmatpush.bf16.msra.mxu0 %v1115
      %1139 = vmatmul.bf16.gmra.mxu0 %v1065
      %v1140 = vpop.f32.mrf.mxu0
      %v1141 = vadd.f32 %v1082, %v1140
      %v1142 = vpop.f32.mrf.mxu0
      %1143 = vdwg.mxu0
      %v1144 = vmul.f32 %v1141, 0.16666667
      %v1145 = vadd.f32 %v1144, 0.5
      %v1146 = vmax.f32 %v1145, 0.0
      %v1147 = vmin.f32 %v1146, 1.0
      %v1148 = vperm.slane %v1147, 0
      %v1149 = vmul.f32 %v956, %v1148
      %v1150 = vmul.f32 %v957, %v1148
      %v1151 = vmul.f32 %v958, %v1148
      %v1152 = vmul.f32 %v959, %v1148
      %v1153 = vmul.f32 %v960, %v1148
      %v1154 = vmul.f32 %v961, %v1148
      %v1155 = vmul.f32 %v962, %v1148
      %v1156 = vmul.f32 %v963, %v1148
      %v1157 = vld [vmem:[%s10] sm:$0xf]
      %v1158 = vld [vmem:[%s10 + $0x4] sm:$0xf]
      %v1159 = vld [vmem:[%s10 + $0x8] sm:$0xf]
      %v1160 = vld [vmem:[%s10 + $0xc] sm:$0xf]
      %v1161 = vld [vmem:[%s10 + $0x10] sm:$0xf]
      %v1162 = vld [vmem:[%s10 + $0x14] sm:$0xf]
      %v1163 = vld [vmem:[%s10 + $0x18] sm:$0xf]
      %v1164 = vld [vmem:[%s10 + $0x1c] sm:$0xf]
      %v1165 = vld [vmem:[%s10 + $0x20] sm:$0xf]
      %v1166 = vld [vmem:[%s10 + $0x24] sm:$0xf]
      %v1167 = vld [vmem:[%s10 + $0x28] sm:$0xf]
      %v1168 = vld [vmem:[%s10 + $0x2c] sm:$0xf]
      %v1169 = vld [vmem:[%s10 + $0x30] sm:$0xf]
      %v1170 = vld [vmem:[%s10 + $0x34] sm:$0xf]
      %v1171 = vld [vmem:[%s10 + $0x38] sm:$0xf]
      %v1172 = vld [vmem:[%s10 + $0x3c] sm:$0xf]
      %v1173 = vld [vmem:[%s11] sm:$0x1]
      %v1174 = vpack.c.bf16 %v1150, %v1149
      %v1175 = vpack.c.bf16 %v1152, %v1151
      %v1176 = vpack.c.bf16 %v1154, %v1153
      %v1177 = vpack.c.bf16 %v1156, %v1155
      %v1179 = vperm.slane %v1173, 0
      %v1197 = vunpack.c.l.b16 %v1157
      %v1198 = vunpack.c.l.b16 %v1158
      %v1199 = vunpack.c.l.b16 %v1159
      %v1200 = vunpack.c.l.b16 %v1160
      %v1201 = vunpack.c.l.b16 %v1161
      %v1202 = vunpack.c.l.b16 %v1162
      %v1203 = vunpack.c.l.b16 %v1163
      %v1204 = vunpack.c.l.b16 %v1164
      %v1205 = vunpack.c.l.b16 %v1165
      %v1206 = vunpack.c.l.b16 %v1166
      %v1207 = vunpack.c.l.b16 %v1167
      %v1208 = vunpack.c.l.b16 %v1168
      %v1209 = vunpack.c.l.b16 %v1169
      %v1210 = vunpack.c.l.b16 %v1170
      %v1211 = vunpack.c.l.b16 %v1171
      %v1212 = vunpack.c.l.b16 %v1172
      %v1213 = vpack.c.b16 %v1198, %v1197
      %v1214 = vpack.c.b16 %v1200, %v1199
      %v1215 = vpack.c.b16 %v1202, %v1201
      %v1216 = vpack.c.b16 %v1204, %v1203
      %v1217 = vpack.c.b16 %v1206, %v1205
      %v1218 = vpack.c.b16 %v1208, %v1207
      %v1219 = vpack.c.b16 %v1210, %v1209
      %v1220 = vpack.c.b16 %v1212, %v1211
      %1229 = vmatpush.bf16.msra.mxu0 %v1220
      %1230 = vmatpush.bf16.msra.mxu0 %v1219
      %1231 = vmatpush.bf16.msra.mxu0 %v1218
      %1232 = vmatpush.bf16.msra.mxu0 %v1217
      %1233 = vmatpush.bf16.msra.mxu0 %v1216
      %1234 = vmatpush.bf16.msra.mxu0 %v1215
      %1235 = vmatpush.bf16.msra.mxu0 %v1214
      %1236 = vmatpush.bf16.msra.mxu0 %v1213
      %1237 = vmatmul.bf16.gmra.mxu0 %v1174
      %v1238 = vpop.f32.mrf.mxu0
      %v1239 = vadd.f32 %v1179, %v1238
      %v1240 = vpop.f32.mrf.mxu0
      %v1241 = vadd.f32 %v1179, %v1240
      %1242 = vmatmul.bf16.gmra.mxu0 %v1175
      %v1243 = vpop.f32.mrf.mxu0
      %v1244 = vadd.f32 %v1179, %v1243
      %v1245 = vpop.f32.mrf.mxu0
      %v1246 = vadd.f32 %v1179, %v1245
      %1247 = vmatmul.bf16.gmra.mxu0 %v1176
      %v1248 = vpop.f32.mrf.mxu0
      %v1249 = vadd.f32 %v1179, %v1248
      %v1250 = vpop.f32.mrf.mxu0
      %v1251 = vadd.f32 %v1179, %v1250
      %1252 = vmatmul.bf16.gmra.mxu0 %v1177
      %v1253 = vpop.f32.mrf.mxu0
      %v1254 = vadd.f32 %v1179, %v1253
      %v1255 = vpop.f32.mrf.mxu0
      %v1256 = vadd.f32 %v1179, %v1255
      %1257 = vdwg.mxu0
      %v1258 = vpack.c.bf16 %v1239, %v1239
      %v1259 = vpack.c.bf16 %v1241, %v1241
      %v1260 = vpack.c.bf16 %v1244, %v1244
      %v1261 = vpack.c.bf16 %v1246, %v1246
      %v1262 = vpack.c.bf16 %v1249, %v1249
      %v1263 = vpack.c.bf16 %v1251, %v1251
      %v1264 = vpack.c.bf16 %v1254, %v1254
      %v1265 = vpack.c.bf16 %v1256, %v1256
      %1266 = vst [vmem:[%s473] sm:$0xf] %v1258
      %1267 = vst [vmem:[%s473 + $0x4] sm:$0xf] %v1259
      %1268 = vst [vmem:[%s473 + $0x8] sm:$0xf] %v1260
      %1269 = vst [vmem:[%s473 + $0xc] sm:$0xf] %v1261
      %1270 = vst [vmem:[%s473 + $0x10] sm:$0xf] %v1262
      %1271 = vst [vmem:[%s473 + $0x14] sm:$0xf] %v1263
      %1272 = vst [vmem:[%s473 + $0x18] sm:$0xf] %v1264
      %1273 = vst [vmem:[%s473 + $0x1c] sm:$0xf] %v1265
      %p1274 = scmp.lt.s32.totalorder %s23, 1
      %s1275 = scalar_select %p1274, %s23, 1
      %s1276 = smul.addr %s1275, 8
      %s1277 = smul.addr %s1276, 4
      %s1278 = scalar_lea.vmem %s12, %s1277
      // Predicated region
      $region69: #{mobilenet_v3_forward.7} parent=67 // pred_check
        %p1279 = pneg %p313
      $region70: #{mobilenet_v3_forward.7} parent=67 // pred_check_branch
        %1281 = sbr.rel (%p1279) target = $region72
      $region71: #{mobilenet_v3_forward.7} parent=67 // pred_region
        _
      $region72: #{mobilenet_v3_forward.7} parent=67 // pred_fallthru
        _
    $region68: #{mobilenet_v3_forward.7} parent=5 // pred_fallthru
      _
    %p1282 = scmp.le.s32.totalorder 2, %s18
    // Predicated region
    $region73: #{mobilenet_v3_forward.7} parent=5 // pred_check
      %p1283 = pneg %p1282
    $region74: #{mobilenet_v3_forward.7} parent=5 // pred_check_branch
      %1285 = sbr.rel (%p1283) target = $region76
    $region75: #{mobilenet_v3_forward.7} parent=5 // pred_region
      %s1286 = ssub.s32 %s18, 2
      // Predicated region
      $region77: #{mobilenet_v3_forward.7} parent=75 // pred_check
        %p1287 = pneg %p319
      $region78: #{mobilenet_v3_forward.7} parent=75 // pred_check_branch
        %1289 = sbr.rel (%p1287) target = $region80
      $region79: #{mobilenet_v3_forward.7} parent=75 // pred_region
        %p1290 = scmp.lt.s32.totalorder %s24, 1
        %s1291 = scalar_select %p1290, %s24, 1
        %s1292 = smul.addr %s1291, 8
        %s1293 = smul.addr %s1292, 4
        %s1294 = scalar_lea.vmem %s12, %s1293
      $region80: #{mobilenet_v3_forward.7} parent=75 // pred_fallthru
        _
    $region76: #{mobilenet_v3_forward.7} parent=5 // pred_fallthru
      _
  $region6: #{mobilenet_v3_forward.7} parent=0 // loop_footer
    %s22 = sadd.s32 1, %s18
  $region7: #{mobilenet_v3_forward.7} parent=0 // loop_footer_branch
    %17 = sbr.rel target = $region3
  $region8: #{mobilenet_v3_forward.7} parent=0 // loop_exit
    _

// kernel: mobilenet_v3_forward.8
$region0: #{mobilenet_v3_forward.8}
  #allocation0 [shape = 'u32[]', space=smem, size = 0x4, offset = 0x4, fixed_abs, tag = 'smem constant byte address 0x4 - core index']
  #allocation1 [shape = 'u32[72,128]{1,0:T(1,128)}', space=vmem, size = 0x9000, scoped, tag = 'internal scratch']
  #allocation2 [shape = 'f32[4,5,5,128]{3,2,1,0:T(8,128)}', space=vmem, size = 0x14000, scoped, tag = 'scratch operand']
  %s0 = inlined_call_operand.vmem [shape: bf16[2,5,5,128], index: 0, kind: input, shape index: {}]
  %s1 = inlined_call_operand.vmem [shape: bf16[2,5,5,128], index: 1, kind: input, shape index: {}]
  %s2 = inlined_call_operand.vmem [shape: bf16[2,5,5,128], index: 2, kind: input, shape index: {}]
  %s3 = inlined_call_operand.vmem [shape: bf16[2,5,5,128], index: 3, kind: input, shape index: {}]
  %s4 = inlined_call_operand.vmem [shape: bf16[128,128], index: 4, kind: input, shape index: {}]
  %s5 = inlined_call_operand.vmem [shape: f32[1,128], index: 5, kind: input, shape index: {}]
  %s6 = inlined_call_operand.vmem [shape: f32[9,128], index: 6, kind: input, shape index: {}]
  %s7 = inlined_call_operand.vmem [shape: f32[1,128], index: 7, kind: input, shape index: {}]
  %s8 = inlined_call_operand.vmem [shape: bf16[128,128], index: 8, kind: input, shape index: {}]
  %s9 = inlined_call_operand.vmem [shape: f32[1,128], index: 9, kind: input, shape index: {}]
  %s10 = inlined_call_operand.vmem [shape: bf16[2,4,4,128], index: 10, kind: output, shape index: {}]
  %s11 = sld [smem:[#allocation0]]
  $region73: #{mobilenet_v3_forward.8} parent=0
    _
  %s13 = ssub.s32 1, %s11
  %s14 = scalar_select 0, %s13, %s11
  loop: start=0, step=1, limit=4
  $region2: #{mobilenet_v3_forward.8} parent=0 // loop_pre_header
    _
  $region3: #{mobilenet_v3_forward.8} parent=0 // loop_header
    %s16 = sphi 0, %s20
    %p17 = scmp.ge.s32.totalorder %s16, 4
    %s26 = sphi 0, %s28
    %s29 = sphi 0, %s26
    %s30 = sphi 0, %s29
    %s46 = sphi 0, %s30
    %s52 = sphi 0, %s54
    %s55 = sphi 0, %s52
    %s56 = sphi 0, %s55
    %s72 = sphi 0, %s56
    %s78 = sphi 0, %s80
    %s81 = sphi 0, %s78
    %s82 = sphi 0, %s81
    %s98 = sphi 0, %s82
    %s104 = sphi 0, %s106
    %s107 = sphi 0, %s104
    %s108 = sphi 0, %s107
    %s124 = sphi 0, %s108
    %s128 = sphi 0, %s128
    %s130 = sphi 0, %s128
    %s131 = sphi 0, %s130
    %s145 = sphi 0, %s131
    %s149 = sphi 0, %s149
    %s151 = sphi 0, %s149
    %s152 = sphi 0, %s151
    %s166 = sphi 0, %s152
    %s170 = sphi 0, %s170
    %s172 = sphi 0, %s170
    %s173 = sphi 0, %s172
    %s187 = sphi 0, %s173
    %s191 = sphi 0, %s191
    %s193 = sphi 0, %s191
    %s194 = sphi 0, %s193
    %s208 = sphi 0, %s194
    %s212 = sphi 0, %s212
    %s214 = sphi 0, %s212
    %s215 = sphi 0, %s214
    %s229 = sphi 0, %s215
    %s233 = sphi 0, %s233
    %s235 = sphi 0, %s233
    %s236 = sphi 0, %s235
    %s250 = sphi 0, %s236
    %s256 = sphi 0, %s258
    %s259 = sphi 0, %s256
    %s260 = sphi 0, %s259
    %s276 = sphi 0, %s260
  $region4: #{mobilenet_v3_forward.8} parent=0 // loop_header_branch
    %19 = sbr.rel (%p17) target = $region8
  $region5: #{mobilenet_v3_forward.8} parent=0 // loop_body
    %s21 = ssub.s32 %s16, 1
    %s22 = ssub.s32 %s16, 2
    %s23 = sadd.s32 %s16, 1
    %s24 = ssub.s32 %s16, %s23
    %p25 = scmp.eq.s32.totalorder %s24, 0
    %s27 = sadd.s32 %s26, 1
    %s28 = scalar_select %p25, %s26, %s27
    %p31 = pneg %p25
    %p32 = scmp.eq.s32.totalorder %s16, 1
    %p33 = por %p31, %p32
    %p34 = scmp.ne.s32.totalorder %s26, %s29
    %p35 = scmp.eq.s32.totalorder %s16, 0
    %p36 = por %p34, %p35
    %p37 = scmp.ne.s32.totalorder %s26, %s29
    %p38 = scmp.eq.s32.totalorder %s21, 1
    %p39 = por %p37, %p38
    %p40 = scmp.ne.s32.totalorder %s29, %s30
    %p41 = scmp.eq.s32.totalorder %s21, 0
    %p42 = por %p40, %p41
    %p43 = scmp.ne.s32.totalorder %s29, %s30
    %p44 = scmp.eq.s32.totalorder %s22, 1
    %p45 = por %p43, %p44
    %p47 = scmp.ne.s32.totalorder %s30, %s46
    %p48 = scmp.eq.s32.totalorder %s22, 0
    %p49 = por %p47, %p48
    %s50 = ssub.s32 %s16, %s23
    %p51 = scmp.eq.s32.totalorder %s50, 0
    %s53 = sadd.s32 %s52, 1
    %s54 = scalar_select %p51, %s52, %s53
    %p57 = pneg %p51
    %p58 = scmp.eq.s32.totalorder %s16, 1
    %p59 = por %p57, %p58
    %p60 = scmp.ne.s32.totalorder %s52, %s55
    %p61 = scmp.eq.s32.totalorder %s16, 0
    %p62 = por %p60, %p61
    %p63 = scmp.ne.s32.totalorder %s52, %s55
    %p64 = scmp.eq.s32.totalorder %s21, 1
    %p65 = por %p63, %p64
    %p66 = scmp.ne.s32.totalorder %s55, %s56
    %p67 = scmp.eq.s32.totalorder %s21, 0
    %p68 = por %p66, %p67
    %p69 = scmp.ne.s32.totalorder %s55, %s56
    %p70 = scmp.eq.s32.totalorder %s22, 1
    %p71 = por %p69, %p70
    %p73 = scmp.ne.s32.totalorder %s56, %s72
    %p74 = scmp.eq.s32.totalorder %s22, 0
    %p75 = por %p73, %p74
    %s76 = ssub.s32 %s16, %s23
    %p77 = scmp.eq.s32.totalorder %s76, 0
    %s79 = sadd.s32 %s78, 1
    %s80 = scalar_select %p77, %s78, %s79
    %p83 = pneg %p77
    %p84 = scmp.eq.s32.totalorder %s16, 1
    %p85 = por %p83, %p84
    %p86 = scmp.ne.s32.totalorder %s78, %s81
    %p87 = scmp.eq.s32.totalorder %s16, 0
    %p88 = por %p86, %p87
    %p89 = scmp.ne.s32.totalorder %s78, %s81
    %p90 = scmp.eq.s32.totalorder %s21, 1
    %p91 = por %p89, %p90
    %p92 = scmp.ne.s32.totalorder %s81, %s82
    %p93 = scmp.eq.s32.totalorder %s21, 0
    %p94 = por %p92, %p93
    %p95 = scmp.ne.s32.totalorder %s81, %s82
    %p96 = scmp.eq.s32.totalorder %s22, 1
    %p97 = por %p95, %p96
    %p99 = scmp.ne.s32.totalorder %s82, %s98
    %p100 = scmp.eq.s32.totalorder %s22, 0
    %p101 = por %p99, %p100
    %s102 = ssub.s32 %s16, %s23
    %p103 = scmp.eq.s32.totalorder %s102, 0
    %s105 = sadd.s32 %s104, 1
    %s106 = scalar_select %p103, %s104, %s105
    %p109 = pneg %p103
    %p110 = scmp.eq.s32.totalorder %s16, 1
    %p111 = por %p109, %p110
    %p112 = scmp.ne.s32.totalorder %s104, %s107
    %p113 = scmp.eq.s32.totalorder %s16, 0
    %p114 = por %p112, %p113
    %p115 = scmp.ne.s32.totalorder %s104, %s107
    %p116 = scmp.eq.s32.totalorder %s21, 1
    %p117 = por %p115, %p116
    %p118 = scmp.ne.s32.totalorder %s107, %s108
    %p119 = scmp.eq.s32.totalorder %s21, 0
    %p120 = por %p118, %p119
    %p121 = scmp.ne.s32.totalorder %s107, %s108
    %p122 = scmp.eq.s32.totalorder %s22, 1
    %p123 = por %p121, %p122
    %p125 = scmp.ne.s32.totalorder %s108, %s124
    %p126 = scmp.eq.s32.totalorder %s22, 0
    %p127 = por %p125, %p126
    %s129 = sadd.s32 %s128, 1
    %p132 = scmp.eq.s32.totalorder %s16, 1
    %p133 = scmp.ne.s32.totalorder %s128, %s130
    %p134 = scmp.eq.s32.totalorder %s16, 0
    %p135 = por %p133, %p134
    %p136 = scmp.ne.s32.totalorder %s128, %s130
    %p137 = scmp.eq.s32.totalorder %s21, 1
    %p138 = por %p136, %p137
    %p139 = scmp.ne.s32.totalorder %s130, %s131
    %p140 = scmp.eq.s32.totalorder %s21, 0
    %p141 = por %p139, %p140
    %p142 = scmp.ne.s32.totalorder %s130, %s131
    %p143 = scmp.eq.s32.totalorder %s22, 1
    %p144 = por %p142, %p143
    %p146 = scmp.ne.s32.totalorder %s131, %s145
    %p147 = scmp.eq.s32.totalorder %s22, 0
    %p148 = por %p146, %p147
    %s150 = sadd.s32 %s149, 1
    %p153 = scmp.eq.s32.totalorder %s16, 1
    %p154 = scmp.ne.s32.totalorder %s149, %s151
    %p155 = scmp.eq.s32.totalorder %s16, 0
    %p156 = por %p154, %p155
    %p157 = scmp.ne.s32.totalorder %s149, %s151
    %p158 = scmp.eq.s32.totalorder %s21, 1
    %p159 = por %p157, %p158
    %p160 = scmp.ne.s32.totalorder %s151, %s152
    %p161 = scmp.eq.s32.totalorder %s21, 0
    %p162 = por %p160, %p161
    %p163 = scmp.ne.s32.totalorder %s151, %s152
    %p164 = scmp.eq.s32.totalorder %s22, 1
    %p165 = por %p163, %p164
    %p167 = scmp.ne.s32.totalorder %s152, %s166
    %p168 = scmp.eq.s32.totalorder %s22, 0
    %p169 = por %p167, %p168
    %s171 = sadd.s32 %s170, 1
    %p174 = scmp.eq.s32.totalorder %s16, 1
    %p175 = scmp.ne.s32.totalorder %s170, %s172
    %p176 = scmp.eq.s32.totalorder %s16, 0
    %p177 = por %p175, %p176
    %p178 = scmp.ne.s32.totalorder %s170, %s172
    %p179 = scmp.eq.s32.totalorder %s21, 1
    %p180 = por %p178, %p179
    %p181 = scmp.ne.s32.totalorder %s172, %s173
    %p182 = scmp.eq.s32.totalorder %s21, 0
    %p183 = por %p181, %p182
    %p184 = scmp.ne.s32.totalorder %s172, %s173
    %p185 = scmp.eq.s32.totalorder %s22, 1
    %p186 = por %p184, %p185
    %p188 = scmp.ne.s32.totalorder %s173, %s187
    %p189 = scmp.eq.s32.totalorder %s22, 0
    %p190 = por %p188, %p189
    %s192 = sadd.s32 %s191, 1
    %p195 = scmp.eq.s32.totalorder %s16, 1
    %p196 = scmp.ne.s32.totalorder %s191, %s193
    %p197 = scmp.eq.s32.totalorder %s16, 0
    %p198 = por %p196, %p197
    %p199 = scmp.ne.s32.totalorder %s191, %s193
    %p200 = scmp.eq.s32.totalorder %s21, 1
    %p201 = por %p199, %p200
    %p202 = scmp.ne.s32.totalorder %s193, %s194
    %p203 = scmp.eq.s32.totalorder %s21, 0
    %p204 = por %p202, %p203
    %p205 = scmp.ne.s32.totalorder %s193, %s194
    %p206 = scmp.eq.s32.totalorder %s22, 1
    %p207 = por %p205, %p206
    %p209 = scmp.ne.s32.totalorder %s194, %s208
    %p210 = scmp.eq.s32.totalorder %s22, 0
    %p211 = por %p209, %p210
    %s213 = sadd.s32 %s212, 1
    %p216 = scmp.eq.s32.totalorder %s16, 1
    %p217 = scmp.ne.s32.totalorder %s212, %s214
    %p218 = scmp.eq.s32.totalorder %s16, 0
    %p219 = por %p217, %p218
    %p220 = scmp.ne.s32.totalorder %s212, %s214
    %p221 = scmp.eq.s32.totalorder %s21, 1
    %p222 = por %p220, %p221
    %p223 = scmp.ne.s32.totalorder %s214, %s215
    %p224 = scmp.eq.s32.totalorder %s21, 0
    %p225 = por %p223, %p224
    %p226 = scmp.ne.s32.totalorder %s214, %s215
    %p227 = scmp.eq.s32.totalorder %s22, 1
    %p228 = por %p226, %p227
    %p230 = scmp.ne.s32.totalorder %s215, %s229
    %p231 = scmp.eq.s32.totalorder %s22, 0
    %p232 = por %p230, %p231
    %s234 = sadd.s32 %s233, 1
    %p237 = scmp.eq.s32.totalorder %s16, 1
    %p238 = scmp.ne.s32.totalorder %s233, %s235
    %p239 = scmp.eq.s32.totalorder %s16, 0
    %p240 = por %p238, %p239
    %p241 = scmp.ne.s32.totalorder %s233, %s235
    %p242 = scmp.eq.s32.totalorder %s21, 1
    %p243 = por %p241, %p242
    %p244 = scmp.ne.s32.totalorder %s235, %s236
    %p245 = scmp.eq.s32.totalorder %s21, 0
    %p246 = por %p244, %p245
    %p247 = scmp.ne.s32.totalorder %s235, %s236
    %p248 = scmp.eq.s32.totalorder %s22, 1
    %p249 = por %p247, %p248
    %p251 = scmp.ne.s32.totalorder %s236, %s250
    %p252 = scmp.eq.s32.totalorder %s22, 0
    %p253 = por %p251, %p252
    %s254 = ssub.s32 %s16, %s23
    %p255 = scmp.eq.s32.totalorder %s254, 0
    %s257 = sadd.s32 %s256, 1
    %s258 = scalar_select %p255, %s256, %s257
    %p261 = pneg %p255
    %p262 = scmp.eq.s32.totalorder %s16, 1
    %p263 = por %p261, %p262
    %p264 = scmp.ne.s32.totalorder %s256, %s259
    %p265 = scmp.eq.s32.totalorder %s16, 0
    %p266 = por %p264, %p265
    %p267 = scmp.ne.s32.totalorder %s256, %s259
    %p268 = scmp.eq.s32.totalorder %s21, 1
    %p269 = por %p267, %p268
    %p270 = scmp.ne.s32.totalorder %s259, %s260
    %p271 = scmp.eq.s32.totalorder %s21, 0
    %p272 = por %p270, %p271
    %p273 = scmp.ne.s32.totalorder %s259, %s260
    %p274 = scmp.eq.s32.totalorder %s22, 1
    %p275 = por %p273, %p274
    %p277 = scmp.ne.s32.totalorder %s260, %s276
    %p278 = scmp.eq.s32.totalorder %s22, 0
    %p279 = por %p277, %p278
    %p280 = scmp.le.s32.totalorder 1, %s16
    %p281 = scmp.lt.s32.totalorder %s16, 3
    %p282 = pnand %p280, %p281
    %p283 = pneg %p282
    // Predicated region
    $region9: #{mobilenet_v3_forward.8} parent=5 // pred_check
      _
    $region10: #{mobilenet_v3_forward.8} parent=5 // pred_check_branch
      %285 = sbr.rel (%p282) target = $region12
    $region11: #{mobilenet_v3_forward.8} parent=5 // pred_region
      %s286 = ssub.s32 %s16, 1
      // Predicated region
      $region13: #{mobilenet_v3_forward.8} parent=11 // pred_check
        %p287 = pneg %p141
      $region14: #{mobilenet_v3_forward.8} parent=11 // pred_check_branch
        %289 = sbr.rel (%p287) target = $region16
      $region15: #{mobilenet_v3_forward.8} parent=11 // pred_region
        _
      $region16: #{mobilenet_v3_forward.8} parent=11 // pred_fallthru
        _
      // Predicated region
      $region17: #{mobilenet_v3_forward.8} parent=11 // pred_check
        %p290 = pneg %p162
      $region18: #{mobilenet_v3_forward.8} parent=11 // pred_check_branch
        %292 = sbr.rel (%p290) target = $region20
      $region19: #{mobilenet_v3_forward.8} parent=11 // pred_region
        _
      $region20: #{mobilenet_v3_forward.8} parent=11 // pred_fallthru
        _
      // Predicated region
      $region21: #{mobilenet_v3_forward.8} parent=11 // pred_check
        %p293 = pneg %p183
      $region22: #{mobilenet_v3_forward.8} parent=11 // pred_check_branch
        %295 = sbr.rel (%p293) target = $region24
      $region23: #{mobilenet_v3_forward.8} parent=11 // pred_region
        _
      $region24: #{mobilenet_v3_forward.8} parent=11 // pred_fallthru
        _
      // Predicated region
      $region25: #{mobilenet_v3_forward.8} parent=11 // pred_check
        %p296 = pneg %p204
      $region26: #{mobilenet_v3_forward.8} parent=11 // pred_check_branch
        %298 = sbr.rel (%p296) target = $region28
      $region27: #{mobilenet_v3_forward.8} parent=11 // pred_region
        _
      $region28: #{mobilenet_v3_forward.8} parent=11 // pred_fallthru
        _
      // Predicated region
      $region29: #{mobilenet_v3_forward.8} parent=11 // pred_check
        %p299 = pneg %p225
      $region30: #{mobilenet_v3_forward.8} parent=11 // pred_check_branch
        %301 = sbr.rel (%p299) target = $region32
      $region31: #{mobilenet_v3_forward.8} parent=11 // pred_region
        _
      $region32: #{mobilenet_v3_forward.8} parent=11 // pred_fallthru
        _
      // Predicated region
      $region33: #{mobilenet_v3_forward.8} parent=11 // pred_check
        %p302 = pneg %p246
      $region34: #{mobilenet_v3_forward.8} parent=11 // pred_check_branch
        %304 = sbr.rel (%p302) target = $region36
      $region35: #{mobilenet_v3_forward.8} parent=11 // pred_region
        _
      $region36: #{mobilenet_v3_forward.8} parent=11 // pred_fallthru
        _
    $region12: #{mobilenet_v3_forward.8} parent=5 // pred_fallthru
      _
    %p305 = scmp.lt.s32.totalorder %s16, 2
    // Predicated region
    $region37: #{mobilenet_v3_forward.8} parent=5 // pred_check
      %p306 = pneg %p305
    $region38: #{mobilenet_v3_forward.8} parent=5 // pred_check_branch
      %308 = sbr.rel (%p306) target = $region40
    $region39: #{mobilenet_v3_forward.8} parent=5 // pred_region
      // Predicated region
      $region41: #{mobilenet_v3_forward.8} parent=39 // pred_check
        %p309 = pneg %p36
      $region42: #{mobilenet_v3_forward.8} parent=39 // pred_check_branch
        %311 = sbr.rel (%p309) target = $region44
      $region43: #{mobilenet_v3_forward.8} parent=39 // pred_region
        %p312 = scmp.lt.s32.totalorder %s16, 1
        %s313 = scalar_select %p312, %s16, 1
        %s314 = smul.addr %s313, 5
        %s315 = smul.addr %s314, 4
        %s316 = scalar_lea.vmem %s0, %s315
      $region44: #{mobilenet_v3_forward.8} parent=39 // pred_fallthru
        _
      // Predicated region
      $region45: #{mobilenet_v3_forward.8} parent=39 // pred_check
        %p317 = pneg %p62
      $region46: #{mobilenet_v3_forward.8} parent=39 // pred_check_branch
        %319 = sbr.rel (%p317) target = $region48
      $region47: #{mobilenet_v3_forward.8} parent=39 // pred_region
        %p320 = scmp.lt.s32.totalorder %s16, 1
        %s321 = scalar_select %p320, %s16, 1
        %s322 = smul.addr %s321, 5
        %s323 = smul.addr %s322, 4
        %s324 = scalar_lea.vmem %s1, %s323
      $region48: #{mobilenet_v3_forward.8} parent=39 // pred_fallthru
        _
      // Predicated region
      $region49: #{mobilenet_v3_forward.8} parent=39 // pred_check
        %p325 = pneg %p88
      $region50: #{mobilenet_v3_forward.8} parent=39 // pred_check_branch
        %327 = sbr.rel (%p325) target = $region52
      $region51: #{mobilenet_v3_forward.8} parent=39 // pred_region
        %p328 = scmp.lt.s32.totalorder %s16, 1
        %s329 = scalar_select %p328, %s16, 1
        %s330 = smul.addr %s329, 5
        %s331 = smul.addr %s330, 4
        %s332 = scalar_lea.vmem %s2, %s331
      $region52: #{mobilenet_v3_forward.8} parent=39 // pred_fallthru
        _
      // Predicated region
      $region53: #{mobilenet_v3_forward.8} parent=39 // pred_check
        %p333 = pneg %p114
      $region54: #{mobilenet_v3_forward.8} parent=39 // pred_check_branch
        %335 = sbr.rel (%p333) target = $region56
      $region55: #{mobilenet_v3_forward.8} parent=39 // pred_region
        %p336 = scmp.lt.s32.totalorder %s16, 1
        %s337 = scalar_select %p336, %s16, 1
        %s338 = smul.addr %s337, 5
        %s339 = smul.addr %s338, 4
        %s340 = scalar_lea.vmem %s3, %s339
      $region56: #{mobilenet_v3_forward.8} parent=39 // pred_fallthru
        _
    $region40: #{mobilenet_v3_forward.8} parent=5 // pred_fallthru
      _
    %p341 = scmp.le.s32.totalorder 1, %s16
    %p342 = scmp.lt.s32.totalorder %s16, 3
    %p343 = pnand %p341, %p342
    %p344 = pneg %p343
    // Predicated region
    $region57: #{mobilenet_v3_forward.8} parent=5 // pred_check
      _
    $region58: #{mobilenet_v3_forward.8} parent=5 // pred_check_branch
      %346 = sbr.rel (%p343) target = $region60
    $region59: #{mobilenet_v3_forward.8} parent=5 // pred_region
      %s347 = ssub.s32 %s16, 1
      %p348 = scmp.lt.s32.totalorder %s21, 1
      %s349 = scalar_select %p348, %s21, 1
      %s350 = smul.addr %s349, 5
      %s351 = smul.addr %s350, 4
      %s352 = scalar_lea.vmem %s0, %s351
      %p353 = pneg %p42
      %p354 = pneg %p39
      %p355 = scmp.lt.s32.totalorder %s21, 1
      %s356 = scalar_select %p355, %s21, 1
      %s357 = smul.addr %s356, 5
      %s358 = smul.addr %s357, 4
      %s359 = scalar_lea.vmem %s1, %s358
      %p360 = pneg %p68
      %p361 = pneg %p65
      %p362 = scmp.lt.s32.totalorder %s21, 1
      %s363 = scalar_select %p362, %s21, 1
      %s364 = smul.addr %s363, 5
      %s365 = smul.addr %s364, 4
      %s366 = scalar_lea.vmem %s2, %s365
      %p367 = pneg %p94
      %p368 = pneg %p91
      %p369 = scmp.lt.s32.totalorder %s21, 1
      %s370 = scalar_select %p369, %s21, 1
      %s371 = smul.addr %s370, 5
      %s372 = smul.addr %s371, 4
      %s373 = scalar_lea.vmem %s3, %s372
      %p374 = pneg %p120
      %p375 = pneg %p117
      %p376 = pneg %p141
      %p377 = pneg %p138
      %p378 = pneg %p162
      %p379 = pneg %p159
      %p380 = pneg %p183
      %p381 = pneg %p180
      %p382 = pneg %p204
      %p383 = pneg %p201
      %p384 = pneg %p225
      %p385 = pneg %p222
      %p386 = pneg %p246
      %p387 = pneg %p243
      %p388 = pneg %p272
      %p389 = pneg %p269
      %p390 = scmp.lt.s32.totalorder %s21, 1
      %s391 = scalar_select %p390, %s21, 1
      %s392 = smul.addr %s391, 4
      %s393 = smul.addr %s392, 2
      %s394 = scalar_lea.vmem %s10, %s393
      %p395 = scmp.lt.s32.totalorder %s21, 1
      %s396 = scalar_select %p395, %s21, 1
      %s397 = smul.addr %s396, 5
      %s398 = smul.addr %s397, 4
      %s399 = scalar_lea.vmem %s0, %s398
      %p400 = scmp.lt.s32.totalorder %s21, 1
      %s401 = scalar_select %p400, %s21, 1
      %s402 = smul.addr %s401, 5
      %s403 = smul.addr %s402, 4
      %s404 = scalar_lea.vmem %s1, %s403
      %p405 = scmp.lt.s32.totalorder %s21, 1
      %s406 = scalar_select %p405, %s21, 1
      %s407 = smul.addr %s406, 5
      %s408 = smul.addr %s407, 4
      %s409 = scalar_lea.vmem %s2, %s408
      %p410 = scmp.lt.s32.totalorder %s21, 1
      %s411 = scalar_select %p410, %s21, 1
      %s412 = smul.addr %s411, 5
      %s413 = smul.addr %s412, 4
      %s414 = scalar_lea.vmem %s3, %s413
      %p415 = scmp.lt.s32.totalorder %s21, 1
      %s416 = scalar_select %p415, %s21, 1
      %s417 = smul.addr %s416, 4
      %s418 = smul.addr %s417, 2
      %s419 = scalar_lea.vmem %s10, %s418
      %420 = vst [vmem:[#allocation2] sm:$0x1f] 0.0
      %421 = vst [vmem:[#allocation2 + $0x8] sm:$0x1f] 0.0
      %422 = vst [vmem:[#allocation2 + $0x10] sm:$0x1f] 0.0
      %423 = vst [vmem:[#allocation2 + $0x18] sm:$0x1f] 0.0
      %424 = vst [vmem:[#allocation2 + $0x20] sm:$0x1f] 0.0
      %425 = vst [vmem:[#allocation2 + $0x28] sm:$0x1f] 0.0
      %426 = vst [vmem:[#allocation2 + $0x30] sm:$0x1f] 0.0
      %427 = vst [vmem:[#allocation2 + $0x38] sm:$0x1f] 0.0
      %428 = vst [vmem:[#allocation2 + $0x40] sm:$0x1f] 0.0
      %429 = vst [vmem:[#allocation2 + $0x48] sm:$0x1f] 0.0
      %430 = vst [vmem:[#allocation2 + $0x50] sm:$0x1f] 0.0
      %431 = vst [vmem:[#allocation2 + $0x58] sm:$0x1f] 0.0
      %432 = vst [vmem:[#allocation2 + $0x60] sm:$0x1f] 0.0
      %433 = vst [vmem:[#allocation2 + $0x68] sm:$0x1f] 0.0
      %434 = vst [vmem:[#allocation2 + $0x70] sm:$0x1f] 0.0
      %435 = vst [vmem:[#allocation2 + $0x78] sm:$0x1f] 0.0
      %436 = vst [vmem:[#allocation2 + $0x80] sm:$0x1f] 0.0
      %437 = vst [vmem:[#allocation2 + $0x88] sm:$0x1f] 0.0
      %438 = vst [vmem:[#allocation2 + $0x90] sm:$0x1f] 0.0
      %439 = vst [vmem:[#allocation2 + $0x98] sm:$0x1f] 0.0
      %v440 = vld [vmem:[%s4] sm:$0xf]
      %v441 = vld [vmem:[%s4 + $0x4] sm:$0xf]
      %v442 = vld [vmem:[%s4 + $0x8] sm:$0xf]
      %v443 = vld [vmem:[%s4 + $0xc] sm:$0xf]
      %v444 = vld [vmem:[%s4 + $0x10] sm:$0xf]
      %v445 = vld [vmem:[%s4 + $0x14] sm:$0xf]
      %v446 = vld [vmem:[%s4 + $0x18] sm:$0xf]
      %v447 = vld [vmem:[%s4 + $0x1c] sm:$0xf]
      %v448 = vld [vmem:[%s4 + $0x20] sm:$0xf]
      %v449 = vld [vmem:[%s4 + $0x24] sm:$0xf]
      %v450 = vld [vmem:[%s4 + $0x28] sm:$0xf]
      %v451 = vld [vmem:[%s4 + $0x2c] sm:$0xf]
      %v452 = vld [vmem:[%s4 + $0x30] sm:$0xf]
      %v453 = vld [vmem:[%s4 + $0x34] sm:$0xf]
      %v454 = vld [vmem:[%s4 + $0x38] sm:$0xf]
      %v455 = vld [vmem:[%s4 + $0x3c] sm:$0xf]
      %v456 = vld [vmem:[%s5] sm:$0x1]
      %s457 = scalar_lea.vmem %s399, 4
      %v458 = vld [vmem:[%s457] sm:$0x7]
      %v460 = vperm.slane %v456, 0
      %v463 = vunpack.c.l.b16 %v458
      %v464 = vpack.c.b16 %v463, %v463
      %v466 = vshrl.u32 %v464, 16
      %v468 = vshll.u32 %v464, 16
      %v470 = vrot.slane %v468, 1
      %v471 = vor.u32 %v466, %v470
      %v489 = vunpack.c.l.b16 %v440
      %v490 = vunpack.c.l.b16 %v441
      %v491 = vunpack.c.l.b16 %v442
      %v492 = vunpack.c.l.b16 %v443
      %v493 = vunpack.c.l.b16 %v444
      %v494 = vunpack.c.l.b16 %v445
      %v495 = vunpack.c.l.b16 %v446
      %v496 = vunpack.c.l.b16 %v447
      %v497 = vunpack.c.l.b16 %v448
      %v498 = vunpack.c.l.b16 %v449
      %v499 = vunpack.c.l.b16 %v450
      %v500 = vunpack.c.l.b16 %v451
      %v501 = vunpack.c.l.b16 %v452
      %v502 = vunpack.c.l.b16 %v453
      %v503 = vunpack.c.l.b16 %v454
      %v504 = vunpack.c.l.b16 %v455
      %v505 = vpack.c.b16 %v490, %v489
      %v506 = vpack.c.b16 %v492, %v491
      %v507 = vpack.c.b16 %v494, %v493
      %v508 = vpack.c.b16 %v496, %v495
      %v509 = vpack.c.b16 %v498, %v497
      %v510 = vpack.c.b16 %v500, %v499
      %v511 = vpack.c.b16 %v502, %v501
      %v512 = vpack.c.b16 %v504, %v503
      %521 = vmatpush.bf16.msra.mxu0 %v512
      %522 = vmatpush.bf16.msra.mxu0 %v511
      %523 = vmatpush.bf16.msra.mxu0 %v510
      %524 = vmatpush.bf16.msra.mxu0 %v509
      %525 = vmatpush.bf16.msra.mxu0 %v508
      %526 = vmatpush.bf16.msra.mxu0 %v507
      %527 = vmatpush.bf16.msra.mxu0 %v506
      %528 = vmatpush.bf16.msra.mxu0 %v505
      %529 = vmatmul.bf16.gmra.mxu0 %v471
      %v530 = vpop.f32.mrf.mxu0
      %v531 = vadd.f32 %v460, %v530
      %v532 = vpop.f32.mrf.mxu0
      %533 = vdwg.mxu0
      %v534 = vmax.f32 %v531, 0.0
      %s535 = scalar_lea.vmem [#allocation2], 8
      %536 = vst [vmem:[%s535 + $0x1] sm:$0xf] %v534
      %s537 = scalar_lea.vmem %s399, 8
      %v538 = vld [vmem:[%s537] sm:$0x7]
      %v540 = vunpack.c.l.b16 %v538
      %v541 = vpack.c.b16 %v540, %v540
      %v543 = vshrl.u32 %v541, 16
      %v545 = vshll.u32 %v541, 16
      %v547 = vrot.slane %v545, 1
      %v548 = vor.u32 %v543, %v547
      %550 = vmatpush.bf16.msra.mxu0 %v512
      %551 = vmatpush.bf16.msra.mxu0 %v511
      %552 = vmatpush.bf16.msra.mxu0 %v510
      %553 = vmatpush.bf16.msra.mxu0 %v509
      %554 = vmatpush.bf16.msra.mxu0 %v508
      %555 = vmatpush.bf16.msra.mxu0 %v507
      %556 = vmatpush.bf16.msra.mxu0 %v506
      %557 = vmatpush.bf16.msra.mxu0 %v505
      %558 = vmatmul.bf16.gmra.mxu0 %v548
      %v559 = vpop.f32.mrf.mxu0
      %v560 = vadd.f32 %v460, %v559
      %v561 = vpop.f32.mrf.mxu0
      %562 = vdwg.mxu0
      %v563 = vmax.f32 %v560, 0.0
      %s564 = scalar_lea.vmem [#allocation2], 16
      %565 = vst [vmem:[%s564 + $0x1] sm:$0xf] %v563
      %s566 = scalar_lea.vmem %s399, 12
      %v567 = vld [vmem:[%s566] sm:$0x7]
      %v569 = vunpack.c.l.b16 %v567
      %v570 = vpack.c.b16 %v569, %v569
      %v572 = vshrl.u32 %v570, 16
      %v574 = vshll.u32 %v570, 16
      %v576 = vrot.slane %v574, 1
      %v577 = vor.u32 %v572, %v576
      %579 = vmatpush.bf16.msra.mxu0 %v512
      %580 = vmatpush.bf16.msra.mxu0 %v511
      %581 = vmatpush.bf16.msra.mxu0 %v510
      %582 = vmatpush.bf16.msra.mxu0 %v509
      %583 = vmatpush.bf16.msra.mxu0 %v508
      %584 = vmatpush.bf16.msra.mxu0 %v507
      %585 = vmatpush.bf16.msra.mxu0 %v506
      %586 = vmatpush.bf16.msra.mxu0 %v505
      %587 = vmatmul.bf16.gmra.mxu0 %v577
      %v588 = vpop.f32.mrf.mxu0
      %v589 = vadd.f32 %v460, %v588
      %v590 = vpop.f32.mrf.mxu0
      %591 = vdwg.mxu0
      %v592 = vmax.f32 %v589, 0.0
      %s593 = scalar_lea.vmem [#allocation2], 24
      %594 = vst [vmem:[%s593 + $0x1] sm:$0xf] %v592
      %s595 = scalar_lea.vmem %s399, 16
      %v596 = vld [vmem:[%s595] sm:$0x7]
      %v598 = vunpack.c.l.b16 %v596
      %v599 = vpack.c.b16 %v598, %v598
      %v601 = vshrl.u32 %v599, 16
      %v603 = vshll.u32 %v599, 16
      %v605 = vrot.slane %v603, 1
      %v606 = vor.u32 %v601, %v605
      %608 = vmatpush.bf16.msra.mxu0 %v512
      %609 = vmatpush.bf16.msra.mxu0 %v511
      %610 = vmatpush.bf16.msra.mxu0 %v510
      %611 = vmatpush.bf16.msra.mxu0 %v509
      %612 = vmatpush.bf16.msra.mxu0 %v508
      %613 = vmatpush.bf16.msra.mxu0 %v507
      %614 = vmatpush.bf16.msra.mxu0 %v506
      %615 = vmatpush.bf16.msra.mxu0 %v505
      %616 = vmatmul.bf16.gmra.mxu0 %v606
      %v617 = vpop.f32.mrf.mxu0
      %v618 = vadd.f32 %v460, %v617
      %v619 = vpop.f32.mrf.mxu0
      %620 = vdwg.mxu0
      %v621 = vmax.f32 %v618, 0.0
      %s622 = scalar_lea.vmem [#allocation2], 32
      %623 = vst [vmem:[%s622 + $0x1] sm:$0xf] %v621
      %s624 = scalar_lea.vmem %s404, 4
      %v625 = vld [vmem:[%s624] sm:$0x3]
      %626 = vmatpush.bf16.msra.mxu0 %v512
      %627 = vmatpush.bf16.msra.mxu0 %v511
      %628 = vmatpush.bf16.msra.mxu0 %v510
      %629 = vmatpush.bf16.msra.mxu0 %v509
      %630 = vmatpush.bf16.msra.mxu0 %v508
      %631 = vmatpush.bf16.msra.mxu0 %v507
      %632 = vmatpush.bf16.msra.mxu0 %v506
      %633 = vmatpush.bf16.msra.mxu0 %v505
      %634 = vmatmul.bf16.gmra.mxu0 %v625
      %v635 = vpop.f32.mrf.mxu0
      %v636 = vadd.f32 %v460, %v635
      %v637 = vpop.f32.mrf.mxu0
      %638 = vdwg.mxu0
      %v639 = vmax.f32 %v636, 0.0
      %s640 = scalar_lea.vmem [#allocation2], 48
      %641 = vst [vmem:[%s640] sm:$0xf] %v639
      %s642 = scalar_lea.vmem %s404, 8
      %v643 = vld [vmem:[%s642] sm:$0x3]
      %644 = vmatpush.bf16.msra.mxu0 %v512
      %645 = vmatpush.bf16.msra.mxu0 %v511
      %646 = vmatpush.bf16.msra.mxu0 %v510
      %647 = vmatpush.bf16.msra.mxu0 %v509
      %648 = vmatpush.bf16.msra.mxu0 %v508
      %649 = vmatpush.bf16.msra.mxu0 %v507
      %650 = vmatpush.bf16.msra.mxu0 %v506
      %651 = vmatpush.bf16.msra.mxu0 %v505
      %652 = vmatmul.bf16.gmra.mxu0 %v643
      %v653 = vpop.f32.mrf.mxu0
      %v654 = vadd.f32 %v460, %v653
      %v655 = vpop.f32.mrf.mxu0
      %656 = vdwg.mxu0
      %v657 = vmax.f32 %v654, 0.0
      %s658 = scalar_lea.vmem [#allocation2], 56
      %659 = vst [vmem:[%s658] sm:$0xf] %v657
      %s660 = scalar_lea.vmem %s404, 12
      %v661 = vld [vmem:[%s660] sm:$0x3]
      %662 = vmatpush.bf16.msra.mxu0 %v512
      %663 = vmatpush.bf16.msra.mxu0 %v511
      %664 = vmatpush.bf16.msra.mxu0 %v510
      %665 = vmatpush.bf16.msra.mxu0 %v509
      %666 = vmatpush.bf16.msra.mxu0 %v508
      %667 = vmatpush.bf16.msra.mxu0 %v507
      %668 = vmatpush.bf16.msra.mxu0 %v506
      %669 = vmatpush.bf16.msra.mxu0 %v505
      %670 = vmatmul.bf16.gmra.mxu0 %v661
      %v671 = vpop.f32.mrf.mxu0
      %v672 = vadd.f32 %v460, %v671
      %v673 = vpop.f32.mrf.mxu0
      %674 = vdwg.mxu0
      %v675 = vmax.f32 %v672, 0.0
      %s676 = scalar_lea.vmem [#allocation2], 64
      %677 = vst [vmem:[%s676] sm:$0xf] %v675
      %s678 = scalar_lea.vmem %s404, 16
      %v679 = vld [vmem:[%s678] sm:$0x3]
      %680 = vmatpush.bf16.msra.mxu0 %v512
      %681 = vmatpush.bf16.msra.mxu0 %v511
      %682 = vmatpush.bf16.msra.mxu0 %v510
      %683 = vmatpush.bf16.msra.mxu0 %v509
      %684 = vmatpush.bf16.msra.mxu0 %v508
      %685 = vmatpush.bf16.msra.mxu0 %v507
      %686 = vmatpush.bf16.msra.mxu0 %v506
      %687 = vmatpush.bf16.msra.mxu0 %v505
      %688 = vmatmul.bf16.gmra.mxu0 %v679
      %v689 = vpop.f32.mrf.mxu0
      %v690 = vadd.f32 %v460, %v689
      %v691 = vpop.f32.mrf.mxu0
      %692 = vdwg.mxu0
      %v693 = vmax.f32 %v690, 0.0
      %s694 = scalar_lea.vmem [#allocation2], 72
      %695 = vst [vmem:[%s694] sm:$0xf] %v693
      %v696 = vld [vmem:[%s409] sm:$0x7]
      %v698 = vunpack.c.l.b16 %v696
      %v699 = vpack.c.b16 %v698, %v698
      %v701 = vshrl.u32 %v699, 16
      %v703 = vshll.u32 %v699, 16
      %v705 = vrot.slane %v703, 1
      %v706 = vor.u32 %v701, %v705
      %708 = vmatpush.bf16.msra.mxu0 %v512
      %709 = vmatpush.bf16.msra.mxu0 %v511
      %710 = vmatpush.bf16.msra.mxu0 %v510
      %711 = vmatpush.bf16.msra.mxu0 %v509
      %712 = vmatpush.bf16.msra.mxu0 %v508
      %713 = vmatpush.bf16.msra.mxu0 %v507
      %714 = vmatpush.bf16.msra.mxu0 %v506
      %715 = vmatpush.bf16.msra.mxu0 %v505
      %716 = vmatmul.bf16.gmra.mxu0 %v706
      %v717 = vpop.f32.mrf.mxu0
      %v718 = vadd.f32 %v460, %v717
      %v719 = vpop.f32.mrf.mxu0
      %720 = vdwg.mxu0
      %v721 = vmax.f32 %v718, 0.0
      %s722 = scalar_lea.vmem [#allocation2], 80
      %723 = vst [vmem:[%s722 + $0x1] sm:$0xf] %v721
      %s724 = scalar_lea.vmem %s409, 4
      %v725 = vld [vmem:[%s724] sm:$0x7]
      %v727 = vunpack.c.l.b16 %v725
      %v728 = vpack.c.b16 %v727, %v727
      %v730 = vshrl.u32 %v728, 16
      %v732 = vshll.u32 %v728, 16
      %v734 = vrot.slane %v732, 1
      %v735 = vor.u32 %v730, %v734
      %737 = vmatpush.bf16.msra.mxu0 %v512
      %738 = vmatpush.bf16.msra.mxu0 %v511
      %739 = vmatpush.bf16.msra.mxu0 %v510
      %740 = vmatpush.bf16.msra.mxu0 %v509
      %741 = vmatpush.bf16.msra.mxu0 %v508
      %742 = vmatpush.bf16.msra.mxu0 %v507
      %743 = vmatpush.bf16.msra.mxu0 %v506
      %744 = vmatpush.bf16.msra.mxu0 %v505
      %745 = vmatmul.bf16.gmra.mxu0 %v735
      %v746 = vpop.f32.mrf.mxu0
      %v747 = vadd.f32 %v460, %v746
      %v748 = vpop.f32.mrf.mxu0
      %749 = vdwg.mxu0
      %v750 = vmax.f32 %v747, 0.0
      %s751 = scalar_lea.vmem [#allocation2], 88
      %752 = vst [vmem:[%s751 + $0x1] sm:$0xf] %v750
      %s753 = scalar_lea.vmem %s409, 8
      %v754 = vld [vmem:[%s753] sm:$0x7]
      %v756 = vunpack.c.l.b16 %v754
      %v757 = vpack.c.b16 %v756, %v756
      %v759 = vshrl.u32 %v757, 16
      %v761 = vshll.u32 %v757, 16
      %v763 = vrot.slane %v761, 1
      %v764 = vor.u32 %v759, %v763
      %766 = vmatpush.bf16.msra.mxu0 %v512
      %767 = vmatpush.bf16.msra.mxu0 %v511
      %768 = vmatpush.bf16.msra.mxu0 %v510
      %769 = vmatpush.bf16.msra.mxu0 %v509
      %770 = vmatpush.bf16.msra.mxu0 %v508
      %771 = vmatpush.bf16.msra.mxu0 %v507
      %772 = vmatpush.bf16.msra.mxu0 %v506
      %773 = vmatpush.bf16.msra.mxu0 %v505
      %774 = vmatmul.bf16.gmra.mxu0 %v764
      %v775 = vpop.f32.mrf.mxu0
      %v776 = vadd.f32 %v460, %v775
      %v777 = vpop.f32.mrf.mxu0
      %778 = vdwg.mxu0
      %v779 = vmax.f32 %v776, 0.0
      %s780 = scalar_lea.vmem [#allocation2], 96
      %781 = vst [vmem:[%s780 + $0x1] sm:$0xf] %v779
      %s782 = scalar_lea.vmem %s409, 12
      %v783 = vld [vmem:[%s782] sm:$0x7]
      %v785 = vunpack.c.l.b16 %v783
      %v786 = vpack.c.b16 %v785, %v785
      %v788 = vshrl.u32 %v786, 16
      %v790 = vshll.u32 %v786, 16
      %v792 = vrot.slane %v790, 1
      %v793 = vor.u32 %v788, %v792
      %795 = vmatpush.bf16.msra.mxu0 %v512
      %796 = vmatpush.bf16.msra.mxu0 %v511
      %797 = vmatpush.bf16.msra.mxu0 %v510
      %798 = vmatpush.bf16.msra.mxu0 %v509
      %799 = vmatpush.bf16.msra.mxu0 %v508
      %800 = vmatpush.bf16.msra.mxu0 %v507
      %801 = vmatpush.bf16.msra.mxu0 %v506
      %802 = vmatpush.bf16.msra.mxu0 %v505
      %803 = vmatmul.bf16.gmra.mxu0 %v793
      %v804 = vpop.f32.mrf.mxu0
      %v805 = vadd.f32 %v460, %v804
      %v806 = vpop.f32.mrf.mxu0
      %807 = vdwg.mxu0
      %v808 = vmax.f32 %v805, 0.0
      %s809 = scalar_lea.vmem [#allocation2], 104
      %810 = vst [vmem:[%s809 + $0x1] sm:$0xf] %v808
      %v811 = vld [vmem:[%s414] sm:$0x3]
      %812 = vmatpush.bf16.msra.mxu0 %v512
      %813 = vmatpush.bf16.msra.mxu0 %v511
      %814 = vmatpush.bf16.msra.mxu0 %v510
      %815 = vmatpush.bf16.msra.mxu0 %v509
      %816 = vmatpush.bf16.msra.mxu0 %v508
      %817 = vmatpush.bf16.msra.mxu0 %v507
      %818 = vmatpush.bf16.msra.mxu0 %v506
      %819 = vmatpush.bf16.msra.mxu0 %v505
      %820 = vmatmul.bf16.gmra.mxu0 %v811
      %v821 = vpop.f32.mrf.mxu0
      %v822 = vadd.f32 %v460, %v821
      %v823 = vpop.f32.mrf.mxu0
      %824 = vdwg.mxu0
      %v825 = vmax.f32 %v822, 0.0
      %s826 = scalar_lea.vmem [#allocation2], 120
      %827 = vst [vmem:[%s826] sm:$0xf] %v825
      %s828 = scalar_lea.vmem %s414, 4
      %v829 = vld [vmem:[%s828] sm:$0x3]
      %830 = vmatpush.bf16.msra.mxu0 %v512
      %831 = vmatpush.bf16.msra.mxu0 %v511
      %832 = vmatpush.bf16.msra.mxu0 %v510
      %833 = vmatpush.bf16.msra.mxu0 %v509
      %834 = vmatpush.bf16.msra.mxu0 %v508
      %835 = vmatpush.bf16.msra.mxu0 %v507
      %836 = vmatpush.bf16.msra.mxu0 %v506
      %837 = vmatpush.bf16.msra.mxu0 %v505
      %838 = vmatmul.bf16.gmra.mxu0 %v829
      %v839 = vpop.f32.mrf.mxu0
      %v840 = vadd.f32 %v460, %v839
      %v841 = vpop.f32.mrf.mxu0
      %842 = vdwg.mxu0
      %v843 = vmax.f32 %v840, 0.0
      %s844 = scalar_lea.vmem [#allocation2], 128
      %845 = vst [vmem:[%s844] sm:$0xf] %v843
      %s846 = scalar_lea.vmem %s414, 8
      %v847 = vld [vmem:[%s846] sm:$0x3]
      %848 = vmatpush.bf16.msra.mxu0 %v512
      %849 = vmatpush.bf16.msra.mxu0 %v511
      %850 = vmatpush.bf16.msra.mxu0 %v510
      %851 = vmatpush.bf16.msra.mxu0 %v509
      %852 = vmatpush.bf16.msra.mxu0 %v508
      %853 = vmatpush.bf16.msra.mxu0 %v507
      %854 = vmatpush.bf16.msra.mxu0 %v506
      %855 = vmatpush.bf16.msra.mxu0 %v505
      %856 = vmatmul.bf16.gmra.mxu0 %v847
      %v857 = vpop.f32.mrf.mxu0
      %v858 = vadd.f32 %v460, %v857
      %v859 = vpop.f32.mrf.mxu0
      %860 = vdwg.mxu0
      %v861 = vmax.f32 %v858, 0.0
      %s862 = scalar_lea.vmem [#allocation2], 136
      %863 = vst [vmem:[%s862] sm:$0xf] %v861
      %s864 = scalar_lea.vmem %s414, 12
      %v865 = vld [vmem:[%s864] sm:$0x3]
      %866 = vmatpush.bf16.msra.mxu0 %v512
      %867 = vmatpush.bf16.msra.mxu0 %v511
      %868 = vmatpush.bf16.msra.mxu0 %v510
      %869 = vmatpush.bf16.msra.mxu0 %v509
      %870 = vmatpush.bf16.msra.mxu0 %v508
      %871 = vmatpush.bf16.msra.mxu0 %v507
      %872 = vmatpush.bf16.msra.mxu0 %v506
      %873 = vmatpush.bf16.msra.mxu0 %v505
      %874 = vmatmul.bf16.gmra.mxu0 %v865
      %v875 = vpop.f32.mrf.mxu0
      %v876 = vadd.f32 %v460, %v875
      %v877 = vpop.f32.mrf.mxu0
      %878 = vdwg.mxu0
      %v879 = vmax.f32 %v876, 0.0
      %s880 = scalar_lea.vmem [#allocation2], 144
      %881 = vst [vmem:[%s880] sm:$0xf] %v879
      %v882 = vld [vmem:[%s6] sm:$0xff]
      %v883 = vld [vmem:[%s6 + $0x8] sm:$0x1]
      %v884 = vld [vmem:[#allocation2] sm:$0xf]
      %v885 = vld [vmem:[#allocation2 + $0x8] sm:$0xf]
      %v886 = vld [vmem:[#allocation2 + $0x10] sm:$0xf]
      %v887 = vld [vmem:[#allocation2 + $0x18] sm:$0xf]
      %v888 = vperm.slane %v882, 0
      %v889 = vmul.f32 %v884, %v888
      %v890 = vmul.f32 %v885, %v888
      %v891 = vmul.f32 %v886, %v888
      %v892 = vmul.f32 %v887, %v888
      %v893 = vadd.f32 %v889, 0.0
      %v894 = vadd.f32 %v890, 0.0
      %v895 = vadd.f32 %v891, 0.0
      %v896 = vadd.f32 %v892, 0.0
      %s897 = scalar_lea.vmem [#allocation2], 40
      %v898 = vld [vmem:[%s897] sm:$0xf]
      %v899 = vld [vmem:[%s897 + $0x8] sm:$0xf]
      %v900 = vld [vmem:[%s897 + $0x10] sm:$0xf]
      %v901 = vld [vmem:[%s897 + $0x18] sm:$0xf]
      %v902 = vperm.slane %v882, 1
      %v903 = vmul.f32 %v898, %v902
      %v904 = vmul.f32 %v899, %v902
      %v905 = vmul.f32 %v900, %v902
      %v906 = vmul.f32 %v901, %v902
      %v907 = vadd.f32 %v893, %v903
      %v908 = vadd.f32 %v894, %v904
      %v909 = vadd.f32 %v895, %v905
      %v910 = vadd.f32 %v896, %v906
      %v911 = vld [vmem:[#allocation2 + $0x1] sm:$0xf]
      %v912 = vld [vmem:[#allocation2 + $0x9] sm:$0xf]
      %v913 = vld [vmem:[#allocation2 + $0x11] sm:$0xf]
      %v914 = vld [vmem:[#allocation2 + $0x19] sm:$0xf]
      %v915 = vperm.slane %v882, 2
      %v916 = vmul.f32 %v911, %v915
      %v917 = vmul.f32 %v912, %v915
      %v918 = vmul.f32 %v913, %v915
      %v919 = vmul.f32 %v914, %v915
      %v920 = vadd.f32 %v907, %v916
      %v921 = vadd.f32 %v908, %v917
      %v922 = vadd.f32 %v909, %v918
      %v923 = vadd.f32 %v910, %v919
      %v924 = vld [vmem:[%s722] sm:$0xf]
      %v925 = vld [vmem:[%s722 + $0x8] sm:$0xf]
      %v926 = vld [vmem:[%s722 + $0x10] sm:$0xf]
      %v927 = vld [vmem:[%s722 + $0x18] sm:$0xf]
      %v928 = vperm.slane %v882, 3
      %v929 = vmul.f32 %v924, %v928
      %v930 = vmul.f32 %v925, %v928
      %v931 = vmul.f32 %v926, %v928
      %v932 = vmul.f32 %v927, %v928
      %v933 = vadd.f32 %v920, %v929
      %v934 = vadd.f32 %v921, %v930
      %v935 = vadd.f32 %v922, %v931
      %v936 = vadd.f32 %v923, %v932
      %v937 = vld [vmem:[%s826] sm:$0xf]
      %v938 = vld [vmem:[%s826 + $0x8] sm:$0xf]
      %v939 = vld [vmem:[%s826 + $0x10] sm:$0xf]
      %v940 = vld [vmem:[%s826 + $0x18] sm:$0xf]
      %v941 = vperm.slane %v882, 4
      %v942 = vmul.f32 %v937, %v941
      %v943 = vmul.f32 %v938, %v941
      %v944 = vmul.f32 %v939, %v941
      %v945 = vmul.f32 %v940, %v941
      %v946 = vadd.f32 %v933, %v942
      %v947 = vadd.f32 %v934, %v943
      %v948 = vadd.f32 %v935, %v944
      %v949 = vadd.f32 %v936, %v945
      %v950 = vld [vmem:[%s722 + $0x1] sm:$0xf]
      %v951 = vld [vmem:[%s722 + $0x9] sm:$0xf]
      %v952 = vld [vmem:[%s722 + $0x11] sm:$0xf]
      %v953 = vld [vmem:[%s722 + $0x19] sm:$0xf]
      %v954 = vperm.slane %v882, 5
      %v955 = vmul.f32 %v950, %v954
      %v956 = vmul.f32 %v951, %v954
      %v957 = vmul.f32 %v952, %v954
      %v958 = vmul.f32 %v953, %v954
      %v959 = vadd.f32 %v946, %v955
      %v960 = vadd.f32 %v947, %v956
      %v961 = vadd.f32 %v948, %v957
      %v962 = vadd.f32 %v949, %v958
      %v963 = vld [vmem:[%s535] sm:$0xf]
      %v964 = vld [vmem:[%s535 + $0x8] sm:$0xf]
      %v965 = vld [vmem:[%s535 + $0x10] sm:$0xf]
      %v966 = vld [vmem:[%s535 + $0x18] sm:$0xf]
      %v967 = vperm.slane %v882, 6
      %v968 = vmul.f32 %v963, %v967
      %v969 = vmul.f32 %v964, %v967
      %v970 = vmul.f32 %v965, %v967
      %v971 = vmul.f32 %v966, %v967
      %v972 = vadd.f32 %v959, %v968
      %v973 = vadd.f32 %v960, %v969
      %v974 = vadd.f32 %v961, %v970
      %v975 = vadd.f32 %v962, %v971
      %v976 = vld [vmem:[%s640] sm:$0xf]
      %v977 = vld [vmem:[%s640 + $0x8] sm:$0xf]
      %v978 = vld [vmem:[%s640 + $0x10] sm:$0xf]
      %v979 = vld [vmem:[%s640 + $0x18] sm:$0xf]
      %v980 = vperm.slane %v882, 7
      %v981 = vmul.f32 %v976, %v980
      %v982 = vmul.f32 %v977, %v980
      %v983 = vmul.f32 %v978, %v980
      %v984 = vmul.f32 %v979, %v980
      %v985 = vadd.f32 %v972, %v981
      %v986 = vadd.f32 %v973, %v982
      %v987 = vadd.f32 %v974, %v983
      %v988 = vadd.f32 %v975, %v984
      %v989 = vld [vmem:[%s535 + $0x1] sm:$0xf]
      %v990 = vld [vmem:[%s535 + $0x9] sm:$0xf]
      %v991 = vld [vmem:[%s535 + $0x11] sm:$0xf]
      %v992 = vld [vmem:[%s535 + $0x19] sm:$0xf]
      %v993 = vperm.slane %v883, 0
      %v994 = vmul.f32 %v989, %v993
      %v995 = vmul.f32 %v990, %v993
      %v996 = vmul.f32 %v991, %v993
      %v997 = vmul.f32 %v992, %v993
      %v998 = vadd.f32 %v985, %v994
      %v999 = vadd.f32 %v986, %v995
      %v1000 = vadd.f32 %v987, %v996
      %v1001 = vadd.f32 %v988, %v997
      %v1002 = vld [vmem:[%s7] sm:$0x1]
      %v1004 = vperm.slane %v1002, 0
      %v1006 = vadd.f32 %v998, %v1004
      %v1007 = vadd.f32 %v999, %v1004
      %v1008 = vadd.f32 %v1000, %v1004
      %v1009 = vadd.f32 %v1001, %v1004
      %v1010 = vmax.f32 %v1006, 0.0
      %v1011 = vmax.f32 %v1007, 0.0
      %v1012 = vmax.f32 %v1008, 0.0
      %v1013 = vmax.f32 %v1009, 0.0
      %v1014 = vld [vmem:[%s8] sm:$0xf]
      %v1015 = vld [vmem:[%s8 + $0x4] sm:$0xf]
      %v1016 = vld [vmem:[%s8 + $0x8] sm:$0xf]
      %v1017 = vld [vmem:[%s8 + $0xc] sm:$0xf]
      %v1018 = vld [vmem:[%s8 + $0x10] sm:$0xf]
      %v1019 = vld [vmem:[%s8 + $0x14] sm:$0xf]
      %v1020 = vld [vmem:[%s8 + $0x18] sm:$0xf]
      %v1021 = vld [vmem:[%s8 + $0x1c] sm:$0xf]
      %v1022 = vld [vmem:[%s8 + $0x20] sm:$0xf]
      %v1023 = vld [vmem:[%s8 + $0x24] sm:$0xf]
      %v1024 = vld [vmem:[%s8 + $0x28] sm:$0xf]
      %v1025 = vld [vmem:[%s8 + $0x2c] sm:$0xf]
      %v1026 = vld [vmem:[%s8 + $0x30] sm:$0xf]
      %v1027 = vld [vmem:[%s8 + $0x34] sm:$0xf]
      %v1028 = vld [vmem:[%s8 + $0x38] sm:$0xf]
      %v1029 = vld [vmem:[%s8 + $0x3c] sm:$0xf]
      %v1030 = vld [vmem:[%s9] sm:$0x1]
      %v1031 = vpack.c.bf16 %v1010, %v1010
      %v1033 = vperm.slane %v1030, 0
      %v1051 = vunpack.c.l.b16 %v1014
      %v1052 = vunpack.c.l.b16 %v1015
      %v1053 = vunpack.c.l.b16 %v1016
      %v1054 = vunpack.c.l.b16 %v1017
      %v1055 = vunpack.c.l.b16 %v1018
      %v1056 = vunpack.c.l.b16 %v1019
      %v1057 = vunpack.c.l.b16 %v1020
      %v1058 = vunpack.c.l.b16 %v1021
      %v1059 = vunpack.c.l.b16 %v1022
      %v1060 = vunpack.c.l.b16 %v1023
      %v1061 = vunpack.c.l.b16 %v1024
      %v1062 = vunpack.c.l.b16 %v1025
      %v1063 = vunpack.c.l.b16 %v1026
      %v1064 = vunpack.c.l.b16 %v1027
      %v1065 = vunpack.c.l.b16 %v1028
      %v1066 = vunpack.c.l.b16 %v1029
      %v1067 = vpack.c.b16 %v1052, %v1051
      %v1068 = vpack.c.b16 %v1054, %v1053
      %v1069 = vpack.c.b16 %v1056, %v1055
      %v1070 = vpack.c.b16 %v1058, %v1057
      %v1071 = vpack.c.b16 %v1060, %v1059
      %v1072 = vpack.c.b16 %v1062, %v1061
      %v1073 = vpack.c.b16 %v1064, %v1063
      %v1074 = vpack.c.b16 %v1066, %v1065
      %1083 = vmatpush.bf16.msra.mxu0 %v1074
      %1084 = vmatpush.bf16.msra.mxu0 %v1073
      %1085 = vmatpush.bf16.msra.mxu0 %v1072
      %1086 = vmatpush.bf16.msra.mxu0 %v1071
      %1087 = vmatpush.bf16.msra.mxu0 %v1070
      %1088 = vmatpush.bf16.msra.mxu0 %v1069
      %1089 = vmatpush.bf16.msra.mxu0 %v1068
      %1090 = vmatpush.bf16.msra.mxu0 %v1067
      %1091 = vmatmul.bf16.gmra.mxu0 %v1031
      %v1092 = vpop.f32.mrf.mxu0
      %v1093 = vadd.f32 %v1033, %v1092
      %v1094 = vpop.f32.mrf.mxu0
      %1095 = vdwg.mxu0
      %v1096 = vpack.c.bf16 %v1093, %v1093
      %1097 = vst [vmem:[%s419] sm:$0x3] %v1096
      %v1098 = vpack.c.bf16 %v1011, %v1011
      %1099 = vmatpush.bf16.msra.mxu0 %v1074
      %1100 = vmatpush.bf16.msra.mxu0 %v1073
      %1101 = vmatpush.bf16.msra.mxu0 %v1072
      %1102 = vmatpush.bf16.msra.mxu0 %v1071
      %1103 = vmatpush.bf16.msra.mxu0 %v1070
      %1104 = vmatpush.bf16.msra.mxu0 %v1069
      %1105 = vmatpush.bf16.msra.mxu0 %v1068
      %1106 = vmatpush.bf16.msra.mxu0 %v1067
      %1107 = vmatmul.bf16.gmra.mxu0 %v1098
      %v1108 = vpop.f32.mrf.mxu0
      %v1109 = vadd.f32 %v1033, %v1108
      %v1110 = vpop.f32.mrf.mxu0
      %1111 = vdwg.mxu0
      %v1112 = vpack.c.bf16 %v1109, %v1109
      %s1113 = scalar_lea.vmem %s419, 2
      %1114 = vst [vmem:[%s1113] sm:$0x3] %v1112
      %v1115 = vpack.c.bf16 %v1012, %v1012
      %1116 = vmatpush.bf16.msra.mxu0 %v1074
      %1117 = vmatpush.bf16.msra.mxu0 %v1073
      %1118 = vmatpush.bf16.msra.mxu0 %v1072
      %1119 = vmatpush.bf16.msra.mxu0 %v1071
      %1120 = vmatpush.bf16.msra.mxu0 %v1070
      %1121 = vmatpush.bf16.msra.mxu0 %v1069
      %1122 = vmatpush.bf16.msra.mxu0 %v1068
      %1123 = vmatpush.bf16.msra.mxu0 %v1067
      %1124 = vmatmul.bf16.gmra.mxu0 %v1115
      %v1125 = vpop.f32.mrf.mxu0
      %v1126 = vadd.f32 %v1033, %v1125
      %v1127 = vpop.f32.mrf.mxu0
      %1128 = vdwg.mxu0
      %v1129 = vpack.c.bf16 %v1126, %v1126
      %s1130 = scalar_lea.vmem %s419, 4
      %1131 = vst [vmem:[%s1130] sm:$0x3] %v1129
      %v1132 = vpack.c.bf16 %v1013, %v1013
      %1133 = vmatpush.bf16.msra.mxu0 %v1074
      %1134 = vmatpush.bf16.msra.mxu0 %v1073
      %1135 = vmatpush.bf16.msra.mxu0 %v1072
      %1136 = vmatpush.bf16.msra.mxu0 %v1071
      %1137 = vmatpush.bf16.msra.mxu0 %v1070
      %1138 = vmatpush.bf16.msra.mxu0 %v1069
      %1139 = vmatpush.bf16.msra.mxu0 %v1068
      %1140 = vmatpush.bf16.msra.mxu0 %v1067
      %1141 = vmatmul.bf16.gmra.mxu0 %v1132
      %v1142 = vpop.f32.mrf.mxu0
      %v1143 = vadd.f32 %v1033, %v1142
      %v1144 = vpop.f32.mrf.mxu0
      %1145 = vdwg.mxu0
      %v1146 = vpack.c.bf16 %v1143, %v1143
      %s1147 = scalar_lea.vmem %s419, 6
      %1148 = vst [vmem:[%s1147] sm:$0x3] %v1146
      %p1149 = scmp.lt.s32.totalorder %s21, 1
      %s1150 = scalar_select %p1149, %s21, 1
      %s1151 = smul.addr %s1150, 4
      %s1152 = smul.addr %s1151, 2
      %s1153 = scalar_lea.vmem %s10, %s1152
      // Predicated region
      $region61: #{mobilenet_v3_forward.8} parent=59 // pred_check
        %p1154 = pneg %p269
      $region62: #{mobilenet_v3_forward.8} parent=59 // pred_check_branch
        %1156 = sbr.rel (%p1154) target = $region64
      $region63: #{mobilenet_v3_forward.8} parent=59 // pred_region
        _
      $region64: #{mobilenet_v3_forward.8} parent=59 // pred_fallthru
        _
    $region60: #{mobilenet_v3_forward.8} parent=5 // pred_fallthru
      _
    %p1157 = scmp.le.s32.totalorder 2, %s16
    // Predicated region
    $region65: #{mobilenet_v3_forward.8} parent=5 // pred_check
      %p1158 = pneg %p1157
    $region66: #{mobilenet_v3_forward.8} parent=5 // pred_check_branch
      %1160 = sbr.rel (%p1158) target = $region68
    $region67: #{mobilenet_v3_forward.8} parent=5 // pred_region
      %s1161 = ssub.s32 %s16, 2
      // Predicated region
      $region69: #{mobilenet_v3_forward.8} parent=67 // pred_check
        %p1162 = pneg %p275
      $region70: #{mobilenet_v3_forward.8} parent=67 // pred_check_branch
        %1164 = sbr.rel (%p1162) target = $region72
      $region71: #{mobilenet_v3_forward.8} parent=67 // pred_region
        %p1165 = scmp.lt.s32.totalorder %s22, 1
        %s1166 = scalar_select %p1165, %s22, 1
        %s1167 = smul.addr %s1166, 4
        %s1168 = smul.addr %s1167, 2
        %s1169 = scalar_lea.vmem %s10, %s1168
      $region72: #{mobilenet_v3_forward.8} parent=67 // pred_fallthru
        _
    $region68: #{mobilenet_v3_forward.8} parent=5 // pred_fallthru
      _
  $region6: #{mobilenet_v3_forward.8} parent=0 // loop_footer
    %s20 = sadd.s32 1, %s16
  $region7: #{mobilenet_v3_forward.8} parent=0 // loop_footer_branch
    %15 = sbr.rel target = $region3
  $region8: #{mobilenet_v3_forward.8} parent=0 // loop_exit
    _

// kernel: mobilenet_v3_forward.10
$region0: #{mobilenet_v3_forward.10}
  #allocation0 [shape = 'u32[]', space=smem, size = 0x4, offset = 0x4, fixed_abs, tag = 'smem constant byte address 0x4 - core index']
  #allocation1 [shape = 'u32[72,128]{1,0:T(1,128)}', space=vmem, size = 0x9000, scoped, tag = 'internal scratch']
  #allocation2 [shape = 'f32[6,6,128]{2,1,0:T(8,128)}', space=vmem, size = 0x6000, scoped, tag = 'scratch operand']
  %s0 = inlined_call_operand.vmem [shape: bf16[2,4,4,128], index: 0, kind: input, shape index: {}]
  %s1 = inlined_call_operand.vmem [shape: bf16[128,128], index: 1, kind: input, shape index: {}]
  %s2 = inlined_call_operand.vmem [shape: f32[1,128], index: 2, kind: input, shape index: {}]
  %s3 = inlined_call_operand.vmem [shape: f32[9,128], index: 3, kind: input, shape index: {}]
  %s4 = inlined_call_operand.vmem [shape: f32[1,128], index: 4, kind: input, shape index: {}]
  %s5 = inlined_call_operand.vmem [shape: bf16[128,128], index: 5, kind: input, shape index: {}]
  %s6 = inlined_call_operand.vmem [shape: f32[1,128], index: 6, kind: input, shape index: {}]
  %s7 = inlined_call_operand.vmem [shape: bf16[128,128], index: 7, kind: input, shape index: {}]
  %s8 = inlined_call_operand.vmem [shape: f32[1,128], index: 8, kind: input, shape index: {}]
  %s9 = inlined_call_operand.vmem [shape: bf16[128,128], index: 9, kind: input, shape index: {}]
  %s10 = inlined_call_operand.vmem [shape: f32[1,128], index: 10, kind: input, shape index: {}]
  %s11 = inlined_call_operand.vmem [shape: bf16[2,4,4,128], index: 11, kind: output, shape index: {}]
  %s12 = sld [smem:[#allocation0]]
  $region77: #{mobilenet_v3_forward.10} parent=0
    _
  %s14 = ssub.s32 1, %s12
  %s15 = scalar_select 0, %s14, %s12
  loop: start=0, step=1, limit=4
  $region2: #{mobilenet_v3_forward.10} parent=0 // loop_pre_header
    _
  $region3: #{mobilenet_v3_forward.10} parent=0 // loop_header
    %s17 = sphi 0, %s21
    %p18 = scmp.ge.s32.totalorder %s17, 4
    %s27 = sphi 0, %s29
    %s30 = sphi 0, %s27
    %s31 = sphi 0, %s30
    %s47 = sphi 0, %s31
    %s51 = sphi 0, %s51
    %s53 = sphi 0, %s51
    %s54 = sphi 0, %s53
    %s68 = sphi 0, %s54
    %s72 = sphi 0, %s72
    %s74 = sphi 0, %s72
    %s75 = sphi 0, %s74
    %s89 = sphi 0, %s75
    %s93 = sphi 0, %s93
    %s95 = sphi 0, %s93
    %s96 = sphi 0, %s95
    %s110 = sphi 0, %s96
    %s114 = sphi 0, %s114
    %s116 = sphi 0, %s114
    %s117 = sphi 0, %s116
    %s131 = sphi 0, %s117
    %s135 = sphi 0, %s135
    %s137 = sphi 0, %s135
    %s138 = sphi 0, %s137
    %s152 = sphi 0, %s138
    %s156 = sphi 0, %s156
    %s158 = sphi 0, %s156
    %s159 = sphi 0, %s158
    %s173 = sphi 0, %s159
    %s177 = sphi 0, %s177
    %s179 = sphi 0, %s177
    %s180 = sphi 0, %s179
    %s194 = sphi 0, %s180
    %s198 = sphi 0, %s198
    %s200 = sphi 0, %s198
    %s201 = sphi 0, %s200
    %s215 = sphi 0, %s201
    %s219 = sphi 0, %s219
    %s221 = sphi 0, %s219
    %s222 = sphi 0, %s221
    %s236 = sphi 0, %s222
    %s240 = sphi 0, %s240
    %s242 = sphi 0, %s240
    %s243 = sphi 0, %s242
    %s257 = sphi 0, %s243
    %s263 = sphi 0, %s265
    %s266 = sphi 0, %s263
    %s267 = sphi 0, %s266
    %s283 = sphi 0, %s267
  $region4: #{mobilenet_v3_forward.10} parent=0 // loop_header_branch
    %20 = sbr.rel (%p18) target = $region8
  $region5: #{mobilenet_v3_forward.10} parent=0 // loop_body
    %s22 = ssub.s32 %s17, 1
    %s23 = ssub.s32 %s17, 2
    %s24 = sadd.s32 %s17, 1
    %s25 = ssub.s32 %s17, %s24
    %p26 = scmp.eq.s32.totalorder %s25, 0
    %s28 = sadd.s32 %s27, 1
    %s29 = scalar_select %p26, %s27, %s28
    %p32 = pneg %p26
    %p33 = scmp.eq.s32.totalorder %s17, 1
    %p34 = por %p32, %p33
    %p35 = scmp.ne.s32.totalorder %s27, %s30
    %p36 = scmp.eq.s32.totalorder %s17, 0
    %p37 = por %p35, %p36
    %p38 = scmp.ne.s32.totalorder %s27, %s30
    %p39 = scmp.eq.s32.totalorder %s22, 1
    %p40 = por %p38, %p39
    %p41 = scmp.ne.s32.totalorder %s30, %s31
    %p42 = scmp.eq.s32.totalorder %s22, 0
    %p43 = por %p41, %p42
    %p44 = scmp.ne.s32.totalorder %s30, %s31
    %p45 = scmp.eq.s32.totalorder %s23, 1
    %p46 = por %p44, %p45
    %p48 = scmp.ne.s32.totalorder %s31, %s47
    %p49 = scmp.eq.s32.totalorder %s23, 0
    %p50 = por %p48, %p49
    %s52 = sadd.s32 %s51, 1
    %p55 = scmp.eq.s32.totalorder %s17, 1
    %p56 = scmp.ne.s32.totalorder %s51, %s53
    %p57 = scmp.eq.s32.totalorder %s17, 0
    %p58 = por %p56, %p57
    %p59 = scmp.ne.s32.totalorder %s51, %s53
    %p60 = scmp.eq.s32.totalorder %s22, 1
    %p61 = por %p59, %p60
    %p62 = scmp.ne.s32.totalorder %s53, %s54
    %p63 = scmp.eq.s32.totalorder %s22, 0
    %p64 = por %p62, %p63
    %p65 = scmp.ne.s32.totalorder %s53, %s54
    %p66 = scmp.eq.s32.totalorder %s23, 1
    %p67 = por %p65, %p66
    %p69 = scmp.ne.s32.totalorder %s54, %s68
    %p70 = scmp.eq.s32.totalorder %s23, 0
    %p71 = por %p69, %p70
    %s73 = sadd.s32 %s72, 1
    %p76 = scmp.eq.s32.totalorder %s17, 1
    %p77 = scmp.ne.s32.totalorder %s72, %s74
    %p78 = scmp.eq.s32.totalorder %s17, 0
    %p79 = por %p77, %p78
    %p80 = scmp.ne.s32.totalorder %s72, %s74
    %p81 = scmp.eq.s32.totalorder %s22, 1
    %p82 = por %p80, %p81
    %p83 = scmp.ne.s32.totalorder %s74, %s75
    %p84 = scmp.eq.s32.totalorder %s22, 0
    %p85 = por %p83, %p84
    %p86 = scmp.ne.s32.totalorder %s74, %s75
    %p87 = scmp.eq.s32.totalorder %s23, 1
    %p88 = por %p86, %p87
    %p90 = scmp.ne.s32.totalorder %s75, %s89
    %p91 = scmp.eq.s32.totalorder %s23, 0
    %p92 = por %p90, %p91
    %s94 = sadd.s32 %s93, 1
    %p97 = scmp.eq.s32.totalorder %s17, 1
    %p98 = scmp.ne.s32.totalorder %s93, %s95
    %p99 = scmp.eq.s32.totalorder %s17, 0
    %p100 = por %p98, %p99
    %p101 = scmp.ne.s32.totalorder %s93, %s95
    %p102 = scmp.eq.s32.totalorder %s22, 1
    %p103 = por %p101, %p102
    %p104 = scmp.ne.s32.totalorder %s95, %s96
    %p105 = scmp.eq.s32.totalorder %s22, 0
    %p106 = por %p104, %p105
    %p107 = scmp.ne.s32.totalorder %s95, %s96
    %p108 = scmp.eq.s32.totalorder %s23, 1
    %p109 = por %p107, %p108
    %p111 = scmp.ne.s32.totalorder %s96, %s110
    %p112 = scmp.eq.s32.totalorder %s23, 0
    %p113 = por %p111, %p112
    %s115 = sadd.s32 %s114, 1
    %p118 = scmp.eq.s32.totalorder %s17, 1
    %p119 = scmp.ne.s32.totalorder %s114, %s116
    %p120 = scmp.eq.s32.totalorder %s17, 0
    %p121 = por %p119, %p120
    %p122 = scmp.ne.s32.totalorder %s114, %s116
    %p123 = scmp.eq.s32.totalorder %s22, 1
    %p124 = por %p122, %p123
    %p125 = scmp.ne.s32.totalorder %s116, %s117
    %p126 = scmp.eq.s32.totalorder %s22, 0
    %p127 = por %p125, %p126
    %p128 = scmp.ne.s32.totalorder %s116, %s117
    %p129 = scmp.eq.s32.totalorder %s23, 1
    %p130 = por %p128, %p129
    %p132 = scmp.ne.s32.totalorder %s117, %s131
    %p133 = scmp.eq.s32.totalorder %s23, 0
    %p134 = por %p132, %p133
    %s136 = sadd.s32 %s135, 1
    %p139 = scmp.eq.s32.totalorder %s17, 1
    %p140 = scmp.ne.s32.totalorder %s135, %s137
    %p141 = scmp.eq.s32.totalorder %s17, 0
    %p142 = por %p140, %p141
    %p143 = scmp.ne.s32.totalorder %s135, %s137
    %p144 = scmp.eq.s32.totalorder %s22, 1
    %p145 = por %p143, %p144
    %p146 = scmp.ne.s32.totalorder %s137, %s138
    %p147 = scmp.eq.s32.totalorder %s22, 0
    %p148 = por %p146, %p147
    %p149 = scmp.ne.s32.totalorder %s137, %s138
    %p150 = scmp.eq.s32.totalorder %s23, 1
    %p151 = por %p149, %p150
    %p153 = scmp.ne.s32.totalorder %s138, %s152
    %p154 = scmp.eq.s32.totalorder %s23, 0
    %p155 = por %p153, %p154
    %s157 = sadd.s32 %s156, 1
    %p160 = scmp.eq.s32.totalorder %s17, 1
    %p161 = scmp.ne.s32.totalorder %s156, %s158
    %p162 = scmp.eq.s32.totalorder %s17, 0
    %p163 = por %p161, %p162
    %p164 = scmp.ne.s32.totalorder %s156, %s158
    %p165 = scmp.eq.s32.totalorder %s22, 1
    %p166 = por %p164, %p165
    %p167 = scmp.ne.s32.totalorder %s158, %s159
    %p168 = scmp.eq.s32.totalorder %s22, 0
    %p169 = por %p167, %p168
    %p170 = scmp.ne.s32.totalorder %s158, %s159
    %p171 = scmp.eq.s32.totalorder %s23, 1
    %p172 = por %p170, %p171
    %p174 = scmp.ne.s32.totalorder %s159, %s173
    %p175 = scmp.eq.s32.totalorder %s23, 0
    %p176 = por %p174, %p175
    %s178 = sadd.s32 %s177, 1
    %p181 = scmp.eq.s32.totalorder %s17, 1
    %p182 = scmp.ne.s32.totalorder %s177, %s179
    %p183 = scmp.eq.s32.totalorder %s17, 0
    %p184 = por %p182, %p183
    %p185 = scmp.ne.s32.totalorder %s177, %s179
    %p186 = scmp.eq.s32.totalorder %s22, 1
    %p187 = por %p185, %p186
    %p188 = scmp.ne.s32.totalorder %s179, %s180
    %p189 = scmp.eq.s32.totalorder %s22, 0
    %p190 = por %p188, %p189
    %p191 = scmp.ne.s32.totalorder %s179, %s180
    %p192 = scmp.eq.s32.totalorder %s23, 1
    %p193 = por %p191, %p192
    %p195 = scmp.ne.s32.totalorder %s180, %s194
    %p196 = scmp.eq.s32.totalorder %s23, 0
    %p197 = por %p195, %p196
    %s199 = sadd.s32 %s198, 1
    %p202 = scmp.eq.s32.totalorder %s17, 1
    %p203 = scmp.ne.s32.totalorder %s198, %s200
    %p204 = scmp.eq.s32.totalorder %s17, 0
    %p205 = por %p203, %p204
    %p206 = scmp.ne.s32.totalorder %s198, %s200
    %p207 = scmp.eq.s32.totalorder %s22, 1
    %p208 = por %p206, %p207
    %p209 = scmp.ne.s32.totalorder %s200, %s201
    %p210 = scmp.eq.s32.totalorder %s22, 0
    %p211 = por %p209, %p210
    %p212 = scmp.ne.s32.totalorder %s200, %s201
    %p213 = scmp.eq.s32.totalorder %s23, 1
    %p214 = por %p212, %p213
    %p216 = scmp.ne.s32.totalorder %s201, %s215
    %p217 = scmp.eq.s32.totalorder %s23, 0
    %p218 = por %p216, %p217
    %s220 = sadd.s32 %s219, 1
    %p223 = scmp.eq.s32.totalorder %s17, 1
    %p224 = scmp.ne.s32.totalorder %s219, %s221
    %p225 = scmp.eq.s32.totalorder %s17, 0
    %p226 = por %p224, %p225
    %p227 = scmp.ne.s32.totalorder %s219, %s221
    %p228 = scmp.eq.s32.totalorder %s22, 1
    %p229 = por %p227, %p228
    %p230 = scmp.ne.s32.totalorder %s221, %s222
    %p231 = scmp.eq.s32.totalorder %s22, 0
    %p232 = por %p230, %p231
    %p233 = scmp.ne.s32.totalorder %s221, %s222
    %p234 = scmp.eq.s32.totalorder %s23, 1
    %p235 = por %p233, %p234
    %p237 = scmp.ne.s32.totalorder %s222, %s236
    %p238 = scmp.eq.s32.totalorder %s23, 0
    %p239 = por %p237, %p238
    %s241 = sadd.s32 %s240, 1
    %p244 = scmp.eq.s32.totalorder %s17, 1
    %p245 = scmp.ne.s32.totalorder %s240, %s242
    %p246 = scmp.eq.s32.totalorder %s17, 0
    %p247 = por %p245, %p246
    %p248 = scmp.ne.s32.totalorder %s240, %s242
    %p249 = scmp.eq.s32.totalorder %s22, 1
    %p250 = por %p248, %p249
    %p251 = scmp.ne.s32.totalorder %s242, %s243
    %p252 = scmp.eq.s32.totalorder %s22, 0
    %p253 = por %p251, %p252
    %p254 = scmp.ne.s32.totalorder %s242, %s243
    %p255 = scmp.eq.s32.totalorder %s23, 1
    %p256 = por %p254, %p255
    %p258 = scmp.ne.s32.totalorder %s243, %s257
    %p259 = scmp.eq.s32.totalorder %s23, 0
    %p260 = por %p258, %p259
    %s261 = ssub.s32 %s17, %s24
    %p262 = scmp.eq.s32.totalorder %s261, 0
    %s264 = sadd.s32 %s263, 1
    %s265 = scalar_select %p262, %s263, %s264
    %p268 = pneg %p262
    %p269 = scmp.eq.s32.totalorder %s17, 1
    %p270 = por %p268, %p269
    %p271 = scmp.ne.s32.totalorder %s263, %s266
    %p272 = scmp.eq.s32.totalorder %s17, 0
    %p273 = por %p271, %p272
    %p274 = scmp.ne.s32.totalorder %s263, %s266
    %p275 = scmp.eq.s32.totalorder %s22, 1
    %p276 = por %p274, %p275
    %p277 = scmp.ne.s32.totalorder %s266, %s267
    %p278 = scmp.eq.s32.totalorder %s22, 0
    %p279 = por %p277, %p278
    %p280 = scmp.ne.s32.totalorder %s266, %s267
    %p281 = scmp.eq.s32.totalorder %s23, 1
    %p282 = por %p280, %p281
    %p284 = scmp.ne.s32.totalorder %s267, %s283
    %p285 = scmp.eq.s32.totalorder %s23, 0
    %p286 = por %p284, %p285
    %p287 = scmp.le.s32.totalorder 1, %s17
    %p288 = scmp.lt.s32.totalorder %s17, 3
    %p289 = pnand %p287, %p288
    %p290 = pneg %p289
    // Predicated region
    $region9: #{mobilenet_v3_forward.10} parent=5 // pred_check
      _
    $region10: #{mobilenet_v3_forward.10} parent=5 // pred_check_branch
      %292 = sbr.rel (%p289) target = $region12
    $region11: #{mobilenet_v3_forward.10} parent=5 // pred_region
      %s293 = ssub.s32 %s17, 1
      // Predicated region
      $region13: #{mobilenet_v3_forward.10} parent=11 // pred_check
        %p294 = pneg %p64
      $region14: #{mobilenet_v3_forward.10} parent=11 // pred_check_branch
        %296 = sbr.rel (%p294) target = $region16
      $region15: #{mobilenet_v3_forward.10} parent=11 // pred_region
        _
      $region16: #{mobilenet_v3_forward.10} parent=11 // pred_fallthru
        _
      // Predicated region
      $region17: #{mobilenet_v3_forward.10} parent=11 // pred_check
        %p297 = pneg %p85
      $region18: #{mobilenet_v3_forward.10} parent=11 // pred_check_branch
        %299 = sbr.rel (%p297) target = $region20
      $region19: #{mobilenet_v3_forward.10} parent=11 // pred_region
        _
      $region20: #{mobilenet_v3_forward.10} parent=11 // pred_fallthru
        _
      // Predicated region
      $region21: #{mobilenet_v3_forward.10} parent=11 // pred_check
        %p300 = pneg %p106
      $region22: #{mobilenet_v3_forward.10} parent=11 // pred_check_branch
        %302 = sbr.rel (%p300) target = $region24
      $region23: #{mobilenet_v3_forward.10} parent=11 // pred_region
        _
      $region24: #{mobilenet_v3_forward.10} parent=11 // pred_fallthru
        _
      // Predicated region
      $region25: #{mobilenet_v3_forward.10} parent=11 // pred_check
        %p303 = pneg %p127
      $region26: #{mobilenet_v3_forward.10} parent=11 // pred_check_branch
        %305 = sbr.rel (%p303) target = $region28
      $region27: #{mobilenet_v3_forward.10} parent=11 // pred_region
        _
      $region28: #{mobilenet_v3_forward.10} parent=11 // pred_fallthru
        _
      // Predicated region
      $region29: #{mobilenet_v3_forward.10} parent=11 // pred_check
        %p306 = pneg %p148
      $region30: #{mobilenet_v3_forward.10} parent=11 // pred_check_branch
        %308 = sbr.rel (%p306) target = $region32
      $region31: #{mobilenet_v3_forward.10} parent=11 // pred_region
        _
      $region32: #{mobilenet_v3_forward.10} parent=11 // pred_fallthru
        _
      // Predicated region
      $region33: #{mobilenet_v3_forward.10} parent=11 // pred_check
        %p309 = pneg %p169
      $region34: #{mobilenet_v3_forward.10} parent=11 // pred_check_branch
        %311 = sbr.rel (%p309) target = $region36
      $region35: #{mobilenet_v3_forward.10} parent=11 // pred_region
        _
      $region36: #{mobilenet_v3_forward.10} parent=11 // pred_fallthru
        _
      // Predicated region
      $region37: #{mobilenet_v3_forward.10} parent=11 // pred_check
        %p312 = pneg %p190
      $region38: #{mobilenet_v3_forward.10} parent=11 // pred_check_branch
        %314 = sbr.rel (%p312) target = $region40
      $region39: #{mobilenet_v3_forward.10} parent=11 // pred_region
        _
      $region40: #{mobilenet_v3_forward.10} parent=11 // pred_fallthru
        _
      // Predicated region
      $region41: #{mobilenet_v3_forward.10} parent=11 // pred_check
        %p315 = pneg %p211
      $region42: #{mobilenet_v3_forward.10} parent=11 // pred_check_branch
        %317 = sbr.rel (%p315) target = $region44
      $region43: #{mobilenet_v3_forward.10} parent=11 // pred_region
        _
      $region44: #{mobilenet_v3_forward.10} parent=11 // pred_fallthru
        _
      // Predicated region
      $region45: #{mobilenet_v3_forward.10} parent=11 // pred_check
        %p318 = pneg %p232
      $region46: #{mobilenet_v3_forward.10} parent=11 // pred_check_branch
        %320 = sbr.rel (%p318) target = $region48
      $region47: #{mobilenet_v3_forward.10} parent=11 // pred_region
        _
      $region48: #{mobilenet_v3_forward.10} parent=11 // pred_fallthru
        _
      // Predicated region
      $region49: #{mobilenet_v3_forward.10} parent=11 // pred_check
        %p321 = pneg %p253
      $region50: #{mobilenet_v3_forward.10} parent=11 // pred_check_branch
        %323 = sbr.rel (%p321) target = $region52
      $region51: #{mobilenet_v3_forward.10} parent=11 // pred_region
        _
      $region52: #{mobilenet_v3_forward.10} parent=11 // pred_fallthru
        _
    $region12: #{mobilenet_v3_forward.10} parent=5 // pred_fallthru
      _
    %p324 = scmp.lt.s32.totalorder %s17, 2
    // Predicated region
    $region53: #{mobilenet_v3_forward.10} parent=5 // pred_check
      %p325 = pneg %p324
    $region54: #{mobilenet_v3_forward.10} parent=5 // pred_check_branch
      %327 = sbr.rel (%p325) target = $region56
    $region55: #{mobilenet_v3_forward.10} parent=5 // pred_region
      // Predicated region
      $region57: #{mobilenet_v3_forward.10} parent=55 // pred_check
        %p328 = pneg %p37
      $region58: #{mobilenet_v3_forward.10} parent=55 // pred_check_branch
        %330 = sbr.rel (%p328) target = $region60
      $region59: #{mobilenet_v3_forward.10} parent=55 // pred_region
        %p331 = scmp.lt.s32.totalorder %s17, 1
        %s332 = scalar_select %p331, %s17, 1
        %s333 = smul.addr %s332, 4
        %s334 = smul.addr %s333, 2
        %s335 = scalar_lea.vmem %s0, %s334
      $region60: #{mobilenet_v3_forward.10} parent=55 // pred_fallthru
        _
    $region56: #{mobilenet_v3_forward.10} parent=5 // pred_fallthru
      _
    %p336 = scmp.le.s32.totalorder 1, %s17
    %p337 = scmp.lt.s32.totalorder %s17, 3
    %p338 = pnand %p336, %p337
    %p339 = pneg %p338
    // Predicated region
    $region61: #{mobilenet_v3_forward.10} parent=5 // pred_check
      _
    $region62: #{mobilenet_v3_forward.10} parent=5 // pred_check_branch
      %341 = sbr.rel (%p338) target = $region64
    $region63: #{mobilenet_v3_forward.10} parent=5 // pred_region
      %s342 = ssub.s32 %s17, 1
      %p343 = scmp.lt.s32.totalorder %s22, 1
      %s344 = scalar_select %p343, %s22, 1
      %s345 = smul.addr %s344, 4
      %s346 = smul.addr %s345, 2
      %s347 = scalar_lea.vmem %s0, %s346
      %p348 = pneg %p43
      %p349 = pneg %p40
      %p350 = pneg %p64
      %p351 = pneg %p61
      %p352 = pneg %p85
      %p353 = pneg %p82
      %p354 = pneg %p106
      %p355 = pneg %p103
      %p356 = pneg %p127
      %p357 = pneg %p124
      %p358 = pneg %p148
      %p359 = pneg %p145
      %p360 = pneg %p169
      %p361 = pneg %p166
      %p362 = pneg %p190
      %p363 = pneg %p187
      %p364 = pneg %p211
      %p365 = pneg %p208
      %p366 = pneg %p232
      %p367 = pneg %p229
      %p368 = pneg %p253
      %p369 = pneg %p250
      %p370 = pneg %p279
      %p371 = pneg %p276
      %p372 = scmp.lt.s32.totalorder %s22, 1
      %s373 = scalar_select %p372, %s22, 1
      %s374 = smul.addr %s373, 4
      %s375 = smul.addr %s374, 2
      %s376 = scalar_lea.vmem %s11, %s375
      %p377 = scmp.lt.s32.totalorder %s22, 1
      %s378 = scalar_select %p377, %s22, 1
      %s379 = smul.addr %s378, 4
      %s380 = smul.addr %s379, 2
      %s381 = scalar_lea.vmem %s0, %s380
      %p382 = scmp.lt.s32.totalorder %s22, 1
      %s383 = scalar_select %p382, %s22, 1
      %s384 = smul.addr %s383, 4
      %s385 = smul.addr %s384, 2
      %s386 = scalar_lea.vmem %s11, %s385
      %387 = vst [vmem:[#allocation2] sm:$0x3f] 0.0
      %388 = vst [vmem:[#allocation2 + $0x8] sm:$0x3f] 0.0
      %389 = vst [vmem:[#allocation2 + $0x10] sm:$0x3f] 0.0
      %390 = vst [vmem:[#allocation2 + $0x18] sm:$0x3f] 0.0
      %391 = vst [vmem:[#allocation2 + $0x20] sm:$0x3f] 0.0
      %392 = vst [vmem:[#allocation2 + $0x28] sm:$0x3f] 0.0
      %v393 = vld [vmem:[%s1] sm:$0xf]
      %v394 = vld [vmem:[%s1 + $0x4] sm:$0xf]
      %v395 = vld [vmem:[%s1 + $0x8] sm:$0xf]
      %v396 = vld [vmem:[%s1 + $0xc] sm:$0xf]
      %v397 = vld [vmem:[%s1 + $0x10] sm:$0xf]
      %v398 = vld [vmem:[%s1 + $0x14] sm:$0xf]
      %v399 = vld [vmem:[%s1 + $0x18] sm:$0xf]
      %v400 = vld [vmem:[%s1 + $0x1c] sm:$0xf]
      %v401 = vld [vmem:[%s1 + $0x20] sm:$0xf]
      %v402 = vld [vmem:[%s1 + $0x24] sm:$0xf]
      %v403 = vld [vmem:[%s1 + $0x28] sm:$0xf]
      %v404 = vld [vmem:[%s1 + $0x2c] sm:$0xf]
      %v405 = vld [vmem:[%s1 + $0x30] sm:$0xf]
      %v406 = vld [vmem:[%s1 + $0x34] sm:$0xf]
      %v407 = vld [vmem:[%s1 + $0x38] sm:$0xf]
      %v408 = vld [vmem:[%s1 + $0x3c] sm:$0xf]
      %v409 = vld [vmem:[%s2] sm:$0x1]
      %v410 = vld [vmem:[%s381] sm:$0x3]
      %v412 = vperm.slane %v409, 0
      %v430 = vunpack.c.l.b16 %v393
      %v431 = vunpack.c.l.b16 %v394
      %v432 = vunpack.c.l.b16 %v395
      %v433 = vunpack.c.l.b16 %v396
      %v434 = vunpack.c.l.b16 %v397
      %v435 = vunpack.c.l.b16 %v398
      %v436 = vunpack.c.l.b16 %v399
      %v437 = vunpack.c.l.b16 %v400
      %v438 = vunpack.c.l.b16 %v401
      %v439 = vunpack.c.l.b16 %v402
      %v440 = vunpack.c.l.b16 %v403
      %v441 = vunpack.c.l.b16 %v404
      %v442 = vunpack.c.l.b16 %v405
      %v443 = vunpack.c.l.b16 %v406
      %v444 = vunpack.c.l.b16 %v407
      %v445 = vunpack.c.l.b16 %v408
      %v446 = vpack.c.b16 %v431, %v430
      %v447 = vpack.c.b16 %v433, %v432
      %v448 = vpack.c.b16 %v435, %v434
      %v449 = vpack.c.b16 %v437, %v436
      %v450 = vpack.c.b16 %v439, %v438
      %v451 = vpack.c.b16 %v441, %v440
      %v452 = vpack.c.b16 %v443, %v442
      %v453 = vpack.c.b16 %v445, %v444
      %462 = vmatpush.bf16.msra.mxu0 %v453
      %463 = vmatpush.bf16.msra.mxu0 %v452
      %464 = vmatpush.bf16.msra.mxu0 %v451
      %465 = vmatpush.bf16.msra.mxu0 %v450
      %466 = vmatpush.bf16.msra.mxu0 %v449
      %467 = vmatpush.bf16.msra.mxu0 %v448
      %468 = vmatpush.bf16.msra.mxu0 %v447
      %469 = vmatpush.bf16.msra.mxu0 %v446
      %470 = vmatmul.bf16.gmra.mxu0 %v410
      %v471 = vpop.f32.mrf.mxu0
      %v472 = vadd.f32 %v412, %v471
      %v473 = vpop.f32.mrf.mxu0
      %474 = vdwg.mxu0
      %v475 = vadd.f32 %v472, 3.0
      %v476 = vmax.f32 %v475, 0.0
      %v477 = vmin.f32 %v476, 6.0
      %v478 = vmul.f32 %v472, %v477
      %v479 = vmul.f32 %v478, 0.16666667
      %s480 = scalar_lea.vmem [#allocation2], 8
      %481 = vst [vmem:[%s480 + $0x1] sm:$0xf] %v479
      %s482 = scalar_lea.vmem %s381, 2
      %v483 = vld [vmem:[%s482] sm:$0x3]
      %484 = vmatpush.bf16.msra.mxu0 %v453
      %485 = vmatpush.bf16.msra.mxu0 %v452
      %486 = vmatpush.bf16.msra.mxu0 %v451
      %487 = vmatpush.bf16.msra.mxu0 %v450
      %488 = vmatpush.bf16.msra.mxu0 %v449
      %489 = vmatpush.bf16.msra.mxu0 %v448
      %490 = vmatpush.bf16.msra.mxu0 %v447
      %491 = vmatpush.bf16.msra.mxu0 %v446
      %492 = vmatmul.bf16.gmra.mxu0 %v483
      %v493 = vpop.f32.mrf.mxu0
      %v494 = vadd.f32 %v412, %v493
      %v495 = vpop.f32.mrf.mxu0
      %496 = vdwg.mxu0
      %v497 = vadd.f32 %v494, 3.0
      %v498 = vmax.f32 %v497, 0.0
      %v499 = vmin.f32 %v498, 6.0
      %v500 = vmul.f32 %v494, %v499
      %v501 = vmul.f32 %v500, 0.16666667
      %s502 = scalar_lea.vmem [#allocation2], 16
      %503 = vst [vmem:[%s502 + $0x1] sm:$0xf] %v501
      %s504 = scalar_lea.vmem %s381, 4
      %v505 = vld [vmem:[%s504] sm:$0x3]
      %506 = vmatpush.bf16.msra.mxu0 %v453
      %507 = vmatpush.bf16.msra.mxu0 %v452
      %508 = vmatpush.bf16.msra.mxu0 %v451
      %509 = vmatpush.bf16.msra.mxu0 %v450
      %510 = vmatpush.bf16.msra.mxu0 %v449
      %511 = vmatpush.bf16.msra.mxu0 %v448
      %512 = vmatpush.bf16.msra.mxu0 %v447
      %513 = vmatpush.bf16.msra.mxu0 %v446
      %514 = vmatmul.bf16.gmra.mxu0 %v505
      %v515 = vpop.f32.mrf.mxu0
      %v516 = vadd.f32 %v412, %v515
      %v517 = vpop.f32.mrf.mxu0
      %518 = vdwg.mxu0
      %v519 = vadd.f32 %v516, 3.0
      %v520 = vmax.f32 %v519, 0.0
      %v521 = vmin.f32 %v520, 6.0
      %v522 = vmul.f32 %v516, %v521
      %v523 = vmul.f32 %v522, 0.16666667
      %s524 = scalar_lea.vmem [#allocation2], 24
      %525 = vst [vmem:[%s524 + $0x1] sm:$0xf] %v523
      %s526 = scalar_lea.vmem %s381, 6
      %v527 = vld [vmem:[%s526] sm:$0x3]
      %528 = vmatpush.bf16.msra.mxu0 %v453
      %529 = vmatpush.bf16.msra.mxu0 %v452
      %530 = vmatpush.bf16.msra.mxu0 %v451
      %531 = vmatpush.bf16.msra.mxu0 %v450
      %532 = vmatpush.bf16.msra.mxu0 %v449
      %533 = vmatpush.bf16.msra.mxu0 %v448
      %534 = vmatpush.bf16.msra.mxu0 %v447
      %535 = vmatpush.bf16.msra.mxu0 %v446
      %536 = vmatmul.bf16.gmra.mxu0 %v527
      %v537 = vpop.f32.mrf.mxu0
      %v538 = vadd.f32 %v412, %v537
      %v539 = vpop.f32.mrf.mxu0
      %540 = vdwg.mxu0
      %v541 = vadd.f32 %v538, 3.0
      %v542 = vmax.f32 %v541, 0.0
      %v543 = vmin.f32 %v542, 6.0
      %v544 = vmul.f32 %v538, %v543
      %v545 = vmul.f32 %v544, 0.16666667
      %s546 = scalar_lea.vmem [#allocation2], 32
      %547 = vst [vmem:[%s546 + $0x1] sm:$0xf] %v545
      %v548 = vld [vmem:[%s3] sm:$0xff]
      %v549 = vld [vmem:[%s3 + $0x8] sm:$0x1]
      %v550 = vld [vmem:[#allocation2] sm:$0xf]
      %v551 = vld [vmem:[#allocation2 + $0x8] sm:$0xf]
      %v552 = vld [vmem:[#allocation2 + $0x10] sm:$0xf]
      %v553 = vld [vmem:[#allocation2 + $0x18] sm:$0xf]
      %v554 = vperm.slane %v548, 0
      %v555 = vmul.f32 %v550, %v554
      %v556 = vmul.f32 %v551, %v554
      %v557 = vmul.f32 %v552, %v554
      %v558 = vmul.f32 %v553, %v554
      %v559 = vadd.f32 %v555, 0.0
      %v560 = vadd.f32 %v556, 0.0
      %v561 = vadd.f32 %v557, 0.0
      %v562 = vadd.f32 %v558, 0.0
      %v563 = vld [vmem:[#allocation2 + $0x1] sm:$0xf]
      %v564 = vld [vmem:[#allocation2 + $0x9] sm:$0xf]
      %v565 = vld [vmem:[#allocation2 + $0x11] sm:$0xf]
      %v566 = vld [vmem:[#allocation2 + $0x19] sm:$0xf]
      %v567 = vperm.slane %v548, 1
      %v568 = vmul.f32 %v563, %v567
      %v569 = vmul.f32 %v564, %v567
      %v570 = vmul.f32 %v565, %v567
      %v571 = vmul.f32 %v566, %v567
      %v572 = vadd.f32 %v559, %v568
      %v573 = vadd.f32 %v560, %v569
      %v574 = vadd.f32 %v561, %v570
      %v575 = vadd.f32 %v562, %v571
      %v576 = vld [vmem:[#allocation2 + $0x2] sm:$0xf]
      %v577 = vld [vmem:[#allocation2 + $0xa] sm:$0xf]
      %v578 = vld [vmem:[#allocation2 + $0x12] sm:$0xf]
      %v579 = vld [vmem:[#allocation2 + $0x1a] sm:$0xf]
      %v580 = vperm.slane %v548, 2
      %v581 = vmul.f32 %v576, %v580
      %v582 = vmul.f32 %v577, %v580
      %v583 = vmul.f32 %v578, %v580
      %v584 = vmul.f32 %v579, %v580
      %v585 = vadd.f32 %v572, %v581
      %v586 = vadd.f32 %v573, %v582
      %v587 = vadd.f32 %v574, %v583
      %v588 = vadd.f32 %v575, %v584
      %v589 = vld [vmem:[%s480] sm:$0xf]
      %v590 = vld [vmem:[%s480 + $0x8] sm:$0xf]
      %v591 = vld [vmem:[%s480 + $0x10] sm:$0xf]
      %v592 = vld [vmem:[%s480 + $0x18] sm:$0xf]
      %v593 = vperm.slane %v548, 3
      %v594 = vmul.f32 %v589, %v593
      %v595 = vmul.f32 %v590, %v593
      %v596 = vmul.f32 %v591, %v593
      %v597 = vmul.f32 %v592, %v593
      %v598 = vadd.f32 %v585, %v594
      %v599 = vadd.f32 %v586, %v595
      %v600 = vadd.f32 %v587, %v596
      %v601 = vadd.f32 %v588, %v597
      %v602 = vld [vmem:[%s480 + $0x1] sm:$0xf]
      %v603 = vld [vmem:[%s480 + $0x9] sm:$0xf]
      %v604 = vld [vmem:[%s480 + $0x11] sm:$0xf]
      %v605 = vld [vmem:[%s480 + $0x19] sm:$0xf]
      %v606 = vperm.slane %v548, 4
      %v607 = vmul.f32 %v602, %v606
      %v608 = vmul.f32 %v603, %v606
      %v609 = vmul.f32 %v604, %v606
      %v610 = vmul.f32 %v605, %v606
      %v611 = vadd.f32 %v598, %v607
      %v612 = vadd.f32 %v599, %v608
      %v613 = vadd.f32 %v600, %v609
      %v614 = vadd.f32 %v601, %v610
      %v615 = vld [vmem:[%s480 + $0x2] sm:$0xf]
      %v616 = vld [vmem:[%s480 + $0xa] sm:$0xf]
      %v617 = vld [vmem:[%s480 + $0x12] sm:$0xf]
      %v618 = vld [vmem:[%s480 + $0x1a] sm:$0xf]
      %v619 = vperm.slane %v548, 5
      %v620 = vmul.f32 %v615, %v619
      %v621 = vmul.f32 %v616, %v619
      %v622 = vmul.f32 %v617, %v619
      %v623 = vmul.f32 %v618, %v619
      %v624 = vadd.f32 %v611, %v620
      %v625 = vadd.f32 %v612, %v621
      %v626 = vadd.f32 %v613, %v622
      %v627 = vadd.f32 %v614, %v623
      %v628 = vld [vmem:[%s502] sm:$0xf]
      %v629 = vld [vmem:[%s502 + $0x8] sm:$0xf]
      %v630 = vld [vmem:[%s502 + $0x10] sm:$0xf]
      %v631 = vld [vmem:[%s502 + $0x18] sm:$0xf]
      %v632 = vperm.slane %v548, 6
      %v633 = vmul.f32 %v628, %v632
      %v634 = vmul.f32 %v629, %v632
      %v635 = vmul.f32 %v630, %v632
      %v636 = vmul.f32 %v631, %v632
      %v637 = vadd.f32 %v624, %v633
      %v638 = vadd.f32 %v625, %v634
      %v639 = vadd.f32 %v626, %v635
      %v640 = vadd.f32 %v627, %v636
      %v641 = vld [vmem:[%s502 + $0x1] sm:$0xf]
      %v642 = vld [vmem:[%s502 + $0x9] sm:$0xf]
      %v643 = vld [vmem:[%s502 + $0x11] sm:$0xf]
      %v644 = vld [vmem:[%s502 + $0x19] sm:$0xf]
      %v645 = vperm.slane %v548, 7
      %v646 = vmul.f32 %v641, %v645
      %v647 = vmul.f32 %v642, %v645
      %v648 = vmul.f32 %v643, %v645
      %v649 = vmul.f32 %v644, %v645
      %v650 = vadd.f32 %v637, %v646
      %v651 = vadd.f32 %v638, %v647
      %v652 = vadd.f32 %v639, %v648
      %v653 = vadd.f32 %v640, %v649
      %v654 = vld [vmem:[%s502 + $0x2] sm:$0xf]
      %v655 = vld [vmem:[%s502 + $0xa] sm:$0xf]
      %v656 = vld [vmem:[%s502 + $0x12] sm:$0xf]
      %v657 = vld [vmem:[%s502 + $0x1a] sm:$0xf]
      %v658 = vperm.slane %v549, 0
      %v659 = vmul.f32 %v654, %v658
      %v660 = vmul.f32 %v655, %v658
      %v661 = vmul.f32 %v656, %v658
      %v662 = vmul.f32 %v657, %v658
      %v663 = vadd.f32 %v650, %v659
      %v664 = vadd.f32 %v651, %v660
      %v665 = vadd.f32 %v652, %v661
      %v666 = vadd.f32 %v653, %v662
      %v667 = vld [vmem:[%s4] sm:$0x1]
      %v669 = vperm.slane %v667, 0
      %v671 = vadd.f32 %v663, %v669
      %v672 = vadd.f32 %v664, %v669
      %v673 = vadd.f32 %v665, %v669
      %v674 = vadd.f32 %v666, %v669
      %v675 = vadd.f32 %v671, 3.0
      %v676 = vadd.f32 %v672, 3.0
      %v677 = vadd.f32 %v673, 3.0
      %v678 = vadd.f32 %v674, 3.0
      %v679 = vmax.f32 %v675, 0.0
      %v680 = vmax.f32 %v676, 0.0
      %v681 = vmax.f32 %v677, 0.0
      %v682 = vmax.f32 %v678, 0.0
      %v683 = vmin.f32 %v679, 6.0
      %v684 = vmin.f32 %v680, 6.0
      %v685 = vmin.f32 %v681, 6.0
      %v686 = vmin.f32 %v682, 6.0
      %v687 = vmul.f32 %v671, %v683
      %v688 = vmul.f32 %v672, %v684
      %v689 = vmul.f32 %v673, %v685
      %v690 = vmul.f32 %v674, %v686
      %v691 = vmul.f32 %v687, 0.16666667
      %v692 = vmul.f32 %v688, 0.16666667
      %v693 = vmul.f32 %v689, 0.16666667
      %v694 = vmul.f32 %v690, 0.16666667
      %vm695 = vcmask 1043456
      %v696 = vsel %vm695, %v691, 0.0
      %v697 = vsel %vm695, %v692, 0.0
      %v698 = vadd.f32 %v696, %v697
      %v699 = vsel %vm695, %v693, 0.0
      %v700 = vadd.f32 %v698, %v699
      %v701 = vsel %vm695, %v694, 0.0
      %v702 = vadd.f32 %v700, %v701
      %v703 = vrot.slane %v702, 4
      %v704 = vadd.f32 %v702, %v703
      %v705 = vrot.slane %v704, 2
      %v706 = vadd.f32 %v704, %v705
      %v707 = vrot.slane %v706, 1
      %v708 = vadd.f32 %v706, %v707
      %v709 = vrcp.pop 16.0
      %v710 = vmul.f32 16.0, %v709
      %v711 = vsub.f32 1.0, %v710
      %v712 = vmul.f32 %v709, %v711
      %v713 = vadd.f32 %v709, %v712
      %vm714 = vweird.f32 %v709
      %v715 = vsel %vm714, %v709, %v713
      %v716 = vmul.f32 %v708, %v715
      %v717 = vpack.c.bf16 %v716, %v716
      %v718 = vld [vmem:[%s5] sm:$0xf]
      %v719 = vld [vmem:[%s5 + $0x4] sm:$0xf]
      %v720 = vld [vmem:[%s5 + $0x8] sm:$0xf]
      %v721 = vld [vmem:[%s5 + $0xc] sm:$0xf]
      %v722 = vld [vmem:[%s5 + $0x10] sm:$0xf]
      %v723 = vld [vmem:[%s5 + $0x14] sm:$0xf]
      %v724 = vld [vmem:[%s5 + $0x18] sm:$0xf]
      %v725 = vld [vmem:[%s5 + $0x1c] sm:$0xf]
      %v726 = vld [vmem:[%s5 + $0x20] sm:$0xf]
      %v727 = vld [vmem:[%s5 + $0x24] sm:$0xf]
      %v728 = vld [vmem:[%s5 + $0x28] sm:$0xf]
      %v729 = vld [vmem:[%s5 + $0x2c] sm:$0xf]
      %v730 = vld [vmem:[%s5 + $0x30] sm:$0xf]
      %v731 = vld [vmem:[%s5 + $0x34] sm:$0xf]
      %v732 = vld [vmem:[%s5 + $0x38] sm:$0xf]
      %v733 = vld [vmem:[%s5 + $0x3c] sm:$0xf]
      %v734 = vld [vmem:[%s6] sm:$0x1]
      %v751 = vunpack.c.l.b16 %v718
      %v752 = vunpack.c.l.b16 %v719
      %v753 = vunpack.c.l.b16 %v720
      %v754 = vunpack.c.l.b16 %v721
      %v755 = vunpack.c.l.b16 %v722
      %v756 = vunpack.c.l.b16 %v723
      %v757 = vunpack.c.l.b16 %v724
      %v758 = vunpack.c.l.b16 %v725
      %v759 = vunpack.c.l.b16 %v726
      %v760 = vunpack.c.l.b16 %v727
      %v761 = vunpack.c.l.b16 %v728
      %v762 = vunpack.c.l.b16 %v729
      %v763 = vunpack.c.l.b16 %v730
      %v764 = vunpack.c.l.b16 %v731
      %v765 = vunpack.c.l.b16 %v732
      %v766 = vunpack.c.l.b16 %v733
      %v767 = vpack.c.b16 %v752, %v751
      %v768 = vpack.c.b16 %v754, %v753
      %v769 = vpack.c.b16 %v756, %v755
      %v770 = vpack.c.b16 %v758, %v757
      %v771 = vpack.c.b16 %v760, %v759
      %v772 = vpack.c.b16 %v762, %v761
      %v773 = vpack.c.b16 %v764, %v763
      %v774 = vpack.c.b16 %v766, %v765
      %783 = vmatpush.bf16.msra.mxu0 %v774
      %784 = vmatpush.bf16.msra.mxu0 %v773
      %785 = vmatpush.bf16.msra.mxu0 %v772
      %786 = vmatpush.bf16.msra.mxu0 %v771
      %787 = vmatpush.bf16.msra.mxu0 %v770
      %788 = vmatpush.bf16.msra.mxu0 %v769
      %789 = vmatpush.bf16.msra.mxu0 %v768
      %790 = vmatpush.bf16.msra.mxu0 %v767
      %791 = vmatmul.bf16.gmra.mxu0 %v717
      %v792 = vpop.f32.mrf.mxu0
      %v793 = vadd.f32 %v734, %v792
      %v794 = vpop.f32.mrf.mxu0
      %795 = vdwg.mxu0
      %v796 = vmax.f32 %v793, 0.0
      %v797 = vpack.c.bf16 %v796, %v796
      %v798 = vld [vmem:[%s7] sm:$0xf]
      %v799 = vld [vmem:[%s7 + $0x4] sm:$0xf]
      %v800 = vld [vmem:[%s7 + $0x8] sm:$0xf]
      %v801 = vld [vmem:[%s7 + $0xc] sm:$0xf]
      %v802 = vld [vmem:[%s7 + $0x10] sm:$0xf]
      %v803 = vld [vmem:[%s7 + $0x14] sm:$0xf]
      %v804 = vld [vmem:[%s7 + $0x18] sm:$0xf]
      %v805 = vld [vmem:[%s7 + $0x1c] sm:$0xf]
      %v806 = vld [vmem:[%s7 + $0x20] sm:$0xf]
      %v807 = vld [vmem:[%s7 + $0x24] sm:$0xf]
      %v808 = vld [vmem:[%s7 + $0x28] sm:$0xf]
      %v809 = vld [vmem:[%s7 + $0x2c] sm:$0xf]
      %v810 = vld [vmem:[%s7 + $0x30] sm:$0xf]
      %v811 = vld [vmem:[%s7 + $0x34] sm:$0xf]
      %v812 = vld [vmem:[%s7 + $0x38] sm:$0xf]
      %v813 = vld [vmem:[%s7 + $0x3c] sm:$0xf]
      %v814 = vld [vmem:[%s8] sm:$0x1]
      %v831 = vunpack.c.l.b16 %v798
      %v832 = vunpack.c.l.b16 %v799
      %v833 = vunpack.c.l.b16 %v800
      %v834 = vunpack.c.l.b16 %v801
      %v835 = vunpack.c.l.b16 %v802
      %v836 = vunpack.c.l.b16 %v803
      %v837 = vunpack.c.l.b16 %v804
      %v838 = vunpack.c.l.b16 %v805
      %v839 = vunpack.c.l.b16 %v806
      %v840 = vunpack.c.l.b16 %v807
      %v841 = vunpack.c.l.b16 %v808
      %v842 = vunpack.c.l.b16 %v809
      %v843 = vunpack.c.l.b16 %v810
      %v844 = vunpack.c.l.b16 %v811
      %v845 = vunpack.c.l.b16 %v812
      %v846 = vunpack.c.l.b16 %v813
      %v847 = vpack.c.b16 %v832, %v831
      %v848 = vpack.c.b16 %v834, %v833
      %v849 = vpack.c.b16 %v836, %v835
      %v850 = vpack.c.b16 %v838, %v837
      %v851 = vpack.c.b16 %v840, %v839
      %v852 = vpack.c.b16 %v842, %v841
      %v853 = vpack.c.b16 %v844, %v843
      %v854 = vpack.c.b16 %v846, %v845
      %863 = vmatpush.bf16.msra.mxu0 %v854
      %864 = vmatpush.bf16.msra.mxu0 %v853
      %865 = vmatpush.bf16.msra.mxu0 %v852
      %866 = vmatpush.bf16.msra.mxu0 %v851
      %867 = vmatpush.bf16.msra.mxu0 %v850
      %868 = vmatpush.bf16.msra.mxu0 %v849
      %869 = vmatpush.bf16.msra.mxu0 %v848
      %870 = vmatpush.bf16.msra.mxu0 %v847
      %871 = vmatmul.bf16.gmra.mxu0 %v797
      %v872 = vpop.f32.mrf.mxu0
      %v873 = vadd.f32 %v814, %v872
      %v874 = vpop.f32.mrf.mxu0
      %875 = vdwg.mxu0
      %v876 = vmul.f32 %v873, 0.16666667
      %v877 = vadd.f32 %v876, 0.5
      %v878 = vmax.f32 %v877, 0.0
      %v879 = vmin.f32 %v878, 1.0
      %v880 = vperm.slane %v879, 0
      %v881 = vmul.f32 %v691, %v880
      %v882 = vmul.f32 %v692, %v880
      %v883 = vmul.f32 %v693, %v880
      %v884 = vmul.f32 %v694, %v880
      %v885 = vld [vmem:[%s9] sm:$0xf]
      %v886 = vld [vmem:[%s9 + $0x4] sm:$0xf]
      %v887 = vld [vmem:[%s9 + $0x8] sm:$0xf]
      %v888 = vld [vmem:[%s9 + $0xc] sm:$0xf]
      %v889 = vld [vmem:[%s9 + $0x10] sm:$0xf]
      %v890 = vld [vmem:[%s9 + $0x14] sm:$0xf]
      %v891 = vld [vmem:[%s9 + $0x18] sm:$0xf]
      %v892 = vld [vmem:[%s9 + $0x1c] sm:$0xf]
      %v893 = vld [vmem:[%s9 + $0x20] sm:$0xf]
      %v894 = vld [vmem:[%s9 + $0x24] sm:$0xf]
      %v895 = vld [vmem:[%s9 + $0x28] sm:$0xf]
      %v896 = vld [vmem:[%s9 + $0x2c] sm:$0xf]
      %v897 = vld [vmem:[%s9 + $0x30] sm:$0xf]
      %v898 = vld [vmem:[%s9 + $0x34] sm:$0xf]
      %v899 = vld [vmem:[%s9 + $0x38] sm:$0xf]
      %v900 = vld [vmem:[%s9 + $0x3c] sm:$0xf]
      %v901 = vld [vmem:[%s10] sm:$0x1]
      %v902 = vpack.c.bf16 %v881, %v881
      %v904 = vperm.slane %v901, 0
      %v922 = vunpack.c.l.b16 %v885
      %v923 = vunpack.c.l.b16 %v886
      %v924 = vunpack.c.l.b16 %v887
      %v925 = vunpack.c.l.b16 %v888
      %v926 = vunpack.c.l.b16 %v889
      %v927 = vunpack.c.l.b16 %v890
      %v928 = vunpack.c.l.b16 %v891
      %v929 = vunpack.c.l.b16 %v892
      %v930 = vunpack.c.l.b16 %v893
      %v931 = vunpack.c.l.b16 %v894
      %v932 = vunpack.c.l.b16 %v895
      %v933 = vunpack.c.l.b16 %v896
      %v934 = vunpack.c.l.b16 %v897
      %v935 = vunpack.c.l.b16 %v898
      %v936 = vunpack.c.l.b16 %v899
      %v937 = vunpack.c.l.b16 %v900
      %v938 = vpack.c.b16 %v923, %v922
      %v939 = vpack.c.b16 %v925, %v924
      %v940 = vpack.c.b16 %v927, %v926
      %v941 = vpack.c.b16 %v929, %v928
      %v942 = vpack.c.b16 %v931, %v930
      %v943 = vpack.c.b16 %v933, %v932
      %v944 = vpack.c.b16 %v935, %v934
      %v945 = vpack.c.b16 %v937, %v936
      %954 = vmatpush.bf16.msra.mxu0 %v945
      %955 = vmatpush.bf16.msra.mxu0 %v944
      %956 = vmatpush.bf16.msra.mxu0 %v943
      %957 = vmatpush.bf16.msra.mxu0 %v942
      %958 = vmatpush.bf16.msra.mxu0 %v941
      %959 = vmatpush.bf16.msra.mxu0 %v940
      %960 = vmatpush.bf16.msra.mxu0 %v939
      %961 = vmatpush.bf16.msra.mxu0 %v938
      %962 = vmatmul.bf16.gmra.mxu0 %v902
      %v963 = vpop.f32.mrf.mxu0
      %v964 = vadd.f32 %v904, %v963
      %v965 = vpop.f32.mrf.mxu0
      %966 = vdwg.mxu0
      %v967 = vld [vmem:[%s381] sm:$0x3]
      %v968 = vunpack.c.l.bf16 %v967
      %v969 = vadd.f32 %v964, %v968
      %v970 = vpack.c.bf16 %v969, %v969
      %971 = vst [vmem:[%s386] sm:$0x3] %v970
      %v972 = vpack.c.bf16 %v882, %v882
      %973 = vmatpush.bf16.msra.mxu0 %v945
      %974 = vmatpush.bf16.msra.mxu0 %v944
      %975 = vmatpush.bf16.msra.mxu0 %v943
      %976 = vmatpush.bf16.msra.mxu0 %v942
      %977 = vmatpush.bf16.msra.mxu0 %v941
      %978 = vmatpush.bf16.msra.mxu0 %v940
      %979 = vmatpush.bf16.msra.mxu0 %v939
      %980 = vmatpush.bf16.msra.mxu0 %v938
      %981 = vmatmul.bf16.gmra.mxu0 %v972
      %v982 = vpop.f32.mrf.mxu0
      %v983 = vadd.f32 %v904, %v982
      %v984 = vpop.f32.mrf.mxu0
      %985 = vdwg.mxu0
      %v986 = vld [vmem:[%s482] sm:$0x3]
      %v987 = vunpack.c.l.bf16 %v986
      %v988 = vadd.f32 %v983, %v987
      %v989 = vpack.c.bf16 %v988, %v988
      %s990 = scalar_lea.vmem %s386, 2
      %991 = vst [vmem:[%s990] sm:$0x3] %v989
      %v992 = vpack.c.bf16 %v883, %v883
      %993 = vmatpush.bf16.msra.mxu0 %v945
      %994 = vmatpush.bf16.msra.mxu0 %v944
      %995 = vmatpush.bf16.msra.mxu0 %v943
      %996 = vmatpush.bf16.msra.mxu0 %v942
      %997 = vmatpush.bf16.msra.mxu0 %v941
      %998 = vmatpush.bf16.msra.mxu0 %v940
      %999 = vmatpush.bf16.msra.mxu0 %v939
      %1000 = vmatpush.bf16.msra.mxu0 %v938
      %1001 = vmatmul.bf16.gmra.mxu0 %v992
      %v1002 = vpop.f32.mrf.mxu0
      %v1003 = vadd.f32 %v904, %v1002
      %v1004 = vpop.f32.mrf.mxu0
      %1005 = vdwg.mxu0
      %v1006 = vld [vmem:[%s504] sm:$0x3]
      %v1007 = vunpack.c.l.bf16 %v1006
      %v1008 = vadd.f32 %v1003, %v1007
      %v1009 = vpack.c.bf16 %v1008, %v1008
      %s1010 = scalar_lea.vmem %s386, 4
      %1011 = vst [vmem:[%s1010] sm:$0x3] %v1009
      %v1012 = vpack.c.bf16 %v884, %v884
      %1013 = vmatpush.bf16.msra.mxu0 %v945
      %1014 = vmatpush.bf16.msra.mxu0 %v944
      %1015 = vmatpush.bf16.msra.mxu0 %v943
      %1016 = vmatpush.bf16.msra.mxu0 %v942
      %1017 = vmatpush.bf16.msra.mxu0 %v941
      %1018 = vmatpush.bf16.msra.mxu0 %v940
      %1019 = vmatpush.bf16.msra.mxu0 %v939
      %1020 = vmatpush.bf16.msra.mxu0 %v938
      %1021 = vmatmul.bf16.gmra.mxu0 %v1012
      %v1022 = vpop.f32.mrf.mxu0
      %v1023 = vadd.f32 %v904, %v1022
      %v1024 = vpop.f32.mrf.mxu0
      %1025 = vdwg.mxu0
      %v1026 = vld [vmem:[%s526] sm:$0x3]
      %v1027 = vunpack.c.l.bf16 %v1026
      %v1028 = vadd.f32 %v1023, %v1027
      %v1029 = vpack.c.bf16 %v1028, %v1028
      %s1030 = scalar_lea.vmem %s386, 6
      %1031 = vst [vmem:[%s1030] sm:$0x3] %v1029
      %p1032 = scmp.lt.s32.totalorder %s22, 1
      %s1033 = scalar_select %p1032, %s22, 1
      %s1034 = smul.addr %s1033, 4
      %s1035 = smul.addr %s1034, 2
      %s1036 = scalar_lea.vmem %s11, %s1035
      // Predicated region
      $region65: #{mobilenet_v3_forward.10} parent=63 // pred_check
        %p1037 = pneg %p276
      $region66: #{mobilenet_v3_forward.10} parent=63 // pred_check_branch
        %1039 = sbr.rel (%p1037) target = $region68
      $region67: #{mobilenet_v3_forward.10} parent=63 // pred_region
        _
      $region68: #{mobilenet_v3_forward.10} parent=63 // pred_fallthru
        _
    $region64: #{mobilenet_v3_forward.10} parent=5 // pred_fallthru
      _
    %p1040 = scmp.le.s32.totalorder 2, %s17
    // Predicated region
    $region69: #{mobilenet_v3_forward.10} parent=5 // pred_check
      %p1041 = pneg %p1040
    $region70: #{mobilenet_v3_forward.10} parent=5 // pred_check_branch
      %1043 = sbr.rel (%p1041) target = $region72
    $region71: #{mobilenet_v3_forward.10} parent=5 // pred_region
      %s1044 = ssub.s32 %s17, 2
      // Predicated region
      $region73: #{mobilenet_v3_forward.10} parent=71 // pred_check
        %p1045 = pneg %p282
      $region74: #{mobilenet_v3_forward.10} parent=71 // pred_check_branch
        %1047 = sbr.rel (%p1045) target = $region76
      $region75: #{mobilenet_v3_forward.10} parent=71 // pred_region
        %p1048 = scmp.lt.s32.totalorder %s23, 1
        %s1049 = scalar_select %p1048, %s23, 1
        %s1050 = smul.addr %s1049, 4
        %s1051 = smul.addr %s1050, 2
        %s1052 = scalar_lea.vmem %s11, %s1051
      $region76: #{mobilenet_v3_forward.10} parent=71 // pred_fallthru
        _
    $region72: #{mobilenet_v3_forward.10} parent=5 // pred_fallthru
      _
  $region6: #{mobilenet_v3_forward.10} parent=0 // loop_footer
    %s21 = sadd.s32 1, %s17
  $region7: #{mobilenet_v3_forward.10} parent=0 // loop_footer_branch
    %16 = sbr.rel target = $region3
  $region8: #{mobilenet_v3_forward.10} parent=0 // loop_exit
    _

// kernel: mobilenet_v3_forward.11
$region0: #{mobilenet_v3_forward.11}
  #allocation0 [shape = 'u32[]', space=smem, size = 0x4, offset = 0x4, fixed_abs, tag = 'smem constant byte address 0x4 - core index']
  #allocation1 [shape = 'u32[72,128]{1,0:T(1,128)}', space=vmem, size = 0x9000, scoped, tag = 'internal scratch']
  %s0 = inlined_call_operand.vmem [shape: bf16[2,16,128], index: 0, kind: input, shape index: {}]
  %s1 = inlined_call_operand.vmem [shape: bf16[128,256], index: 1, kind: input, shape index: {}]
  %s2 = inlined_call_operand.vmem [shape: f32[1,256], index: 2, kind: input, shape index: {}]
  %s3 = inlined_call_operand.vmem [shape: bf16[256,128], index: 3, kind: input, shape index: {}]
  %s4 = inlined_call_operand.vmem [shape: f32[1,128], index: 4, kind: input, shape index: {}]
  %s5 = inlined_call_operand.vmem [shape: bf16[128,128], index: 5, kind: input, shape index: {}]
  %s6 = inlined_call_operand.vmem [shape: f32[1,128], index: 6, kind: input, shape index: {}]
  %s7 = inlined_call_operand.hbm [shape: f32[2,1,128], index: 7, kind: output, shape index: {}]
  %s8 = sld [smem:[#allocation0]]
  $region61: #{mobilenet_v3_forward.11} parent=0
    _
  %s10 = ssub.s32 1, %s8
  %s11 = scalar_select 0, %s10, %s8
  $region1: #{mobilenet_v3_forward.11} parent=0
    #allocation2 [shape = 'u8[1024]{0}', space=vmem, size = 0x400, scoped, tag = 'output window, operand 0']
    #allocation3 [shape = 's32[2]{0}', space=sflag, size = 0x8, scoped, tag = 'scoped memory for mobilenet_v3_forward.11']
    %12 = vsyncpa [#allocation3], 0
    %s13 = scalar_lea.sflag [#allocation3], 1
    %14 = vsyncpa %s13, 0
    loop: start=0, step=1, limit=4
    $region2: #{mobilenet_v3_forward.11} parent=1 // loop_pre_header
      _
    $region3: #{mobilenet_v3_forward.11} parent=1 // loop_header
      %s16 = sphi 0, %s20
      %p17 = scmp.ge.s32.totalorder %s16, 4
      %s26 = sphi 0, %s28
      %s29 = sphi 0, %s26
      %s30 = sphi 0, %s29
      %s46 = sphi 0, %s30
      %s50 = sphi 0, %s50
      %s52 = sphi 0, %s50
      %s53 = sphi 0, %s52
      %s67 = sphi 0, %s53
      %s71 = sphi 0, %s71
      %s73 = sphi 0, %s71
      %s74 = sphi 0, %s73
      %s88 = sphi 0, %s74
      %s92 = sphi 0, %s92
      %s94 = sphi 0, %s92
      %s95 = sphi 0, %s94
      %s109 = sphi 0, %s95
      %s113 = sphi 0, %s113
      %s115 = sphi 0, %s113
      %s116 = sphi 0, %s115
      %s130 = sphi 0, %s116
      %s134 = sphi 0, %s134
      %s136 = sphi 0, %s134
      %s137 = sphi 0, %s136
      %s151 = sphi 0, %s137
      %s155 = sphi 0, %s155
      %s157 = sphi 0, %s155
      %s158 = sphi 0, %s157
      %s172 = sphi 0, %s158
      %s178 = sphi 0, %s180
      %s181 = sphi 0, %s178
      %s182 = sphi 0, %s181
      %s198 = sphi 0, %s182
    $region4: #{mobilenet_v3_forward.11} parent=1 // loop_header_branch
      %19 = sbr.rel (%p17) target = $region8
    $region5: #{mobilenet_v3_forward.11} parent=1 // loop_body
      %s21 = ssub.s32 %s16, 1
      %s22 = ssub.s32 %s16, 2
      %s23 = sadd.s32 %s16, 1
      %s24 = ssub.s32 %s16, %s23
      %p25 = scmp.eq.s32.totalorder %s24, 0
      %s27 = sadd.s32 %s26, 1
      %s28 = scalar_select %p25, %s26, %s27
      %p31 = pneg %p25
      %p32 = scmp.eq.s32.totalorder %s16, 1
      %p33 = por %p31, %p32
      %p34 = scmp.ne.s32.totalorder %s26, %s29
      %p35 = scmp.eq.s32.totalorder %s16, 0
      %p36 = por %p34, %p35
      %p37 = scmp.ne.s32.totalorder %s26, %s29
      %p38 = scmp.eq.s32.totalorder %s21, 1
      %p39 = por %p37, %p38
      %p40 = scmp.ne.s32.totalorder %s29, %s30
      %p41 = scmp.eq.s32.totalorder %s21, 0
      %p42 = por %p40, %p41
      %p43 = scmp.ne.s32.totalorder %s29, %s30
      %p44 = scmp.eq.s32.totalorder %s22, 1
      %p45 = por %p43, %p44
      %p47 = scmp.ne.s32.totalorder %s30, %s46
      %p48 = scmp.eq.s32.totalorder %s22, 0
      %p49 = por %p47, %p48
      %s51 = sadd.s32 %s50, 1
      %p54 = scmp.eq.s32.totalorder %s16, 1
      %p55 = scmp.ne.s32.totalorder %s50, %s52
      %p56 = scmp.eq.s32.totalorder %s16, 0
      %p57 = por %p55, %p56
      %p58 = scmp.ne.s32.totalorder %s50, %s52
      %p59 = scmp.eq.s32.totalorder %s21, 1
      %p60 = por %p58, %p59
      %p61 = scmp.ne.s32.totalorder %s52, %s53
      %p62 = scmp.eq.s32.totalorder %s21, 0
      %p63 = por %p61, %p62
      %p64 = scmp.ne.s32.totalorder %s52, %s53
      %p65 = scmp.eq.s32.totalorder %s22, 1
      %p66 = por %p64, %p65
      %p68 = scmp.ne.s32.totalorder %s53, %s67
      %p69 = scmp.eq.s32.totalorder %s22, 0
      %p70 = por %p68, %p69
      %s72 = sadd.s32 %s71, 1
      %p75 = scmp.eq.s32.totalorder %s16, 1
      %p76 = scmp.ne.s32.totalorder %s71, %s73
      %p77 = scmp.eq.s32.totalorder %s16, 0
      %p78 = por %p76, %p77
      %p79 = scmp.ne.s32.totalorder %s71, %s73
      %p80 = scmp.eq.s32.totalorder %s21, 1
      %p81 = por %p79, %p80
      %p82 = scmp.ne.s32.totalorder %s73, %s74
      %p83 = scmp.eq.s32.totalorder %s21, 0
      %p84 = por %p82, %p83
      %p85 = scmp.ne.s32.totalorder %s73, %s74
      %p86 = scmp.eq.s32.totalorder %s22, 1
      %p87 = por %p85, %p86
      %p89 = scmp.ne.s32.totalorder %s74, %s88
      %p90 = scmp.eq.s32.totalorder %s22, 0
      %p91 = por %p89, %p90
      %s93 = sadd.s32 %s92, 1
      %p96 = scmp.eq.s32.totalorder %s16, 1
      %p97 = scmp.ne.s32.totalorder %s92, %s94
      %p98 = scmp.eq.s32.totalorder %s16, 0
      %p99 = por %p97, %p98
      %p100 = scmp.ne.s32.totalorder %s92, %s94
      %p101 = scmp.eq.s32.totalorder %s21, 1
      %p102 = por %p100, %p101
      %p103 = scmp.ne.s32.totalorder %s94, %s95
      %p104 = scmp.eq.s32.totalorder %s21, 0
      %p105 = por %p103, %p104
      %p106 = scmp.ne.s32.totalorder %s94, %s95
      %p107 = scmp.eq.s32.totalorder %s22, 1
      %p108 = por %p106, %p107
      %p110 = scmp.ne.s32.totalorder %s95, %s109
      %p111 = scmp.eq.s32.totalorder %s22, 0
      %p112 = por %p110, %p111
      %s114 = sadd.s32 %s113, 1
      %p117 = scmp.eq.s32.totalorder %s16, 1
      %p118 = scmp.ne.s32.totalorder %s113, %s115
      %p119 = scmp.eq.s32.totalorder %s16, 0
      %p120 = por %p118, %p119
      %p121 = scmp.ne.s32.totalorder %s113, %s115
      %p122 = scmp.eq.s32.totalorder %s21, 1
      %p123 = por %p121, %p122
      %p124 = scmp.ne.s32.totalorder %s115, %s116
      %p125 = scmp.eq.s32.totalorder %s21, 0
      %p126 = por %p124, %p125
      %p127 = scmp.ne.s32.totalorder %s115, %s116
      %p128 = scmp.eq.s32.totalorder %s22, 1
      %p129 = por %p127, %p128
      %p131 = scmp.ne.s32.totalorder %s116, %s130
      %p132 = scmp.eq.s32.totalorder %s22, 0
      %p133 = por %p131, %p132
      %s135 = sadd.s32 %s134, 1
      %p138 = scmp.eq.s32.totalorder %s16, 1
      %p139 = scmp.ne.s32.totalorder %s134, %s136
      %p140 = scmp.eq.s32.totalorder %s16, 0
      %p141 = por %p139, %p140
      %p142 = scmp.ne.s32.totalorder %s134, %s136
      %p143 = scmp.eq.s32.totalorder %s21, 1
      %p144 = por %p142, %p143
      %p145 = scmp.ne.s32.totalorder %s136, %s137
      %p146 = scmp.eq.s32.totalorder %s21, 0
      %p147 = por %p145, %p146
      %p148 = scmp.ne.s32.totalorder %s136, %s137
      %p149 = scmp.eq.s32.totalorder %s22, 1
      %p150 = por %p148, %p149
      %p152 = scmp.ne.s32.totalorder %s137, %s151
      %p153 = scmp.eq.s32.totalorder %s22, 0
      %p154 = por %p152, %p153
      %s156 = sadd.s32 %s155, 1
      %p159 = scmp.eq.s32.totalorder %s16, 1
      %p160 = scmp.ne.s32.totalorder %s155, %s157
      %p161 = scmp.eq.s32.totalorder %s16, 0
      %p162 = por %p160, %p161
      %p163 = scmp.ne.s32.totalorder %s155, %s157
      %p164 = scmp.eq.s32.totalorder %s21, 1
      %p165 = por %p163, %p164
      %p166 = scmp.ne.s32.totalorder %s157, %s158
      %p167 = scmp.eq.s32.totalorder %s21, 0
      %p168 = por %p166, %p167
      %p169 = scmp.ne.s32.totalorder %s157, %s158
      %p170 = scmp.eq.s32.totalorder %s22, 1
      %p171 = por %p169, %p170
      %p173 = scmp.ne.s32.totalorder %s158, %s172
      %p174 = scmp.eq.s32.totalorder %s22, 0
      %p175 = por %p173, %p174
      %s176 = ssub.s32 %s16, %s23
      %p177 = scmp.eq.s32.totalorder %s176, 0
      %s179 = sadd.s32 %s178, 1
      %s180 = scalar_select %p177, %s178, %s179
      %p183 = pneg %p177
      %p184 = scmp.eq.s32.totalorder %s16, 1
      %p185 = por %p183, %p184
      %p186 = scmp.ne.s32.totalorder %s178, %s181
      %p187 = scmp.eq.s32.totalorder %s16, 0
      %p188 = por %p186, %p187
      %p189 = scmp.ne.s32.totalorder %s178, %s181
      %p190 = scmp.eq.s32.totalorder %s21, 1
      %p191 = por %p189, %p190
      %p192 = scmp.ne.s32.totalorder %s181, %s182
      %p193 = scmp.eq.s32.totalorder %s21, 0
      %p194 = por %p192, %p193
      %p195 = scmp.ne.s32.totalorder %s181, %s182
      %p196 = scmp.eq.s32.totalorder %s22, 1
      %p197 = por %p195, %p196
      %p199 = scmp.ne.s32.totalorder %s182, %s198
      %p200 = scmp.eq.s32.totalorder %s22, 0
      %p201 = por %p199, %p200
      %p202 = scmp.le.s32.totalorder 1, %s16
      %p203 = scmp.lt.s32.totalorder %s16, 3
      %p204 = pnand %p202, %p203
      %p205 = pneg %p204
      // Predicated region
      $region9: #{mobilenet_v3_forward.11} parent=5 // pred_check
        _
      $region10: #{mobilenet_v3_forward.11} parent=5 // pred_check_branch
        %207 = sbr.rel (%p204) target = $region12
      $region11: #{mobilenet_v3_forward.11} parent=5 // pred_region
        %s208 = ssub.s32 %s16, 1
        // Predicated region
        $region13: #{mobilenet_v3_forward.11} parent=11 // pred_check
          %p209 = pneg %p63
        $region14: #{mobilenet_v3_forward.11} parent=11 // pred_check_branch
          %211 = sbr.rel (%p209) target = $region16
        $region15: #{mobilenet_v3_forward.11} parent=11 // pred_region
          _
        $region16: #{mobilenet_v3_forward.11} parent=11 // pred_fallthru
          _
        // Predicated region
        $region17: #{mobilenet_v3_forward.11} parent=11 // pred_check
          %p212 = pneg %p84
        $region18: #{mobilenet_v3_forward.11} parent=11 // pred_check_branch
          %214 = sbr.rel (%p212) target = $region20
        $region19: #{mobilenet_v3_forward.11} parent=11 // pred_region
          _
        $region20: #{mobilenet_v3_forward.11} parent=11 // pred_fallthru
          _
        // Predicated region
        $region21: #{mobilenet_v3_forward.11} parent=11 // pred_check
          %p215 = pneg %p105
        $region22: #{mobilenet_v3_forward.11} parent=11 // pred_check_branch
          %217 = sbr.rel (%p215) target = $region24
        $region23: #{mobilenet_v3_forward.11} parent=11 // pred_region
          _
        $region24: #{mobilenet_v3_forward.11} parent=11 // pred_fallthru
          _
        // Predicated region
        $region25: #{mobilenet_v3_forward.11} parent=11 // pred_check
          %p218 = pneg %p126
        $region26: #{mobilenet_v3_forward.11} parent=11 // pred_check_branch
          %220 = sbr.rel (%p218) target = $region28
        $region27: #{mobilenet_v3_forward.11} parent=11 // pred_region
          _
        $region28: #{mobilenet_v3_forward.11} parent=11 // pred_fallthru
          _
        // Predicated region
        $region29: #{mobilenet_v3_forward.11} parent=11 // pred_check
          %p221 = pneg %p147
        $region30: #{mobilenet_v3_forward.11} parent=11 // pred_check_branch
          %223 = sbr.rel (%p221) target = $region32
        $region31: #{mobilenet_v3_forward.11} parent=11 // pred_region
          _
        $region32: #{mobilenet_v3_forward.11} parent=11 // pred_fallthru
          _
        // Predicated region
        $region33: #{mobilenet_v3_forward.11} parent=11 // pred_check
          %p224 = pneg %p168
        $region34: #{mobilenet_v3_forward.11} parent=11 // pred_check_branch
          %226 = sbr.rel (%p224) target = $region36
        $region35: #{mobilenet_v3_forward.11} parent=11 // pred_region
          _
        $region36: #{mobilenet_v3_forward.11} parent=11 // pred_fallthru
          _
      $region12: #{mobilenet_v3_forward.11} parent=5 // pred_fallthru
        _
      %p227 = scmp.lt.s32.totalorder %s16, 2
      // Predicated region
      $region37: #{mobilenet_v3_forward.11} parent=5 // pred_check
        %p228 = pneg %p227
      $region38: #{mobilenet_v3_forward.11} parent=5 // pred_check_branch
        %230 = sbr.rel (%p228) target = $region40
      $region39: #{mobilenet_v3_forward.11} parent=5 // pred_region
        // Predicated region
        $region41: #{mobilenet_v3_forward.11} parent=39 // pred_check
          %p231 = pneg %p36
        $region42: #{mobilenet_v3_forward.11} parent=39 // pred_check_branch
          %233 = sbr.rel (%p231) target = $region44
        $region43: #{mobilenet_v3_forward.11} parent=39 // pred_region
          %p234 = scmp.lt.s32.totalorder %s16, 1
          %s235 = scalar_select %p234, %s16, 1
          %s236 = smul.addr %s235, 2
          %s237 = smul.addr %s236, 4
          %s238 = scalar_lea.vmem %s0, %s237
        $region44: #{mobilenet_v3_forward.11} parent=39 // pred_fallthru
          _
      $region40: #{mobilenet_v3_forward.11} parent=5 // pred_fallthru
        _
      %p239 = scmp.le.s32.totalorder 1, %s16
      %p240 = scmp.lt.s32.totalorder %s16, 3
      %p241 = pnand %p239, %p240
      %p242 = pneg %p241
      // Predicated region
      $region45: #{mobilenet_v3_forward.11} parent=5 // pred_check
        _
      $region46: #{mobilenet_v3_forward.11} parent=5 // pred_check_branch
        %244 = sbr.rel (%p241) target = $region48
      $region47: #{mobilenet_v3_forward.11} parent=5 // pred_region
        %s245 = ssub.s32 %s16, 1
        %p246 = scmp.lt.s32.totalorder %s21, 1
        %s247 = scalar_select %p246, %s21, 1
        %s248 = smul.addr %s247, 2
        %s249 = smul.addr %s248, 4
        %s250 = scalar_lea.vmem %s0, %s249
        %p251 = pneg %p42
        %p252 = pneg %p39
        %p253 = pneg %p63
        %p254 = pneg %p60
        %p255 = pneg %p84
        %p256 = pneg %p81
        %p257 = pneg %p105
        %p258 = pneg %p102
        %p259 = pneg %p126
        %p260 = pneg %p123
        %p261 = pneg %p147
        %p262 = pneg %p144
        %p263 = pneg %p168
        %p264 = pneg %p165
        %p265 = pneg %p194
        %p266 = pneg %p191
        %s267 = sand.u32 %s181, 1
        %s268 = scalar_lea.sflag [#allocation3], %s267
        %s269 = sand.u32 %s181, 1
        %s270 = scalar_lea.vmem [#allocation2], %s269
        %p271 = scmp.lt.s32.totalorder %s21, 1
        %s272 = scalar_select %p271, %s21, 1
        %s273 = smul.addr %s272, 2
        %s274 = smul.addr %s273, 4
        %s275 = scalar_lea.vmem %s0, %s274
        %v276 = vld [vmem:[%s275] sm:$0xf]
        %v277 = vld [vmem:[%s275 + $0x4] sm:$0xf]
        %v278 = vld [vmem:[%s1] sm:$0xff]
        %v279 = vld [vmem:[%s1 + $0x8] sm:$0xff]
        %v280 = vld [vmem:[%s1 + $0x10] sm:$0xff]
        %v281 = vld [vmem:[%s1 + $0x18] sm:$0xff]
        %v282 = vld [vmem:[%s1 + $0x20] sm:$0xff]
        %v283 = vld [vmem:[%s1 + $0x28] sm:$0xff]
        %v284 = vld [vmem:[%s1 + $0x30] sm:$0xff]
        %v285 = vld [vmem:[%s1 + $0x38] sm:$0xff]
        %v286 = vld [vmem:[%s1 + $0x40] sm:$0xff]
        %v287 = vld [vmem:[%s1 + $0x48] sm:$0xff]
        %v288 = vld [vmem:[%s1 + $0x50] sm:$0xff]
        %v289 = vld [vmem:[%s1 + $0x58] sm:$0xff]
        %v290 = vld [vmem:[%s1 + $0x60] sm:$0xff]
        %v291 = vld [vmem:[%s1 + $0x68] sm:$0xff]
        %v292 = vld [vmem:[%s1 + $0x70] sm:$0xff]
        %v293 = vld [vmem:[%s1 + $0x78] sm:$0xff]
        %v294 = vld [vmem:[%s2] sm:$0x3]
        %v296 = vperm.slane %v294, 0
        %v297 = vperm.slane %v294, 1
        %v302 = vunpack.c.l.b16 %v276
        %v303 = vunpack.c.l.b16 %v277
        %v304 = vpack.c.b16 %v303, %v302
        %v322 = vunpack.c.l.b16 %v278
        %v323 = vunpack.c.h.b16 %v278
        %v324 = vunpack.c.l.b16 %v279
        %v325 = vunpack.c.h.b16 %v279
        %v326 = vunpack.c.l.b16 %v280
        %v327 = vunpack.c.h.b16 %v280
        %v328 = vunpack.c.l.b16 %v281
        %v329 = vunpack.c.h.b16 %v281
        %v330 = vunpack.c.l.b16 %v282
        %v331 = vunpack.c.h.b16 %v282
        %v332 = vunpack.c.l.b16 %v283
        %v333 = vunpack.c.h.b16 %v283
        %v334 = vunpack.c.l.b16 %v284
        %v335 = vunpack.c.h.b16 %v284
        %v336 = vunpack.c.l.b16 %v285
        %v337 = vunpack.c.h.b16 %v285
        %v338 = vunpack.c.l.b16 %v286
        %v339 = vunpack.c.h.b16 %v286
        %v340 = vunpack.c.l.b16 %v287
        %v341 = vunpack.c.h.b16 %v287
        %v342 = vunpack.c.l.b16 %v288
        %v343 = vunpack.c.h.b16 %v288
        %v344 = vunpack.c.l.b16 %v289
        %v345 = vunpack.c.h.b16 %v289
        %v346 = vunpack.c.l.b16 %v290
        %v347 = vunpack.c.h.b16 %v290
        %v348 = vunpack.c.l.b16 %v291
        %v349 = vunpack.c.h.b16 %v291
        %v350 = vunpack.c.l.b16 %v292
        %v351 = vunpack.c.h.b16 %v292
        %v352 = vunpack.c.l.b16 %v293
        %v353 = vunpack.c.h.b16 %v293
        %v354 = vpack.c.b16 %v324, %v322
        %v355 = vpack.c.b16 %v325, %v323
        %v356 = vpack.c.b16 %v328, %v326
        %v357 = vpack.c.b16 %v329, %v327
        %v358 = vpack.c.b16 %v332, %v330
        %v359 = vpack.c.b16 %v333, %v331
        %v360 = vpack.c.b16 %v336, %v334
        %v361 = vpack.c.b16 %v337, %v335
        %v362 = vpack.c.b16 %v340, %v338
        %v363 = vpack.c.b16 %v341, %v339
        %v364 = vpack.c.b16 %v344, %v342
        %v365 = vpack.c.b16 %v345, %v343
        %v366 = vpack.c.b16 %v348, %v346
        %v367 = vpack.c.b16 %v349, %v347
        %v368 = vpack.c.b16 %v352, %v350
        %v369 = vpack.c.b16 %v353, %v351
        %386 = vmatpush.bf16.msra.mxu0 %v368
        %387 = vmatpush.bf16.msra.mxu0 %v366
        %388 = vmatpush.bf16.msra.mxu0 %v364
        %389 = vmatpush.bf16.msra.mxu0 %v362
        %390 = vmatpush.bf16.msra.mxu0 %v360
        %391 = vmatpush.bf16.msra.mxu0 %v358
        %392 = vmatpush.bf16.msra.mxu0 %v356
        %393 = vmatpush.bf16.msra.mxu0 %v354
        %394 = vmatmul.bf16.gmra.mxu0 %v304
        %v395 = vpop.f32.mrf.mxu0
        %v396 = vadd.f32 %v296, %v395
        %v397 = vpop.f32.mrf.mxu0
        %v398 = vadd.f32 %v296, %v397
        %399 = vdwg.mxu0
        %400 = vmatpush.bf16.msra.mxu0 %v369
        %401 = vmatpush.bf16.msra.mxu0 %v367
        %402 = vmatpush.bf16.msra.mxu0 %v365
        %403 = vmatpush.bf16.msra.mxu0 %v363
        %404 = vmatpush.bf16.msra.mxu0 %v361
        %405 = vmatpush.bf16.msra.mxu0 %v359
        %406 = vmatpush.bf16.msra.mxu0 %v357
        %407 = vmatpush.bf16.msra.mxu0 %v355
        %408 = vmatmul.bf16.gmra.mxu0 %v304
        %v409 = vpop.f32.mrf.mxu0
        %v410 = vadd.f32 %v297, %v409
        %v411 = vpop.f32.mrf.mxu0
        %v412 = vadd.f32 %v297, %v411
        %413 = vdwg.mxu0
        %v414 = vadd.f32 %v396, 3.0
        %v415 = vadd.f32 %v410, 3.0
        %v416 = vadd.f32 %v398, 3.0
        %v417 = vadd.f32 %v412, 3.0
        %v418 = vmax.f32 %v414, 0.0
        %v419 = vmax.f32 %v415, 0.0
        %v420 = vmax.f32 %v416, 0.0
        %v421 = vmax.f32 %v417, 0.0
        %v422 = vmin.f32 %v418, 6.0
        %v423 = vmin.f32 %v419, 6.0
        %v424 = vmin.f32 %v420, 6.0
        %v425 = vmin.f32 %v421, 6.0
        %v426 = vmul.f32 %v396, %v422
        %v427 = vmul.f32 %v410, %v423
        %v428 = vmul.f32 %v398, %v424
        %v429 = vmul.f32 %v412, %v425
        %v430 = vmul.f32 %v426, 0.16666667
        %v431 = vmul.f32 %v427, 0.16666667
        %v432 = vmul.f32 %v428, 0.16666667
        %v433 = vmul.f32 %v429, 0.16666667
        %v434 = vadd.f32 %v430, %v432
        %v435 = vrot.slane %v434, 4
        %v436 = vadd.f32 %v434, %v435
        %v437 = vrot.slane %v436, 2
        %v438 = vadd.f32 %v436, %v437
        %v439 = vrot.slane %v438, 1
        %v440 = vadd.f32 %v438, %v439
        %v441 = vadd.f32 %v431, %v433
        %v442 = vrot.slane %v441, 4
        %v443 = vadd.f32 %v441, %v442
        %v444 = vrot.slane %v443, 2
        %v445 = vadd.f32 %v443, %v444
        %v446 = vrot.slane %v445, 1
        %v447 = vadd.f32 %v445, %v446
        %v448 = vrcp.pop 16.0
        %v449 = vmul.f32 16.0, %v448
        %v450 = vsub.f32 1.0, %v449
        %v451 = vmul.f32 %v448, %v450
        %v452 = vadd.f32 %v448, %v451
        %vm453 = vweird.f32 %v448
        %v454 = vsel %vm453, %v448, %v452
        %v455 = vmul.f32 %v440, %v454
        %v456 = vmul.f32 %v447, %v454
        %v457 = vpack.c.bf16 %v455, %v455
        %v458 = vpack.c.bf16 %v456, %v456
        %v459 = vld [vmem:[%s3] sm:$0xf]
        %v460 = vld [vmem:[%s3 + $0x4] sm:$0xf]
        %v461 = vld [vmem:[%s3 + $0x8] sm:$0xf]
        %v462 = vld [vmem:[%s3 + $0xc] sm:$0xf]
        %v463 = vld [vmem:[%s3 + $0x10] sm:$0xf]
        %v464 = vld [vmem:[%s3 + $0x14] sm:$0xf]
        %v465 = vld [vmem:[%s3 + $0x18] sm:$0xf]
        %v466 = vld [vmem:[%s3 + $0x1c] sm:$0xf]
        %v467 = vld [vmem:[%s3 + $0x20] sm:$0xf]
        %v468 = vld [vmem:[%s3 + $0x24] sm:$0xf]
        %v469 = vld [vmem:[%s3 + $0x28] sm:$0xf]
        %v470 = vld [vmem:[%s3 + $0x2c] sm:$0xf]
        %v471 = vld [vmem:[%s3 + $0x30] sm:$0xf]
        %v472 = vld [vmem:[%s3 + $0x34] sm:$0xf]
        %v473 = vld [vmem:[%s3 + $0x38] sm:$0xf]
        %v474 = vld [vmem:[%s3 + $0x3c] sm:$0xf]
        %v475 = vld [vmem:[%s3 + $0x40] sm:$0xf]
        %v476 = vld [vmem:[%s3 + $0x44] sm:$0xf]
        %v477 = vld [vmem:[%s3 + $0x48] sm:$0xf]
        %v478 = vld [vmem:[%s3 + $0x4c] sm:$0xf]
        %v479 = vld [vmem:[%s3 + $0x50] sm:$0xf]
        %v480 = vld [vmem:[%s3 + $0x54] sm:$0xf]
        %v481 = vld [vmem:[%s3 + $0x58] sm:$0xf]
        %v482 = vld [vmem:[%s3 + $0x5c] sm:$0xf]
        %v483 = vld [vmem:[%s3 + $0x60] sm:$0xf]
        %v484 = vld [vmem:[%s3 + $0x64] sm:$0xf]
        %v485 = vld [vmem:[%s3 + $0x68] sm:$0xf]
        %v486 = vld [vmem:[%s3 + $0x6c] sm:$0xf]
        %v487 = vld [vmem:[%s3 + $0x70] sm:$0xf]
        %v488 = vld [vmem:[%s3 + $0x74] sm:$0xf]
        %v489 = vld [vmem:[%s3 + $0x78] sm:$0xf]
        %v490 = vld [vmem:[%s3 + $0x7c] sm:$0xf]
        %v491 = vld [vmem:[%s4] sm:$0x1]
        %v524 = vunpack.c.l.b16 %v459
        %v525 = vunpack.c.l.b16 %v460
        %v526 = vunpack.c.l.b16 %v461
        %v527 = vunpack.c.l.b16 %v462
        %v528 = vunpack.c.l.b16 %v463
        %v529 = vunpack.c.l.b16 %v464
        %v530 = vunpack.c.l.b16 %v465
        %v531 = vunpack.c.l.b16 %v466
        %v532 = vunpack.c.l.b16 %v467
        %v533 = vunpack.c.l.b16 %v468
        %v534 = vunpack.c.l.b16 %v469
        %v535 = vunpack.c.l.b16 %v470
        %v536 = vunpack.c.l.b16 %v471
        %v537 = vunpack.c.l.b16 %v472
        %v538 = vunpack.c.l.b16 %v473
        %v539 = vunpack.c.l.b16 %v474
        %v540 = vunpack.c.l.b16 %v475
        %v541 = vunpack.c.l.b16 %v476
        %v542 = vunpack.c.l.b16 %v477
        %v543 = vunpack.c.l.b16 %v478
        %v544 = vunpack.c.l.b16 %v479
        %v545 = vunpack.c.l.b16 %v480
        %v546 = vunpack.c.l.b16 %v481
        %v547 = vunpack.c.l.b16 %v482
        %v548 = vunpack.c.l.b16 %v483
        %v549 = vunpack.c.l.b16 %v484
        %v550 = vunpack.c.l.b16 %v485
        %v551 = vunpack.c.l.b16 %v486
        %v552 = vunpack.c.l.b16 %v487
        %v553 = vunpack.c.l.b16 %v488
        %v554 = vunpack.c.l.b16 %v489
        %v555 = vunpack.c.l.b16 %v490
        %v556 = vpack.c.b16 %v525, %v524
        %v557 = vpack.c.b16 %v527, %v526
        %v558 = vpack.c.b16 %v529, %v528
        %v559 = vpack.c.b16 %v531, %v530
        %v560 = vpack.c.b16 %v533, %v532
        %v561 = vpack.c.b16 %v535, %v534
        %v562 = vpack.c.b16 %v537, %v536
        %v563 = vpack.c.b16 %v539, %v538
        %v564 = vpack.c.b16 %v541, %v540
        %v565 = vpack.c.b16 %v543, %v542
        %v566 = vpack.c.b16 %v545, %v544
        %v567 = vpack.c.b16 %v547, %v546
        %v568 = vpack.c.b16 %v549, %v548
        %v569 = vpack.c.b16 %v551, %v550
        %v570 = vpack.c.b16 %v553, %v552
        %v571 = vpack.c.b16 %v555, %v554
        %588 = vmatpush.bf16.msra.mxu0 %v563
        %589 = vmatpush.bf16.msra.mxu0 %v562
        %590 = vmatpush.bf16.msra.mxu0 %v561
        %591 = vmatpush.bf16.msra.mxu0 %v560
        %592 = vmatpush.bf16.msra.mxu0 %v559
        %593 = vmatpush.bf16.msra.mxu0 %v558
        %594 = vmatpush.bf16.msra.mxu0 %v557
        %595 = vmatpush.bf16.msra.mxu0 %v556
        %596 = vmatmul.bf16.gmra.mxu0 %v457
        %v597 = vpop.f32.mrf.mxu0
        %v598 = vadd.f32 %v491, %v597
        %v599 = vpop.f32.mrf.mxu0
        %600 = vdwg.mxu0
        %601 = vmatpush.bf16.msra.mxu0 %v571
        %602 = vmatpush.bf16.msra.mxu0 %v570
        %603 = vmatpush.bf16.msra.mxu0 %v569
        %604 = vmatpush.bf16.msra.mxu0 %v568
        %605 = vmatpush.bf16.msra.mxu0 %v567
        %606 = vmatpush.bf16.msra.mxu0 %v566
        %607 = vmatpush.bf16.msra.mxu0 %v565
        %608 = vmatpush.bf16.msra.mxu0 %v564
        %609 = vmatmul.bf16.gmra.mxu0 %v458
        %v610 = vpop.f32.mrf.mxu0
        %v611 = vadd.f32 %v598, %v610
        %v612 = vpop.f32.mrf.mxu0
        %613 = vdwg.mxu0
        %v614 = vadd.f32 %v611, 3.0
        %v615 = vmax.f32 %v614, 0.0
        %v616 = vmin.f32 %v615, 6.0
        %v617 = vmul.f32 %v611, %v616
        %v618 = vmul.f32 %v617, 0.16666667
        %v619 = vpack.c.bf16 %v618, %v618
        %v620 = vld [vmem:[%s5] sm:$0xf]
        %v621 = vld [vmem:[%s5 + $0x4] sm:$0xf]
        %v622 = vld [vmem:[%s5 + $0x8] sm:$0xf]
        %v623 = vld [vmem:[%s5 + $0xc] sm:$0xf]
        %v624 = vld [vmem:[%s5 + $0x10] sm:$0xf]
        %v625 = vld [vmem:[%s5 + $0x14] sm:$0xf]
        %v626 = vld [vmem:[%s5 + $0x18] sm:$0xf]
        %v627 = vld [vmem:[%s5 + $0x1c] sm:$0xf]
        %v628 = vld [vmem:[%s5 + $0x20] sm:$0xf]
        %v629 = vld [vmem:[%s5 + $0x24] sm:$0xf]
        %v630 = vld [vmem:[%s5 + $0x28] sm:$0xf]
        %v631 = vld [vmem:[%s5 + $0x2c] sm:$0xf]
        %v632 = vld [vmem:[%s5 + $0x30] sm:$0xf]
        %v633 = vld [vmem:[%s5 + $0x34] sm:$0xf]
        %v634 = vld [vmem:[%s5 + $0x38] sm:$0xf]
        %v635 = vld [vmem:[%s5 + $0x3c] sm:$0xf]
        %v636 = vld [vmem:[%s6] sm:$0x1]
        %v653 = vunpack.c.l.b16 %v620
        %v654 = vunpack.c.l.b16 %v621
        %v655 = vunpack.c.l.b16 %v622
        %v656 = vunpack.c.l.b16 %v623
        %v657 = vunpack.c.l.b16 %v624
        %v658 = vunpack.c.l.b16 %v625
        %v659 = vunpack.c.l.b16 %v626
        %v660 = vunpack.c.l.b16 %v627
        %v661 = vunpack.c.l.b16 %v628
        %v662 = vunpack.c.l.b16 %v629
        %v663 = vunpack.c.l.b16 %v630
        %v664 = vunpack.c.l.b16 %v631
        %v665 = vunpack.c.l.b16 %v632
        %v666 = vunpack.c.l.b16 %v633
        %v667 = vunpack.c.l.b16 %v634
        %v668 = vunpack.c.l.b16 %v635
        %v669 = vpack.c.b16 %v654, %v653
        %v670 = vpack.c.b16 %v656, %v655
        %v671 = vpack.c.b16 %v658, %v657
        %v672 = vpack.c.b16 %v660, %v659
        %v673 = vpack.c.b16 %v662, %v661
        %v674 = vpack.c.b16 %v664, %v663
        %v675 = vpack.c.b16 %v666, %v665
        %v676 = vpack.c.b16 %v668, %v667
        %685 = vmatpush.bf16.msra.mxu0 %v676
        %686 = vmatpush.bf16.msra.mxu0 %v675
        %687 = vmatpush.bf16.msra.mxu0 %v674
        %688 = vmatpush.bf16.msra.mxu0 %v673
        %689 = vmatpush.bf16.msra.mxu0 %v672
        %690 = vmatpush.bf16.msra.mxu0 %v671
        %691 = vmatpush.bf16.msra.mxu0 %v670
        %692 = vmatpush.bf16.msra.mxu0 %v669
        %693 = vmatmul.bf16.gmra.mxu0 %v619
        %v694 = vpop.f32.mrf.mxu0
        %v695 = vadd.f32 %v636, %v694
        %v696 = vpop.f32.mrf.mxu0
        %697 = vdwg.mxu0
        %698 = vst [vmem:[%s270] sm:$0x1] %v695
        %s699 = sand.u32 %s181, 1
        %s700 = scalar_lea.sflag [#allocation3], %s699
        %s701 = sand.u32 %s181, 1
        %s702 = scalar_lea.vmem [#allocation2], %s701
        // Predicated region
        $region49: #{mobilenet_v3_forward.11} parent=47 // pred_check
          %p703 = pneg %p191
        $region50: #{mobilenet_v3_forward.11} parent=47 // pred_check_branch
          %705 = sbr.rel (%p703) target = $region52
        $region51: #{mobilenet_v3_forward.11} parent=47 // pred_region
          %707 = vsyncadd %s700, 0
          %s708 = scalar_lea.hbm %s7, %s21
          %s710 = sshll.u32 %s702, 4
          %s711 = int_to_ptr.vmem [resolvable:$true] %s710
          %s712 = sshll.u32 %s708, 4
          %s713 = int_to_ptr.hbm [resolvable:$true] %s712
          %715 = dma.vmem_to_hbm [thread:$0]  %s711, 16, %s713, %s700
        $region52: #{mobilenet_v3_forward.11} parent=47 // pred_fallthru
          _
      $region48: #{mobilenet_v3_forward.11} parent=5 // pred_fallthru
        _
      %p716 = scmp.le.s32.totalorder 2, %s16
      // Predicated region
      $region53: #{mobilenet_v3_forward.11} parent=5 // pred_check
        %p717 = pneg %p716
      $region54: #{mobilenet_v3_forward.11} parent=5 // pred_check_branch
        %719 = sbr.rel (%p717) target = $region56
      $region55: #{mobilenet_v3_forward.11} parent=5 // pred_region
        %s720 = ssub.s32 %s16, 2
        // Predicated region
        $region57: #{mobilenet_v3_forward.11} parent=55 // pred_check
          %p721 = pneg %p197
        $region58: #{mobilenet_v3_forward.11} parent=55 // pred_check_branch
          %723 = sbr.rel (%p721) target = $region60
        $region59: #{mobilenet_v3_forward.11} parent=55 // pred_region
          %s724 = sand.u32 %s182, 1
          %s725 = scalar_lea.sflag [#allocation3], %s724
          %s726 = sand.u32 %s182, 1
          %s727 = scalar_lea.vmem [#allocation2], %s726
          %729 = dma.done %s725, 16
        $region60: #{mobilenet_v3_forward.11} parent=55 // pred_fallthru
          _
      $region56: #{mobilenet_v3_forward.11} parent=5 // pred_fallthru
        _
    $region6: #{mobilenet_v3_forward.11} parent=1 // loop_footer
      %s20 = sadd.s32 1, %s16
    $region7: #{mobilenet_v3_forward.11} parent=1 // loop_footer_branch
      %15 = sbr.rel target = $region3
    $region8: #{mobilenet_v3_forward.11} parent=1 // loop_exit
      _
    %730 = vsyncpa [#allocation3], 1
    %s731 = scalar_lea.sflag [#allocation3], 1
    %732 = vsyncpa %s731, 1

// kernel: mobilenet_v3_forward.9
$region0: #{mobilenet_v3_forward.9}
  #allocation0 [shape = 'u32[]', space=smem, size = 0x4, offset = 0x4, fixed_abs, tag = 'smem constant byte address 0x4 - core index']
  #allocation1 [shape = 'u32[72,128]{1,0:T(1,128)}', space=vmem, size = 0x9000, scoped, tag = 'internal scratch']
  #allocation2 [shape = 'f32[8,8,128]{2,1,0:T(8,128)}', space=vmem, size = 0x8000, scoped, tag = 'scratch operand']
  %s0 = inlined_call_operand.vmem [shape: bf16[2,4,4,128], index: 0, kind: input, shape index: {}]
  %s1 = inlined_call_operand.vmem [shape: bf16[128,128], index: 1, kind: input, shape index: {}]
  %s2 = inlined_call_operand.vmem [shape: f32[1,128], index: 2, kind: input, shape index: {}]
  %s3 = inlined_call_operand.vmem [shape: f32[25,128], index: 3, kind: input, shape index: {}]
  %s4 = inlined_call_operand.vmem [shape: f32[1,128], index: 4, kind: input, shape index: {}]
  %s5 = inlined_call_operand.vmem [shape: bf16[128,128], index: 5, kind: input, shape index: {}]
  %s6 = inlined_call_operand.vmem [shape: f32[1,128], index: 6, kind: input, shape index: {}]
  %s7 = inlined_call_operand.vmem [shape: bf16[128,128], index: 7, kind: input, shape index: {}]
  %s8 = inlined_call_operand.vmem [shape: f32[1,128], index: 8, kind: input, shape index: {}]
  %s9 = inlined_call_operand.vmem [shape: bf16[128,128], index: 9, kind: input, shape index: {}]
  %s10 = inlined_call_operand.vmem [shape: f32[1,128], index: 10, kind: input, shape index: {}]
  %s11 = inlined_call_operand.vmem [shape: bf16[2,4,4,128], index: 11, kind: output, shape index: {}]
  %s12 = sld [smem:[#allocation0]]
  $region77: #{mobilenet_v3_forward.9} parent=0
    _
  %s14 = ssub.s32 1, %s12
  %s15 = scalar_select 0, %s14, %s12
  loop: start=0, step=1, limit=4
  $region2: #{mobilenet_v3_forward.9} parent=0 // loop_pre_header
    _
  $region3: #{mobilenet_v3_forward.9} parent=0 // loop_header
    %s17 = sphi 0, %s21
    %p18 = scmp.ge.s32.totalorder %s17, 4
    %s27 = sphi 0, %s29
    %s30 = sphi 0, %s27
    %s31 = sphi 0, %s30
    %s47 = sphi 0, %s31
    %s51 = sphi 0, %s51
    %s53 = sphi 0, %s51
    %s54 = sphi 0, %s53
    %s68 = sphi 0, %s54
    %s72 = sphi 0, %s72
    %s74 = sphi 0, %s72
    %s75 = sphi 0, %s74
    %s89 = sphi 0, %s75
    %s93 = sphi 0, %s93
    %s95 = sphi 0, %s93
    %s96 = sphi 0, %s95
    %s110 = sphi 0, %s96
    %s114 = sphi 0, %s114
    %s116 = sphi 0, %s114
    %s117 = sphi 0, %s116
    %s131 = sphi 0, %s117
    %s135 = sphi 0, %s135
    %s137 = sphi 0, %s135
    %s138 = sphi 0, %s137
    %s152 = sphi 0, %s138
    %s156 = sphi 0, %s156
    %s158 = sphi 0, %s156
    %s159 = sphi 0, %s158
    %s173 = sphi 0, %s159
    %s177 = sphi 0, %s177
    %s179 = sphi 0, %s177
    %s180 = sphi 0, %s179
    %s194 = sphi 0, %s180
    %s198 = sphi 0, %s198
    %s200 = sphi 0, %s198
    %s201 = sphi 0, %s200
    %s215 = sphi 0, %s201
    %s219 = sphi 0, %s219
    %s221 = sphi 0, %s219
    %s222 = sphi 0, %s221
    %s236 = sphi 0, %s222
    %s240 = sphi 0, %s240
    %s242 = sphi 0, %s240
    %s243 = sphi 0, %s242
    %s257 = sphi 0, %s243
    %s263 = sphi 0, %s265
    %s266 = sphi 0, %s263
    %s267 = sphi 0, %s266
    %s283 = sphi 0, %s267
  $region4: #{mobilenet_v3_forward.9} parent=0 // loop_header_branch
    %20 = sbr.rel (%p18) target = $region8
  $region5: #{mobilenet_v3_forward.9} parent=0 // loop_body
    %s22 = ssub.s32 %s17, 1
    %s23 = ssub.s32 %s17, 2
    %s24 = sadd.s32 %s17, 1
    %s25 = ssub.s32 %s17, %s24
    %p26 = scmp.eq.s32.totalorder %s25, 0
    %s28 = sadd.s32 %s27, 1
    %s29 = scalar_select %p26, %s27, %s28
    %p32 = pneg %p26
    %p33 = scmp.eq.s32.totalorder %s17, 1
    %p34 = por %p32, %p33
    %p35 = scmp.ne.s32.totalorder %s27, %s30
    %p36 = scmp.eq.s32.totalorder %s17, 0
    %p37 = por %p35, %p36
    %p38 = scmp.ne.s32.totalorder %s27, %s30
    %p39 = scmp.eq.s32.totalorder %s22, 1
    %p40 = por %p38, %p39
    %p41 = scmp.ne.s32.totalorder %s30, %s31
    %p42 = scmp.eq.s32.totalorder %s22, 0
    %p43 = por %p41, %p42
    %p44 = scmp.ne.s32.totalorder %s30, %s31
    %p45 = scmp.eq.s32.totalorder %s23, 1
    %p46 = por %p44, %p45
    %p48 = scmp.ne.s32.totalorder %s31, %s47
    %p49 = scmp.eq.s32.totalorder %s23, 0
    %p50 = por %p48, %p49
    %s52 = sadd.s32 %s51, 1
    %p55 = scmp.eq.s32.totalorder %s17, 1
    %p56 = scmp.ne.s32.totalorder %s51, %s53
    %p57 = scmp.eq.s32.totalorder %s17, 0
    %p58 = por %p56, %p57
    %p59 = scmp.ne.s32.totalorder %s51, %s53
    %p60 = scmp.eq.s32.totalorder %s22, 1
    %p61 = por %p59, %p60
    %p62 = scmp.ne.s32.totalorder %s53, %s54
    %p63 = scmp.eq.s32.totalorder %s22, 0
    %p64 = por %p62, %p63
    %p65 = scmp.ne.s32.totalorder %s53, %s54
    %p66 = scmp.eq.s32.totalorder %s23, 1
    %p67 = por %p65, %p66
    %p69 = scmp.ne.s32.totalorder %s54, %s68
    %p70 = scmp.eq.s32.totalorder %s23, 0
    %p71 = por %p69, %p70
    %s73 = sadd.s32 %s72, 1
    %p76 = scmp.eq.s32.totalorder %s17, 1
    %p77 = scmp.ne.s32.totalorder %s72, %s74
    %p78 = scmp.eq.s32.totalorder %s17, 0
    %p79 = por %p77, %p78
    %p80 = scmp.ne.s32.totalorder %s72, %s74
    %p81 = scmp.eq.s32.totalorder %s22, 1
    %p82 = por %p80, %p81
    %p83 = scmp.ne.s32.totalorder %s74, %s75
    %p84 = scmp.eq.s32.totalorder %s22, 0
    %p85 = por %p83, %p84
    %p86 = scmp.ne.s32.totalorder %s74, %s75
    %p87 = scmp.eq.s32.totalorder %s23, 1
    %p88 = por %p86, %p87
    %p90 = scmp.ne.s32.totalorder %s75, %s89
    %p91 = scmp.eq.s32.totalorder %s23, 0
    %p92 = por %p90, %p91
    %s94 = sadd.s32 %s93, 1
    %p97 = scmp.eq.s32.totalorder %s17, 1
    %p98 = scmp.ne.s32.totalorder %s93, %s95
    %p99 = scmp.eq.s32.totalorder %s17, 0
    %p100 = por %p98, %p99
    %p101 = scmp.ne.s32.totalorder %s93, %s95
    %p102 = scmp.eq.s32.totalorder %s22, 1
    %p103 = por %p101, %p102
    %p104 = scmp.ne.s32.totalorder %s95, %s96
    %p105 = scmp.eq.s32.totalorder %s22, 0
    %p106 = por %p104, %p105
    %p107 = scmp.ne.s32.totalorder %s95, %s96
    %p108 = scmp.eq.s32.totalorder %s23, 1
    %p109 = por %p107, %p108
    %p111 = scmp.ne.s32.totalorder %s96, %s110
    %p112 = scmp.eq.s32.totalorder %s23, 0
    %p113 = por %p111, %p112
    %s115 = sadd.s32 %s114, 1
    %p118 = scmp.eq.s32.totalorder %s17, 1
    %p119 = scmp.ne.s32.totalorder %s114, %s116
    %p120 = scmp.eq.s32.totalorder %s17, 0
    %p121 = por %p119, %p120
    %p122 = scmp.ne.s32.totalorder %s114, %s116
    %p123 = scmp.eq.s32.totalorder %s22, 1
    %p124 = por %p122, %p123
    %p125 = scmp.ne.s32.totalorder %s116, %s117
    %p126 = scmp.eq.s32.totalorder %s22, 0
    %p127 = por %p125, %p126
    %p128 = scmp.ne.s32.totalorder %s116, %s117
    %p129 = scmp.eq.s32.totalorder %s23, 1
    %p130 = por %p128, %p129
    %p132 = scmp.ne.s32.totalorder %s117, %s131
    %p133 = scmp.eq.s32.totalorder %s23, 0
    %p134 = por %p132, %p133
    %s136 = sadd.s32 %s135, 1
    %p139 = scmp.eq.s32.totalorder %s17, 1
    %p140 = scmp.ne.s32.totalorder %s135, %s137
    %p141 = scmp.eq.s32.totalorder %s17, 0
    %p142 = por %p140, %p141
    %p143 = scmp.ne.s32.totalorder %s135, %s137
    %p144 = scmp.eq.s32.totalorder %s22, 1
    %p145 = por %p143, %p144
    %p146 = scmp.ne.s32.totalorder %s137, %s138
    %p147 = scmp.eq.s32.totalorder %s22, 0
    %p148 = por %p146, %p147
    %p149 = scmp.ne.s32.totalorder %s137, %s138
    %p150 = scmp.eq.s32.totalorder %s23, 1
    %p151 = por %p149, %p150
    %p153 = scmp.ne.s32.totalorder %s138, %s152
    %p154 = scmp.eq.s32.totalorder %s23, 0
    %p155 = por %p153, %p154
    %s157 = sadd.s32 %s156, 1
    %p160 = scmp.eq.s32.totalorder %s17, 1
    %p161 = scmp.ne.s32.totalorder %s156, %s158
    %p162 = scmp.eq.s32.totalorder %s17, 0
    %p163 = por %p161, %p162
    %p164 = scmp.ne.s32.totalorder %s156, %s158
    %p165 = scmp.eq.s32.totalorder %s22, 1
    %p166 = por %p164, %p165
    %p167 = scmp.ne.s32.totalorder %s158, %s159
    %p168 = scmp.eq.s32.totalorder %s22, 0
    %p169 = por %p167, %p168
    %p170 = scmp.ne.s32.totalorder %s158, %s159
    %p171 = scmp.eq.s32.totalorder %s23, 1
    %p172 = por %p170, %p171
    %p174 = scmp.ne.s32.totalorder %s159, %s173
    %p175 = scmp.eq.s32.totalorder %s23, 0
    %p176 = por %p174, %p175
    %s178 = sadd.s32 %s177, 1
    %p181 = scmp.eq.s32.totalorder %s17, 1
    %p182 = scmp.ne.s32.totalorder %s177, %s179
    %p183 = scmp.eq.s32.totalorder %s17, 0
    %p184 = por %p182, %p183
    %p185 = scmp.ne.s32.totalorder %s177, %s179
    %p186 = scmp.eq.s32.totalorder %s22, 1
    %p187 = por %p185, %p186
    %p188 = scmp.ne.s32.totalorder %s179, %s180
    %p189 = scmp.eq.s32.totalorder %s22, 0
    %p190 = por %p188, %p189
    %p191 = scmp.ne.s32.totalorder %s179, %s180
    %p192 = scmp.eq.s32.totalorder %s23, 1
    %p193 = por %p191, %p192
    %p195 = scmp.ne.s32.totalorder %s180, %s194
    %p196 = scmp.eq.s32.totalorder %s23, 0
    %p197 = por %p195, %p196
    %s199 = sadd.s32 %s198, 1
    %p202 = scmp.eq.s32.totalorder %s17, 1
    %p203 = scmp.ne.s32.totalorder %s198, %s200
    %p204 = scmp.eq.s32.totalorder %s17, 0
    %p205 = por %p203, %p204
    %p206 = scmp.ne.s32.totalorder %s198, %s200
    %p207 = scmp.eq.s32.totalorder %s22, 1
    %p208 = por %p206, %p207
    %p209 = scmp.ne.s32.totalorder %s200, %s201
    %p210 = scmp.eq.s32.totalorder %s22, 0
    %p211 = por %p209, %p210
    %p212 = scmp.ne.s32.totalorder %s200, %s201
    %p213 = scmp.eq.s32.totalorder %s23, 1
    %p214 = por %p212, %p213
    %p216 = scmp.ne.s32.totalorder %s201, %s215
    %p217 = scmp.eq.s32.totalorder %s23, 0
    %p218 = por %p216, %p217
    %s220 = sadd.s32 %s219, 1
    %p223 = scmp.eq.s32.totalorder %s17, 1
    %p224 = scmp.ne.s32.totalorder %s219, %s221
    %p225 = scmp.eq.s32.totalorder %s17, 0
    %p226 = por %p224, %p225
    %p227 = scmp.ne.s32.totalorder %s219, %s221
    %p228 = scmp.eq.s32.totalorder %s22, 1
    %p229 = por %p227, %p228
    %p230 = scmp.ne.s32.totalorder %s221, %s222
    %p231 = scmp.eq.s32.totalorder %s22, 0
    %p232 = por %p230, %p231
    %p233 = scmp.ne.s32.totalorder %s221, %s222
    %p234 = scmp.eq.s32.totalorder %s23, 1
    %p235 = por %p233, %p234
    %p237 = scmp.ne.s32.totalorder %s222, %s236
    %p238 = scmp.eq.s32.totalorder %s23, 0
    %p239 = por %p237, %p238
    %s241 = sadd.s32 %s240, 1
    %p244 = scmp.eq.s32.totalorder %s17, 1
    %p245 = scmp.ne.s32.totalorder %s240, %s242
    %p246 = scmp.eq.s32.totalorder %s17, 0
    %p247 = por %p245, %p246
    %p248 = scmp.ne.s32.totalorder %s240, %s242
    %p249 = scmp.eq.s32.totalorder %s22, 1
    %p250 = por %p248, %p249
    %p251 = scmp.ne.s32.totalorder %s242, %s243
    %p252 = scmp.eq.s32.totalorder %s22, 0
    %p253 = por %p251, %p252
    %p254 = scmp.ne.s32.totalorder %s242, %s243
    %p255 = scmp.eq.s32.totalorder %s23, 1
    %p256 = por %p254, %p255
    %p258 = scmp.ne.s32.totalorder %s243, %s257
    %p259 = scmp.eq.s32.totalorder %s23, 0
    %p260 = por %p258, %p259
    %s261 = ssub.s32 %s17, %s24
    %p262 = scmp.eq.s32.totalorder %s261, 0
    %s264 = sadd.s32 %s263, 1
    %s265 = scalar_select %p262, %s263, %s264
    %p268 = pneg %p262
    %p269 = scmp.eq.s32.totalorder %s17, 1
    %p270 = por %p268, %p269
    %p271 = scmp.ne.s32.totalorder %s263, %s266
    %p272 = scmp.eq.s32.totalorder %s17, 0
    %p273 = por %p271, %p272
    %p274 = scmp.ne.s32.totalorder %s263, %s266
    %p275 = scmp.eq.s32.totalorder %s22, 1
    %p276 = por %p274, %p275
    %p277 = scmp.ne.s32.totalorder %s266, %s267
    %p278 = scmp.eq.s32.totalorder %s22, 0
    %p279 = por %p277, %p278
    %p280 = scmp.ne.s32.totalorder %s266, %s267
    %p281 = scmp.eq.s32.totalorder %s23, 1
    %p282 = por %p280, %p281
    %p284 = scmp.ne.s32.totalorder %s267, %s283
    %p285 = scmp.eq.s32.totalorder %s23, 0
    %p286 = por %p284, %p285
    %p287 = scmp.le.s32.totalorder 1, %s17
    %p288 = scmp.lt.s32.totalorder %s17, 3
    %p289 = pnand %p287, %p288
    %p290 = pneg %p289
    // Predicated region
    $region9: #{mobilenet_v3_forward.9} parent=5 // pred_check
      _
    $region10: #{mobilenet_v3_forward.9} parent=5 // pred_check_branch
      %292 = sbr.rel (%p289) target = $region12
    $region11: #{mobilenet_v3_forward.9} parent=5 // pred_region
      %s293 = ssub.s32 %s17, 1
      // Predicated region
      $region13: #{mobilenet_v3_forward.9} parent=11 // pred_check
        %p294 = pneg %p64
      $region14: #{mobilenet_v3_forward.9} parent=11 // pred_check_branch
        %296 = sbr.rel (%p294) target = $region16
      $region15: #{mobilenet_v3_forward.9} parent=11 // pred_region
        _
      $region16: #{mobilenet_v3_forward.9} parent=11 // pred_fallthru
        _
      // Predicated region
      $region17: #{mobilenet_v3_forward.9} parent=11 // pred_check
        %p297 = pneg %p85
      $region18: #{mobilenet_v3_forward.9} parent=11 // pred_check_branch
        %299 = sbr.rel (%p297) target = $region20
      $region19: #{mobilenet_v3_forward.9} parent=11 // pred_region
        _
      $region20: #{mobilenet_v3_forward.9} parent=11 // pred_fallthru
        _
      // Predicated region
      $region21: #{mobilenet_v3_forward.9} parent=11 // pred_check
        %p300 = pneg %p106
      $region22: #{mobilenet_v3_forward.9} parent=11 // pred_check_branch
        %302 = sbr.rel (%p300) target = $region24
      $region23: #{mobilenet_v3_forward.9} parent=11 // pred_region
        _
      $region24: #{mobilenet_v3_forward.9} parent=11 // pred_fallthru
        _
      // Predicated region
      $region25: #{mobilenet_v3_forward.9} parent=11 // pred_check
        %p303 = pneg %p127
      $region26: #{mobilenet_v3_forward.9} parent=11 // pred_check_branch
        %305 = sbr.rel (%p303) target = $region28
      $region27: #{mobilenet_v3_forward.9} parent=11 // pred_region
        _
      $region28: #{mobilenet_v3_forward.9} parent=11 // pred_fallthru
        _
      // Predicated region
      $region29: #{mobilenet_v3_forward.9} parent=11 // pred_check
        %p306 = pneg %p148
      $region30: #{mobilenet_v3_forward.9} parent=11 // pred_check_branch
        %308 = sbr.rel (%p306) target = $region32
      $region31: #{mobilenet_v3_forward.9} parent=11 // pred_region
        _
      $region32: #{mobilenet_v3_forward.9} parent=11 // pred_fallthru
        _
      // Predicated region
      $region33: #{mobilenet_v3_forward.9} parent=11 // pred_check
        %p309 = pneg %p169
      $region34: #{mobilenet_v3_forward.9} parent=11 // pred_check_branch
        %311 = sbr.rel (%p309) target = $region36
      $region35: #{mobilenet_v3_forward.9} parent=11 // pred_region
        _
      $region36: #{mobilenet_v3_forward.9} parent=11 // pred_fallthru
        _
      // Predicated region
      $region37: #{mobilenet_v3_forward.9} parent=11 // pred_check
        %p312 = pneg %p190
      $region38: #{mobilenet_v3_forward.9} parent=11 // pred_check_branch
        %314 = sbr.rel (%p312) target = $region40
      $region39: #{mobilenet_v3_forward.9} parent=11 // pred_region
        _
      $region40: #{mobilenet_v3_forward.9} parent=11 // pred_fallthru
        _
      // Predicated region
      $region41: #{mobilenet_v3_forward.9} parent=11 // pred_check
        %p315 = pneg %p211
      $region42: #{mobilenet_v3_forward.9} parent=11 // pred_check_branch
        %317 = sbr.rel (%p315) target = $region44
      $region43: #{mobilenet_v3_forward.9} parent=11 // pred_region
        _
      $region44: #{mobilenet_v3_forward.9} parent=11 // pred_fallthru
        _
      // Predicated region
      $region45: #{mobilenet_v3_forward.9} parent=11 // pred_check
        %p318 = pneg %p232
      $region46: #{mobilenet_v3_forward.9} parent=11 // pred_check_branch
        %320 = sbr.rel (%p318) target = $region48
      $region47: #{mobilenet_v3_forward.9} parent=11 // pred_region
        _
      $region48: #{mobilenet_v3_forward.9} parent=11 // pred_fallthru
        _
      // Predicated region
      $region49: #{mobilenet_v3_forward.9} parent=11 // pred_check
        %p321 = pneg %p253
      $region50: #{mobilenet_v3_forward.9} parent=11 // pred_check_branch
        %323 = sbr.rel (%p321) target = $region52
      $region51: #{mobilenet_v3_forward.9} parent=11 // pred_region
        _
      $region52: #{mobilenet_v3_forward.9} parent=11 // pred_fallthru
        _
    $region12: #{mobilenet_v3_forward.9} parent=5 // pred_fallthru
      _
    %p324 = scmp.lt.s32.totalorder %s17, 2
    // Predicated region
    $region53: #{mobilenet_v3_forward.9} parent=5 // pred_check
      %p325 = pneg %p324
    $region54: #{mobilenet_v3_forward.9} parent=5 // pred_check_branch
      %327 = sbr.rel (%p325) target = $region56
    $region55: #{mobilenet_v3_forward.9} parent=5 // pred_region
      // Predicated region
      $region57: #{mobilenet_v3_forward.9} parent=55 // pred_check
        %p328 = pneg %p37
      $region58: #{mobilenet_v3_forward.9} parent=55 // pred_check_branch
        %330 = sbr.rel (%p328) target = $region60
      $region59: #{mobilenet_v3_forward.9} parent=55 // pred_region
        %p331 = scmp.lt.s32.totalorder %s17, 1
        %s332 = scalar_select %p331, %s17, 1
        %s333 = smul.addr %s332, 4
        %s334 = smul.addr %s333, 2
        %s335 = scalar_lea.vmem %s0, %s334
      $region60: #{mobilenet_v3_forward.9} parent=55 // pred_fallthru
        _
    $region56: #{mobilenet_v3_forward.9} parent=5 // pred_fallthru
      _
    %p336 = scmp.le.s32.totalorder 1, %s17
    %p337 = scmp.lt.s32.totalorder %s17, 3
    %p338 = pnand %p336, %p337
    %p339 = pneg %p338
    // Predicated region
    $region61: #{mobilenet_v3_forward.9} parent=5 // pred_check
      _
    $region62: #{mobilenet_v3_forward.9} parent=5 // pred_check_branch
      %341 = sbr.rel (%p338) target = $region64
    $region63: #{mobilenet_v3_forward.9} parent=5 // pred_region
      %s342 = ssub.s32 %s17, 1
      %p343 = scmp.lt.s32.totalorder %s22, 1
      %s344 = scalar_select %p343, %s22, 1
      %s345 = smul.addr %s344, 4
      %s346 = smul.addr %s345, 2
      %s347 = scalar_lea.vmem %s0, %s346
      %p348 = pneg %p43
      %p349 = pneg %p40
      %p350 = pneg %p64
      %p351 = pneg %p61
      %p352 = pneg %p85
      %p353 = pneg %p82
      %p354 = pneg %p106
      %p355 = pneg %p103
      %p356 = pneg %p127
      %p357 = pneg %p124
      %p358 = pneg %p148
      %p359 = pneg %p145
      %p360 = pneg %p169
      %p361 = pneg %p166
      %p362 = pneg %p190
      %p363 = pneg %p187
      %p364 = pneg %p211
      %p365 = pneg %p208
      %p366 = pneg %p232
      %p367 = pneg %p229
      %p368 = pneg %p253
      %p369 = pneg %p250
      %p370 = pneg %p279
      %p371 = pneg %p276
      %p372 = scmp.lt.s32.totalorder %s22, 1
      %s373 = scalar_select %p372, %s22, 1
      %s374 = smul.addr %s373, 4
      %s375 = smul.addr %s374, 2
      %s376 = scalar_lea.vmem %s11, %s375
      %p377 = scmp.lt.s32.totalorder %s22, 1
      %s378 = scalar_select %p377, %s22, 1
      %s379 = smul.addr %s378, 4
      %s380 = smul.addr %s379, 2
      %s381 = scalar_lea.vmem %s0, %s380
      %p382 = scmp.lt.s32.totalorder %s22, 1
      %s383 = scalar_select %p382, %s22, 1
      %s384 = smul.addr %s383, 4
      %s385 = smul.addr %s384, 2
      %s386 = scalar_lea.vmem %s11, %s385
      %387 = vst [vmem:[#allocation2] sm:$0xff] 0.0
      %388 = vst [vmem:[#allocation2 + $0x8] sm:$0xff] 0.0
      %389 = vst [vmem:[#allocation2 + $0x10] sm:$0xff] 0.0
      %390 = vst [vmem:[#allocation2 + $0x18] sm:$0xff] 0.0
      %391 = vst [vmem:[#allocation2 + $0x20] sm:$0xff] 0.0
      %392 = vst [vmem:[#allocation2 + $0x28] sm:$0xff] 0.0
      %393 = vst [vmem:[#allocation2 + $0x30] sm:$0xff] 0.0
      %394 = vst [vmem:[#allocation2 + $0x38] sm:$0xff] 0.0
      %v395 = vld [vmem:[%s1] sm:$0xf]
      %v396 = vld [vmem:[%s1 + $0x4] sm:$0xf]
      %v397 = vld [vmem:[%s1 + $0x8] sm:$0xf]
      %v398 = vld [vmem:[%s1 + $0xc] sm:$0xf]
      %v399 = vld [vmem:[%s1 + $0x10] sm:$0xf]
      %v400 = vld [vmem:[%s1 + $0x14] sm:$0xf]
      %v401 = vld [vmem:[%s1 + $0x18] sm:$0xf]
      %v402 = vld [vmem:[%s1 + $0x1c] sm:$0xf]
      %v403 = vld [vmem:[%s1 + $0x20] sm:$0xf]
      %v404 = vld [vmem:[%s1 + $0x24] sm:$0xf]
      %v405 = vld [vmem:[%s1 + $0x28] sm:$0xf]
      %v406 = vld [vmem:[%s1 + $0x2c] sm:$0xf]
      %v407 = vld [vmem:[%s1 + $0x30] sm:$0xf]
      %v408 = vld [vmem:[%s1 + $0x34] sm:$0xf]
      %v409 = vld [vmem:[%s1 + $0x38] sm:$0xf]
      %v410 = vld [vmem:[%s1 + $0x3c] sm:$0xf]
      %v411 = vld [vmem:[%s2] sm:$0x1]
      %v412 = vld [vmem:[%s381] sm:$0x3]
      %v414 = vperm.slane %v411, 0
      %v432 = vunpack.c.l.b16 %v395
      %v433 = vunpack.c.l.b16 %v396
      %v434 = vunpack.c.l.b16 %v397
      %v435 = vunpack.c.l.b16 %v398
      %v436 = vunpack.c.l.b16 %v399
      %v437 = vunpack.c.l.b16 %v400
      %v438 = vunpack.c.l.b16 %v401
      %v439 = vunpack.c.l.b16 %v402
      %v440 = vunpack.c.l.b16 %v403
      %v441 = vunpack.c.l.b16 %v404
      %v442 = vunpack.c.l.b16 %v405
      %v443 = vunpack.c.l.b16 %v406
      %v444 = vunpack.c.l.b16 %v407
      %v445 = vunpack.c.l.b16 %v408
      %v446 = vunpack.c.l.b16 %v409
      %v447 = vunpack.c.l.b16 %v410
      %v448 = vpack.c.b16 %v433, %v432
      %v449 = vpack.c.b16 %v435, %v434
      %v450 = vpack.c.b16 %v437, %v436
      %v451 = vpack.c.b16 %v439, %v438
      %v452 = vpack.c.b16 %v441, %v440
      %v453 = vpack.c.b16 %v443, %v442
      %v454 = vpack.c.b16 %v445, %v444
      %v455 = vpack.c.b16 %v447, %v446
      %464 = vmatpush.bf16.msra.mxu0 %v455
      %465 = vmatpush.bf16.msra.mxu0 %v454
      %466 = vmatpush.bf16.msra.mxu0 %v453
      %467 = vmatpush.bf16.msra.mxu0 %v452
      %468 = vmatpush.bf16.msra.mxu0 %v451
      %469 = vmatpush.bf16.msra.mxu0 %v450
      %470 = vmatpush.bf16.msra.mxu0 %v449
      %471 = vmatpush.bf16.msra.mxu0 %v448
      %472 = vmatmul.bf16.gmra.mxu0 %v412
      %v473 = vpop.f32.mrf.mxu0
      %v474 = vadd.f32 %v414, %v473
      %v475 = vpop.f32.mrf.mxu0
      %476 = vdwg.mxu0
      %v477 = vadd.f32 %v474, 3.0
      %v478 = vmax.f32 %v477, 0.0
      %v479 = vmin.f32 %v478, 6.0
      %v480 = vmul.f32 %v474, %v479
      %v481 = vmul.f32 %v480, 0.16666667
      %s482 = scalar_lea.vmem [#allocation2], 16
      %483 = vst [vmem:[%s482 + $0x2] sm:$0xf] %v481
      %s484 = scalar_lea.vmem %s381, 2
      %v485 = vld [vmem:[%s484] sm:$0x3]
      %486 = vmatpush.bf16.msra.mxu0 %v455
      %487 = vmatpush.bf16.msra.mxu0 %v454
      %488 = vmatpush.bf16.msra.mxu0 %v453
      %489 = vmatpush.bf16.msra.mxu0 %v452
      %490 = vmatpush.bf16.msra.mxu0 %v451
      %491 = vmatpush.bf16.msra.mxu0 %v450
      %492 = vmatpush.bf16.msra.mxu0 %v449
      %493 = vmatpush.bf16.msra.mxu0 %v448
      %494 = vmatmul.bf16.gmra.mxu0 %v485
      %v495 = vpop.f32.mrf.mxu0
      %v496 = vadd.f32 %v414, %v495
      %v497 = vpop.f32.mrf.mxu0
      %498 = vdwg.mxu0
      %v499 = vadd.f32 %v496, 3.0
      %v500 = vmax.f32 %v499, 0.0
      %v501 = vmin.f32 %v500, 6.0
      %v502 = vmul.f32 %v496, %v501
      %v503 = vmul.f32 %v502, 0.16666667
      %s504 = scalar_lea.vmem [#allocation2], 24
      %505 = vst [vmem:[%s504 + $0x2] sm:$0xf] %v503
      %s506 = scalar_lea.vmem %s381, 4
      %v507 = vld [vmem:[%s506] sm:$0x3]
      %508 = vmatpush.bf16.msra.mxu0 %v455
      %509 = vmatpush.bf16.msra.mxu0 %v454
      %510 = vmatpush.bf16.msra.mxu0 %v453
      %511 = vmatpush.bf16.msra.mxu0 %v452
      %512 = vmatpush.bf16.msra.mxu0 %v451
      %513 = vmatpush.bf16.msra.mxu0 %v450
      %514 = vmatpush.bf16.msra.mxu0 %v449
      %515 = vmatpush.bf16.msra.mxu0 %v448
      %516 = vmatmul.bf16.gmra.mxu0 %v507
      %v517 = vpop.f32.mrf.mxu0
      %v518 = vadd.f32 %v414, %v517
      %v519 = vpop.f32.mrf.mxu0
      %520 = vdwg.mxu0
      %v521 = vadd.f32 %v518, 3.0
      %v522 = vmax.f32 %v521, 0.0
      %v523 = vmin.f32 %v522, 6.0
      %v524 = vmul.f32 %v518, %v523
      %v525 = vmul.f32 %v524, 0.16666667
      %s526 = scalar_lea.vmem [#allocation2], 32
      %527 = vst [vmem:[%s526 + $0x2] sm:$0xf] %v525
      %s528 = scalar_lea.vmem %s381, 6
      %v529 = vld [vmem:[%s528] sm:$0x3]
      %530 = vmatpush.bf16.msra.mxu0 %v455
      %531 = vmatpush.bf16.msra.mxu0 %v454
      %532 = vmatpush.bf16.msra.mxu0 %v453
      %533 = vmatpush.bf16.msra.mxu0 %v452
      %534 = vmatpush.bf16.msra.mxu0 %v451
      %535 = vmatpush.bf16.msra.mxu0 %v450
      %536 = vmatpush.bf16.msra.mxu0 %v449
      %537 = vmatpush.bf16.msra.mxu0 %v448
      %538 = vmatmul.bf16.gmra.mxu0 %v529
      %v539 = vpop.f32.mrf.mxu0
      %v540 = vadd.f32 %v414, %v539
      %v541 = vpop.f32.mrf.mxu0
      %542 = vdwg.mxu0
      %v543 = vadd.f32 %v540, 3.0
      %v544 = vmax.f32 %v543, 0.0
      %v545 = vmin.f32 %v544, 6.0
      %v546 = vmul.f32 %v540, %v545
      %v547 = vmul.f32 %v546, 0.16666667
      %s548 = scalar_lea.vmem [#allocation2], 40
      %549 = vst [vmem:[%s548 + $0x2] sm:$0xf] %v547
      %v550 = vld [vmem:[%s3] sm:$0xff]
      %v551 = vld [vmem:[%s3 + $0x8] sm:$0xff]
      %v552 = vld [vmem:[%s3 + $0x10] sm:$0xff]
      %v553 = vld [vmem:[%s3 + $0x18] sm:$0x1]
      %v554 = vld [vmem:[#allocation2] sm:$0xf]
      %v555 = vld [vmem:[#allocation2 + $0x8] sm:$0xf]
      %v556 = vld [vmem:[#allocation2 + $0x10] sm:$0xf]
      %v557 = vld [vmem:[#allocation2 + $0x18] sm:$0xf]
      %v558 = vperm.slane %v550, 0
      %v559 = vmul.f32 %v554, %v558
      %v560 = vmul.f32 %v555, %v558
      %v561 = vmul.f32 %v556, %v558
      %v562 = vmul.f32 %v557, %v558
      %v563 = vadd.f32 %v559, 0.0
      %v564 = vadd.f32 %v560, 0.0
      %v565 = vadd.f32 %v561, 0.0
      %v566 = vadd.f32 %v562, 0.0
      %v567 = vld [vmem:[#allocation2 + $0x1] sm:$0xf]
      %v568 = vld [vmem:[#allocation2 + $0x9] sm:$0xf]
      %v569 = vld [vmem:[#allocation2 + $0x11] sm:$0xf]
      %v570 = vld [vmem:[#allocation2 + $0x19] sm:$0xf]
      %v571 = vperm.slane %v550, 1
      %v572 = vmul.f32 %v567, %v571
      %v573 = vmul.f32 %v568, %v571
      %v574 = vmul.f32 %v569, %v571
      %v575 = vmul.f32 %v570, %v571
      %v576 = vadd.f32 %v563, %v572
      %v577 = vadd.f32 %v564, %v573
      %v578 = vadd.f32 %v565, %v574
      %v579 = vadd.f32 %v566, %v575
      %v580 = vld [vmem:[#allocation2 + $0x2] sm:$0xf]
      %v581 = vld [vmem:[#allocation2 + $0xa] sm:$0xf]
      %v582 = vld [vmem:[#allocation2 + $0x12] sm:$0xf]
      %v583 = vld [vmem:[#allocation2 + $0x1a] sm:$0xf]
      %v584 = vperm.slane %v550, 2
      %v585 = vmul.f32 %v580, %v584
      %v586 = vmul.f32 %v581, %v584
      %v587 = vmul.f32 %v582, %v584
      %v588 = vmul.f32 %v583, %v584
      %v589 = vadd.f32 %v576, %v585
      %v590 = vadd.f32 %v577, %v586
      %v591 = vadd.f32 %v578, %v587
      %v592 = vadd.f32 %v579, %v588
      %v593 = vld [vmem:[#allocation2 + $0x3] sm:$0xf]
      %v594 = vld [vmem:[#allocation2 + $0xb] sm:$0xf]
      %v595 = vld [vmem:[#allocation2 + $0x13] sm:$0xf]
      %v596 = vld [vmem:[#allocation2 + $0x1b] sm:$0xf]
      %v597 = vperm.slane %v550, 3
      %v598 = vmul.f32 %v593, %v597
      %v599 = vmul.f32 %v594, %v597
      %v600 = vmul.f32 %v595, %v597
      %v601 = vmul.f32 %v596, %v597
      %v602 = vadd.f32 %v589, %v598
      %v603 = vadd.f32 %v590, %v599
      %v604 = vadd.f32 %v591, %v600
      %v605 = vadd.f32 %v592, %v601
      %v606 = vld [vmem:[#allocation2 + $0x4] sm:$0xf]
      %v607 = vld [vmem:[#allocation2 + $0xc] sm:$0xf]
      %v608 = vld [vmem:[#allocation2 + $0x14] sm:$0xf]
      %v609 = vld [vmem:[#allocation2 + $0x1c] sm:$0xf]
      %v610 = vperm.slane %v550, 4
      %v611 = vmul.f32 %v606, %v610
      %v612 = vmul.f32 %v607, %v610
      %v613 = vmul.f32 %v608, %v610
      %v614 = vmul.f32 %v609, %v610
      %v615 = vadd.f32 %v602, %v611
      %v616 = vadd.f32 %v603, %v612
      %v617 = vadd.f32 %v604, %v613
      %v618 = vadd.f32 %v605, %v614
      %s619 = scalar_lea.vmem [#allocation2], 8
      %v620 = vld [vmem:[%s619] sm:$0xf]
      %v621 = vld [vmem:[%s619 + $0x8] sm:$0xf]
      %v622 = vld [vmem:[%s619 + $0x10] sm:$0xf]
      %v623 = vld [vmem:[%s619 + $0x18] sm:$0xf]
      %v624 = vperm.slane %v550, 5
      %v625 = vmul.f32 %v620, %v624
      %v626 = vmul.f32 %v621, %v624
      %v627 = vmul.f32 %v622, %v624
      %v628 = vmul.f32 %v623, %v624
      %v629 = vadd.f32 %v615, %v625
      %v630 = vadd.f32 %v616, %v626
      %v631 = vadd.f32 %v617, %v627
      %v632 = vadd.f32 %v618, %v628
      %v633 = vld [vmem:[%s619 + $0x1] sm:$0xf]
      %v634 = vld [vmem:[%s619 + $0x9] sm:$0xf]
      %v635 = vld [vmem:[%s619 + $0x11] sm:$0xf]
      %v636 = vld [vmem:[%s619 + $0x19] sm:$0xf]
      %v637 = vperm.slane %v550, 6
      %v638 = vmul.f32 %v633, %v637
      %v639 = vmul.f32 %v634, %v637
      %v640 = vmul.f32 %v635, %v637
      %v641 = vmul.f32 %v636, %v637
      %v642 = vadd.f32 %v629, %v638
      %v643 = vadd.f32 %v630, %v639
      %v644 = vadd.f32 %v631, %v640
      %v645 = vadd.f32 %v632, %v641
      %v646 = vld [vmem:[%s619 + $0x2] sm:$0xf]
      %v647 = vld [vmem:[%s619 + $0xa] sm:$0xf]
      %v648 = vld [vmem:[%s619 + $0x12] sm:$0xf]
      %v649 = vld [vmem:[%s619 + $0x1a] sm:$0xf]
      %v650 = vperm.slane %v550, 7
      %v651 = vmul.f32 %v646, %v650
      %v652 = vmul.f32 %v647, %v650
      %v653 = vmul.f32 %v648, %v650
      %v654 = vmul.f32 %v649, %v650
      %v655 = vadd.f32 %v642, %v651
      %v656 = vadd.f32 %v643, %v652
      %v657 = vadd.f32 %v644, %v653
      %v658 = vadd.f32 %v645, %v654
      %v659 = vld [vmem:[%s619 + $0x3] sm:$0xf]
      %v660 = vld [vmem:[%s619 + $0xb] sm:$0xf]
      %v661 = vld [vmem:[%s619 + $0x13] sm:$0xf]
      %v662 = vld [vmem:[%s619 + $0x1b] sm:$0xf]
      %v663 = vperm.slane %v551, 0
      %v664 = vmul.f32 %v659, %v663
      %v665 = vmul.f32 %v660, %v663
      %v666 = vmul.f32 %v661, %v663
      %v667 = vmul.f32 %v662, %v663
      %v668 = vadd.f32 %v655, %v664
      %v669 = vadd.f32 %v656, %v665
      %v670 = vadd.f32 %v657, %v666
      %v671 = vadd.f32 %v658, %v667
      %v672 = vld [vmem:[%s619 + $0x4] sm:$0xf]
      %v673 = vld [vmem:[%s619 + $0xc] sm:$0xf]
      %v674 = vld [vmem:[%s619 + $0x14] sm:$0xf]
      %v675 = vld [vmem:[%s619 + $0x1c] sm:$0xf]
      %v676 = vperm.slane %v551, 1
      %v677 = vmul.f32 %v672, %v676
      %v678 = vmul.f32 %v673, %v676
      %v679 = vmul.f32 %v674, %v676
      %v680 = vmul.f32 %v675, %v676
      %v681 = vadd.f32 %v668, %v677
      %v682 = vadd.f32 %v669, %v678
      %v683 = vadd.f32 %v670, %v679
      %v684 = vadd.f32 %v671, %v680
      %v685 = vld [vmem:[%s482] sm:$0xf]
      %v686 = vld [vmem:[%s482 + $0x8] sm:$0xf]
      %v687 = vld [vmem:[%s482 + $0x10] sm:$0xf]
      %v688 = vld [vmem:[%s482 + $0x18] sm:$0xf]
      %v689 = vperm.slane %v551, 2
      %v690 = vmul.f32 %v685, %v689
      %v691 = vmul.f32 %v686, %v689
      %v692 = vmul.f32 %v687, %v689
      %v693 = vmul.f32 %v688, %v689
      %v694 = vadd.f32 %v681, %v690
      %v695 = vadd.f32 %v682, %v691
      %v696 = vadd.f32 %v683, %v692
      %v697 = vadd.f32 %v684, %v693
      %v698 = vld [vmem:[%s482 + $0x1] sm:$0xf]
      %v699 = vld [vmem:[%s482 + $0x9] sm:$0xf]
      %v700 = vld [vmem:[%s482 + $0x11] sm:$0xf]
      %v701 = vld [vmem:[%s482 + $0x19] sm:$0xf]
      %v702 = vperm.slane %v551, 3
      %v703 = vmul.f32 %v698, %v702
      %v704 = vmul.f32 %v699, %v702
      %v705 = vmul.f32 %v700, %v702
      %v706 = vmul.f32 %v701, %v702
      %v707 = vadd.f32 %v694, %v703
      %v708 = vadd.f32 %v695, %v704
      %v709 = vadd.f32 %v696, %v705
      %v710 = vadd.f32 %v697, %v706
      %v711 = vld [vmem:[%s482 + $0x2] sm:$0xf]
      %v712 = vld [vmem:[%s482 + $0xa] sm:$0xf]
      %v713 = vld [vmem:[%s482 + $0x12] sm:$0xf]
      %v714 = vld [vmem:[%s482 + $0x1a] sm:$0xf]
      %v715 = vperm.slane %v551, 4
      %v716 = vmul.f32 %v711, %v715
      %v717 = vmul.f32 %v712, %v715
      %v718 = vmul.f32 %v713, %v715
      %v719 = vmul.f32 %v714, %v715
      %v720 = vadd.f32 %v707, %v716
      %v721 = vadd.f32 %v708, %v717
      %v722 = vadd.f32 %v709, %v718
      %v723 = vadd.f32 %v710, %v719
      %v724 = vld [vmem:[%s482 + $0x3] sm:$0xf]
      %v725 = vld [vmem:[%s482 + $0xb] sm:$0xf]
      %v726 = vld [vmem:[%s482 + $0x13] sm:$0xf]
      %v727 = vld [vmem:[%s482 + $0x1b] sm:$0xf]
      %v728 = vperm.slane %v551, 5
      %v729 = vmul.f32 %v724, %v728
      %v730 = vmul.f32 %v725, %v728
      %v731 = vmul.f32 %v726, %v728
      %v732 = vmul.f32 %v727, %v728
      %v733 = vadd.f32 %v720, %v729
      %v734 = vadd.f32 %v721, %v730
      %v735 = vadd.f32 %v722, %v731
      %v736 = vadd.f32 %v723, %v732
      %v737 = vld [vmem:[%s482 + $0x4] sm:$0xf]
      %v738 = vld [vmem:[%s482 + $0xc] sm:$0xf]
      %v739 = vld [vmem:[%s482 + $0x14] sm:$0xf]
      %v740 = vld [vmem:[%s482 + $0x1c] sm:$0xf]
      %v741 = vperm.slane %v551, 6
      %v742 = vmul.f32 %v737, %v741
      %v743 = vmul.f32 %v738, %v741
      %v744 = vmul.f32 %v739, %v741
      %v745 = vmul.f32 %v740, %v741
      %v746 = vadd.f32 %v733, %v742
      %v747 = vadd.f32 %v734, %v743
      %v748 = vadd.f32 %v735, %v744
      %v749 = vadd.f32 %v736, %v745
      %v750 = vld [vmem:[%s504] sm:$0xf]
      %v751 = vld [vmem:[%s504 + $0x8] sm:$0xf]
      %v752 = vld [vmem:[%s504 + $0x10] sm:$0xf]
      %v753 = vld [vmem:[%s504 + $0x18] sm:$0xf]
      %v754 = vperm.slane %v551, 7
      %v755 = vmul.f32 %v750, %v754
      %v756 = vmul.f32 %v751, %v754
      %v757 = vmul.f32 %v752, %v754
      %v758 = vmul.f32 %v753, %v754
      %v759 = vadd.f32 %v746, %v755
      %v760 = vadd.f32 %v747, %v756
      %v761 = vadd.f32 %v748, %v757
      %v762 = vadd.f32 %v749, %v758
      %v763 = vld [vmem:[%s504 + $0x1] sm:$0xf]
      %v764 = vld [vmem:[%s504 + $0x9] sm:$0xf]
      %v765 = vld [vmem:[%s504 + $0x11] sm:$0xf]
      %v766 = vld [vmem:[%s504 + $0x19] sm:$0xf]
      %v767 = vperm.slane %v552, 0
      %v768 = vmul.f32 %v763, %v767
      %v769 = vmul.f32 %v764, %v767
      %v770 = vmul.f32 %v765, %v767
      %v771 = vmul.f32 %v766, %v767
      %v772 = vadd.f32 %v759, %v768
      %v773 = vadd.f32 %v760, %v769
      %v774 = vadd.f32 %v761, %v770
      %v775 = vadd.f32 %v762, %v771
      %v776 = vld [vmem:[%s504 + $0x2] sm:$0xf]
      %v777 = vld [vmem:[%s504 + $0xa] sm:$0xf]
      %v778 = vld [vmem:[%s504 + $0x12] sm:$0xf]
      %v779 = vld [vmem:[%s504 + $0x1a] sm:$0xf]
      %v780 = vperm.slane %v552, 1
      %v781 = vmul.f32 %v776, %v780
      %v782 = vmul.f32 %v777, %v780
      %v783 = vmul.f32 %v778, %v780
      %v784 = vmul.f32 %v779, %v780
      %v785 = vadd.f32 %v772, %v781
      %v786 = vadd.f32 %v773, %v782
      %v787 = vadd.f32 %v774, %v783
      %v788 = vadd.f32 %v775, %v784
      %v789 = vld [vmem:[%s504 + $0x3] sm:$0xf]
      %v790 = vld [vmem:[%s504 + $0xb] sm:$0xf]
      %v791 = vld [vmem:[%s504 + $0x13] sm:$0xf]
      %v792 = vld [vmem:[%s504 + $0x1b] sm:$0xf]
      %v793 = vperm.slane %v552, 2
      %v794 = vmul.f32 %v789, %v793
      %v795 = vmul.f32 %v790, %v793
      %v796 = vmul.f32 %v791, %v793
      %v797 = vmul.f32 %v792, %v793
      %v798 = vadd.f32 %v785, %v794
      %v799 = vadd.f32 %v786, %v795
      %v800 = vadd.f32 %v787, %v796
      %v801 = vadd.f32 %v788, %v797
      %v802 = vld [vmem:[%s504 + $0x4] sm:$0xf]
      %v803 = vld [vmem:[%s504 + $0xc] sm:$0xf]
      %v804 = vld [vmem:[%s504 + $0x14] sm:$0xf]
      %v805 = vld [vmem:[%s504 + $0x1c] sm:$0xf]
      %v806 = vperm.slane %v552, 3
      %v807 = vmul.f32 %v802, %v806
      %v808 = vmul.f32 %v803, %v806
      %v809 = vmul.f32 %v804, %v806
      %v810 = vmul.f32 %v805, %v806
      %v811 = vadd.f32 %v798, %v807
      %v812 = vadd.f32 %v799, %v808
      %v813 = vadd.f32 %v800, %v809
      %v814 = vadd.f32 %v801, %v810
      %v815 = vld [vmem:[%s526] sm:$0xf]
      %v816 = vld [vmem:[%s526 + $0x8] sm:$0xf]
      %v817 = vld [vmem:[%s526 + $0x10] sm:$0xf]
      %v818 = vld [vmem:[%s526 + $0x18] sm:$0xf]
      %v819 = vperm.slane %v552, 4
      %v820 = vmul.f32 %v815, %v819
      %v821 = vmul.f32 %v816, %v819
      %v822 = vmul.f32 %v817, %v819
      %v823 = vmul.f32 %v818, %v819
      %v824 = vadd.f32 %v811, %v820
      %v825 = vadd.f32 %v812, %v821
      %v826 = vadd.f32 %v813, %v822
      %v827 = vadd.f32 %v814, %v823
      %v828 = vld [vmem:[%s526 + $0x1] sm:$0xf]
      %v829 = vld [vmem:[%s526 + $0x9] sm:$0xf]
      %v830 = vld [vmem:[%s526 + $0x11] sm:$0xf]
      %v831 = vld [vmem:[%s526 + $0x19] sm:$0xf]
      %v832 = vperm.slane %v552, 5
      %v833 = vmul.f32 %v828, %v832
      %v834 = vmul.f32 %v829, %v832
      %v835 = vmul.f32 %v830, %v832
      %v836 = vmul.f32 %v831, %v832
      %v837 = vadd.f32 %v824, %v833
      %v838 = vadd.f32 %v825, %v834
      %v839 = vadd.f32 %v826, %v835
      %v840 = vadd.f32 %v827, %v836
      %v841 = vld [vmem:[%s526 + $0x2] sm:$0xf]
      %v842 = vld [vmem:[%s526 + $0xa] sm:$0xf]
      %v843 = vld [vmem:[%s526 + $0x12] sm:$0xf]
      %v844 = vld [vmem:[%s526 + $0x1a] sm:$0xf]
      %v845 = vperm.slane %v552, 6
      %v846 = vmul.f32 %v841, %v845
      %v847 = vmul.f32 %v842, %v845
      %v848 = vmul.f32 %v843, %v845
      %v849 = vmul.f32 %v844, %v845
      %v850 = vadd.f32 %v837, %v846
      %v851 = vadd.f32 %v838, %v847
      %v852 = vadd.f32 %v839, %v848
      %v853 = vadd.f32 %v840, %v849
      %v854 = vld [vmem:[%s526 + $0x3] sm:$0xf]
      %v855 = vld [vmem:[%s526 + $0xb] sm:$0xf]
      %v856 = vld [vmem:[%s526 + $0x13] sm:$0xf]
      %v857 = vld [vmem:[%s526 + $0x1b] sm:$0xf]
      %v858 = vperm.slane %v552, 7
      %v859 = vmul.f32 %v854, %v858
      %v860 = vmul.f32 %v855, %v858
      %v861 = vmul.f32 %v856, %v858
      %v862 = vmul.f32 %v857, %v858
      %v863 = vadd.f32 %v850, %v859
      %v864 = vadd.f32 %v851, %v860
      %v865 = vadd.f32 %v852, %v861
      %v866 = vadd.f32 %v853, %v862
      %v867 = vld [vmem:[%s526 + $0x4] sm:$0xf]
      %v868 = vld [vmem:[%s526 + $0xc] sm:$0xf]
      %v869 = vld [vmem:[%s526 + $0x14] sm:$0xf]
      %v870 = vld [vmem:[%s526 + $0x1c] sm:$0xf]
      %v871 = vperm.slane %v553, 0
      %v872 = vmul.f32 %v867, %v871
      %v873 = vmul.f32 %v868, %v871
      %v874 = vmul.f32 %v869, %v871
      %v875 = vmul.f32 %v870, %v871
      %v876 = vadd.f32 %v863, %v872
      %v877 = vadd.f32 %v864, %v873
      %v878 = vadd.f32 %v865, %v874
      %v879 = vadd.f32 %v866, %v875
      %v880 = vld [vmem:[%s4] sm:$0x1]
      %v882 = vperm.slane %v880, 0
      %v884 = vadd.f32 %v876, %v882
      %v885 = vadd.f32 %v877, %v882
      %v886 = vadd.f32 %v878, %v882
      %v887 = vadd.f32 %v879, %v882
      %v888 = vadd.f32 %v884, 3.0
      %v889 = vadd.f32 %v885, 3.0
      %v890 = vadd.f32 %v886, 3.0
      %v891 = vadd.f32 %v887, 3.0
      %v892 = vmax.f32 %v888, 0.0
      %v893 = vmax.f32 %v889, 0.0
      %v894 = vmax.f32 %v890, 0.0
      %v895 = vmax.f32 %v891, 0.0
      %v896 = vmin.f32 %v892, 6.0
      %v897 = vmin.f32 %v893, 6.0
      %v898 = vmin.f32 %v894, 6.0
      %v899 = vmin.f32 %v895, 6.0
      %v900 = vmul.f32 %v884, %v896
      %v901 = vmul.f32 %v885, %v897
      %v902 = vmul.f32 %v886, %v898
      %v903 = vmul.f32 %v887, %v899
      %v904 = vmul.f32 %v900, 0.16666667
      %v905 = vmul.f32 %v901, 0.16666667
      %v906 = vmul.f32 %v902, 0.16666667
      %v907 = vmul.f32 %v903, 0.16666667
      %vm908 = vcmask 1043456
      %v909 = vsel %vm908, %v904, 0.0
      %v910 = vsel %vm908, %v905, 0.0
      %v911 = vadd.f32 %v909, %v910
      %v912 = vsel %vm908, %v906, 0.0
      %v913 = vadd.f32 %v911, %v912
      %v914 = vsel %vm908, %v907, 0.0
      %v915 = vadd.f32 %v913, %v914
      %v916 = vrot.slane %v915, 4
      %v917 = vadd.f32 %v915, %v916
      %v918 = vrot.slane %v917, 2
      %v919 = vadd.f32 %v917, %v918
      %v920 = vrot.slane %v919, 1
      %v921 = vadd.f32 %v919, %v920
      %v922 = vrcp.pop 16.0
      %v923 = vmul.f32 16.0, %v922
      %v924 = vsub.f32 1.0, %v923
      %v925 = vmul.f32 %v922, %v924
      %v926 = vadd.f32 %v922, %v925
      %vm927 = vweird.f32 %v922
      %v928 = vsel %vm927, %v922, %v926
      %v929 = vmul.f32 %v921, %v928
      %v930 = vpack.c.bf16 %v929, %v929
      %v931 = vld [vmem:[%s5] sm:$0xf]
      %v932 = vld [vmem:[%s5 + $0x4] sm:$0xf]
      %v933 = vld [vmem:[%s5 + $0x8] sm:$0xf]
      %v934 = vld [vmem:[%s5 + $0xc] sm:$0xf]
      %v935 = vld [vmem:[%s5 + $0x10] sm:$0xf]
      %v936 = vld [vmem:[%s5 + $0x14] sm:$0xf]
      %v937 = vld [vmem:[%s5 + $0x18] sm:$0xf]
      %v938 = vld [vmem:[%s5 + $0x1c] sm:$0xf]
      %v939 = vld [vmem:[%s5 + $0x20] sm:$0xf]
      %v940 = vld [vmem:[%s5 + $0x24] sm:$0xf]
      %v941 = vld [vmem:[%s5 + $0x28] sm:$0xf]
      %v942 = vld [vmem:[%s5 + $0x2c] sm:$0xf]
      %v943 = vld [vmem:[%s5 + $0x30] sm:$0xf]
      %v944 = vld [vmem:[%s5 + $0x34] sm:$0xf]
      %v945 = vld [vmem:[%s5 + $0x38] sm:$0xf]
      %v946 = vld [vmem:[%s5 + $0x3c] sm:$0xf]
      %v947 = vld [vmem:[%s6] sm:$0x1]
      %v964 = vunpack.c.l.b16 %v931
      %v965 = vunpack.c.l.b16 %v932
      %v966 = vunpack.c.l.b16 %v933
      %v967 = vunpack.c.l.b16 %v934
      %v968 = vunpack.c.l.b16 %v935
      %v969 = vunpack.c.l.b16 %v936
      %v970 = vunpack.c.l.b16 %v937
      %v971 = vunpack.c.l.b16 %v938
      %v972 = vunpack.c.l.b16 %v939
      %v973 = vunpack.c.l.b16 %v940
      %v974 = vunpack.c.l.b16 %v941
      %v975 = vunpack.c.l.b16 %v942
      %v976 = vunpack.c.l.b16 %v943
      %v977 = vunpack.c.l.b16 %v944
      %v978 = vunpack.c.l.b16 %v945
      %v979 = vunpack.c.l.b16 %v946
      %v980 = vpack.c.b16 %v965, %v964
      %v981 = vpack.c.b16 %v967, %v966
      %v982 = vpack.c.b16 %v969, %v968
      %v983 = vpack.c.b16 %v971, %v970
      %v984 = vpack.c.b16 %v973, %v972
      %v985 = vpack.c.b16 %v975, %v974
      %v986 = vpack.c.b16 %v977, %v976
      %v987 = vpack.c.b16 %v979, %v978
      %996 = vmatpush.bf16.msra.mxu0 %v987
      %997 = vmatpush.bf16.msra.mxu0 %v986
      %998 = vmatpush.bf16.msra.mxu0 %v985
      %999 = vmatpush.bf16.msra.mxu0 %v984
      %1000 = vmatpush.bf16.msra.mxu0 %v983
      %1001 = vmatpush.bf16.msra.mxu0 %v982
      %1002 = vmatpush.bf16.msra.mxu0 %v981
      %1003 = vmatpush.bf16.msra.mxu0 %v980
      %1004 = vmatmul.bf16.gmra.mxu0 %v930
      %v1005 = vpop.f32.mrf.mxu0
      %v1006 = vadd.f32 %v947, %v1005
      %v1007 = vpop.f32.mrf.mxu0
      %1008 = vdwg.mxu0
      %v1009 = vmax.f32 %v1006, 0.0
      %v1010 = vpack.c.bf16 %v1009, %v1009
      %v1011 = vld [vmem:[%s7] sm:$0xf]
      %v1012 = vld [vmem:[%s7 + $0x4] sm:$0xf]
      %v1013 = vld [vmem:[%s7 + $0x8] sm:$0xf]
      %v1014 = vld [vmem:[%s7 + $0xc] sm:$0xf]
      %v1015 = vld [vmem:[%s7 + $0x10] sm:$0xf]
      %v1016 = vld [vmem:[%s7 + $0x14] sm:$0xf]
      %v1017 = vld [vmem:[%s7 + $0x18] sm:$0xf]
      %v1018 = vld [vmem:[%s7 + $0x1c] sm:$0xf]
      %v1019 = vld [vmem:[%s7 + $0x20] sm:$0xf]
      %v1020 = vld [vmem:[%s7 + $0x24] sm:$0xf]
      %v1021 = vld [vmem:[%s7 + $0x28] sm:$0xf]
      %v1022 = vld [vmem:[%s7 + $0x2c] sm:$0xf]
      %v1023 = vld [vmem:[%s7 + $0x30] sm:$0xf]
      %v1024 = vld [vmem:[%s7 + $0x34] sm:$0xf]
      %v1025 = vld [vmem:[%s7 + $0x38] sm:$0xf]
      %v1026 = vld [vmem:[%s7 + $0x3c] sm:$0xf]
      %v1027 = vld [vmem:[%s8] sm:$0x1]
      %v1044 = vunpack.c.l.b16 %v1011
      %v1045 = vunpack.c.l.b16 %v1012
      %v1046 = vunpack.c.l.b16 %v1013
      %v1047 = vunpack.c.l.b16 %v1014
      %v1048 = vunpack.c.l.b16 %v1015
      %v1049 = vunpack.c.l.b16 %v1016
      %v1050 = vunpack.c.l.b16 %v1017
      %v1051 = vunpack.c.l.b16 %v1018
      %v1052 = vunpack.c.l.b16 %v1019
      %v1053 = vunpack.c.l.b16 %v1020
      %v1054 = vunpack.c.l.b16 %v1021
      %v1055 = vunpack.c.l.b16 %v1022
      %v1056 = vunpack.c.l.b16 %v1023
      %v1057 = vunpack.c.l.b16 %v1024
      %v1058 = vunpack.c.l.b16 %v1025
      %v1059 = vunpack.c.l.b16 %v1026
      %v1060 = vpack.c.b16 %v1045, %v1044
      %v1061 = vpack.c.b16 %v1047, %v1046
      %v1062 = vpack.c.b16 %v1049, %v1048
      %v1063 = vpack.c.b16 %v1051, %v1050
      %v1064 = vpack.c.b16 %v1053, %v1052
      %v1065 = vpack.c.b16 %v1055, %v1054
      %v1066 = vpack.c.b16 %v1057, %v1056
      %v1067 = vpack.c.b16 %v1059, %v1058
      %1076 = vmatpush.bf16.msra.mxu0 %v1067
      %1077 = vmatpush.bf16.msra.mxu0 %v1066
      %1078 = vmatpush.bf16.msra.mxu0 %v1065
      %1079 = vmatpush.bf16.msra.mxu0 %v1064
      %1080 = vmatpush.bf16.msra.mxu0 %v1063
      %1081 = vmatpush.bf16.msra.mxu0 %v1062
      %1082 = vmatpush.bf16.msra.mxu0 %v1061
      %1083 = vmatpush.bf16.msra.mxu0 %v1060
      %1084 = vmatmul.bf16.gmra.mxu0 %v1010
      %v1085 = vpop.f32.mrf.mxu0
      %v1086 = vadd.f32 %v1027, %v1085
      %v1087 = vpop.f32.mrf.mxu0
      %1088 = vdwg.mxu0
      %v1089 = vmul.f32 %v1086, 0.16666667
      %v1090 = vadd.f32 %v1089, 0.5
      %v1091 = vmax.f32 %v1090, 0.0
      %v1092 = vmin.f32 %v1091, 1.0
      %v1093 = vperm.slane %v1092, 0
      %v1094 = vmul.f32 %v904, %v1093
      %v1095 = vmul.f32 %v905, %v1093
      %v1096 = vmul.f32 %v906, %v1093
      %v1097 = vmul.f32 %v907, %v1093
      %v1098 = vld [vmem:[%s9] sm:$0xf]
      %v1099 = vld [vmem:[%s9 + $0x4] sm:$0xf]
      %v1100 = vld [vmem:[%s9 + $0x8] sm:$0xf]
      %v1101 = vld [vmem:[%s9 + $0xc] sm:$0xf]
      %v1102 = vld [vmem:[%s9 + $0x10] sm:$0xf]
      %v1103 = vld [vmem:[%s9 + $0x14] sm:$0xf]
      %v1104 = vld [vmem:[%s9 + $0x18] sm:$0xf]
      %v1105 = vld [vmem:[%s9 + $0x1c] sm:$0xf]
      %v1106 = vld [vmem:[%s9 + $0x20] sm:$0xf]
      %v1107 = vld [vmem:[%s9 + $0x24] sm:$0xf]
      %v1108 = vld [vmem:[%s9 + $0x28] sm:$0xf]
      %v1109 = vld [vmem:[%s9 + $0x2c] sm:$0xf]
      %v1110 = vld [vmem:[%s9 + $0x30] sm:$0xf]
      %v1111 = vld [vmem:[%s9 + $0x34] sm:$0xf]
      %v1112 = vld [vmem:[%s9 + $0x38] sm:$0xf]
      %v1113 = vld [vmem:[%s9 + $0x3c] sm:$0xf]
      %v1114 = vld [vmem:[%s10] sm:$0x1]
      %v1115 = vpack.c.bf16 %v1094, %v1094
      %v1117 = vperm.slane %v1114, 0
      %v1135 = vunpack.c.l.b16 %v1098
      %v1136 = vunpack.c.l.b16 %v1099
      %v1137 = vunpack.c.l.b16 %v1100
      %v1138 = vunpack.c.l.b16 %v1101
      %v1139 = vunpack.c.l.b16 %v1102
      %v1140 = vunpack.c.l.b16 %v1103
      %v1141 = vunpack.c.l.b16 %v1104
      %v1142 = vunpack.c.l.b16 %v1105
      %v1143 = vunpack.c.l.b16 %v1106
      %v1144 = vunpack.c.l.b16 %v1107
      %v1145 = vunpack.c.l.b16 %v1108
      %v1146 = vunpack.c.l.b16 %v1109
      %v1147 = vunpack.c.l.b16 %v1110
      %v1148 = vunpack.c.l.b16 %v1111
      %v1149 = vunpack.c.l.b16 %v1112
      %v1150 = vunpack.c.l.b16 %v1113
      %v1151 = vpack.c.b16 %v1136, %v1135
      %v1152 = vpack.c.b16 %v1138, %v1137
      %v1153 = vpack.c.b16 %v1140, %v1139
      %v1154 = vpack.c.b16 %v1142, %v1141
      %v1155 = vpack.c.b16 %v1144, %v1143
      %v1156 = vpack.c.b16 %v1146, %v1145
      %v1157 = vpack.c.b16 %v1148, %v1147
      %v1158 = vpack.c.b16 %v1150, %v1149
      %1167 = vmatpush.bf16.msra.mxu0 %v1158
      %1168 = vmatpush.bf16.msra.mxu0 %v1157
      %1169 = vmatpush.bf16.msra.mxu0 %v1156
      %1170 = vmatpush.bf16.msra.mxu0 %v1155
      %1171 = vmatpush.bf16.msra.mxu0 %v1154
      %1172 = vmatpush.bf16.msra.mxu0 %v1153
      %1173 = vmatpush.bf16.msra.mxu0 %v1152
      %1174 = vmatpush.bf16.msra.mxu0 %v1151
      %1175 = vmatmul.bf16.gmra.mxu0 %v1115
      %v1176 = vpop.f32.mrf.mxu0
      %v1177 = vadd.f32 %v1117, %v1176
      %v1178 = vpop.f32.mrf.mxu0
      %1179 = vdwg.mxu0
      %v1180 = vpack.c.bf16 %v1177, %v1177
      %1181 = vst [vmem:[%s386] sm:$0x3] %v1180
      %v1182 = vpack.c.bf16 %v1095, %v1095
      %1183 = vmatpush.bf16.msra.mxu0 %v1158
      %1184 = vmatpush.bf16.msra.mxu0 %v1157
      %1185 = vmatpush.bf16.msra.mxu0 %v1156
      %1186 = vmatpush.bf16.msra.mxu0 %v1155
      %1187 = vmatpush.bf16.msra.mxu0 %v1154
      %1188 = vmatpush.bf16.msra.mxu0 %v1153
      %1189 = vmatpush.bf16.msra.mxu0 %v1152
      %1190 = vmatpush.bf16.msra.mxu0 %v1151
      %1191 = vmatmul.bf16.gmra.mxu0 %v1182
      %v1192 = vpop.f32.mrf.mxu0
      %v1193 = vadd.f32 %v1117, %v1192
      %v1194 = vpop.f32.mrf.mxu0
      %1195 = vdwg.mxu0
      %v1196 = vpack.c.bf16 %v1193, %v1193
      %s1197 = scalar_lea.vmem %s386, 2
      %1198 = vst [vmem:[%s1197] sm:$0x3] %v1196
      %v1199 = vpack.c.bf16 %v1096, %v1096
      %1200 = vmatpush.bf16.msra.mxu0 %v1158
      %1201 = vmatpush.bf16.msra.mxu0 %v1157
      %1202 = vmatpush.bf16.msra.mxu0 %v1156
      %1203 = vmatpush.bf16.msra.mxu0 %v1155
      %1204 = vmatpush.bf16.msra.mxu0 %v1154
      %1205 = vmatpush.bf16.msra.mxu0 %v1153
      %1206 = vmatpush.bf16.msra.mxu0 %v1152
      %1207 = vmatpush.bf16.msra.mxu0 %v1151
      %1208 = vmatmul.bf16.gmra.mxu0 %v1199
      %v1209 = vpop.f32.mrf.mxu0
      %v1210 = vadd.f32 %v1117, %v1209
      %v1211 = vpop.f32.mrf.mxu0
      %1212 = vdwg.mxu0
      %v1213 = vpack.c.bf16 %v1210, %v1210
      %s1214 = scalar_lea.vmem %s386, 4
      %1215 = vst [vmem:[%s1214] sm:$0x3] %v1213
      %v1216 = vpack.c.bf16 %v1097, %v1097
      %1217 = vmatpush.bf16.msra.mxu0 %v1158
      %1218 = vmatpush.bf16.msra.mxu0 %v1157
      %1219 = vmatpush.bf16.msra.mxu0 %v1156
      %1220 = vmatpush.bf16.msra.mxu0 %v1155
      %1221 = vmatpush.bf16.msra.mxu0 %v1154
      %1222 = vmatpush.bf16.msra.mxu0 %v1153
      %1223 = vmatpush.bf16.msra.mxu0 %v1152
      %1224 = vmatpush.bf16.msra.mxu0 %v1151
      %1225 = vmatmul.bf16.gmra.mxu0 %v1216
      %v1226 = vpop.f32.mrf.mxu0
      %v1227 = vadd.f32 %v1117, %v1226
      %v1228 = vpop.f32.mrf.mxu0
      %1229 = vdwg.mxu0
      %v1230 = vpack.c.bf16 %v1227, %v1227
      %s1231 = scalar_lea.vmem %s386, 6
      %1232 = vst [vmem:[%s1231] sm:$0x3] %v1230
      %p1233 = scmp.lt.s32.totalorder %s22, 1
      %s1234 = scalar_select %p1233, %s22, 1
      %s1235 = smul.addr %s1234, 4
      %s1236 = smul.addr %s1235, 2
      %s1237 = scalar_lea.vmem %s11, %s1236
      // Predicated region
      $region65: #{mobilenet_v3_forward.9} parent=63 // pred_check
        %p1238 = pneg %p276
      $region66: #{mobilenet_v3_forward.9} parent=63 // pred_check_branch
        %1240 = sbr.rel (%p1238) target = $region68
      $region67: #{mobilenet_v3_forward.9} parent=63 // pred_region
        _
      $region68: #{mobilenet_v3_forward.9} parent=63 // pred_fallthru
        _
    $region64: #{mobilenet_v3_forward.9} parent=5 // pred_fallthru
      _
    %p1241 = scmp.le.s32.totalorder 2, %s17
    // Predicated region
    $region69: #{mobilenet_v3_forward.9} parent=5 // pred_check
      %p1242 = pneg %p1241
    $region70: #{mobilenet_v3_forward.9} parent=5 // pred_check_branch
      %1244 = sbr.rel (%p1242) target = $region72
    $region71: #{mobilenet_v3_forward.9} parent=5 // pred_region
      %s1245 = ssub.s32 %s17, 2
      // Predicated region
      $region73: #{mobilenet_v3_forward.9} parent=71 // pred_check
        %p1246 = pneg %p282
      $region74: #{mobilenet_v3_forward.9} parent=71 // pred_check_branch
        %1248 = sbr.rel (%p1246) target = $region76
      $region75: #{mobilenet_v3_forward.9} parent=71 // pred_region
        %p1249 = scmp.lt.s32.totalorder %s23, 1
        %s1250 = scalar_select %p1249, %s23, 1
        %s1251 = smul.addr %s1250, 4
        %s1252 = smul.addr %s1251, 2
        %s1253 = scalar_lea.vmem %s11, %s1252
      $region76: #{mobilenet_v3_forward.9} parent=71 // pred_fallthru
        _
    $region72: #{mobilenet_v3_forward.9} parent=5 // pred_fallthru
      _
  $region6: #{mobilenet_v3_forward.9} parent=0 // loop_footer
    %s21 = sadd.s32 1, %s17
  $region7: #{mobilenet_v3_forward.9} parent=0 // loop_footer_branch
    %16 = sbr.rel target = $region3
  $region8: #{mobilenet_v3_forward.9} parent=0 // loop_exit
    _

</llo_original>
